<compile_context>
chip_gen: v7x
topology: tpu7x:2x2x1
jax: 0.10.0
libtpu: 0.0.40
codegen_flags: <defaults>
</compile_context>

<pallas_src>
import functools

import jax
import jax.numpy as jnp
from jax import lax
from jax.experimental import pallas as pl
from jax.experimental.pallas import tpu as pltpu


_BIG = 1e30
_KEY_IDX_BITS = 11                       # merged-lane index packed into the key's low bits
_KEY_IDX_MASK = (1 << _KEY_IDX_BITS) - 1


def _round_up(x, m):
    return ((int(x) + m - 1) // m) * m


def _tpu_vmem_bytes():
    try:
        info = pltpu.get_tpu_info()
        return int(getattr(info, "vmem_capacity_bytes", 128 << 20))
    except Exception:
        return 128 << 20


def _pad_and_tile(n, tile_max, align=128, min_tiles=1):
    """Return (padded, tile) with padded % tile == 0 and tile a multiple of `align`."""
    n = max(int(n), 1)
    padded = _round_up(max(n, align), align)
    if padded <= tile_max and min_tiles <= 1:
        return padded, padded
    tile = min(tile_max, padded)
    while min_tiles > 1 and padded // tile < min_tiles and tile > align:
        tile = max(align, tile // 2)
    padded = _round_up(padded, tile)
    return padded, tile


# --------------------------------------------------------------------------- #
# Kernel 1: average K-nearest-neighbour squared distance per point.
# Grid: (query-row tiles [parallel], data-column tiles [arbitrary, reduction]).
# --------------------------------------------------------------------------- #
def _knn_kernel(q_ref, dT_ref, avg_ref, topk_ref, *, k_neighbors, tm, tc):
    i = pl.program_id(0)
    j = pl.program_id(1)

    @pl.when(j == 0)
    def _():
        topk_ref[...] = jnp.full_like(topk_ref, _BIG)

    # d2 = -2<p_i,p_j> + |p_i|^2 + |p_j|^2, entirely on the MXU (exact f32 passes).
    d2 = jnp.dot(q_ref[...], dT_ref[...],
                 preferred_element_type=jnp.float32,
                 precision=lax.Precision.HIGHEST)                    # (tm, tc)
    d2 = jnp.maximum(d2, 0.0)                                        # kill cancellation noise
    row = i * tm + lax.broadcasted_iota(jnp.int32, d2.shape, 0)
    col = j * tc + lax.broadcasted_iota(jnp.int32, d2.shape, 1)
    d2 = jnp.where(row == col, _BIG, d2)                             # exclude self

    # Merge running K-smallest with this chunk.  Pack (distance bits, lane index) into a
    # single int32 key so ONE cross-lane min per neighbour gives a unique minimum.
    merged = jnp.concatenate([topk_ref[...], d2], axis=1)            # (tm, 128 + tc)
    lane = lax.broadcasted_iota(jnp.int32, merged.shape, 1)
    keys = (pltpu.bitcast(merged, jnp.int32) & jnp.int32(~_KEY_IDX_MASK)) | lane

    masked_key = jnp.int32(0x7F000000)                               # > any real key
    new_topk = jnp.full(topk_ref.shape, _BIG, jnp.float32)
    out_lane = lax.broadcasted_iota(jnp.int32, topk_ref.shape, 1)
    for kk in range(k_neighbors):                                    # K is small & static
        mkey = jnp.min(keys, axis=1, keepdims=True)                  # (tm, 1)
        mval = pltpu.bitcast(mkey & jnp.int32(~_KEY_IDX_MASK), jnp.float32)
        new_topk = jnp.where(out_lane == kk, mval, new_topk)
        keys = jnp.where(keys == mkey, masked_key, keys)             # unique key -> one elem
    topk_ref[...] = new_topk

    @pl.when(j == pl.num_programs(1) - 1)
    def _():
        vals = jnp.where(new_topk < _BIG * 0.5, new_topk, 0.0)       # clamp BIG sentinels
        avg_ref[...] = jnp.sum(vals, axis=1, keepdims=True) * (1.0 / float(k_neighbors))


def knn_avg_dist(q_mat, dT_mat, k):
    npad = q_mat.shape[0]
    ncol = dT_mat.shape[1]
    tm = min(npad, 256)
    tc = min(ncol, 1024)                       # bounds VMEM independent of point count
    assert npad % tm == 0 and ncol % tc == 0
    assert 128 + tc <= (1 << _KEY_IDX_BITS)
    assert int(k) <= 128
    kern = functools.partial(_knn_kernel, k_neighbors=int(k), tm=tm, tc=tc)
    return pl.pallas_call(
        kern,
        out_shape=jax.ShapeDtypeStruct((npad, 1), jnp.float32),
        grid=(npad // tm, ncol // tc),
        in_specs=[
            pl.BlockSpec((tm, 8), lambda i, j: (i, 0)),       # query rows (tiled over i)
            pl.BlockSpec((8, tc), lambda i, j: (0, j)),       # data-point columns (tiled over j)
        ],
        out_specs=pl.BlockSpec((tm, 1), lambda i, j: (i, 0)),
        scratch_shapes=[pltpu.VMEM((tm, 128), jnp.float32)],  # running K-smallest
        compiler_params=pltpu.CompilerParams(
            dimension_semantics=("parallel", "arbitrary")),
    )(q_mat, dT_mat)


# --------------------------------------------------------------------------- #
# Kernel 2: norm-weighted point splatting, tiled (pixel tiles x point tiles).
# --------------------------------------------------------------------------- #
def _raster_kernel(pt_ref, featT_ref, pix_ref, out_ref):
    j = pl.program_id(1)                     # point-tile (reduction) axis, last in grid

    @pl.when(j == 0)
    def _():
        out_ref[...] = jnp.zeros_like(out_ref)

    # dw = 1 - d2/r^2 for every (point, pixel) pair: ONE f32 MXU matmul, the constant
    # "1 -" is folded into the point coefficient rows.
    dw = jnp.dot(pt_ref[...], pix_ref[...],
                 preferred_element_type=jnp.float32,
                 precision=lax.Precision.HIGHEST)                 # (TNp, TP)
    w = jnp.maximum(dw, 0.0).astype(jnp.bfloat16)                 # NormWeighted weights
    out_ref[...] += jnp.dot(featT_ref[...], w,
                            preferred_element_type=jnp.float32)   # bf16 x bf16, f32 acc

    @pl.when(j == pl.num_programs(1) - 1)
    def _():
        acc = out_ref[...]
        wsum = acc[3:4, :]                   # (1, TP)
        has = wsum > 0.0
        inv = pl.reciprocal(wsum + 1e-10, approx=True)            # EUP slot: ~free
        res = jnp.where(has, acc * inv, 0.0)
        rowidx = lax.broadcasted_iota(jnp.int32, res.shape, 0)
        out_ref[...] = jnp.where(rowidx == 3, has.astype(jnp.float32), res)  # row 3 -> mask


def rasterize_points(pt_mat, featT, pix_mat, tnp_, tp_, vmem_limit_bytes):
    nppad = pt_mat.shape[0]
    ppad = pix_mat.shape[1]
    grid = (ppad // tp_, nppad // tnp_)
    return pl.pallas_call(
        _raster_kernel,
        out_shape=jax.ShapeDtypeStruct((8, ppad), jnp.float32),
        grid=grid,
        in_specs=[
            pl.BlockSpec((tnp_, 8), lambda i, j: (j, 0)),   # point coefficient rows (f32)
            pl.BlockSpec((8, tnp_), lambda i, j: (0, j)),   # point features (bf16, transposed)
            pl.BlockSpec((8, tp_), lambda i, j: (0, i)),    # pixel-centre columns (f32)
        ],
        out_specs=pl.BlockSpec((8, tp_), lambda i, j: (0, i)),
        compiler_params=pltpu.CompilerParams(
            dimension_semantics=("parallel", "arbitrary"),
            vmem_limit_bytes=int(vmem_limit_bytes)),
    )(pt_mat, featT, pix_mat)


# --------------------------------------------------------------------------- #
# Wrapper reproducing StaticGeoPointRenderer.forward
# --------------------------------------------------------------------------- #
def static_geo_point_render(*, tgt_h, tgt_w, flat_tgt_cam, st_pcl_rgb, render_cfg):
    assert st_pcl_rgb.ndim == 2, f"{st_pcl_rgb.shape}"
    st_pcl = st_pcl_rgb[:, :3].astype(jnp.float32)
    st_rgb = st_pcl_rgb[:, 3:].astype(jnp.float32)
    N = st_pcl.shape[0]
    H, W = int(tgt_h), int(tgt_w)
    P = H * W

    # ----- outlier removal (knn_points equivalent) ------------------------- #
    if render_cfg["st_pcl_remove_outlier"] and N > 1:
        nk = _round_up(max(N, 256), 256) if N <= 1024 else _round_up(N, 1024)
        sq = jnp.sum(st_pcl * st_pcl, axis=1)                       # (N,)
        q_mat = (
            jnp.zeros((nk, 8), jnp.float32)
            .at[:N, 0:3].set(-2.0 * st_pcl)
            .at[:N, 3].set(sq)
            .at[:N, 4].set(1.0)
        )
        dT = (
            jnp.zeros((8, nk), jnp.float32)
            .at[4, :].set(_BIG)                                     # padded cols -> BIG d2
            .at[0:3, :N].set(st_pcl.T)
            .at[3, :N].set(1.0)
            .at[4, :N].set(sq)
        )
        avg_nn = knn_avg_dist(q_mat, dT, render_cfg["st_pcl_outlier_knn"])[:N, 0]
        med = jnp.sort(avg_nn)[(N - 1) // 2]        # torch.median: lower middle for even N
        std = jnp.std(avg_nn, ddof=1)               # torch.std default: unbiased
        thres = med + std * render_cfg["st_pcl_outlier_std_thres"]
        flag_not_outlier = avg_nn < thres
    else:
        flag_not_outlier = jnp.ones((N,), dtype=bool)

    # ----- camera setup ----------------------------------------------------- #
    Kmat = flat_tgt_cam[2:18].reshape((4, 4)).astype(jnp.float32)
    c2w = flat_tgt_cam[18:34].reshape((4, 4)).astype(jnp.float32)
    w2c = jnp.linalg.inv(c2w)

    pts_h = jnp.concatenate([st_pcl, jnp.ones((N, 1), jnp.float32)], axis=1)  # (N,4)
    cam = pts_h @ w2c.T                                                        # (N,4)
    z = cam[:, 2]
    zsafe = jnp.where(jnp.abs(z) > 1e-6, z, 1.0)
    u = Kmat[0, 0] * cam[:, 0] / zsafe + Kmat[0, 2]
    v = Kmat[1, 1] * cam[:, 1] / zsafe + Kmat[1, 2]
    in_front = z > 1e-6
    pvalid = flag_not_outlier & in_front

    # pytorch3d point radius is in NDC units ([-1,1] over the short image side).
    # TODO(synk): exact pytorch3d NDC/half-pixel screen convention and points_per_pixel
    # nearest-K-by-z compositing are not replicated bit-exactly (all in-radius points
    # contribute, distances measured in pixel units).
    r_pix = float(render_cfg["st_render_pcl_pt_radius"]) * min(H, W) * 0.5
    inv_r2 = 1.0 / (r_pix * r_pix)

    # ----- generation-aware tiling ------------------------------------------ #
    vmem_bytes = _tpu_vmem_bytes()
    small_vmem = vmem_bytes < (100 << 20)          # v7x: 64 MiB / TensorCore
    tnp_max = 512 if small_vmem else 1024
    tp_max = 2048
    vmem_limit = min(vmem_bytes * 3 // 4, 96 << 20)

    nppad, tnp_ = _pad_and_tile(N, tnp_max)
    ppad, tp_ = _pad_and_tile(P, tp_max, min_tiles=2)   # >=2 pixel tiles -> both cores busy

    # Coordinates centered on the image center to limit f32 cancellation in the
    # quadratic expansion of the squared distance.
    cx0, cy0 = 0.5 * W, 0.5 * H
    uc, vc = u - cx0, v - cy0

    # Point rows: dot with pixel column [x, y, x^2+y^2, 1] gives dw = 1 - d2/r^2 directly.
    c0 = jnp.where(pvalid, 2.0 * uc * inv_r2, 0.0)
    c1 = jnp.where(pvalid, 2.0 * vc * inv_r2, 0.0)
    c2 = jnp.where(pvalid, -inv_r2, 0.0)
    c3 = jnp.where(pvalid, 1.0 - (uc * uc + vc * vc) * inv_r2, -1.0)  # invalid -> dw<=-1
    pt_mat = (
        jnp.zeros((nppad, 8), jnp.float32)
        .at[:, 3].set(-1.0)                                  # padded rows -> w=0
        .at[:N, 0].set(c0)
        .at[:N, 1].set(c1)
        .at[:N, 2].set(c2)
        .at[:N, 3].set(c3)
    )
    vf = pvalid.astype(jnp.float32)
    featT = (
        jnp.zeros((8, nppad), jnp.float32)
        .at[0:3, :N].set((st_rgb[:, :3] * vf[:, None]).T)
        .at[3, :N].set(vf)
    ).astype(jnp.bfloat16)                                   # bf16 feature operand

    # Lane-dense pixel-centre slab (padded columns are all-zero -> dw=0 -> w=0).
    yy, xx = jnp.meshgrid(jnp.arange(H, dtype=jnp.float32),
                          jnp.arange(W, dtype=jnp.float32), indexing="ij")
    xf = (xx + 0.5).reshape(-1) - cx0
    yf = (yy + 0.5).reshape(-1) - cy0
    pix_mat = (
        jnp.zeros((8, ppad), jnp.float32)
        .at[0, :P].set(xf)
        .at[1, :P].set(yf)
        .at[2, :P].set(xf * xf + yf * yf)
        .at[3, :P].set(1.0)
    )

    out = rasterize_points(pt_mat, featT, pix_mat, tnp_, tp_, vmem_limit)   # (8, Ppad)
    out = out[:, :P]
    mesh_img = out[0:3, :].T.reshape(H, W, 3)
    mesh_mask = out[3:4, :].T.reshape(H, W, 1)
    return mesh_img, mesh_mask


# --------------------------------------------------------------------------- #
if __name__ == "__main__":
    key = jax.random.PRNGKey(0)
    H = W = 16
    N = 200
    fx = fy = 20.0
    cx, cy = W / 2.0, H / 2.0

    k1, k2, k3 = jax.random.split(key, 3)
    uv = jax.random.uniform(k1, (N, 2), minval=0.0, maxval=float(W))
    z = jax.random.uniform(k2, (N, 1), minval=2.0, maxval=5.0)
    X = (uv[:, 0:1] - cx) * z / fx
    Y = (uv[:, 1:2] - cy) * z / fy
    pcl = jnp.concatenate([X, Y, z], axis=1)
    rgb = jax.random.uniform(k3, (N, 3))
    st_pcl_rgb = jnp.concatenate([pcl, rgb], axis=1).astype(jnp.float32)

    Kmat = jnp.array(
        [[fx, 0.0, cx, 0.0],
         [0.0, fy, cy, 0.0],
         [0.0, 0.0, 1.0, 0.0],
         [0.0, 0.0, 0.0, 1.0]], dtype=jnp.float32)
    c2w = jnp.eye(4, dtype=jnp.float32)
    flat_tgt_cam = jnp.concatenate(
        [jnp.array([H, W], jnp.float32), Kmat.reshape(-1), c2w.reshape(-1)])

    render_cfg = dict(
        st_pcl_remove_outlier=True,
        st_pcl_outlier_knn=4,
        st_pcl_outlier_std_thres=2.0,
        st_render_pcl_pt_radius=0.2,
        st_render_pcl_pts_per_pixel=8,
    )

    mesh_img, mesh_mask = static_geo_point_render(
        tgt_h=H, tgt_w=W, flat_tgt_cam=flat_tgt_cam,
        st_pcl_rgb=st_pcl_rgb, render_cfg=render_cfg)
    jax.block_until_ready((mesh_img, mesh_mask))

    assert mesh_img.shape == (H, W, 3), mesh_img.shape
    assert mesh_mask.shape == (H, W, 1), mesh_mask.shape
    assert jnp.isfinite(mesh_img).all() and jnp.isfinite(mesh_mask).all()
    assert float(mesh_mask.max()) <= 1.0 and float(mesh_mask.min()) >= 0.0
    print("KERNEL_OK")
</pallas_src>

<mosaic_0001>
module attributes {stable_mosaic.version = 11 : i64} {
  func.func @_knn_kernel(%arg0: i32, %arg1: i32, %arg2: memref<256x8xf32, #tpu.memory_space<vmem>>, %arg3: memref<8x256xf32, #tpu.memory_space<vmem>>, %arg4: memref<256x1xf32, #tpu.memory_space<vmem>>, %arg5: memref<256x128xf32, #tpu.memory_space<vmem>>) attributes {dimension_semantics = [#tpu.dimension_semantics<parallel>, #tpu.dimension_semantics<arbitrary>], iteration_bounds = array<i64: 1, 1>, scalar_prefetch = 0 : i64, scratch_operands = 1 : i64, tpu.core_type = #tpu.core_type<tc>, window_params = [{transform_indices = @transform_0, window_bounds = array<i64: 256, 8>}, {transform_indices = @transform_1, window_bounds = array<i64: 8, 256>}, {transform_indices = @transform_2, window_bounds = array<i64: 256, 1>}]} {
    %c0_i32 = arith.constant 0 : i32
    %0 = arith.cmpi eq, %arg1, %c0_i32 : i32
    %1 = arith.extui %0 : i1 to i32
    %c0_i32_0 = arith.constant 0 : i32
    %2 = arith.cmpi ne, %1, %c0_i32_0 : i32
    scf.if %2 {
      %cst_25 = arith.constant 1.000000e+30 : f32
      %84 = vector.broadcast %cst_25 : f32 to vector<256x128xf32>
      %c0_26 = arith.constant 0 : index
      %c0_27 = arith.constant 0 : index
      %85 = vector.load %arg5[%c0_26, %c0_27] : memref<256x128xf32, #tpu.memory_space<vmem>>, vector<256x128xf32>
      tpu.vector_store %arg5[%c0_26, %c0_27], %84 {strides = array<i32>} : memref<256x128xf32, #tpu.memory_space<vmem>>, vector<256x128xf32>,
    } else {
    }
    %c0 = arith.constant 0 : index
    %c0_1 = arith.constant 0 : index
    %3 = vector.load %arg2[%c0, %c0_1] : memref<256x8xf32, #tpu.memory_space<vmem>>, vector<256x8xf32>
    %c0_2 = arith.constant 0 : index
    %c0_3 = arith.constant 0 : index
    %4 = vector.load %arg3[%c0_2, %c0_3] : memref<8x256xf32, #tpu.memory_space<vmem>>, vector<8x256xf32>
    %cst = arith.constant dense<0.000000e+00> : vector<256x256xf32>
    %5 = tpu.matmul %3, %4, %cst {dimension_numbers = #tpu.dot_dimension_numbers<[1], [0], [0], [1], [0, 0, 1, 1], [], []>, precision = #tpu.contract_precision<fp32>} : vector<256x8xf32>, vector<8x256xf32>, vector<256x256xf32> -> vector<256x256xf32>
    %cst_4 = arith.constant 0.000000e+00 : f32
    %6 = vector.broadcast %cst_4 : f32 to vector<256x256xf32>
    %7 = arith.maximumf %5, %6 : vector<256x256xf32>
    %c256_i32 = arith.constant 256 : i32
    %8 = arith.muli %arg0, %c256_i32 : i32
    %9 = tpu.iota {dimensions = array<i32: 0>} : vector<256x256xi32>
    %10 = vector.broadcast %8 : i32 to vector<256x256xi32>
    %11 = arith.addi %10, %9 : vector<256x256xi32>
    %c256_i32_5 = arith.constant 256 : i32
    %12 = arith.muli %arg1, %c256_i32_5 : i32
    %13 = tpu.iota {dimensions = array<i32: 1>} : vector<256x256xi32>
    %14 = vector.broadcast %12 : i32 to vector<256x256xi32>
    %15 = arith.addi %14, %13 : vector<256x256xi32>
    %16 = arith.cmpi eq, %11, %15 : vector<256x256xi32>
    %cst_6 = arith.constant 1.000000e+30 : f32
    %17 = vector.broadcast %cst_6 : f32 to vector<256x256xf32>
    %18 = arith.select %16, %17, %7 : vector<256x256xi1>, vector<256x256xf32>
    %c0_7 = arith.constant 0 : index
    %c0_8 = arith.constant 0 : index
    %19 = vector.load %arg5[%c0_7, %c0_8] : memref<256x128xf32, #tpu.memory_space<vmem>>, vector<256x128xf32>
    %20 = tpu.concatenate %19, %18 in 1 : vector<256x128xf32>, vector<256x256xf32> -> vector<256x384xf32>
    %21 = tpu.iota {dimensions = array<i32: 1>} : vector<256x384xi32>
    %22 = tpu.bitcast %20 : vector<256x384xf32> -> vector<256x384xi32>
    %c-2048_i32 = arith.constant -2048 : i32
    %23 = vector.broadcast %c-2048_i32 : i32 to vector<256x384xi32>
    %24 = arith.andi %22, %23 : vector<256x384xi32>
    %25 = arith.ori %24, %21 : vector<256x384xi32>
    %cst_9 = arith.constant 1.000000e+30 : f32
    %26 = vector.broadcast %cst_9 : f32 to vector<256x128xf32>
    %27 = tpu.iota {dimensions = array<i32: 1>} : vector<256x128xi32>
    %cst_10 = arith.constant dense<2147483647> : vector<256xi32>
    %28 = vector.multi_reduction <minsi>, %25, %cst_10 [1] : vector<256x384xi32> to vector<256xi32>
    %29 = vector.shape_cast %28 : vector<256xi32> to vector<256x1xi32>
    %c-2048_i32_11 = arith.constant -2048 : i32
    %30 = vector.broadcast %c-2048_i32_11 : i32 to vector<256x1xi32>
    %31 = arith.andi %29, %30 : vector<256x1xi32>
    %32 = tpu.bitcast %31 : vector<256x1xi32> -> vector<256x1xf32>
    %c0_i32_12 = arith.constant 0 : i32
    %33 = vector.broadcast %c0_i32_12 : i32 to vector<256x128xi32>
    %34 = arith.cmpi eq, %27, %33 : vector<256x128xi32>
    %35 = vector.shape_cast %32 : vector<256x1xf32> to vector<256x1xf32>
    %36 = vector.broadcast %35 : vector<256x1xf32> to vector<256x128xf32>
    %37 = arith.select %34, %36, %26 : vector<256x128xi1>, vector<256x128xf32>
    %38 = vector.broadcast %29 : vector<256x1xi32> to vector<256x384xi32>
    %39 = arith.cmpi eq, %25, %38 : vector<256x384xi32>
    %c2130706432_i32 = arith.constant 2130706432 : i32
    %40 = vector.broadcast %c2130706432_i32 : i32 to vector<256x384xi32>
    %41 = arith.select %39, %40, %25 : vector<256x384xi1>, vector<256x384xi32>
    %cst_13 = arith.constant dense<2147483647> : vector<256xi32>
    %42 = vector.multi_reduction <minsi>, %41, %cst_13 [1] : vector<256x384xi32> to vector<256xi32>
    %43 = vector.shape_cast %42 : vector<256xi32> to vector<256x1xi32>
    %c-2048_i32_14 = arith.constant -2048 : i32
    %44 = vector.broadcast %c-2048_i32_14 : i32 to vector<256x1xi32>
    %45 = arith.andi %43, %44 : vector<256x1xi32>
    %46 = tpu.bitcast %45 : vector<256x1xi32> -> vector<256x1xf32>
    %c1_i32 = arith.constant 1 : i32
    %47 = vector.broadcast %c1_i32 : i32 to vector<256x128xi32>
    %48 = arith.cmpi eq, %27, %47 : vector<256x128xi32>
    %49 = vector.shape_cast %46 : vector<256x1xf32> to vector<256x1xf32>
    %50 = vector.broadcast %49 : vector<256x1xf32> to vector<256x128xf32>
    %51 = arith.select %48, %50, %37 : vector<256x128xi1>, vector<256x128xf32>
    %52 = vector.broadcast %43 : vector<256x1xi32> to vector<256x384xi32>
    %53 = arith.cmpi eq, %41, %52 : vector<256x384xi32>
    %c2130706432_i32_15 = arith.constant 2130706432 : i32
    %54 = vector.broadcast %c2130706432_i32_15 : i32 to vector<256x384xi32>
    %55 = arith.select %53, %54, %41 : vector<256x384xi1>, vector<256x384xi32>
    %cst_16 = arith.constant dense<2147483647> : vector<256xi32>
    %56 = vector.multi_reduction <minsi>, %55, %cst_16 [1] : vector<256x384xi32> to vector<256xi32>
    %57 = vector.shape_cast %56 : vector<256xi32> to vector<256x1xi32>
    %c-2048_i32_17 = arith.constant -2048 : i32
    %58 = vector.broadcast %c-2048_i32_17 : i32 to vector<256x1xi32>
    %59 = arith.andi %57, %58 : vector<256x1xi32>
    %60 = tpu.bitcast %59 : vector<256x1xi32> -> vector<256x1xf32>
    %c2_i32 = arith.constant 2 : i32
    %61 = vector.broadcast %c2_i32 : i32 to vector<256x128xi32>
    %62 = arith.cmpi eq, %27, %61 : vector<256x128xi32>
    %63 = vector.shape_cast %60 : vector<256x1xf32> to vector<256x1xf32>
    %64 = vector.broadcast %63 : vector<256x1xf32> to vector<256x128xf32>
    %65 = arith.select %62, %64, %51 : vector<256x128xi1>, vector<256x128xf32>
    %66 = vector.broadcast %57 : vector<256x1xi32> to vector<256x384xi32>
    %67 = arith.cmpi eq, %55, %66 : vector<256x384xi32>
    %c2130706432_i32_18 = arith.constant 2130706432 : i32
    %68 = vector.broadcast %c2130706432_i32_18 : i32 to vector<256x384xi32>
    %69 = arith.select %67, %68, %55 : vector<256x384xi1>, vector<256x384xi32>
    %cst_19 = arith.constant dense<2147483647> : vector<256xi32>
    %70 = vector.multi_reduction <minsi>, %69, %cst_19 [1] : vector<256x384xi32> to vector<256xi32>
    %71 = vector.shape_cast %70 : vector<256xi32> to vector<256x1xi32>
    %c-2048_i32_20 = arith.constant -2048 : i32
    %72 = vector.broadcast %c-2048_i32_20 : i32 to vector<256x1xi32>
    %73 = arith.andi %71, %72 : vector<256x1xi32>
    %74 = tpu.bitcast %73 : vector<256x1xi32> -> vector<256x1xf32>
    %c3_i32 = arith.constant 3 : i32
    %75 = vector.broadcast %c3_i32 : i32 to vector<256x128xi32>
    %76 = arith.cmpi eq, %27, %75 : vector<256x128xi32>
    %77 = vector.shape_cast %74 : vector<256x1xf32> to vector<256x1xf32>
    %78 = vector.broadcast %77 : vector<256x1xf32> to vector<256x128xf32>
    %79 = arith.select %76, %78, %65 : vector<256x128xi1>, vector<256x128xf32>
    %c0_21 = arith.constant 0 : index
    %c0_22 = arith.constant 0 : index
    %80 = vector.load %arg5[%c0_21, %c0_22] : memref<256x128xf32, #tpu.memory_space<vmem>>, vector<256x128xf32>
    tpu.vector_store %arg5[%c0_21, %c0_22], %79 {strides = array<i32>} : memref<256x128xf32, #tpu.memory_space<vmem>>, vector<256x128xf32>,
    %c0_i32_23 = arith.constant 0 : i32
    %81 = arith.cmpi eq, %arg1, %c0_i32_23 : i32
    %82 = arith.extui %81 : i1 to i32
    %c0_i32_24 = arith.constant 0 : i32
    %83 = arith.cmpi ne, %82, %c0_i32_24 : i32
    scf.if %83 {
      %cst_25 = arith.constant 5.000000e+29 : f32
      %84 = vector.broadcast %cst_25 : f32 to vector<256x128xf32>
      %85 = arith.cmpf olt, %79, %84 : vector<256x128xf32>
      %cst_26 = arith.constant 0.000000e+00 : f32
      %86 = vector.broadcast %cst_26 : f32 to vector<256x128xf32>
      %87 = arith.select %85, %79, %86 : vector<256x128xi1>, vector<256x128xf32>
      %cst_27 = arith.constant dense<0.000000e+00> : vector<256xf32>
      %88 = vector.multi_reduction <add>, %87, %cst_27 [1] : vector<256x128xf32> to vector<256xf32>
      %89 = vector.shape_cast %88 : vector<256xf32> to vector<256x1xf32>
      %cst_28 = arith.constant 2.500000e-01 : f32
      %90 = vector.broadcast %cst_28 : f32 to vector<256x1xf32>
      %91 = arith.mulf %89, %90 : vector<256x1xf32>
      %c0_29 = arith.constant 0 : index
      %c0_30 = arith.constant 0 : index
      %92 = vector.load %arg4[%c0_29, %c0_30] : memref<256x1xf32, #tpu.memory_space<vmem>>, vector<256x1xf32>
      tpu.vector_store %arg4[%c0_29, %c0_30], %91 {strides = array<i32>} : memref<256x1xf32, #tpu.memory_space<vmem>>, vector<256x1xf32>,
    } else {
    }
    return
  }
  func.func @transform_0(%arg0: i32, %arg1: i32) -> (i32, i32) {
    %c0_i32 = arith.constant 0 : i32
    %c0_i32_0 = arith.constant 0 : i32
    return %arg0, %c0_i32 : i32, i32
  }
  func.func @transform_1(%arg0: i32, %arg1: i32) -> (i32, i32) {
    %c0_i32 = arith.constant 0 : i32
    %c0_i32_0 = arith.constant 0 : i32
    return %c0_i32, %arg1 : i32, i32
  }
  func.func @transform_2(%arg0: i32, %arg1: i32) -> (i32, i32) {
    %c0_i32 = arith.constant 0 : i32
    %c0_i32_0 = arith.constant 0 : i32
    return %arg0, %c0_i32 : i32, i32
  }
}

</mosaic_0001>

<llo_original>
// kernel: tpu_custom_call.1
$region0: #{tpu_custom_call.1}
  #allocation0 [shape = 'u32[]', space=smem, size = 0x4, offset = 0x4, fixed_abs, tag = 'smem constant byte address 0x4 - core index']
  #allocation1 [shape = 'u32[144,128]{1,0:T(1,128)}', space=vmem, size = 0x12000, scoped, tag = 'internal scratch']
  #allocation2 [shape = 'f32[256,128]{1,0:T(8,128)}', space=vmem, size = 0x20000, scoped, tag = 'scratch operand']
  %s0 = inlined_call_operand.vmem [shape: f32[256,8], index: 0, kind: input, shape index: {}]
  %s1 = inlined_call_operand.vmem [shape: f32[8,256], index: 1, kind: input, shape index: {}]
  %s2 = inlined_call_operand.vmem [shape: f32[256,1], index: 2, kind: output, shape index: {}]
  %s3 = sld [smem:[#allocation0]]
  $region26: #{tpu_custom_call.1} parent=0
    _
  %s5 = ssub.s32 1, %s3
  %s6 = scalar_select 0, %s5, %s3
  // Predicated region
  $region2: #{tpu_custom_call.1} parent=0 // pred_check
    _
  $region3: #{tpu_custom_call.1} parent=0 // pred_check_branch
    %8 = sbr.rel (0) target = $region5
  $region4: #{tpu_custom_call.1} parent=0 // pred_region
    _
  $region5: #{tpu_custom_call.1} parent=0 // pred_fallthru
    _
  // Predicated region
  $region6: #{tpu_custom_call.1} parent=0 // pred_check
    _
  $region7: #{tpu_custom_call.1} parent=0 // pred_check_branch
    %10 = sbr.rel (0) target = $region9
  $region8: #{tpu_custom_call.1} parent=0 // pred_region
    _
  $region9: #{tpu_custom_call.1} parent=0 // pred_fallthru
    _
  %p11 = scmp.eq.s32.totalorder 0, 0
  // Predicated region
  $region10: #{tpu_custom_call.1} parent=0 // pred_check
    %p12 = pneg %p11
  $region11: #{tpu_custom_call.1} parent=0 // pred_check_branch
    %14 = sbr.rel (%p12) target = $region13
  $region12: #{tpu_custom_call.1} parent=0 // pred_region
    %15 = vst [vmem:[#allocation2] sm:$0xff] 1e+30
    %16 = vst [vmem:[#allocation2 + $0x8] sm:$0xff] 1e+30
    %17 = vst [vmem:[#allocation2 + $0x10] sm:$0xff] 1e+30
    %18 = vst [vmem:[#allocation2 + $0x18] sm:$0xff] 1e+30
    %19 = vst [vmem:[#allocation2 + $0x20] sm:$0xff] 1e+30
    %20 = vst [vmem:[#allocation2 + $0x28] sm:$0xff] 1e+30
    %21 = vst [vmem:[#allocation2 + $0x30] sm:$0xff] 1e+30
    %22 = vst [vmem:[#allocation2 + $0x38] sm:$0xff] 1e+30
    %23 = vst [vmem:[#allocation2 + $0x40] sm:$0xff] 1e+30
    %24 = vst [vmem:[#allocation2 + $0x48] sm:$0xff] 1e+30
    %25 = vst [vmem:[#allocation2 + $0x50] sm:$0xff] 1e+30
    %26 = vst [vmem:[#allocation2 + $0x58] sm:$0xff] 1e+30
    %27 = vst [vmem:[#allocation2 + $0x60] sm:$0xff] 1e+30
    %28 = vst [vmem:[#allocation2 + $0x68] sm:$0xff] 1e+30
    %29 = vst [vmem:[#allocation2 + $0x70] sm:$0xff] 1e+30
    %30 = vst [vmem:[#allocation2 + $0x78] sm:$0xff] 1e+30
    %31 = vst [vmem:[#allocation2 + $0x80] sm:$0xff] 1e+30
    %32 = vst [vmem:[#allocation2 + $0x88] sm:$0xff] 1e+30
    %33 = vst [vmem:[#allocation2 + $0x90] sm:$0xff] 1e+30
    %34 = vst [vmem:[#allocation2 + $0x98] sm:$0xff] 1e+30
    %35 = vst [vmem:[#allocation2 + $0xa0] sm:$0xff] 1e+30
    %36 = vst [vmem:[#allocation2 + $0xa8] sm:$0xff] 1e+30
    %37 = vst [vmem:[#allocation2 + $0xb0] sm:$0xff] 1e+30
    %38 = vst [vmem:[#allocation2 + $0xb8] sm:$0xff] 1e+30
    %39 = vst [vmem:[#allocation2 + $0xc0] sm:$0xff] 1e+30
    %40 = vst [vmem:[#allocation2 + $0xc8] sm:$0xff] 1e+30
    %41 = vst [vmem:[#allocation2 + $0xd0] sm:$0xff] 1e+30
    %42 = vst [vmem:[#allocation2 + $0xd8] sm:$0xff] 1e+30
    %43 = vst [vmem:[#allocation2 + $0xe0] sm:$0xff] 1e+30
    %44 = vst [vmem:[#allocation2 + $0xe8] sm:$0xff] 1e+30
    %45 = vst [vmem:[#allocation2 + $0xf0] sm:$0xff] 1e+30
    %46 = vst [vmem:[#allocation2 + $0xf8] sm:$0xff] 1e+30
  $region13: #{tpu_custom_call.1} parent=0 // pred_fallthru
    _
  %v47 = vld [vmem:[%s0] sm:$0xff]
  %v48 = vld [vmem:[%s0 + $0x8] sm:$0xff]
  %v49 = vld [vmem:[%s0 + $0x10] sm:$0xff]
  %v50 = vld [vmem:[%s0 + $0x18] sm:$0xff]
  %v51 = vld [vmem:[%s0 + $0x20] sm:$0xff]
  %v52 = vld [vmem:[%s0 + $0x28] sm:$0xff]
  %v53 = vld [vmem:[%s0 + $0x30] sm:$0xff]
  %v54 = vld [vmem:[%s0 + $0x38] sm:$0xff]
  %v55 = vld [vmem:[%s0 + $0x40] sm:$0xff]
  %v56 = vld [vmem:[%s0 + $0x48] sm:$0xff]
  %v57 = vld [vmem:[%s0 + $0x50] sm:$0xff]
  %v58 = vld [vmem:[%s0 + $0x58] sm:$0xff]
  %v59 = vld [vmem:[%s0 + $0x60] sm:$0xff]
  %v60 = vld [vmem:[%s0 + $0x68] sm:$0xff]
  %v61 = vld [vmem:[%s0 + $0x70] sm:$0xff]
  %v62 = vld [vmem:[%s0 + $0x78] sm:$0xff]
  %v63 = vld [vmem:[%s0 + $0x80] sm:$0xff]
  %v64 = vld [vmem:[%s0 + $0x88] sm:$0xff]
  %v65 = vld [vmem:[%s0 + $0x90] sm:$0xff]
  %v66 = vld [vmem:[%s0 + $0x98] sm:$0xff]
  %v67 = vld [vmem:[%s0 + $0xa0] sm:$0xff]
  %v68 = vld [vmem:[%s0 + $0xa8] sm:$0xff]
  %v69 = vld [vmem:[%s0 + $0xb0] sm:$0xff]
  %v70 = vld [vmem:[%s0 + $0xb8] sm:$0xff]
  %v71 = vld [vmem:[%s0 + $0xc0] sm:$0xff]
  %v72 = vld [vmem:[%s0 + $0xc8] sm:$0xff]
  %v73 = vld [vmem:[%s0 + $0xd0] sm:$0xff]
  %v74 = vld [vmem:[%s0 + $0xd8] sm:$0xff]
  %v75 = vld [vmem:[%s0 + $0xe0] sm:$0xff]
  %v76 = vld [vmem:[%s0 + $0xe8] sm:$0xff]
  %v77 = vld [vmem:[%s0 + $0xf0] sm:$0xff]
  %v78 = vld [vmem:[%s0 + $0xf8] sm:$0xff]
  %v79 = vld [vmem:[%s1] sm:$0xff]
  %v80 = vld [vmem:[%s1 + $0x8] sm:$0xff]
  %vm81 = vcmask 64512
  %v83 = vsel %vm81, %v47, 0
  %v86 = vsel %vm81, %v48, 0
  %v89 = vsel %vm81, %v49, 0
  %v92 = vsel %vm81, %v50, 0
  %v95 = vsel %vm81, %v51, 0
  %v98 = vsel %vm81, %v52, 0
  %v101 = vsel %vm81, %v53, 0
  %v104 = vsel %vm81, %v54, 0
  %v107 = vsel %vm81, %v55, 0
  %v110 = vsel %vm81, %v56, 0
  %v113 = vsel %vm81, %v57, 0
  %v116 = vsel %vm81, %v58, 0
  %v119 = vsel %vm81, %v59, 0
  %v122 = vsel %vm81, %v60, 0
  %v125 = vsel %vm81, %v61, 0
  %v128 = vsel %vm81, %v62, 0
  %v131 = vsel %vm81, %v63, 0
  %v134 = vsel %vm81, %v64, 0
  %v137 = vsel %vm81, %v65, 0
  %v140 = vsel %vm81, %v66, 0
  %v143 = vsel %vm81, %v67, 0
  %v146 = vsel %vm81, %v68, 0
  %v149 = vsel %vm81, %v69, 0
  %v152 = vsel %vm81, %v70, 0
  %v155 = vsel %vm81, %v71, 0
  %v158 = vsel %vm81, %v72, 0
  %v161 = vsel %vm81, %v73, 0
  %v164 = vsel %vm81, %v74, 0
  %v167 = vsel %vm81, %v75, 0
  %v170 = vsel %vm81, %v76, 0
  %v173 = vsel %vm81, %v77, 0
  %v176 = vsel %vm81, %v78, 0
  %v178 = vand.u32 %v80, 4294901760
  %179 = vmatprep.subr.mxu0 %v178
  %v180 = vand.u32 %v79, 4294901760
  %181 = vmatpush1.msra.mxu0 %v180
  %182 = vmatprep.subr.mxu0 0.0
  %183 = vmatpush1.msra.mxu0 0.0
  %184 = vmatprep.subr.mxu0 0.0
  %185 = vmatpush1.msra.mxu0 0.0
  %186 = vmatprep.subr.mxu0 0.0
  %187 = vmatpush1.msra.mxu0 0.0
  %188 = vmatprep.subr.mxu0 0.0
  %189 = vmatpush1.msra.mxu0 0.0
  %190 = vmatprep.subr.mxu0 0.0
  %191 = vmatpush1.msra.mxu0 0.0
  %192 = vmatprep.subr.mxu0 0.0
  %193 = vmatpush1.msra.mxu0 0.0
  %194 = vmatprep.subr.mxu0 0.0
  %195 = vmatpush1.msra.mxu0 0.0
  %196 = vmatprep.subr.mxu0 0.0
  %197 = vmatpush1.msra.mxu0 0.0
  %198 = vmatprep.subr.mxu0 0.0
  %199 = vmatpush1.msra.mxu0 0.0
  %200 = vmatprep.subr.mxu0 0.0
  %201 = vmatpush1.msra.mxu0 0.0
  %202 = vmatprep.subr.mxu0 0.0
  %203 = vmatpush1.msra.mxu0 0.0
  %204 = vmatprep.subr.mxu0 0.0
  %205 = vmatpush1.msra.mxu0 0.0
  %206 = vmatprep.subr.mxu0 0.0
  %207 = vmatpush1.msra.mxu0 0.0
  %208 = vmatprep.subr.mxu0 0.0
  %209 = vmatpush1.msra.mxu0 0.0
  %210 = vmatprep.subr.mxu0 0.0
  %211 = vmatpush1.msra.mxu0 0.0
  %212 = vmatprep.subr.mxu0 0.0
  %213 = vmatpush1.msra.mxu0 0.0
  %214 = vmatprep.subr.mxu0 0.0
  %215 = vmatpush1.msra.mxu0 0.0
  %216 = vmatprep.subr.mxu0 0.0
  %217 = vmatpush1.msra.mxu0 0.0
  %218 = vmatprep.subr.mxu0 0.0
  %219 = vmatpush1.msra.mxu0 0.0
  %220 = vmatprep.subr.mxu0 0.0
  %221 = vmatpush1.msra.mxu0 0.0
  %222 = vmatprep.subr.mxu0 0.0
  %223 = vmatpush1.msra.mxu0 0.0
  %224 = vmatprep.subr.mxu0 0.0
  %225 = vmatpush1.msra.mxu0 0.0
  %226 = vmatprep.subr.mxu0 0.0
  %227 = vmatpush1.msra.mxu0 0.0
  %228 = vmatprep.subr.mxu0 0.0
  %229 = vmatpush1.msra.mxu0 0.0
  %230 = vmatprep.subr.mxu0 0.0
  %231 = vmatpush1.msra.mxu0 0.0
  %232 = vmatprep.subr.mxu0 0.0
  %233 = vmatpush1.msra.mxu0 0.0
  %234 = vmatprep.subr.mxu0 0.0
  %235 = vmatpush1.msra.mxu0 0.0
  %236 = vmatprep.subr.mxu0 0.0
  %237 = vmatpush1.msra.mxu0 0.0
  %238 = vmatprep.subr.mxu0 0.0
  %239 = vmatpush1.msra.mxu0 0.0
  %240 = vmatprep.subr.mxu0 0.0
  %241 = vmatpush1.msra.mxu0 0.0
  %242 = vmatprep.subr.mxu0 0.0
  %243 = vmatpush1.msra.mxu0 0.0
  %244 = vmatprep.mubr.f32.mxu0 0.0
  %v245 = vand.u32 %v83, 4294901760
  %v246 = vsub.f32 %v83, %v245
  %v247 = vand.u32 %v246, 4294901760
  %v248 = vsub.f32 %v246, %v247
  %v249 = vand.u32 %v248, 4294901760
  %250 = vmatmul.mubr.f32.gmra.mrb[0].mxu0 %v249
  %v251 = vpop.f32.mrb[0].mxu0
  %v252 = vadd.f32 0.0, %v251
  %v253 = vpop.f32.mrb[0].mxu0
  %v254 = vadd.f32 0.0, %v253
  %255 = vmatprep.mubr.f32.mxu0 0.0
  %v256 = vand.u32 %v86, 4294901760
  %v257 = vsub.f32 %v86, %v256
  %v258 = vand.u32 %v257, 4294901760
  %v259 = vsub.f32 %v257, %v258
  %v260 = vand.u32 %v259, 4294901760
  %261 = vmatmul.mubr.f32.gmra.mrb[0].mxu0 %v260
  %v262 = vpop.f32.mrb[0].mxu0
  %v263 = vadd.f32 0.0, %v262
  %v264 = vpop.f32.mrb[0].mxu0
  %v265 = vadd.f32 0.0, %v264
  %266 = vmatprep.mubr.f32.mxu0 0.0
  %v267 = vand.u32 %v89, 4294901760
  %v268 = vsub.f32 %v89, %v267
  %v269 = vand.u32 %v268, 4294901760
  %v270 = vsub.f32 %v268, %v269
  %v271 = vand.u32 %v270, 4294901760
  %272 = vmatmul.mubr.f32.gmra.mrb[0].mxu0 %v271
  %v273 = vpop.f32.mrb[0].mxu0
  %v274 = vadd.f32 0.0, %v273
  %v275 = vpop.f32.mrb[0].mxu0
  %v276 = vadd.f32 0.0, %v275
  %277 = vmatprep.mubr.f32.mxu0 0.0
  %v278 = vand.u32 %v92, 4294901760
  %v279 = vsub.f32 %v92, %v278
  %v280 = vand.u32 %v279, 4294901760
  %v281 = vsub.f32 %v279, %v280
  %v282 = vand.u32 %v281, 4294901760
  %283 = vmatmul.mubr.f32.gmra.mrb[0].mxu0 %v282
  %v284 = vpop.f32.mrb[0].mxu0
  %v285 = vadd.f32 0.0, %v284
  %v286 = vpop.f32.mrb[0].mxu0
  %v287 = vadd.f32 0.0, %v286
  %288 = vmatprep.mubr.f32.mxu0 0.0
  %v289 = vand.u32 %v95, 4294901760
  %v290 = vsub.f32 %v95, %v289
  %v291 = vand.u32 %v290, 4294901760
  %v292 = vsub.f32 %v290, %v291
  %v293 = vand.u32 %v292, 4294901760
  %294 = vmatmul.mubr.f32.gmra.mrb[0].mxu0 %v293
  %v295 = vpop.f32.mrb[0].mxu0
  %v296 = vadd.f32 0.0, %v295
  %v297 = vpop.f32.mrb[0].mxu0
  %v298 = vadd.f32 0.0, %v297
  %299 = vmatprep.mubr.f32.mxu0 0.0
  %v300 = vand.u32 %v98, 4294901760
  %v301 = vsub.f32 %v98, %v300
  %v302 = vand.u32 %v301, 4294901760
  %v303 = vsub.f32 %v301, %v302
  %v304 = vand.u32 %v303, 4294901760
  %305 = vmatmul.mubr.f32.gmra.mrb[0].mxu0 %v304
  %v306 = vpop.f32.mrb[0].mxu0
  %v307 = vadd.f32 0.0, %v306
  %v308 = vpop.f32.mrb[0].mxu0
  %v309 = vadd.f32 0.0, %v308
  %310 = vmatprep.mubr.f32.mxu0 0.0
  %v311 = vand.u32 %v101, 4294901760
  %v312 = vsub.f32 %v101, %v311
  %v313 = vand.u32 %v312, 4294901760
  %v314 = vsub.f32 %v312, %v313
  %v315 = vand.u32 %v314, 4294901760
  %316 = vmatmul.mubr.f32.gmra.mrb[0].mxu0 %v315
  %v317 = vpop.f32.mrb[0].mxu0
  %v318 = vadd.f32 0.0, %v317
  %v319 = vpop.f32.mrb[0].mxu0
  %v320 = vadd.f32 0.0, %v319
  %321 = vmatprep.mubr.f32.mxu0 0.0
  %v322 = vand.u32 %v104, 4294901760
  %v323 = vsub.f32 %v104, %v322
  %v324 = vand.u32 %v323, 4294901760
  %v325 = vsub.f32 %v323, %v324
  %v326 = vand.u32 %v325, 4294901760
  %327 = vmatmul.mubr.f32.gmra.mrb[0].mxu0 %v326
  %v328 = vpop.f32.mrb[0].mxu0
  %v329 = vadd.f32 0.0, %v328
  %v330 = vpop.f32.mrb[0].mxu0
  %v331 = vadd.f32 0.0, %v330
  %332 = vmatprep.mubr.f32.mxu0 0.0
  %v333 = vand.u32 %v107, 4294901760
  %v334 = vsub.f32 %v107, %v333
  %v335 = vand.u32 %v334, 4294901760
  %v336 = vsub.f32 %v334, %v335
  %v337 = vand.u32 %v336, 4294901760
  %338 = vmatmul.mubr.f32.gmra.mrb[0].mxu0 %v337
  %v339 = vpop.f32.mrb[0].mxu0
  %v340 = vadd.f32 0.0, %v339
  %v341 = vpop.f32.mrb[0].mxu0
  %v342 = vadd.f32 0.0, %v341
  %343 = vmatprep.mubr.f32.mxu0 0.0
  %v344 = vand.u32 %v110, 4294901760
  %v345 = vsub.f32 %v110, %v344
  %v346 = vand.u32 %v345, 4294901760
  %v347 = vsub.f32 %v345, %v346
  %v348 = vand.u32 %v347, 4294901760
  %349 = vmatmul.mubr.f32.gmra.mrb[0].mxu0 %v348
  %v350 = vpop.f32.mrb[0].mxu0
  %v351 = vadd.f32 0.0, %v350
  %v352 = vpop.f32.mrb[0].mxu0
  %v353 = vadd.f32 0.0, %v352
  %354 = vmatprep.mubr.f32.mxu0 0.0
  %v355 = vand.u32 %v113, 4294901760
  %v356 = vsub.f32 %v113, %v355
  %v357 = vand.u32 %v356, 4294901760
  %v358 = vsub.f32 %v356, %v357
  %v359 = vand.u32 %v358, 4294901760
  %360 = vmatmul.mubr.f32.gmra.mrb[0].mxu0 %v359
  %v361 = vpop.f32.mrb[0].mxu0
  %v362 = vadd.f32 0.0, %v361
  %v363 = vpop.f32.mrb[0].mxu0
  %v364 = vadd.f32 0.0, %v363
  %365 = vmatprep.mubr.f32.mxu0 0.0
  %v366 = vand.u32 %v116, 4294901760
  %v367 = vsub.f32 %v116, %v366
  %v368 = vand.u32 %v367, 4294901760
  %v369 = vsub.f32 %v367, %v368
  %v370 = vand.u32 %v369, 4294901760
  %371 = vmatmul.mubr.f32.gmra.mrb[0].mxu0 %v370
  %v372 = vpop.f32.mrb[0].mxu0
  %v373 = vadd.f32 0.0, %v372
  %v374 = vpop.f32.mrb[0].mxu0
  %v375 = vadd.f32 0.0, %v374
  %376 = vmatprep.mubr.f32.mxu0 0.0
  %v377 = vand.u32 %v119, 4294901760
  %v378 = vsub.f32 %v119, %v377
  %v379 = vand.u32 %v378, 4294901760
  %v380 = vsub.f32 %v378, %v379
  %v381 = vand.u32 %v380, 4294901760
  %382 = vmatmul.mubr.f32.gmra.mrb[0].mxu0 %v381
  %v383 = vpop.f32.mrb[0].mxu0
  %v384 = vadd.f32 0.0, %v383
  %v385 = vpop.f32.mrb[0].mxu0
  %v386 = vadd.f32 0.0, %v385
  %387 = vmatprep.mubr.f32.mxu0 0.0
  %v388 = vand.u32 %v122, 4294901760
  %v389 = vsub.f32 %v122, %v388
  %v390 = vand.u32 %v389, 4294901760
  %v391 = vsub.f32 %v389, %v390
  %v392 = vand.u32 %v391, 4294901760
  %393 = vmatmul.mubr.f32.gmra.mrb[0].mxu0 %v392
  %v394 = vpop.f32.mrb[0].mxu0
  %v395 = vadd.f32 0.0, %v394
  %v396 = vpop.f32.mrb[0].mxu0
  %v397 = vadd.f32 0.0, %v396
  %398 = vmatprep.mubr.f32.mxu0 0.0
  %v399 = vand.u32 %v125, 4294901760
  %v400 = vsub.f32 %v125, %v399
  %v401 = vand.u32 %v400, 4294901760
  %v402 = vsub.f32 %v400, %v401
  %v403 = vand.u32 %v402, 4294901760
  %404 = vmatmul.mubr.f32.gmra.mrb[0].mxu0 %v403
  %v405 = vpop.f32.mrb[0].mxu0
  %v406 = vadd.f32 0.0, %v405
  %v407 = vpop.f32.mrb[0].mxu0
  %v408 = vadd.f32 0.0, %v407
  %409 = vmatprep.mubr.f32.mxu0 0.0
  %v410 = vand.u32 %v128, 4294901760
  %v411 = vsub.f32 %v128, %v410
  %v412 = vand.u32 %v411, 4294901760
  %v413 = vsub.f32 %v411, %v412
  %v414 = vand.u32 %v413, 4294901760
  %415 = vmatmul.mubr.f32.gmra.mrb[0].mxu0 %v414
  %v416 = vpop.f32.mrb[0].mxu0
  %v417 = vadd.f32 0.0, %v416
  %v418 = vpop.f32.mrb[0].mxu0
  %v419 = vadd.f32 0.0, %v418
  %420 = vmatprep.mubr.f32.mxu0 0.0
  %v421 = vand.u32 %v131, 4294901760
  %v422 = vsub.f32 %v131, %v421
  %v423 = vand.u32 %v422, 4294901760
  %v424 = vsub.f32 %v422, %v423
  %v425 = vand.u32 %v424, 4294901760
  %426 = vmatmul.mubr.f32.gmra.mrb[0].mxu0 %v425
  %v427 = vpop.f32.mrb[0].mxu0
  %v428 = vadd.f32 0.0, %v427
  %v429 = vpop.f32.mrb[0].mxu0
  %v430 = vadd.f32 0.0, %v429
  %431 = vmatprep.mubr.f32.mxu0 0.0
  %v432 = vand.u32 %v134, 4294901760
  %v433 = vsub.f32 %v134, %v432
  %v434 = vand.u32 %v433, 4294901760
  %v435 = vsub.f32 %v433, %v434
  %v436 = vand.u32 %v435, 4294901760
  %437 = vmatmul.mubr.f32.gmra.mrb[0].mxu0 %v436
  %v438 = vpop.f32.mrb[0].mxu0
  %v439 = vadd.f32 0.0, %v438
  %v440 = vpop.f32.mrb[0].mxu0
  %v441 = vadd.f32 0.0, %v440
  %442 = vmatprep.mubr.f32.mxu0 0.0
  %v443 = vand.u32 %v137, 4294901760
  %v444 = vsub.f32 %v137, %v443
  %v445 = vand.u32 %v444, 4294901760
  %v446 = vsub.f32 %v444, %v445
  %v447 = vand.u32 %v446, 4294901760
  %448 = vmatmul.mubr.f32.gmra.mrb[0].mxu0 %v447
  %v449 = vpop.f32.mrb[0].mxu0
  %v450 = vadd.f32 0.0, %v449
  %v451 = vpop.f32.mrb[0].mxu0
  %v452 = vadd.f32 0.0, %v451
  %453 = vmatprep.mubr.f32.mxu0 0.0
  %v454 = vand.u32 %v140, 4294901760
  %v455 = vsub.f32 %v140, %v454
  %v456 = vand.u32 %v455, 4294901760
  %v457 = vsub.f32 %v455, %v456
  %v458 = vand.u32 %v457, 4294901760
  %459 = vmatmul.mubr.f32.gmra.mrb[0].mxu0 %v458
  %v460 = vpop.f32.mrb[0].mxu0
  %v461 = vadd.f32 0.0, %v460
  %v462 = vpop.f32.mrb[0].mxu0
  %v463 = vadd.f32 0.0, %v462
  %464 = vmatprep.mubr.f32.mxu0 0.0
  %v465 = vand.u32 %v143, 4294901760
  %v466 = vsub.f32 %v143, %v465
  %v467 = vand.u32 %v466, 4294901760
  %v468 = vsub.f32 %v466, %v467
  %v469 = vand.u32 %v468, 4294901760
  %470 = vmatmul.mubr.f32.gmra.mrb[0].mxu0 %v469
  %v471 = vpop.f32.mrb[0].mxu0
  %v472 = vadd.f32 0.0, %v471
  %v473 = vpop.f32.mrb[0].mxu0
  %v474 = vadd.f32 0.0, %v473
  %475 = vmatprep.mubr.f32.mxu0 0.0
  %v476 = vand.u32 %v146, 4294901760
  %v477 = vsub.f32 %v146, %v476
  %v478 = vand.u32 %v477, 4294901760
  %v479 = vsub.f32 %v477, %v478
  %v480 = vand.u32 %v479, 4294901760
  %481 = vmatmul.mubr.f32.gmra.mrb[0].mxu0 %v480
  %v482 = vpop.f32.mrb[0].mxu0
  %v483 = vadd.f32 0.0, %v482
  %v484 = vpop.f32.mrb[0].mxu0
  %v485 = vadd.f32 0.0, %v484
  %486 = vmatprep.mubr.f32.mxu0 0.0
  %v487 = vand.u32 %v149, 4294901760
  %v488 = vsub.f32 %v149, %v487
  %v489 = vand.u32 %v488, 4294901760
  %v490 = vsub.f32 %v488, %v489
  %v491 = vand.u32 %v490, 4294901760
  %492 = vmatmul.mubr.f32.gmra.mrb[0].mxu0 %v491
  %v493 = vpop.f32.mrb[0].mxu0
  %v494 = vadd.f32 0.0, %v493
  %v495 = vpop.f32.mrb[0].mxu0
  %v496 = vadd.f32 0.0, %v495
  %497 = vmatprep.mubr.f32.mxu0 0.0
  %v498 = vand.u32 %v152, 4294901760
  %v499 = vsub.f32 %v152, %v498
  %v500 = vand.u32 %v499, 4294901760
  %v501 = vsub.f32 %v499, %v500
  %v502 = vand.u32 %v501, 4294901760
  %503 = vmatmul.mubr.f32.gmra.mrb[0].mxu0 %v502
  %v504 = vpop.f32.mrb[0].mxu0
  %v505 = vadd.f32 0.0, %v504
  %v506 = vpop.f32.mrb[0].mxu0
  %v507 = vadd.f32 0.0, %v506
  %508 = vmatprep.mubr.f32.mxu0 0.0
  %v509 = vand.u32 %v155, 4294901760
  %v510 = vsub.f32 %v155, %v509
  %v511 = vand.u32 %v510, 4294901760
  %v512 = vsub.f32 %v510, %v511
  %v513 = vand.u32 %v512, 4294901760
  %514 = vmatmul.mubr.f32.gmra.mrb[0].mxu0 %v513
  %v515 = vpop.f32.mrb[0].mxu0
  %v516 = vadd.f32 0.0, %v515
  %v517 = vpop.f32.mrb[0].mxu0
  %v518 = vadd.f32 0.0, %v517
  %519 = vmatprep.mubr.f32.mxu0 0.0
  %v520 = vand.u32 %v158, 4294901760
  %v521 = vsub.f32 %v158, %v520
  %v522 = vand.u32 %v521, 4294901760
  %v523 = vsub.f32 %v521, %v522
  %v524 = vand.u32 %v523, 4294901760
  %525 = vmatmul.mubr.f32.gmra.mrb[0].mxu0 %v524
  %v526 = vpop.f32.mrb[0].mxu0
  %v527 = vadd.f32 0.0, %v526
  %v528 = vpop.f32.mrb[0].mxu0
  %v529 = vadd.f32 0.0, %v528
  %530 = vmatprep.mubr.f32.mxu0 0.0
  %v531 = vand.u32 %v161, 4294901760
  %v532 = vsub.f32 %v161, %v531
  %v533 = vand.u32 %v532, 4294901760
  %v534 = vsub.f32 %v532, %v533
  %v535 = vand.u32 %v534, 4294901760
  %536 = vmatmul.mubr.f32.gmra.mrb[0].mxu0 %v535
  %v537 = vpop.f32.mrb[0].mxu0
  %v538 = vadd.f32 0.0, %v537
  %v539 = vpop.f32.mrb[0].mxu0
  %v540 = vadd.f32 0.0, %v539
  %541 = vmatprep.mubr.f32.mxu0 0.0
  %v542 = vand.u32 %v164, 4294901760
  %v543 = vsub.f32 %v164, %v542
  %v544 = vand.u32 %v543, 4294901760
  %v545 = vsub.f32 %v543, %v544
  %v546 = vand.u32 %v545, 4294901760
  %547 = vmatmul.mubr.f32.gmra.mrb[0].mxu0 %v546
  %v548 = vpop.f32.mrb[0].mxu0
  %v549 = vadd.f32 0.0, %v548
  %v550 = vpop.f32.mrb[0].mxu0
  %v551 = vadd.f32 0.0, %v550
  %552 = vmatprep.mubr.f32.mxu0 0.0
  %v553 = vand.u32 %v167, 4294901760
  %v554 = vsub.f32 %v167, %v553
  %v555 = vand.u32 %v554, 4294901760
  %v556 = vsub.f32 %v554, %v555
  %v557 = vand.u32 %v556, 4294901760
  %558 = vmatmul.mubr.f32.gmra.mrb[0].mxu0 %v557
  %v559 = vpop.f32.mrb[0].mxu0
  %v560 = vadd.f32 0.0, %v559
  %v561 = vpop.f32.mrb[0].mxu0
  %v562 = vadd.f32 0.0, %v561
  %563 = vmatprep.mubr.f32.mxu0 0.0
  %v564 = vand.u32 %v170, 4294901760
  %v565 = vsub.f32 %v170, %v564
  %v566 = vand.u32 %v565, 4294901760
  %v567 = vsub.f32 %v565, %v566
  %v568 = vand.u32 %v567, 4294901760
  %569 = vmatmul.mubr.f32.gmra.mrb[0].mxu0 %v568
  %v570 = vpop.f32.mrb[0].mxu0
  %v571 = vadd.f32 0.0, %v570
  %v572 = vpop.f32.mrb[0].mxu0
  %v573 = vadd.f32 0.0, %v572
  %574 = vmatprep.mubr.f32.mxu0 0.0
  %v575 = vand.u32 %v173, 4294901760
  %v576 = vsub.f32 %v173, %v575
  %v577 = vand.u32 %v576, 4294901760
  %v578 = vsub.f32 %v576, %v577
  %v579 = vand.u32 %v578, 4294901760
  %580 = vmatmul.mubr.f32.gmra.mrb[0].mxu0 %v579
  %v581 = vpop.f32.mrb[0].mxu0
  %v582 = vadd.f32 0.0, %v581
  %v583 = vpop.f32.mrb[0].mxu0
  %v584 = vadd.f32 0.0, %v583
  %585 = vmatprep.mubr.f32.mxu0 0.0
  %v586 = vand.u32 %v176, 4294901760
  %v587 = vsub.f32 %v176, %v586
  %v588 = vand.u32 %v587, 4294901760
  %v589 = vsub.f32 %v587, %v588
  %v590 = vand.u32 %v589, 4294901760
  %591 = vmatmul.mubr.f32.gmra.mrb[0].mxu0 %v590
  %v592 = vpop.f32.mrb[0].mxu0
  %v593 = vadd.f32 0.0, %v592
  %v594 = vpop.f32.mrb[0].mxu0
  %v595 = vadd.f32 0.0, %v594
  %596 = vdwg.mxu0
  %v597 = vand.u32 %v80, 4294901760
  %v598 = vsub.f32 %v80, %v597
  %v599 = vand.u32 %v598, 4294901760
  %v600 = vsub.f32 %v598, %v599
  %v601 = vand.u32 %v600, 4294901760
  %602 = vmatprep.subr.mxu0 %v601
  %v603 = vand.u32 %v79, 4294901760
  %v604 = vsub.f32 %v79, %v603
  %v605 = vand.u32 %v604, 4294901760
  %v606 = vsub.f32 %v604, %v605
  %v607 = vand.u32 %v606, 4294901760
  %608 = vmatpush1.msra.mxu0 %v607
  %609 = vmatprep.subr.mxu0 0.0
  %610 = vmatpush1.msra.mxu0 0.0
  %611 = vmatprep.subr.mxu0 0.0
  %612 = vmatpush1.msra.mxu0 0.0
  %613 = vmatprep.subr.mxu0 0.0
  %614 = vmatpush1.msra.mxu0 0.0
  %615 = vmatprep.subr.mxu0 0.0
  %616 = vmatpush1.msra.mxu0 0.0
  %617 = vmatprep.subr.mxu0 0.0
  %618 = vmatpush1.msra.mxu0 0.0
  %619 = vmatprep.subr.mxu0 0.0
  %620 = vmatpush1.msra.mxu0 0.0
  %621 = vmatprep.subr.mxu0 0.0
  %622 = vmatpush1.msra.mxu0 0.0
  %623 = vmatprep.subr.mxu0 0.0
  %624 = vmatpush1.msra.mxu0 0.0
  %625 = vmatprep.subr.mxu0 0.0
  %626 = vmatpush1.msra.mxu0 0.0
  %627 = vmatprep.subr.mxu0 0.0
  %628 = vmatpush1.msra.mxu0 0.0
  %629 = vmatprep.subr.mxu0 0.0
  %630 = vmatpush1.msra.mxu0 0.0
  %631 = vmatprep.subr.mxu0 0.0
  %632 = vmatpush1.msra.mxu0 0.0
  %633 = vmatprep.subr.mxu0 0.0
  %634 = vmatpush1.msra.mxu0 0.0
  %635 = vmatprep.subr.mxu0 0.0
  %636 = vmatpush1.msra.mxu0 0.0
  %637 = vmatprep.subr.mxu0 0.0
  %638 = vmatpush1.msra.mxu0 0.0
  %639 = vmatprep.subr.mxu0 0.0
  %640 = vmatpush1.msra.mxu0 0.0
  %641 = vmatprep.subr.mxu0 0.0
  %642 = vmatpush1.msra.mxu0 0.0
  %643 = vmatprep.subr.mxu0 0.0
  %644 = vmatpush1.msra.mxu0 0.0
  %645 = vmatprep.subr.mxu0 0.0
  %646 = vmatpush1.msra.mxu0 0.0
  %647 = vmatprep.subr.mxu0 0.0
  %648 = vmatpush1.msra.mxu0 0.0
  %649 = vmatprep.subr.mxu0 0.0
  %650 = vmatpush1.msra.mxu0 0.0
  %651 = vmatprep.subr.mxu0 0.0
  %652 = vmatpush1.msra.mxu0 0.0
  %653 = vmatprep.subr.mxu0 0.0
  %654 = vmatpush1.msra.mxu0 0.0
  %655 = vmatprep.subr.mxu0 0.0
  %656 = vmatpush1.msra.mxu0 0.0
  %657 = vmatprep.subr.mxu0 0.0
  %658 = vmatpush1.msra.mxu0 0.0
  %659 = vmatprep.subr.mxu0 0.0
  %660 = vmatpush1.msra.mxu0 0.0
  %661 = vmatprep.subr.mxu0 0.0
  %662 = vmatpush1.msra.mxu0 0.0
  %663 = vmatprep.subr.mxu0 0.0
  %664 = vmatpush1.msra.mxu0 0.0
  %665 = vmatprep.subr.mxu0 0.0
  %666 = vmatpush1.msra.mxu0 0.0
  %667 = vmatprep.subr.mxu0 0.0
  %668 = vmatpush1.msra.mxu0 0.0
  %669 = vmatprep.subr.mxu0 0.0
  %670 = vmatpush1.msra.mxu0 0.0
  %671 = vmatprep.mubr.f32.mxu0 0.0
  %v672 = vand.u32 %v83, 4294901760
  %673 = vmatmul.mubr.f32.gmra.mrb[0].mxu0 %v672
  %v674 = vpop.f32.mrb[0].mxu0
  %v675 = vadd.f32 %v252, %v674
  %v676 = vpop.f32.mrb[0].mxu0
  %v677 = vadd.f32 %v254, %v676
  %678 = vmatprep.mubr.f32.mxu0 0.0
  %v679 = vand.u32 %v86, 4294901760
  %680 = vmatmul.mubr.f32.gmra.mrb[0].mxu0 %v679
  %v681 = vpop.f32.mrb[0].mxu0
  %v682 = vadd.f32 %v263, %v681
  %v683 = vpop.f32.mrb[0].mxu0
  %v684 = vadd.f32 %v265, %v683
  %685 = vmatprep.mubr.f32.mxu0 0.0
  %v686 = vand.u32 %v89, 4294901760
  %687 = vmatmul.mubr.f32.gmra.mrb[0].mxu0 %v686
  %v688 = vpop.f32.mrb[0].mxu0
  %v689 = vadd.f32 %v274, %v688
  %v690 = vpop.f32.mrb[0].mxu0
  %v691 = vadd.f32 %v276, %v690
  %692 = vmatprep.mubr.f32.mxu0 0.0
  %v693 = vand.u32 %v92, 4294901760
  %694 = vmatmul.mubr.f32.gmra.mrb[0].mxu0 %v693
  %v695 = vpop.f32.mrb[0].mxu0
  %v696 = vadd.f32 %v285, %v695
  %v697 = vpop.f32.mrb[0].mxu0
  %v698 = vadd.f32 %v287, %v697
  %699 = vmatprep.mubr.f32.mxu0 0.0
  %v700 = vand.u32 %v95, 4294901760
  %701 = vmatmul.mubr.f32.gmra.mrb[0].mxu0 %v700
  %v702 = vpop.f32.mrb[0].mxu0
  %v703 = vadd.f32 %v296, %v702
  %v704 = vpop.f32.mrb[0].mxu0
  %v705 = vadd.f32 %v298, %v704
  %706 = vmatprep.mubr.f32.mxu0 0.0
  %v707 = vand.u32 %v98, 4294901760
  %708 = vmatmul.mubr.f32.gmra.mrb[0].mxu0 %v707
  %v709 = vpop.f32.mrb[0].mxu0
  %v710 = vadd.f32 %v307, %v709
  %v711 = vpop.f32.mrb[0].mxu0
  %v712 = vadd.f32 %v309, %v711
  %713 = vmatprep.mubr.f32.mxu0 0.0
  %v714 = vand.u32 %v101, 4294901760
  %715 = vmatmul.mubr.f32.gmra.mrb[0].mxu0 %v714
  %v716 = vpop.f32.mrb[0].mxu0
  %v717 = vadd.f32 %v318, %v716
  %v718 = vpop.f32.mrb[0].mxu0
  %v719 = vadd.f32 %v320, %v718
  %720 = vmatprep.mubr.f32.mxu0 0.0
  %v721 = vand.u32 %v104, 4294901760
  %722 = vmatmul.mubr.f32.gmra.mrb[0].mxu0 %v721
  %v723 = vpop.f32.mrb[0].mxu0
  %v724 = vadd.f32 %v329, %v723
  %v725 = vpop.f32.mrb[0].mxu0
  %v726 = vadd.f32 %v331, %v725
  %727 = vmatprep.mubr.f32.mxu0 0.0
  %v728 = vand.u32 %v107, 4294901760
  %729 = vmatmul.mubr.f32.gmra.mrb[0].mxu0 %v728
  %v730 = vpop.f32.mrb[0].mxu0
  %v731 = vadd.f32 %v340, %v730
  %v732 = vpop.f32.mrb[0].mxu0
  %v733 = vadd.f32 %v342, %v732
  %734 = vmatprep.mubr.f32.mxu0 0.0
  %v735 = vand.u32 %v110, 4294901760
  %736 = vmatmul.mubr.f32.gmra.mrb[0].mxu0 %v735
  %v737 = vpop.f32.mrb[0].mxu0
  %v738 = vadd.f32 %v351, %v737
  %v739 = vpop.f32.mrb[0].mxu0
  %v740 = vadd.f32 %v353, %v739
  %741 = vmatprep.mubr.f32.mxu0 0.0
  %v742 = vand.u32 %v113, 4294901760
  %743 = vmatmul.mubr.f32.gmra.mrb[0].mxu0 %v742
  %v744 = vpop.f32.mrb[0].mxu0
  %v745 = vadd.f32 %v362, %v744
  %v746 = vpop.f32.mrb[0].mxu0
  %v747 = vadd.f32 %v364, %v746
  %748 = vmatprep.mubr.f32.mxu0 0.0
  %v749 = vand.u32 %v116, 4294901760
  %750 = vmatmul.mubr.f32.gmra.mrb[0].mxu0 %v749
  %v751 = vpop.f32.mrb[0].mxu0
  %v752 = vadd.f32 %v373, %v751
  %v753 = vpop.f32.mrb[0].mxu0
  %v754 = vadd.f32 %v375, %v753
  %755 = vmatprep.mubr.f32.mxu0 0.0
  %v756 = vand.u32 %v119, 4294901760
  %757 = vmatmul.mubr.f32.gmra.mrb[0].mxu0 %v756
  %v758 = vpop.f32.mrb[0].mxu0
  %v759 = vadd.f32 %v384, %v758
  %v760 = vpop.f32.mrb[0].mxu0
  %v761 = vadd.f32 %v386, %v760
  %762 = vmatprep.mubr.f32.mxu0 0.0
  %v763 = vand.u32 %v122, 4294901760
  %764 = vmatmul.mubr.f32.gmra.mrb[0].mxu0 %v763
  %v765 = vpop.f32.mrb[0].mxu0
  %v766 = vadd.f32 %v395, %v765
  %v767 = vpop.f32.mrb[0].mxu0
  %v768 = vadd.f32 %v397, %v767
  %769 = vmatprep.mubr.f32.mxu0 0.0
  %v770 = vand.u32 %v125, 4294901760
  %771 = vmatmul.mubr.f32.gmra.mrb[0].mxu0 %v770
  %v772 = vpop.f32.mrb[0].mxu0
  %v773 = vadd.f32 %v406, %v772
  %v774 = vpop.f32.mrb[0].mxu0
  %v775 = vadd.f32 %v408, %v774
  %776 = vmatprep.mubr.f32.mxu0 0.0
  %v777 = vand.u32 %v128, 4294901760
  %778 = vmatmul.mubr.f32.gmra.mrb[0].mxu0 %v777
  %v779 = vpop.f32.mrb[0].mxu0
  %v780 = vadd.f32 %v417, %v779
  %v781 = vpop.f32.mrb[0].mxu0
  %v782 = vadd.f32 %v419, %v781
  %783 = vmatprep.mubr.f32.mxu0 0.0
  %v784 = vand.u32 %v131, 4294901760
  %785 = vmatmul.mubr.f32.gmra.mrb[0].mxu0 %v784
  %v786 = vpop.f32.mrb[0].mxu0
  %v787 = vadd.f32 %v428, %v786
  %v788 = vpop.f32.mrb[0].mxu0
  %v789 = vadd.f32 %v430, %v788
  %790 = vmatprep.mubr.f32.mxu0 0.0
  %v791 = vand.u32 %v134, 4294901760
  %792 = vmatmul.mubr.f32.gmra.mrb[0].mxu0 %v791
  %v793 = vpop.f32.mrb[0].mxu0
  %v794 = vadd.f32 %v439, %v793
  %v795 = vpop.f32.mrb[0].mxu0
  %v796 = vadd.f32 %v441, %v795
  %797 = vmatprep.mubr.f32.mxu0 0.0
  %v798 = vand.u32 %v137, 4294901760
  %799 = vmatmul.mubr.f32.gmra.mrb[0].mxu0 %v798
  %v800 = vpop.f32.mrb[0].mxu0
  %v801 = vadd.f32 %v450, %v800
  %v802 = vpop.f32.mrb[0].mxu0
  %v803 = vadd.f32 %v452, %v802
  %804 = vmatprep.mubr.f32.mxu0 0.0
  %v805 = vand.u32 %v140, 4294901760
  %806 = vmatmul.mubr.f32.gmra.mrb[0].mxu0 %v805
  %v807 = vpop.f32.mrb[0].mxu0
  %v808 = vadd.f32 %v461, %v807
  %v809 = vpop.f32.mrb[0].mxu0
  %v810 = vadd.f32 %v463, %v809
  %811 = vmatprep.mubr.f32.mxu0 0.0
  %v812 = vand.u32 %v143, 4294901760
  %813 = vmatmul.mubr.f32.gmra.mrb[0].mxu0 %v812
  %v814 = vpop.f32.mrb[0].mxu0
  %v815 = vadd.f32 %v472, %v814
  %v816 = vpop.f32.mrb[0].mxu0
  %v817 = vadd.f32 %v474, %v816
  %818 = vmatprep.mubr.f32.mxu0 0.0
  %v819 = vand.u32 %v146, 4294901760
  %820 = vmatmul.mubr.f32.gmra.mrb[0].mxu0 %v819
  %v821 = vpop.f32.mrb[0].mxu0
  %v822 = vadd.f32 %v483, %v821
  %v823 = vpop.f32.mrb[0].mxu0
  %v824 = vadd.f32 %v485, %v823
  %825 = vmatprep.mubr.f32.mxu0 0.0
  %v826 = vand.u32 %v149, 4294901760
  %827 = vmatmul.mubr.f32.gmra.mrb[0].mxu0 %v826
  %v828 = vpop.f32.mrb[0].mxu0
  %v829 = vadd.f32 %v494, %v828
  %v830 = vpop.f32.mrb[0].mxu0
  %v831 = vadd.f32 %v496, %v830
  %832 = vmatprep.mubr.f32.mxu0 0.0
  %v833 = vand.u32 %v152, 4294901760
  %834 = vmatmul.mubr.f32.gmra.mrb[0].mxu0 %v833
  %v835 = vpop.f32.mrb[0].mxu0
  %v836 = vadd.f32 %v505, %v835
  %v837 = vpop.f32.mrb[0].mxu0
  %v838 = vadd.f32 %v507, %v837
  %839 = vmatprep.mubr.f32.mxu0 0.0
  %v840 = vand.u32 %v155, 4294901760
  %841 = vmatmul.mubr.f32.gmra.mrb[0].mxu0 %v840
  %v842 = vpop.f32.mrb[0].mxu0
  %v843 = vadd.f32 %v516, %v842
  %v844 = vpop.f32.mrb[0].mxu0
  %v845 = vadd.f32 %v518, %v844
  %846 = vmatprep.mubr.f32.mxu0 0.0
  %v847 = vand.u32 %v158, 4294901760
  %848 = vmatmul.mubr.f32.gmra.mrb[0].mxu0 %v847
  %v849 = vpop.f32.mrb[0].mxu0
  %v850 = vadd.f32 %v527, %v849
  %v851 = vpop.f32.mrb[0].mxu0
  %v852 = vadd.f32 %v529, %v851
  %853 = vmatprep.mubr.f32.mxu0 0.0
  %v854 = vand.u32 %v161, 4294901760
  %855 = vmatmul.mubr.f32.gmra.mrb[0].mxu0 %v854
  %v856 = vpop.f32.mrb[0].mxu0
  %v857 = vadd.f32 %v538, %v856
  %v858 = vpop.f32.mrb[0].mxu0
  %v859 = vadd.f32 %v540, %v858
  %860 = vmatprep.mubr.f32.mxu0 0.0
  %v861 = vand.u32 %v164, 4294901760
  %862 = vmatmul.mubr.f32.gmra.mrb[0].mxu0 %v861
  %v863 = vpop.f32.mrb[0].mxu0
  %v864 = vadd.f32 %v549, %v863
  %v865 = vpop.f32.mrb[0].mxu0
  %v866 = vadd.f32 %v551, %v865
  %867 = vmatprep.mubr.f32.mxu0 0.0
  %v868 = vand.u32 %v167, 4294901760
  %869 = vmatmul.mubr.f32.gmra.mrb[0].mxu0 %v868
  %v870 = vpop.f32.mrb[0].mxu0
  %v871 = vadd.f32 %v560, %v870
  %v872 = vpop.f32.mrb[0].mxu0
  %v873 = vadd.f32 %v562, %v872
  %874 = vmatprep.mubr.f32.mxu0 0.0
  %v875 = vand.u32 %v170, 4294901760
  %876 = vmatmul.mubr.f32.gmra.mrb[0].mxu0 %v875
  %v877 = vpop.f32.mrb[0].mxu0
  %v878 = vadd.f32 %v571, %v877
  %v879 = vpop.f32.mrb[0].mxu0
  %v880 = vadd.f32 %v573, %v879
  %881 = vmatprep.mubr.f32.mxu0 0.0
  %v882 = vand.u32 %v173, 4294901760
  %883 = vmatmul.mubr.f32.gmra.mrb[0].mxu0 %v882
  %v884 = vpop.f32.mrb[0].mxu0
  %v885 = vadd.f32 %v582, %v884
  %v886 = vpop.f32.mrb[0].mxu0
  %v887 = vadd.f32 %v584, %v886
  %888 = vmatprep.mubr.f32.mxu0 0.0
  %v889 = vand.u32 %v176, 4294901760
  %890 = vmatmul.mubr.f32.gmra.mrb[0].mxu0 %v889
  %v891 = vpop.f32.mrb[0].mxu0
  %v892 = vadd.f32 %v593, %v891
  %v893 = vpop.f32.mrb[0].mxu0
  %v894 = vadd.f32 %v595, %v893
  %895 = vdwg.mxu0
  %v896 = vand.u32 %v80, 4294901760
  %v897 = vsub.f32 %v80, %v896
  %898 = vmatprep.subr.mxu0 %v897
  %v899 = vand.u32 %v79, 4294901760
  %v900 = vsub.f32 %v79, %v899
  %901 = vmatpush1.msra.mxu0 %v900
  %902 = vmatprep.subr.mxu0 0.0
  %903 = vmatpush1.msra.mxu0 0.0
  %904 = vmatprep.subr.mxu0 0.0
  %905 = vmatpush1.msra.mxu0 0.0
  %906 = vmatprep.subr.mxu0 0.0
  %907 = vmatpush1.msra.mxu0 0.0
  %908 = vmatprep.subr.mxu0 0.0
  %909 = vmatpush1.msra.mxu0 0.0
  %910 = vmatprep.subr.mxu0 0.0
  %911 = vmatpush1.msra.mxu0 0.0
  %912 = vmatprep.subr.mxu0 0.0
  %913 = vmatpush1.msra.mxu0 0.0
  %914 = vmatprep.subr.mxu0 0.0
  %915 = vmatpush1.msra.mxu0 0.0
  %916 = vmatprep.subr.mxu0 0.0
  %917 = vmatpush1.msra.mxu0 0.0
  %918 = vmatprep.subr.mxu0 0.0
  %919 = vmatpush1.msra.mxu0 0.0
  %920 = vmatprep.subr.mxu0 0.0
  %921 = vmatpush1.msra.mxu0 0.0
  %922 = vmatprep.subr.mxu0 0.0
  %923 = vmatpush1.msra.mxu0 0.0
  %924 = vmatprep.subr.mxu0 0.0
  %925 = vmatpush1.msra.mxu0 0.0
  %926 = vmatprep.subr.mxu0 0.0
  %927 = vmatpush1.msra.mxu0 0.0
  %928 = vmatprep.subr.mxu0 0.0
  %929 = vmatpush1.msra.mxu0 0.0
  %930 = vmatprep.subr.mxu0 0.0
  %931 = vmatpush1.msra.mxu0 0.0
  %932 = vmatprep.subr.mxu0 0.0
  %933 = vmatpush1.msra.mxu0 0.0
  %934 = vmatprep.subr.mxu0 0.0
  %935 = vmatpush1.msra.mxu0 0.0
  %936 = vmatprep.subr.mxu0 0.0
  %937 = vmatpush1.msra.mxu0 0.0
  %938 = vmatprep.subr.mxu0 0.0
  %939 = vmatpush1.msra.mxu0 0.0
  %940 = vmatprep.subr.mxu0 0.0
  %941 = vmatpush1.msra.mxu0 0.0
  %942 = vmatprep.subr.mxu0 0.0
  %943 = vmatpush1.msra.mxu0 0.0
  %944 = vmatprep.subr.mxu0 0.0
  %945 = vmatpush1.msra.mxu0 0.0
  %946 = vmatprep.subr.mxu0 0.0
  %947 = vmatpush1.msra.mxu0 0.0
  %948 = vmatprep.subr.mxu0 0.0
  %949 = vmatpush1.msra.mxu0 0.0
  %950 = vmatprep.subr.mxu0 0.0
  %951 = vmatpush1.msra.mxu0 0.0
  %952 = vmatprep.subr.mxu0 0.0
  %953 = vmatpush1.msra.mxu0 0.0
  %954 = vmatprep.subr.mxu0 0.0
  %955 = vmatpush1.msra.mxu0 0.0
  %956 = vmatprep.subr.mxu0 0.0
  %957 = vmatpush1.msra.mxu0 0.0
  %958 = vmatprep.subr.mxu0 0.0
  %959 = vmatpush1.msra.mxu0 0.0
  %960 = vmatprep.subr.mxu0 0.0
  %961 = vmatpush1.msra.mxu0 0.0
  %962 = vmatprep.subr.mxu0 0.0
  %963 = vmatpush1.msra.mxu0 0.0
  %964 = vmatprep.mubr.f32.mxu0 0.0
  %v965 = vand.u32 %v83, 4294901760
  %v966 = vsub.f32 %v83, %v965
  %967 = vmatmul.mubr.f32.gmra.mrb[0].mxu0 %v966
  %v968 = vpop.f32.mrb[0].mxu0
  %v969 = vadd.f32 %v675, %v968
  %v970 = vpop.f32.mrb[0].mxu0
  %v971 = vadd.f32 %v677, %v970
  %972 = vmatprep.mubr.f32.mxu0 0.0
  %v973 = vand.u32 %v86, 4294901760
  %v974 = vsub.f32 %v86, %v973
  %975 = vmatmul.mubr.f32.gmra.mrb[0].mxu0 %v974
  %v976 = vpop.f32.mrb[0].mxu0
  %v977 = vadd.f32 %v682, %v976
  %v978 = vpop.f32.mrb[0].mxu0
  %v979 = vadd.f32 %v684, %v978
  %980 = vmatprep.mubr.f32.mxu0 0.0
  %v981 = vand.u32 %v89, 4294901760
  %v982 = vsub.f32 %v89, %v981
  %983 = vmatmul.mubr.f32.gmra.mrb[0].mxu0 %v982
  %v984 = vpop.f32.mrb[0].mxu0
  %v985 = vadd.f32 %v689, %v984
  %v986 = vpop.f32.mrb[0].mxu0
  %v987 = vadd.f32 %v691, %v986
  %988 = vmatprep.mubr.f32.mxu0 0.0
  %v989 = vand.u32 %v92, 4294901760
  %v990 = vsub.f32 %v92, %v989
  %991 = vmatmul.mubr.f32.gmra.mrb[0].mxu0 %v990
  %v992 = vpop.f32.mrb[0].mxu0
  %v993 = vadd.f32 %v696, %v992
  %v994 = vpop.f32.mrb[0].mxu0
  %v995 = vadd.f32 %v698, %v994
  %996 = vmatprep.mubr.f32.mxu0 0.0
  %v997 = vand.u32 %v95, 4294901760
  %v998 = vsub.f32 %v95, %v997
  %999 = vmatmul.mubr.f32.gmra.mrb[0].mxu0 %v998
  %v1000 = vpop.f32.mrb[0].mxu0
  %v1001 = vadd.f32 %v703, %v1000
  %v1002 = vpop.f32.mrb[0].mxu0
  %v1003 = vadd.f32 %v705, %v1002
  %1004 = vmatprep.mubr.f32.mxu0 0.0
  %v1005 = vand.u32 %v98, 4294901760
  %v1006 = vsub.f32 %v98, %v1005
  %1007 = vmatmul.mubr.f32.gmra.mrb[0].mxu0 %v1006
  %v1008 = vpop.f32.mrb[0].mxu0
  %v1009 = vadd.f32 %v710, %v1008
  %v1010 = vpop.f32.mrb[0].mxu0
  %v1011 = vadd.f32 %v712, %v1010
  %1012 = vmatprep.mubr.f32.mxu0 0.0
  %v1013 = vand.u32 %v101, 4294901760
  %v1014 = vsub.f32 %v101, %v1013
  %1015 = vmatmul.mubr.f32.gmra.mrb[0].mxu0 %v1014
  %v1016 = vpop.f32.mrb[0].mxu0
  %v1017 = vadd.f32 %v717, %v1016
  %v1018 = vpop.f32.mrb[0].mxu0
  %v1019 = vadd.f32 %v719, %v1018
  %1020 = vmatprep.mubr.f32.mxu0 0.0
  %v1021 = vand.u32 %v104, 4294901760
  %v1022 = vsub.f32 %v104, %v1021
  %1023 = vmatmul.mubr.f32.gmra.mrb[0].mxu0 %v1022
  %v1024 = vpop.f32.mrb[0].mxu0
  %v1025 = vadd.f32 %v724, %v1024
  %v1026 = vpop.f32.mrb[0].mxu0
  %v1027 = vadd.f32 %v726, %v1026
  %1028 = vmatprep.mubr.f32.mxu0 0.0
  %v1029 = vand.u32 %v107, 4294901760
  %v1030 = vsub.f32 %v107, %v1029
  %1031 = vmatmul.mubr.f32.gmra.mrb[0].mxu0 %v1030
  %v1032 = vpop.f32.mrb[0].mxu0
  %v1033 = vadd.f32 %v731, %v1032
  %v1034 = vpop.f32.mrb[0].mxu0
  %v1035 = vadd.f32 %v733, %v1034
  %1036 = vmatprep.mubr.f32.mxu0 0.0
  %v1037 = vand.u32 %v110, 4294901760
  %v1038 = vsub.f32 %v110, %v1037
  %1039 = vmatmul.mubr.f32.gmra.mrb[0].mxu0 %v1038
  %v1040 = vpop.f32.mrb[0].mxu0
  %v1041 = vadd.f32 %v738, %v1040
  %v1042 = vpop.f32.mrb[0].mxu0
  %v1043 = vadd.f32 %v740, %v1042
  %1044 = vmatprep.mubr.f32.mxu0 0.0
  %v1045 = vand.u32 %v113, 4294901760
  %v1046 = vsub.f32 %v113, %v1045
  %1047 = vmatmul.mubr.f32.gmra.mrb[0].mxu0 %v1046
  %v1048 = vpop.f32.mrb[0].mxu0
  %v1049 = vadd.f32 %v745, %v1048
  %v1050 = vpop.f32.mrb[0].mxu0
  %v1051 = vadd.f32 %v747, %v1050
  %1052 = vmatprep.mubr.f32.mxu0 0.0
  %v1053 = vand.u32 %v116, 4294901760
  %v1054 = vsub.f32 %v116, %v1053
  %1055 = vmatmul.mubr.f32.gmra.mrb[0].mxu0 %v1054
  %v1056 = vpop.f32.mrb[0].mxu0
  %v1057 = vadd.f32 %v752, %v1056
  %v1058 = vpop.f32.mrb[0].mxu0
  %v1059 = vadd.f32 %v754, %v1058
  %1060 = vmatprep.mubr.f32.mxu0 0.0
  %v1061 = vand.u32 %v119, 4294901760
  %v1062 = vsub.f32 %v119, %v1061
  %1063 = vmatmul.mubr.f32.gmra.mrb[0].mxu0 %v1062
  %v1064 = vpop.f32.mrb[0].mxu0
  %v1065 = vadd.f32 %v759, %v1064
  %v1066 = vpop.f32.mrb[0].mxu0
  %v1067 = vadd.f32 %v761, %v1066
  %1068 = vmatprep.mubr.f32.mxu0 0.0
  %v1069 = vand.u32 %v122, 4294901760
  %v1070 = vsub.f32 %v122, %v1069
  %1071 = vmatmul.mubr.f32.gmra.mrb[0].mxu0 %v1070
  %v1072 = vpop.f32.mrb[0].mxu0
  %v1073 = vadd.f32 %v766, %v1072
  %v1074 = vpop.f32.mrb[0].mxu0
  %v1075 = vadd.f32 %v768, %v1074
  %1076 = vmatprep.mubr.f32.mxu0 0.0
  %v1077 = vand.u32 %v125, 4294901760
  %v1078 = vsub.f32 %v125, %v1077
  %1079 = vmatmul.mubr.f32.gmra.mrb[0].mxu0 %v1078
  %v1080 = vpop.f32.mrb[0].mxu0
  %v1081 = vadd.f32 %v773, %v1080
  %v1082 = vpop.f32.mrb[0].mxu0
  %v1083 = vadd.f32 %v775, %v1082
  %1084 = vmatprep.mubr.f32.mxu0 0.0
  %v1085 = vand.u32 %v128, 4294901760
  %v1086 = vsub.f32 %v128, %v1085
  %1087 = vmatmul.mubr.f32.gmra.mrb[0].mxu0 %v1086
  %v1088 = vpop.f32.mrb[0].mxu0
  %v1089 = vadd.f32 %v780, %v1088
  %v1090 = vpop.f32.mrb[0].mxu0
  %v1091 = vadd.f32 %v782, %v1090
  %1092 = vmatprep.mubr.f32.mxu0 0.0
  %v1093 = vand.u32 %v131, 4294901760
  %v1094 = vsub.f32 %v131, %v1093
  %1095 = vmatmul.mubr.f32.gmra.mrb[0].mxu0 %v1094
  %v1096 = vpop.f32.mrb[0].mxu0
  %v1097 = vadd.f32 %v787, %v1096
  %v1098 = vpop.f32.mrb[0].mxu0
  %v1099 = vadd.f32 %v789, %v1098
  %1100 = vmatprep.mubr.f32.mxu0 0.0
  %v1101 = vand.u32 %v134, 4294901760
  %v1102 = vsub.f32 %v134, %v1101
  %1103 = vmatmul.mubr.f32.gmra.mrb[0].mxu0 %v1102
  %v1104 = vpop.f32.mrb[0].mxu0
  %v1105 = vadd.f32 %v794, %v1104
  %v1106 = vpop.f32.mrb[0].mxu0
  %v1107 = vadd.f32 %v796, %v1106
  %1108 = vmatprep.mubr.f32.mxu0 0.0
  %v1109 = vand.u32 %v137, 4294901760
  %v1110 = vsub.f32 %v137, %v1109
  %1111 = vmatmul.mubr.f32.gmra.mrb[0].mxu0 %v1110
  %v1112 = vpop.f32.mrb[0].mxu0
  %v1113 = vadd.f32 %v801, %v1112
  %v1114 = vpop.f32.mrb[0].mxu0
  %v1115 = vadd.f32 %v803, %v1114
  %1116 = vmatprep.mubr.f32.mxu0 0.0
  %v1117 = vand.u32 %v140, 4294901760
  %v1118 = vsub.f32 %v140, %v1117
  %1119 = vmatmul.mubr.f32.gmra.mrb[0].mxu0 %v1118
  %v1120 = vpop.f32.mrb[0].mxu0
  %v1121 = vadd.f32 %v808, %v1120
  %v1122 = vpop.f32.mrb[0].mxu0
  %v1123 = vadd.f32 %v810, %v1122
  %1124 = vmatprep.mubr.f32.mxu0 0.0
  %v1125 = vand.u32 %v143, 4294901760
  %v1126 = vsub.f32 %v143, %v1125
  %1127 = vmatmul.mubr.f32.gmra.mrb[0].mxu0 %v1126
  %v1128 = vpop.f32.mrb[0].mxu0
  %v1129 = vadd.f32 %v815, %v1128
  %v1130 = vpop.f32.mrb[0].mxu0
  %v1131 = vadd.f32 %v817, %v1130
  %1132 = vmatprep.mubr.f32.mxu0 0.0
  %v1133 = vand.u32 %v146, 4294901760
  %v1134 = vsub.f32 %v146, %v1133
  %1135 = vmatmul.mubr.f32.gmra.mrb[0].mxu0 %v1134
  %v1136 = vpop.f32.mrb[0].mxu0
  %v1137 = vadd.f32 %v822, %v1136
  %v1138 = vpop.f32.mrb[0].mxu0
  %v1139 = vadd.f32 %v824, %v1138
  %1140 = vmatprep.mubr.f32.mxu0 0.0
  %v1141 = vand.u32 %v149, 4294901760
  %v1142 = vsub.f32 %v149, %v1141
  %1143 = vmatmul.mubr.f32.gmra.mrb[0].mxu0 %v1142
  %v1144 = vpop.f32.mrb[0].mxu0
  %v1145 = vadd.f32 %v829, %v1144
  %v1146 = vpop.f32.mrb[0].mxu0
  %v1147 = vadd.f32 %v831, %v1146
  %1148 = vmatprep.mubr.f32.mxu0 0.0
  %v1149 = vand.u32 %v152, 4294901760
  %v1150 = vsub.f32 %v152, %v1149
  %1151 = vmatmul.mubr.f32.gmra.mrb[0].mxu0 %v1150
  %v1152 = vpop.f32.mrb[0].mxu0
  %v1153 = vadd.f32 %v836, %v1152
  %v1154 = vpop.f32.mrb[0].mxu0
  %v1155 = vadd.f32 %v838, %v1154
  %1156 = vmatprep.mubr.f32.mxu0 0.0
  %v1157 = vand.u32 %v155, 4294901760
  %v1158 = vsub.f32 %v155, %v1157
  %1159 = vmatmul.mubr.f32.gmra.mrb[0].mxu0 %v1158
  %v1160 = vpop.f32.mrb[0].mxu0
  %v1161 = vadd.f32 %v843, %v1160
  %v1162 = vpop.f32.mrb[0].mxu0
  %v1163 = vadd.f32 %v845, %v1162
  %1164 = vmatprep.mubr.f32.mxu0 0.0
  %v1165 = vand.u32 %v158, 4294901760
  %v1166 = vsub.f32 %v158, %v1165
  %1167 = vmatmul.mubr.f32.gmra.mrb[0].mxu0 %v1166
  %v1168 = vpop.f32.mrb[0].mxu0
  %v1169 = vadd.f32 %v850, %v1168
  %v1170 = vpop.f32.mrb[0].mxu0
  %v1171 = vadd.f32 %v852, %v1170
  %1172 = vmatprep.mubr.f32.mxu0 0.0
  %v1173 = vand.u32 %v161, 4294901760
  %v1174 = vsub.f32 %v161, %v1173
  %1175 = vmatmul.mubr.f32.gmra.mrb[0].mxu0 %v1174
  %v1176 = vpop.f32.mrb[0].mxu0
  %v1177 = vadd.f32 %v857, %v1176
  %v1178 = vpop.f32.mrb[0].mxu0
  %v1179 = vadd.f32 %v859, %v1178
  %1180 = vmatprep.mubr.f32.mxu0 0.0
  %v1181 = vand.u32 %v164, 4294901760
  %v1182 = vsub.f32 %v164, %v1181
  %1183 = vmatmul.mubr.f32.gmra.mrb[0].mxu0 %v1182
  %v1184 = vpop.f32.mrb[0].mxu0
  %v1185 = vadd.f32 %v864, %v1184
  %v1186 = vpop.f32.mrb[0].mxu0
  %v1187 = vadd.f32 %v866, %v1186
  %1188 = vmatprep.mubr.f32.mxu0 0.0
  %v1189 = vand.u32 %v167, 4294901760
  %v1190 = vsub.f32 %v167, %v1189
  %1191 = vmatmul.mubr.f32.gmra.mrb[0].mxu0 %v1190
  %v1192 = vpop.f32.mrb[0].mxu0
  %v1193 = vadd.f32 %v871, %v1192
  %v1194 = vpop.f32.mrb[0].mxu0
  %v1195 = vadd.f32 %v873, %v1194
  %1196 = vmatprep.mubr.f32.mxu0 0.0
  %v1197 = vand.u32 %v170, 4294901760
  %v1198 = vsub.f32 %v170, %v1197
  %1199 = vmatmul.mubr.f32.gmra.mrb[0].mxu0 %v1198
  %v1200 = vpop.f32.mrb[0].mxu0
  %v1201 = vadd.f32 %v878, %v1200
  %v1202 = vpop.f32.mrb[0].mxu0
  %v1203 = vadd.f32 %v880, %v1202
  %1204 = vmatprep.mubr.f32.mxu0 0.0
  %v1205 = vand.u32 %v173, 4294901760
  %v1206 = vsub.f32 %v173, %v1205
  %1207 = vmatmul.mubr.f32.gmra.mrb[0].mxu0 %v1206
  %v1208 = vpop.f32.mrb[0].mxu0
  %v1209 = vadd.f32 %v885, %v1208
  %v1210 = vpop.f32.mrb[0].mxu0
  %v1211 = vadd.f32 %v887, %v1210
  %1212 = vmatprep.mubr.f32.mxu0 0.0
  %v1213 = vand.u32 %v176, 4294901760
  %v1214 = vsub.f32 %v176, %v1213
  %1215 = vmatmul.mubr.f32.gmra.mrb[0].mxu0 %v1214
  %v1216 = vpop.f32.mrb[0].mxu0
  %v1217 = vadd.f32 %v892, %v1216
  %v1218 = vpop.f32.mrb[0].mxu0
  %v1219 = vadd.f32 %v894, %v1218
  %1220 = vdwg.mxu0
  %v1221 = vand.u32 %v80, 4294901760
  %1222 = vmatprep.subr.mxu0 %v1221
  %v1223 = vand.u32 %v79, 4294901760
  %1224 = vmatpush1.msra.mxu0 %v1223
  %1225 = vmatprep.subr.mxu0 0.0
  %1226 = vmatpush1.msra.mxu0 0.0
  %1227 = vmatprep.subr.mxu0 0.0
  %1228 = vmatpush1.msra.mxu0 0.0
  %1229 = vmatprep.subr.mxu0 0.0
  %1230 = vmatpush1.msra.mxu0 0.0
  %1231 = vmatprep.subr.mxu0 0.0
  %1232 = vmatpush1.msra.mxu0 0.0
  %1233 = vmatprep.subr.mxu0 0.0
  %1234 = vmatpush1.msra.mxu0 0.0
  %1235 = vmatprep.subr.mxu0 0.0
  %1236 = vmatpush1.msra.mxu0 0.0
  %1237 = vmatprep.subr.mxu0 0.0
  %1238 = vmatpush1.msra.mxu0 0.0
  %1239 = vmatprep.subr.mxu0 0.0
  %1240 = vmatpush1.msra.mxu0 0.0
  %1241 = vmatprep.subr.mxu0 0.0
  %1242 = vmatpush1.msra.mxu0 0.0
  %1243 = vmatprep.subr.mxu0 0.0
  %1244 = vmatpush1.msra.mxu0 0.0
  %1245 = vmatprep.subr.mxu0 0.0
  %1246 = vmatpush1.msra.mxu0 0.0
  %1247 = vmatprep.subr.mxu0 0.0
  %1248 = vmatpush1.msra.mxu0 0.0
  %1249 = vmatprep.subr.mxu0 0.0
  %1250 = vmatpush1.msra.mxu0 0.0
  %1251 = vmatprep.subr.mxu0 0.0
  %1252 = vmatpush1.msra.mxu0 0.0
  %1253 = vmatprep.subr.mxu0 0.0
  %1254 = vmatpush1.msra.mxu0 0.0
  %1255 = vmatprep.subr.mxu0 0.0
  %1256 = vmatpush1.msra.mxu0 0.0
  %1257 = vmatprep.subr.mxu0 0.0
  %1258 = vmatpush1.msra.mxu0 0.0
  %1259 = vmatprep.subr.mxu0 0.0
  %1260 = vmatpush1.msra.mxu0 0.0
  %1261 = vmatprep.subr.mxu0 0.0
  %1262 = vmatpush1.msra.mxu0 0.0
  %1263 = vmatprep.subr.mxu0 0.0
  %1264 = vmatpush1.msra.mxu0 0.0
  %1265 = vmatprep.subr.mxu0 0.0
  %1266 = vmatpush1.msra.mxu0 0.0
  %1267 = vmatprep.subr.mxu0 0.0
  %1268 = vmatpush1.msra.mxu0 0.0
  %1269 = vmatprep.subr.mxu0 0.0
  %1270 = vmatpush1.msra.mxu0 0.0
  %1271 = vmatprep.subr.mxu0 0.0
  %1272 = vmatpush1.msra.mxu0 0.0
  %1273 = vmatprep.subr.mxu0 0.0
  %1274 = vmatpush1.msra.mxu0 0.0
  %1275 = vmatprep.subr.mxu0 0.0
  %1276 = vmatpush1.msra.mxu0 0.0
  %1277 = vmatprep.subr.mxu0 0.0
  %1278 = vmatpush1.msra.mxu0 0.0
  %1279 = vmatprep.subr.mxu0 0.0
  %1280 = vmatpush1.msra.mxu0 0.0
  %1281 = vmatprep.subr.mxu0 0.0
  %1282 = vmatpush1.msra.mxu0 0.0
  %1283 = vmatprep.subr.mxu0 0.0
  %1284 = vmatpush1.msra.mxu0 0.0
  %1285 = vmatprep.subr.mxu0 0.0
  %1286 = vmatpush1.msra.mxu0 0.0
  %1287 = vmatprep.mubr.f32.mxu0 0.0
  %v1288 = vand.u32 %v83, 4294901760
  %v1289 = vsub.f32 %v83, %v1288
  %v1290 = vand.u32 %v1289, 4294901760
  %1291 = vmatmul.mubr.f32.gmra.mrb[0].mxu0 %v1290
  %v1292 = vpop.f32.mrb[0].mxu0
  %v1293 = vadd.f32 %v969, %v1292
  %v1294 = vpop.f32.mrb[0].mxu0
  %v1295 = vadd.f32 %v971, %v1294
  %1296 = vmatprep.mubr.f32.mxu0 0.0
  %v1297 = vand.u32 %v86, 4294901760
  %v1298 = vsub.f32 %v86, %v1297
  %v1299 = vand.u32 %v1298, 4294901760
  %1300 = vmatmul.mubr.f32.gmra.mrb[0].mxu0 %v1299
  %v1301 = vpop.f32.mrb[0].mxu0
  %v1302 = vadd.f32 %v977, %v1301
  %v1303 = vpop.f32.mrb[0].mxu0
  %v1304 = vadd.f32 %v979, %v1303
  %1305 = vmatprep.mubr.f32.mxu0 0.0
  %v1306 = vand.u32 %v89, 4294901760
  %v1307 = vsub.f32 %v89, %v1306
  %v1308 = vand.u32 %v1307, 4294901760
  %1309 = vmatmul.mubr.f32.gmra.mrb[0].mxu0 %v1308
  %v1310 = vpop.f32.mrb[0].mxu0
  %v1311 = vadd.f32 %v985, %v1310
  %v1312 = vpop.f32.mrb[0].mxu0
  %v1313 = vadd.f32 %v987, %v1312
  %1314 = vmatprep.mubr.f32.mxu0 0.0
  %v1315 = vand.u32 %v92, 4294901760
  %v1316 = vsub.f32 %v92, %v1315
  %v1317 = vand.u32 %v1316, 4294901760
  %1318 = vmatmul.mubr.f32.gmra.mrb[0].mxu0 %v1317
  %v1319 = vpop.f32.mrb[0].mxu0
  %v1320 = vadd.f32 %v993, %v1319
  %v1321 = vpop.f32.mrb[0].mxu0
  %v1322 = vadd.f32 %v995, %v1321
  %1323 = vmatprep.mubr.f32.mxu0 0.0
  %v1324 = vand.u32 %v95, 4294901760
  %v1325 = vsub.f32 %v95, %v1324
  %v1326 = vand.u32 %v1325, 4294901760
  %1327 = vmatmul.mubr.f32.gmra.mrb[0].mxu0 %v1326
  %v1328 = vpop.f32.mrb[0].mxu0
  %v1329 = vadd.f32 %v1001, %v1328
  %v1330 = vpop.f32.mrb[0].mxu0
  %v1331 = vadd.f32 %v1003, %v1330
  %1332 = vmatprep.mubr.f32.mxu0 0.0
  %v1333 = vand.u32 %v98, 4294901760
  %v1334 = vsub.f32 %v98, %v1333
  %v1335 = vand.u32 %v1334, 4294901760
  %1336 = vmatmul.mubr.f32.gmra.mrb[0].mxu0 %v1335
  %v1337 = vpop.f32.mrb[0].mxu0
  %v1338 = vadd.f32 %v1009, %v1337
  %v1339 = vpop.f32.mrb[0].mxu0
  %v1340 = vadd.f32 %v1011, %v1339
  %1341 = vmatprep.mubr.f32.mxu0 0.0
  %v1342 = vand.u32 %v101, 4294901760
  %v1343 = vsub.f32 %v101, %v1342
  %v1344 = vand.u32 %v1343, 4294901760
  %1345 = vmatmul.mubr.f32.gmra.mrb[0].mxu0 %v1344
  %v1346 = vpop.f32.mrb[0].mxu0
  %v1347 = vadd.f32 %v1017, %v1346
  %v1348 = vpop.f32.mrb[0].mxu0
  %v1349 = vadd.f32 %v1019, %v1348
  %1350 = vmatprep.mubr.f32.mxu0 0.0
  %v1351 = vand.u32 %v104, 4294901760
  %v1352 = vsub.f32 %v104, %v1351
  %v1353 = vand.u32 %v1352, 4294901760
  %1354 = vmatmul.mubr.f32.gmra.mrb[0].mxu0 %v1353
  %v1355 = vpop.f32.mrb[0].mxu0
  %v1356 = vadd.f32 %v1025, %v1355
  %v1357 = vpop.f32.mrb[0].mxu0
  %v1358 = vadd.f32 %v1027, %v1357
  %1359 = vmatprep.mubr.f32.mxu0 0.0
  %v1360 = vand.u32 %v107, 4294901760
  %v1361 = vsub.f32 %v107, %v1360
  %v1362 = vand.u32 %v1361, 4294901760
  %1363 = vmatmul.mubr.f32.gmra.mrb[0].mxu0 %v1362
  %v1364 = vpop.f32.mrb[0].mxu0
  %v1365 = vadd.f32 %v1033, %v1364
  %v1366 = vpop.f32.mrb[0].mxu0
  %v1367 = vadd.f32 %v1035, %v1366
  %1368 = vmatprep.mubr.f32.mxu0 0.0
  %v1369 = vand.u32 %v110, 4294901760
  %v1370 = vsub.f32 %v110, %v1369
  %v1371 = vand.u32 %v1370, 4294901760
  %1372 = vmatmul.mubr.f32.gmra.mrb[0].mxu0 %v1371
  %v1373 = vpop.f32.mrb[0].mxu0
  %v1374 = vadd.f32 %v1041, %v1373
  %v1375 = vpop.f32.mrb[0].mxu0
  %v1376 = vadd.f32 %v1043, %v1375
  %1377 = vmatprep.mubr.f32.mxu0 0.0
  %v1378 = vand.u32 %v113, 4294901760
  %v1379 = vsub.f32 %v113, %v1378
  %v1380 = vand.u32 %v1379, 4294901760
  %1381 = vmatmul.mubr.f32.gmra.mrb[0].mxu0 %v1380
  %v1382 = vpop.f32.mrb[0].mxu0
  %v1383 = vadd.f32 %v1049, %v1382
  %v1384 = vpop.f32.mrb[0].mxu0
  %v1385 = vadd.f32 %v1051, %v1384
  %1386 = vmatprep.mubr.f32.mxu0 0.0
  %v1387 = vand.u32 %v116, 4294901760
  %v1388 = vsub.f32 %v116, %v1387
  %v1389 = vand.u32 %v1388, 4294901760
  %1390 = vmatmul.mubr.f32.gmra.mrb[0].mxu0 %v1389
  %v1391 = vpop.f32.mrb[0].mxu0
  %v1392 = vadd.f32 %v1057, %v1391
  %v1393 = vpop.f32.mrb[0].mxu0
  %v1394 = vadd.f32 %v1059, %v1393
  %1395 = vmatprep.mubr.f32.mxu0 0.0
  %v1396 = vand.u32 %v119, 4294901760
  %v1397 = vsub.f32 %v119, %v1396
  %v1398 = vand.u32 %v1397, 4294901760
  %1399 = vmatmul.mubr.f32.gmra.mrb[0].mxu0 %v1398
  %v1400 = vpop.f32.mrb[0].mxu0
  %v1401 = vadd.f32 %v1065, %v1400
  %v1402 = vpop.f32.mrb[0].mxu0
  %v1403 = vadd.f32 %v1067, %v1402
  %1404 = vmatprep.mubr.f32.mxu0 0.0
  %v1405 = vand.u32 %v122, 4294901760
  %v1406 = vsub.f32 %v122, %v1405
  %v1407 = vand.u32 %v1406, 4294901760
  %1408 = vmatmul.mubr.f32.gmra.mrb[0].mxu0 %v1407
  %v1409 = vpop.f32.mrb[0].mxu0
  %v1410 = vadd.f32 %v1073, %v1409
  %v1411 = vpop.f32.mrb[0].mxu0
  %v1412 = vadd.f32 %v1075, %v1411
  %1413 = vmatprep.mubr.f32.mxu0 0.0
  %v1414 = vand.u32 %v125, 4294901760
  %v1415 = vsub.f32 %v125, %v1414
  %v1416 = vand.u32 %v1415, 4294901760
  %1417 = vmatmul.mubr.f32.gmra.mrb[0].mxu0 %v1416
  %v1418 = vpop.f32.mrb[0].mxu0
  %v1419 = vadd.f32 %v1081, %v1418
  %v1420 = vpop.f32.mrb[0].mxu0
  %v1421 = vadd.f32 %v1083, %v1420
  %1422 = vmatprep.mubr.f32.mxu0 0.0
  %v1423 = vand.u32 %v128, 4294901760
  %v1424 = vsub.f32 %v128, %v1423
  %v1425 = vand.u32 %v1424, 4294901760
  %1426 = vmatmul.mubr.f32.gmra.mrb[0].mxu0 %v1425
  %v1427 = vpop.f32.mrb[0].mxu0
  %v1428 = vadd.f32 %v1089, %v1427
  %v1429 = vpop.f32.mrb[0].mxu0
  %v1430 = vadd.f32 %v1091, %v1429
  %1431 = vmatprep.mubr.f32.mxu0 0.0
  %v1432 = vand.u32 %v131, 4294901760
  %v1433 = vsub.f32 %v131, %v1432
  %v1434 = vand.u32 %v1433, 4294901760
  %1435 = vmatmul.mubr.f32.gmra.mrb[0].mxu0 %v1434
  %v1436 = vpop.f32.mrb[0].mxu0
  %v1437 = vadd.f32 %v1097, %v1436
  %v1438 = vpop.f32.mrb[0].mxu0
  %v1439 = vadd.f32 %v1099, %v1438
  %1440 = vmatprep.mubr.f32.mxu0 0.0
  %v1441 = vand.u32 %v134, 4294901760
  %v1442 = vsub.f32 %v134, %v1441
  %v1443 = vand.u32 %v1442, 4294901760
  %1444 = vmatmul.mubr.f32.gmra.mrb[0].mxu0 %v1443
  %v1445 = vpop.f32.mrb[0].mxu0
  %v1446 = vadd.f32 %v1105, %v1445
  %v1447 = vpop.f32.mrb[0].mxu0
  %v1448 = vadd.f32 %v1107, %v1447
  %1449 = vmatprep.mubr.f32.mxu0 0.0
  %v1450 = vand.u32 %v137, 4294901760
  %v1451 = vsub.f32 %v137, %v1450
  %v1452 = vand.u32 %v1451, 4294901760
  %1453 = vmatmul.mubr.f32.gmra.mrb[0].mxu0 %v1452
  %v1454 = vpop.f32.mrb[0].mxu0
  %v1455 = vadd.f32 %v1113, %v1454
  %v1456 = vpop.f32.mrb[0].mxu0
  %v1457 = vadd.f32 %v1115, %v1456
  %1458 = vmatprep.mubr.f32.mxu0 0.0
  %v1459 = vand.u32 %v140, 4294901760
  %v1460 = vsub.f32 %v140, %v1459
  %v1461 = vand.u32 %v1460, 4294901760
  %1462 = vmatmul.mubr.f32.gmra.mrb[0].mxu0 %v1461
  %v1463 = vpop.f32.mrb[0].mxu0
  %v1464 = vadd.f32 %v1121, %v1463
  %v1465 = vpop.f32.mrb[0].mxu0
  %v1466 = vadd.f32 %v1123, %v1465
  %1467 = vmatprep.mubr.f32.mxu0 0.0
  %v1468 = vand.u32 %v143, 4294901760
  %v1469 = vsub.f32 %v143, %v1468
  %v1470 = vand.u32 %v1469, 4294901760
  %1471 = vmatmul.mubr.f32.gmra.mrb[0].mxu0 %v1470
  %v1472 = vpop.f32.mrb[0].mxu0
  %v1473 = vadd.f32 %v1129, %v1472
  %v1474 = vpop.f32.mrb[0].mxu0
  %v1475 = vadd.f32 %v1131, %v1474
  %1476 = vmatprep.mubr.f32.mxu0 0.0
  %v1477 = vand.u32 %v146, 4294901760
  %v1478 = vsub.f32 %v146, %v1477
  %v1479 = vand.u32 %v1478, 4294901760
  %1480 = vmatmul.mubr.f32.gmra.mrb[0].mxu0 %v1479
  %v1481 = vpop.f32.mrb[0].mxu0
  %v1482 = vadd.f32 %v1137, %v1481
  %v1483 = vpop.f32.mrb[0].mxu0
  %v1484 = vadd.f32 %v1139, %v1483
  %1485 = vmatprep.mubr.f32.mxu0 0.0
  %v1486 = vand.u32 %v149, 4294901760
  %v1487 = vsub.f32 %v149, %v1486
  %v1488 = vand.u32 %v1487, 4294901760
  %1489 = vmatmul.mubr.f32.gmra.mrb[0].mxu0 %v1488
  %v1490 = vpop.f32.mrb[0].mxu0
  %v1491 = vadd.f32 %v1145, %v1490
  %v1492 = vpop.f32.mrb[0].mxu0
  %v1493 = vadd.f32 %v1147, %v1492
  %1494 = vmatprep.mubr.f32.mxu0 0.0
  %v1495 = vand.u32 %v152, 4294901760
  %v1496 = vsub.f32 %v152, %v1495
  %v1497 = vand.u32 %v1496, 4294901760
  %1498 = vmatmul.mubr.f32.gmra.mrb[0].mxu0 %v1497
  %v1499 = vpop.f32.mrb[0].mxu0
  %v1500 = vadd.f32 %v1153, %v1499
  %v1501 = vpop.f32.mrb[0].mxu0
  %v1502 = vadd.f32 %v1155, %v1501
  %1503 = vmatprep.mubr.f32.mxu0 0.0
  %v1504 = vand.u32 %v155, 4294901760
  %v1505 = vsub.f32 %v155, %v1504
  %v1506 = vand.u32 %v1505, 4294901760
  %1507 = vmatmul.mubr.f32.gmra.mrb[0].mxu0 %v1506
  %v1508 = vpop.f32.mrb[0].mxu0
  %v1509 = vadd.f32 %v1161, %v1508
  %v1510 = vpop.f32.mrb[0].mxu0
  %v1511 = vadd.f32 %v1163, %v1510
  %1512 = vmatprep.mubr.f32.mxu0 0.0
  %v1513 = vand.u32 %v158, 4294901760
  %v1514 = vsub.f32 %v158, %v1513
  %v1515 = vand.u32 %v1514, 4294901760
  %1516 = vmatmul.mubr.f32.gmra.mrb[0].mxu0 %v1515
  %v1517 = vpop.f32.mrb[0].mxu0
  %v1518 = vadd.f32 %v1169, %v1517
  %v1519 = vpop.f32.mrb[0].mxu0
  %v1520 = vadd.f32 %v1171, %v1519
  %1521 = vmatprep.mubr.f32.mxu0 0.0
  %v1522 = vand.u32 %v161, 4294901760
  %v1523 = vsub.f32 %v161, %v1522
  %v1524 = vand.u32 %v1523, 4294901760
  %1525 = vmatmul.mubr.f32.gmra.mrb[0].mxu0 %v1524
  %v1526 = vpop.f32.mrb[0].mxu0
  %v1527 = vadd.f32 %v1177, %v1526
  %v1528 = vpop.f32.mrb[0].mxu0
  %v1529 = vadd.f32 %v1179, %v1528
  %1530 = vmatprep.mubr.f32.mxu0 0.0
  %v1531 = vand.u32 %v164, 4294901760
  %v1532 = vsub.f32 %v164, %v1531
  %v1533 = vand.u32 %v1532, 4294901760
  %1534 = vmatmul.mubr.f32.gmra.mrb[0].mxu0 %v1533
  %v1535 = vpop.f32.mrb[0].mxu0
  %v1536 = vadd.f32 %v1185, %v1535
  %v1537 = vpop.f32.mrb[0].mxu0
  %v1538 = vadd.f32 %v1187, %v1537
  %1539 = vmatprep.mubr.f32.mxu0 0.0
  %v1540 = vand.u32 %v167, 4294901760
  %v1541 = vsub.f32 %v167, %v1540
  %v1542 = vand.u32 %v1541, 4294901760
  %1543 = vmatmul.mubr.f32.gmra.mrb[0].mxu0 %v1542
  %v1544 = vpop.f32.mrb[0].mxu0
  %v1545 = vadd.f32 %v1193, %v1544
  %v1546 = vpop.f32.mrb[0].mxu0
  %v1547 = vadd.f32 %v1195, %v1546
  %1548 = vmatprep.mubr.f32.mxu0 0.0
  %v1549 = vand.u32 %v170, 4294901760
  %v1550 = vsub.f32 %v170, %v1549
  %v1551 = vand.u32 %v1550, 4294901760
  %1552 = vmatmul.mubr.f32.gmra.mrb[0].mxu0 %v1551
  %v1553 = vpop.f32.mrb[0].mxu0
  %v1554 = vadd.f32 %v1201, %v1553
  %v1555 = vpop.f32.mrb[0].mxu0
  %v1556 = vadd.f32 %v1203, %v1555
  %1557 = vmatprep.mubr.f32.mxu0 0.0
  %v1558 = vand.u32 %v173, 4294901760
  %v1559 = vsub.f32 %v173, %v1558
  %v1560 = vand.u32 %v1559, 4294901760
  %1561 = vmatmul.mubr.f32.gmra.mrb[0].mxu0 %v1560
  %v1562 = vpop.f32.mrb[0].mxu0
  %v1563 = vadd.f32 %v1209, %v1562
  %v1564 = vpop.f32.mrb[0].mxu0
  %v1565 = vadd.f32 %v1211, %v1564
  %1566 = vmatprep.mubr.f32.mxu0 0.0
  %v1567 = vand.u32 %v176, 4294901760
  %v1568 = vsub.f32 %v176, %v1567
  %v1569 = vand.u32 %v1568, 4294901760
  %1570 = vmatmul.mubr.f32.gmra.mrb[0].mxu0 %v1569
  %v1571 = vpop.f32.mrb[0].mxu0
  %v1572 = vadd.f32 %v1217, %v1571
  %v1573 = vpop.f32.mrb[0].mxu0
  %v1574 = vadd.f32 %v1219, %v1573
  %1575 = vdwg.mxu0
  %v1576 = vand.u32 %v80, 4294901760
  %v1577 = vsub.f32 %v80, %v1576
  %v1578 = vand.u32 %v1577, 4294901760
  %1579 = vmatprep.subr.mxu0 %v1578
  %v1580 = vand.u32 %v79, 4294901760
  %v1581 = vsub.f32 %v79, %v1580
  %v1582 = vand.u32 %v1581, 4294901760
  %1583 = vmatpush1.msra.mxu0 %v1582
  %1584 = vmatprep.subr.mxu0 0.0
  %1585 = vmatpush1.msra.mxu0 0.0
  %1586 = vmatprep.subr.mxu0 0.0
  %1587 = vmatpush1.msra.mxu0 0.0
  %1588 = vmatprep.subr.mxu0 0.0
  %1589 = vmatpush1.msra.mxu0 0.0
  %1590 = vmatprep.subr.mxu0 0.0
  %1591 = vmatpush1.msra.mxu0 0.0
  %1592 = vmatprep.subr.mxu0 0.0
  %1593 = vmatpush1.msra.mxu0 0.0
  %1594 = vmatprep.subr.mxu0 0.0
  %1595 = vmatpush1.msra.mxu0 0.0
  %1596 = vmatprep.subr.mxu0 0.0
  %1597 = vmatpush1.msra.mxu0 0.0
  %1598 = vmatprep.subr.mxu0 0.0
  %1599 = vmatpush1.msra.mxu0 0.0
  %1600 = vmatprep.subr.mxu0 0.0
  %1601 = vmatpush1.msra.mxu0 0.0
  %1602 = vmatprep.subr.mxu0 0.0
  %1603 = vmatpush1.msra.mxu0 0.0
  %1604 = vmatprep.subr.mxu0 0.0
  %1605 = vmatpush1.msra.mxu0 0.0
  %1606 = vmatprep.subr.mxu0 0.0
  %1607 = vmatpush1.msra.mxu0 0.0
  %1608 = vmatprep.subr.mxu0 0.0
  %1609 = vmatpush1.msra.mxu0 0.0
  %1610 = vmatprep.subr.mxu0 0.0
  %1611 = vmatpush1.msra.mxu0 0.0
  %1612 = vmatprep.subr.mxu0 0.0
  %1613 = vmatpush1.msra.mxu0 0.0
  %1614 = vmatprep.subr.mxu0 0.0
  %1615 = vmatpush1.msra.mxu0 0.0
  %1616 = vmatprep.subr.mxu0 0.0
  %1617 = vmatpush1.msra.mxu0 0.0
  %1618 = vmatprep.subr.mxu0 0.0
  %1619 = vmatpush1.msra.mxu0 0.0
  %1620 = vmatprep.subr.mxu0 0.0
  %1621 = vmatpush1.msra.mxu0 0.0
  %1622 = vmatprep.subr.mxu0 0.0
  %1623 = vmatpush1.msra.mxu0 0.0
  %1624 = vmatprep.subr.mxu0 0.0
  %1625 = vmatpush1.msra.mxu0 0.0
  %1626 = vmatprep.subr.mxu0 0.0
  %1627 = vmatpush1.msra.mxu0 0.0
  %1628 = vmatprep.subr.mxu0 0.0
  %1629 = vmatpush1.msra.mxu0 0.0
  %1630 = vmatprep.subr.mxu0 0.0
  %1631 = vmatpush1.msra.mxu0 0.0
  %1632 = vmatprep.subr.mxu0 0.0
  %1633 = vmatpush1.msra.mxu0 0.0
  %1634 = vmatprep.subr.mxu0 0.0
  %1635 = vmatpush1.msra.mxu0 0.0
  %1636 = vmatprep.subr.mxu0 0.0
  %1637 = vmatpush1.msra.mxu0 0.0
  %1638 = vmatprep.subr.mxu0 0.0
  %1639 = vmatpush1.msra.mxu0 0.0
  %1640 = vmatprep.subr.mxu0 0.0
  %1641 = vmatpush1.msra.mxu0 0.0
  %1642 = vmatprep.subr.mxu0 0.0
  %1643 = vmatpush1.msra.mxu0 0.0
  %1644 = vmatprep.subr.mxu0 0.0
  %1645 = vmatpush1.msra.mxu0 0.0
  %1646 = vmatprep.mubr.f32.mxu0 0.0
  %v1647 = vand.u32 %v83, 4294901760
  %1648 = vmatmul.mubr.f32.gmra.mrb[0].mxu0 %v1647
  %v1649 = vpop.f32.mrb[0].mxu0
  %v1650 = vadd.f32 %v1293, %v1649
  %v1651 = vpop.f32.mrb[0].mxu0
  %v1652 = vadd.f32 %v1295, %v1651
  %1653 = vmatprep.mubr.f32.mxu0 0.0
  %v1654 = vand.u32 %v86, 4294901760
  %1655 = vmatmul.mubr.f32.gmra.mrb[0].mxu0 %v1654
  %v1656 = vpop.f32.mrb[0].mxu0
  %v1657 = vadd.f32 %v1302, %v1656
  %v1658 = vpop.f32.mrb[0].mxu0
  %v1659 = vadd.f32 %v1304, %v1658
  %1660 = vmatprep.mubr.f32.mxu0 0.0
  %v1661 = vand.u32 %v89, 4294901760
  %1662 = vmatmul.mubr.f32.gmra.mrb[0].mxu0 %v1661
  %v1663 = vpop.f32.mrb[0].mxu0
  %v1664 = vadd.f32 %v1311, %v1663
  %v1665 = vpop.f32.mrb[0].mxu0
  %v1666 = vadd.f32 %v1313, %v1665
  %1667 = vmatprep.mubr.f32.mxu0 0.0
  %v1668 = vand.u32 %v92, 4294901760
  %1669 = vmatmul.mubr.f32.gmra.mrb[0].mxu0 %v1668
  %v1670 = vpop.f32.mrb[0].mxu0
  %v1671 = vadd.f32 %v1320, %v1670
  %v1672 = vpop.f32.mrb[0].mxu0
  %v1673 = vadd.f32 %v1322, %v1672
  %1674 = vmatprep.mubr.f32.mxu0 0.0
  %v1675 = vand.u32 %v95, 4294901760
  %1676 = vmatmul.mubr.f32.gmra.mrb[0].mxu0 %v1675
  %v1677 = vpop.f32.mrb[0].mxu0
  %v1678 = vadd.f32 %v1329, %v1677
  %v1679 = vpop.f32.mrb[0].mxu0
  %v1680 = vadd.f32 %v1331, %v1679
  %1681 = vmatprep.mubr.f32.mxu0 0.0
  %v1682 = vand.u32 %v98, 4294901760
  %1683 = vmatmul.mubr.f32.gmra.mrb[0].mxu0 %v1682
  %v1684 = vpop.f32.mrb[0].mxu0
  %v1685 = vadd.f32 %v1338, %v1684
  %v1686 = vpop.f32.mrb[0].mxu0
  %v1687 = vadd.f32 %v1340, %v1686
  %1688 = vmatprep.mubr.f32.mxu0 0.0
  %v1689 = vand.u32 %v101, 4294901760
  %1690 = vmatmul.mubr.f32.gmra.mrb[0].mxu0 %v1689
  %v1691 = vpop.f32.mrb[0].mxu0
  %v1692 = vadd.f32 %v1347, %v1691
  %v1693 = vpop.f32.mrb[0].mxu0
  %v1694 = vadd.f32 %v1349, %v1693
  %1695 = vmatprep.mubr.f32.mxu0 0.0
  %v1696 = vand.u32 %v104, 4294901760
  %1697 = vmatmul.mubr.f32.gmra.mrb[0].mxu0 %v1696
  %v1698 = vpop.f32.mrb[0].mxu0
  %v1699 = vadd.f32 %v1356, %v1698
  %v1700 = vpop.f32.mrb[0].mxu0
  %v1701 = vadd.f32 %v1358, %v1700
  %1702 = vmatprep.mubr.f32.mxu0 0.0
  %v1703 = vand.u32 %v107, 4294901760
  %1704 = vmatmul.mubr.f32.gmra.mrb[0].mxu0 %v1703
  %v1705 = vpop.f32.mrb[0].mxu0
  %v1706 = vadd.f32 %v1365, %v1705
  %v1707 = vpop.f32.mrb[0].mxu0
  %v1708 = vadd.f32 %v1367, %v1707
  %1709 = vmatprep.mubr.f32.mxu0 0.0
  %v1710 = vand.u32 %v110, 4294901760
  %1711 = vmatmul.mubr.f32.gmra.mrb[0].mxu0 %v1710
  %v1712 = vpop.f32.mrb[0].mxu0
  %v1713 = vadd.f32 %v1374, %v1712
  %v1714 = vpop.f32.mrb[0].mxu0
  %v1715 = vadd.f32 %v1376, %v1714
  %1716 = vmatprep.mubr.f32.mxu0 0.0
  %v1717 = vand.u32 %v113, 4294901760
  %1718 = vmatmul.mubr.f32.gmra.mrb[0].mxu0 %v1717
  %v1719 = vpop.f32.mrb[0].mxu0
  %v1720 = vadd.f32 %v1383, %v1719
  %v1721 = vpop.f32.mrb[0].mxu0
  %v1722 = vadd.f32 %v1385, %v1721
  %1723 = vmatprep.mubr.f32.mxu0 0.0
  %v1724 = vand.u32 %v116, 4294901760
  %1725 = vmatmul.mubr.f32.gmra.mrb[0].mxu0 %v1724
  %v1726 = vpop.f32.mrb[0].mxu0
  %v1727 = vadd.f32 %v1392, %v1726
  %v1728 = vpop.f32.mrb[0].mxu0
  %v1729 = vadd.f32 %v1394, %v1728
  %1730 = vmatprep.mubr.f32.mxu0 0.0
  %v1731 = vand.u32 %v119, 4294901760
  %1732 = vmatmul.mubr.f32.gmra.mrb[0].mxu0 %v1731
  %v1733 = vpop.f32.mrb[0].mxu0
  %v1734 = vadd.f32 %v1401, %v1733
  %v1735 = vpop.f32.mrb[0].mxu0
  %v1736 = vadd.f32 %v1403, %v1735
  %1737 = vmatprep.mubr.f32.mxu0 0.0
  %v1738 = vand.u32 %v122, 4294901760
  %1739 = vmatmul.mubr.f32.gmra.mrb[0].mxu0 %v1738
  %v1740 = vpop.f32.mrb[0].mxu0
  %v1741 = vadd.f32 %v1410, %v1740
  %v1742 = vpop.f32.mrb[0].mxu0
  %v1743 = vadd.f32 %v1412, %v1742
  %1744 = vmatprep.mubr.f32.mxu0 0.0
  %v1745 = vand.u32 %v125, 4294901760
  %1746 = vmatmul.mubr.f32.gmra.mrb[0].mxu0 %v1745
  %v1747 = vpop.f32.mrb[0].mxu0
  %v1748 = vadd.f32 %v1419, %v1747
  %v1749 = vpop.f32.mrb[0].mxu0
  %v1750 = vadd.f32 %v1421, %v1749
  %1751 = vmatprep.mubr.f32.mxu0 0.0
  %v1752 = vand.u32 %v128, 4294901760
  %1753 = vmatmul.mubr.f32.gmra.mrb[0].mxu0 %v1752
  %v1754 = vpop.f32.mrb[0].mxu0
  %v1755 = vadd.f32 %v1428, %v1754
  %v1756 = vpop.f32.mrb[0].mxu0
  %v1757 = vadd.f32 %v1430, %v1756
  %1758 = vmatprep.mubr.f32.mxu0 0.0
  %v1759 = vand.u32 %v131, 4294901760
  %1760 = vmatmul.mubr.f32.gmra.mrb[0].mxu0 %v1759
  %v1761 = vpop.f32.mrb[0].mxu0
  %v1762 = vadd.f32 %v1437, %v1761
  %v1763 = vpop.f32.mrb[0].mxu0
  %v1764 = vadd.f32 %v1439, %v1763
  %1765 = vmatprep.mubr.f32.mxu0 0.0
  %v1766 = vand.u32 %v134, 4294901760
  %1767 = vmatmul.mubr.f32.gmra.mrb[0].mxu0 %v1766
  %v1768 = vpop.f32.mrb[0].mxu0
  %v1769 = vadd.f32 %v1446, %v1768
  %v1770 = vpop.f32.mrb[0].mxu0
  %v1771 = vadd.f32 %v1448, %v1770
  %1772 = vmatprep.mubr.f32.mxu0 0.0
  %v1773 = vand.u32 %v137, 4294901760
  %1774 = vmatmul.mubr.f32.gmra.mrb[0].mxu0 %v1773
  %v1775 = vpop.f32.mrb[0].mxu0
  %v1776 = vadd.f32 %v1455, %v1775
  %v1777 = vpop.f32.mrb[0].mxu0
  %v1778 = vadd.f32 %v1457, %v1777
  %1779 = vmatprep.mubr.f32.mxu0 0.0
  %v1780 = vand.u32 %v140, 4294901760
  %1781 = vmatmul.mubr.f32.gmra.mrb[0].mxu0 %v1780
  %v1782 = vpop.f32.mrb[0].mxu0
  %v1783 = vadd.f32 %v1464, %v1782
  %v1784 = vpop.f32.mrb[0].mxu0
  %v1785 = vadd.f32 %v1466, %v1784
  %1786 = vmatprep.mubr.f32.mxu0 0.0
  %v1787 = vand.u32 %v143, 4294901760
  %1788 = vmatmul.mubr.f32.gmra.mrb[0].mxu0 %v1787
  %v1789 = vpop.f32.mrb[0].mxu0
  %v1790 = vadd.f32 %v1473, %v1789
  %v1791 = vpop.f32.mrb[0].mxu0
  %v1792 = vadd.f32 %v1475, %v1791
  %1793 = vmatprep.mubr.f32.mxu0 0.0
  %v1794 = vand.u32 %v146, 4294901760
  %1795 = vmatmul.mubr.f32.gmra.mrb[0].mxu0 %v1794
  %v1796 = vpop.f32.mrb[0].mxu0
  %v1797 = vadd.f32 %v1482, %v1796
  %v1798 = vpop.f32.mrb[0].mxu0
  %v1799 = vadd.f32 %v1484, %v1798
  %1800 = vmatprep.mubr.f32.mxu0 0.0
  %v1801 = vand.u32 %v149, 4294901760
  %1802 = vmatmul.mubr.f32.gmra.mrb[0].mxu0 %v1801
  %v1803 = vpop.f32.mrb[0].mxu0
  %v1804 = vadd.f32 %v1491, %v1803
  %v1805 = vpop.f32.mrb[0].mxu0
  %v1806 = vadd.f32 %v1493, %v1805
  %1807 = vmatprep.mubr.f32.mxu0 0.0
  %v1808 = vand.u32 %v152, 4294901760
  %1809 = vmatmul.mubr.f32.gmra.mrb[0].mxu0 %v1808
  %v1810 = vpop.f32.mrb[0].mxu0
  %v1811 = vadd.f32 %v1500, %v1810
  %v1812 = vpop.f32.mrb[0].mxu0
  %v1813 = vadd.f32 %v1502, %v1812
  %1814 = vmatprep.mubr.f32.mxu0 0.0
  %v1815 = vand.u32 %v155, 4294901760
  %1816 = vmatmul.mubr.f32.gmra.mrb[0].mxu0 %v1815
  %v1817 = vpop.f32.mrb[0].mxu0
  %v1818 = vadd.f32 %v1509, %v1817
  %v1819 = vpop.f32.mrb[0].mxu0
  %v1820 = vadd.f32 %v1511, %v1819
  %1821 = vmatprep.mubr.f32.mxu0 0.0
  %v1822 = vand.u32 %v158, 4294901760
  %1823 = vmatmul.mubr.f32.gmra.mrb[0].mxu0 %v1822
  %v1824 = vpop.f32.mrb[0].mxu0
  %v1825 = vadd.f32 %v1518, %v1824
  %v1826 = vpop.f32.mrb[0].mxu0
  %v1827 = vadd.f32 %v1520, %v1826
  %1828 = vmatprep.mubr.f32.mxu0 0.0
  %v1829 = vand.u32 %v161, 4294901760
  %1830 = vmatmul.mubr.f32.gmra.mrb[0].mxu0 %v1829
  %v1831 = vpop.f32.mrb[0].mxu0
  %v1832 = vadd.f32 %v1527, %v1831
  %v1833 = vpop.f32.mrb[0].mxu0
  %v1834 = vadd.f32 %v1529, %v1833
  %1835 = vmatprep.mubr.f32.mxu0 0.0
  %v1836 = vand.u32 %v164, 4294901760
  %1837 = vmatmul.mubr.f32.gmra.mrb[0].mxu0 %v1836
  %v1838 = vpop.f32.mrb[0].mxu0
  %v1839 = vadd.f32 %v1536, %v1838
  %v1840 = vpop.f32.mrb[0].mxu0
  %v1841 = vadd.f32 %v1538, %v1840
  %1842 = vmatprep.mubr.f32.mxu0 0.0
  %v1843 = vand.u32 %v167, 4294901760
  %1844 = vmatmul.mubr.f32.gmra.mrb[0].mxu0 %v1843
  %v1845 = vpop.f32.mrb[0].mxu0
  %v1846 = vadd.f32 %v1545, %v1845
  %v1847 = vpop.f32.mrb[0].mxu0
  %v1848 = vadd.f32 %v1547, %v1847
  %1849 = vmatprep.mubr.f32.mxu0 0.0
  %v1850 = vand.u32 %v170, 4294901760
  %1851 = vmatmul.mubr.f32.gmra.mrb[0].mxu0 %v1850
  %v1852 = vpop.f32.mrb[0].mxu0
  %v1853 = vadd.f32 %v1554, %v1852
  %v1854 = vpop.f32.mrb[0].mxu0
  %v1855 = vadd.f32 %v1556, %v1854
  %1856 = vmatprep.mubr.f32.mxu0 0.0
  %v1857 = vand.u32 %v173, 4294901760
  %1858 = vmatmul.mubr.f32.gmra.mrb[0].mxu0 %v1857
  %v1859 = vpop.f32.mrb[0].mxu0
  %v1860 = vadd.f32 %v1563, %v1859
  %v1861 = vpop.f32.mrb[0].mxu0
  %v1862 = vadd.f32 %v1565, %v1861
  %1863 = vmatprep.mubr.f32.mxu0 0.0
  %v1864 = vand.u32 %v176, 4294901760
  %1865 = vmatmul.mubr.f32.gmra.mrb[0].mxu0 %v1864
  %v1866 = vpop.f32.mrb[0].mxu0
  %v1867 = vadd.f32 %v1572, %v1866
  %v1868 = vpop.f32.mrb[0].mxu0
  %v1869 = vadd.f32 %v1574, %v1868
  %1870 = vdwg.mxu0
  %v1871 = vand.u32 %v80, 4294901760
  %1872 = vmatprep.subr.mxu0 %v1871
  %v1873 = vand.u32 %v79, 4294901760
  %1874 = vmatpush1.msra.mxu0 %v1873
  %1875 = vmatprep.subr.mxu0 0.0
  %1876 = vmatpush1.msra.mxu0 0.0
  %1877 = vmatprep.subr.mxu0 0.0
  %1878 = vmatpush1.msra.mxu0 0.0
  %1879 = vmatprep.subr.mxu0 0.0
  %1880 = vmatpush1.msra.mxu0 0.0
  %1881 = vmatprep.subr.mxu0 0.0
  %1882 = vmatpush1.msra.mxu0 0.0
  %1883 = vmatprep.subr.mxu0 0.0
  %1884 = vmatpush1.msra.mxu0 0.0
  %1885 = vmatprep.subr.mxu0 0.0
  %1886 = vmatpush1.msra.mxu0 0.0
  %1887 = vmatprep.subr.mxu0 0.0
  %1888 = vmatpush1.msra.mxu0 0.0
  %1889 = vmatprep.subr.mxu0 0.0
  %1890 = vmatpush1.msra.mxu0 0.0
  %1891 = vmatprep.subr.mxu0 0.0
  %1892 = vmatpush1.msra.mxu0 0.0
  %1893 = vmatprep.subr.mxu0 0.0
  %1894 = vmatpush1.msra.mxu0 0.0
  %1895 = vmatprep.subr.mxu0 0.0
  %1896 = vmatpush1.msra.mxu0 0.0
  %1897 = vmatprep.subr.mxu0 0.0
  %1898 = vmatpush1.msra.mxu0 0.0
  %1899 = vmatprep.subr.mxu0 0.0
  %1900 = vmatpush1.msra.mxu0 0.0
  %1901 = vmatprep.subr.mxu0 0.0
  %1902 = vmatpush1.msra.mxu0 0.0
  %1903 = vmatprep.subr.mxu0 0.0
  %1904 = vmatpush1.msra.mxu0 0.0
  %1905 = vmatprep.subr.mxu0 0.0
  %1906 = vmatpush1.msra.mxu0 0.0
  %1907 = vmatprep.subr.mxu0 0.0
  %1908 = vmatpush1.msra.mxu0 0.0
  %1909 = vmatprep.subr.mxu0 0.0
  %1910 = vmatpush1.msra.mxu0 0.0
  %1911 = vmatprep.subr.mxu0 0.0
  %1912 = vmatpush1.msra.mxu0 0.0
  %1913 = vmatprep.subr.mxu0 0.0
  %1914 = vmatpush1.msra.mxu0 0.0
  %1915 = vmatprep.subr.mxu0 0.0
  %1916 = vmatpush1.msra.mxu0 0.0
  %1917 = vmatprep.subr.mxu0 0.0
  %1918 = vmatpush1.msra.mxu0 0.0
  %1919 = vmatprep.subr.mxu0 0.0
  %1920 = vmatpush1.msra.mxu0 0.0
  %1921 = vmatprep.subr.mxu0 0.0
  %1922 = vmatpush1.msra.mxu0 0.0
  %1923 = vmatprep.subr.mxu0 0.0
  %1924 = vmatpush1.msra.mxu0 0.0
  %1925 = vmatprep.subr.mxu0 0.0
  %1926 = vmatpush1.msra.mxu0 0.0
  %1927 = vmatprep.subr.mxu0 0.0
  %1928 = vmatpush1.msra.mxu0 0.0
  %1929 = vmatprep.subr.mxu0 0.0
  %1930 = vmatpush1.msra.mxu0 0.0
  %1931 = vmatprep.subr.mxu0 0.0
  %1932 = vmatpush1.msra.mxu0 0.0
  %1933 = vmatprep.subr.mxu0 0.0
  %1934 = vmatpush1.msra.mxu0 0.0
  %1935 = vmatprep.subr.mxu0 0.0
  %1936 = vmatpush1.msra.mxu0 0.0
  %1937 = vmatprep.mubr.f32.mxu0 0.0
  %v1938 = vand.u32 %v83, 4294901760
  %1939 = vmatmul.mubr.f32.gmra.mrb[0].mxu0 %v1938
  %v1940 = vpop.f32.mrb[0].mxu0
  %v1941 = vadd.f32 %v1650, %v1940
  %v1942 = vpop.f32.mrb[0].mxu0
  %v1943 = vadd.f32 %v1652, %v1942
  %1944 = vmatprep.mubr.f32.mxu0 0.0
  %v1945 = vand.u32 %v86, 4294901760
  %1946 = vmatmul.mubr.f32.gmra.mrb[0].mxu0 %v1945
  %v1947 = vpop.f32.mrb[0].mxu0
  %v1948 = vadd.f32 %v1657, %v1947
  %v1949 = vpop.f32.mrb[0].mxu0
  %v1950 = vadd.f32 %v1659, %v1949
  %1951 = vmatprep.mubr.f32.mxu0 0.0
  %v1952 = vand.u32 %v89, 4294901760
  %1953 = vmatmul.mubr.f32.gmra.mrb[0].mxu0 %v1952
  %v1954 = vpop.f32.mrb[0].mxu0
  %v1955 = vadd.f32 %v1664, %v1954
  %v1956 = vpop.f32.mrb[0].mxu0
  %v1957 = vadd.f32 %v1666, %v1956
  %1958 = vmatprep.mubr.f32.mxu0 0.0
  %v1959 = vand.u32 %v92, 4294901760
  %1960 = vmatmul.mubr.f32.gmra.mrb[0].mxu0 %v1959
  %v1961 = vpop.f32.mrb[0].mxu0
  %v1962 = vadd.f32 %v1671, %v1961
  %v1963 = vpop.f32.mrb[0].mxu0
  %v1964 = vadd.f32 %v1673, %v1963
  %1965 = vmatprep.mubr.f32.mxu0 0.0
  %v1966 = vand.u32 %v95, 4294901760
  %1967 = vmatmul.mubr.f32.gmra.mrb[0].mxu0 %v1966
  %v1968 = vpop.f32.mrb[0].mxu0
  %v1969 = vadd.f32 %v1678, %v1968
  %v1970 = vpop.f32.mrb[0].mxu0
  %v1971 = vadd.f32 %v1680, %v1970
  %1972 = vmatprep.mubr.f32.mxu0 0.0
  %v1973 = vand.u32 %v98, 4294901760
  %1974 = vmatmul.mubr.f32.gmra.mrb[0].mxu0 %v1973
  %v1975 = vpop.f32.mrb[0].mxu0
  %v1976 = vadd.f32 %v1685, %v1975
  %v1977 = vpop.f32.mrb[0].mxu0
  %v1978 = vadd.f32 %v1687, %v1977
  %1979 = vmatprep.mubr.f32.mxu0 0.0
  %v1980 = vand.u32 %v101, 4294901760
  %1981 = vmatmul.mubr.f32.gmra.mrb[0].mxu0 %v1980
  %v1982 = vpop.f32.mrb[0].mxu0
  %v1983 = vadd.f32 %v1692, %v1982
  %v1984 = vpop.f32.mrb[0].mxu0
  %v1985 = vadd.f32 %v1694, %v1984
  %1986 = vmatprep.mubr.f32.mxu0 0.0
  %v1987 = vand.u32 %v104, 4294901760
  %1988 = vmatmul.mubr.f32.gmra.mrb[0].mxu0 %v1987
  %v1989 = vpop.f32.mrb[0].mxu0
  %v1990 = vadd.f32 %v1699, %v1989
  %v1991 = vpop.f32.mrb[0].mxu0
  %v1992 = vadd.f32 %v1701, %v1991
  %1993 = vmatprep.mubr.f32.mxu0 0.0
  %v1994 = vand.u32 %v107, 4294901760
  %1995 = vmatmul.mubr.f32.gmra.mrb[0].mxu0 %v1994
  %v1996 = vpop.f32.mrb[0].mxu0
  %v1997 = vadd.f32 %v1706, %v1996
  %v1998 = vpop.f32.mrb[0].mxu0
  %v1999 = vadd.f32 %v1708, %v1998
  %2000 = vmatprep.mubr.f32.mxu0 0.0
  %v2001 = vand.u32 %v110, 4294901760
  %2002 = vmatmul.mubr.f32.gmra.mrb[0].mxu0 %v2001
  %v2003 = vpop.f32.mrb[0].mxu0
  %v2004 = vadd.f32 %v1713, %v2003
  %v2005 = vpop.f32.mrb[0].mxu0
  %v2006 = vadd.f32 %v1715, %v2005
  %2007 = vmatprep.mubr.f32.mxu0 0.0
  %v2008 = vand.u32 %v113, 4294901760
  %2009 = vmatmul.mubr.f32.gmra.mrb[0].mxu0 %v2008
  %v2010 = vpop.f32.mrb[0].mxu0
  %v2011 = vadd.f32 %v1720, %v2010
  %v2012 = vpop.f32.mrb[0].mxu0
  %v2013 = vadd.f32 %v1722, %v2012
  %2014 = vmatprep.mubr.f32.mxu0 0.0
  %v2015 = vand.u32 %v116, 4294901760
  %2016 = vmatmul.mubr.f32.gmra.mrb[0].mxu0 %v2015
  %v2017 = vpop.f32.mrb[0].mxu0
  %v2018 = vadd.f32 %v1727, %v2017
  %v2019 = vpop.f32.mrb[0].mxu0
  %v2020 = vadd.f32 %v1729, %v2019
  %2021 = vmatprep.mubr.f32.mxu0 0.0
  %v2022 = vand.u32 %v119, 4294901760
  %2023 = vmatmul.mubr.f32.gmra.mrb[0].mxu0 %v2022
  %v2024 = vpop.f32.mrb[0].mxu0
  %v2025 = vadd.f32 %v1734, %v2024
  %v2026 = vpop.f32.mrb[0].mxu0
  %v2027 = vadd.f32 %v1736, %v2026
  %2028 = vmatprep.mubr.f32.mxu0 0.0
  %v2029 = vand.u32 %v122, 4294901760
  %2030 = vmatmul.mubr.f32.gmra.mrb[0].mxu0 %v2029
  %v2031 = vpop.f32.mrb[0].mxu0
  %v2032 = vadd.f32 %v1741, %v2031
  %v2033 = vpop.f32.mrb[0].mxu0
  %v2034 = vadd.f32 %v1743, %v2033
  %2035 = vmatprep.mubr.f32.mxu0 0.0
  %v2036 = vand.u32 %v125, 4294901760
  %2037 = vmatmul.mubr.f32.gmra.mrb[0].mxu0 %v2036
  %v2038 = vpop.f32.mrb[0].mxu0
  %v2039 = vadd.f32 %v1748, %v2038
  %v2040 = vpop.f32.mrb[0].mxu0
  %v2041 = vadd.f32 %v1750, %v2040
  %2042 = vmatprep.mubr.f32.mxu0 0.0
  %v2043 = vand.u32 %v128, 4294901760
  %2044 = vmatmul.mubr.f32.gmra.mrb[0].mxu0 %v2043
  %v2045 = vpop.f32.mrb[0].mxu0
  %v2046 = vadd.f32 %v1755, %v2045
  %v2047 = vpop.f32.mrb[0].mxu0
  %v2048 = vadd.f32 %v1757, %v2047
  %2049 = vmatprep.mubr.f32.mxu0 0.0
  %v2050 = vand.u32 %v131, 4294901760
  %2051 = vmatmul.mubr.f32.gmra.mrb[0].mxu0 %v2050
  %v2052 = vpop.f32.mrb[0].mxu0
  %v2053 = vadd.f32 %v1762, %v2052
  %v2054 = vpop.f32.mrb[0].mxu0
  %v2055 = vadd.f32 %v1764, %v2054
  %2056 = vmatprep.mubr.f32.mxu0 0.0
  %v2057 = vand.u32 %v134, 4294901760
  %2058 = vmatmul.mubr.f32.gmra.mrb[0].mxu0 %v2057
  %v2059 = vpop.f32.mrb[0].mxu0
  %v2060 = vadd.f32 %v1769, %v2059
  %v2061 = vpop.f32.mrb[0].mxu0
  %v2062 = vadd.f32 %v1771, %v2061
  %2063 = vmatprep.mubr.f32.mxu0 0.0
  %v2064 = vand.u32 %v137, 4294901760
  %2065 = vmatmul.mubr.f32.gmra.mrb[0].mxu0 %v2064
  %v2066 = vpop.f32.mrb[0].mxu0
  %v2067 = vadd.f32 %v1776, %v2066
  %v2068 = vpop.f32.mrb[0].mxu0
  %v2069 = vadd.f32 %v1778, %v2068
  %2070 = vmatprep.mubr.f32.mxu0 0.0
  %v2071 = vand.u32 %v140, 4294901760
  %2072 = vmatmul.mubr.f32.gmra.mrb[0].mxu0 %v2071
  %v2073 = vpop.f32.mrb[0].mxu0
  %v2074 = vadd.f32 %v1783, %v2073
  %v2075 = vpop.f32.mrb[0].mxu0
  %v2076 = vadd.f32 %v1785, %v2075
  %2077 = vmatprep.mubr.f32.mxu0 0.0
  %v2078 = vand.u32 %v143, 4294901760
  %2079 = vmatmul.mubr.f32.gmra.mrb[0].mxu0 %v2078
  %v2080 = vpop.f32.mrb[0].mxu0
  %v2081 = vadd.f32 %v1790, %v2080
  %v2082 = vpop.f32.mrb[0].mxu0
  %v2083 = vadd.f32 %v1792, %v2082
  %2084 = vmatprep.mubr.f32.mxu0 0.0
  %v2085 = vand.u32 %v146, 4294901760
  %2086 = vmatmul.mubr.f32.gmra.mrb[0].mxu0 %v2085
  %v2087 = vpop.f32.mrb[0].mxu0
  %v2088 = vadd.f32 %v1797, %v2087
  %v2089 = vpop.f32.mrb[0].mxu0
  %v2090 = vadd.f32 %v1799, %v2089
  %2091 = vmatprep.mubr.f32.mxu0 0.0
  %v2092 = vand.u32 %v149, 4294901760
  %2093 = vmatmul.mubr.f32.gmra.mrb[0].mxu0 %v2092
  %v2094 = vpop.f32.mrb[0].mxu0
  %v2095 = vadd.f32 %v1804, %v2094
  %v2096 = vpop.f32.mrb[0].mxu0
  %v2097 = vadd.f32 %v1806, %v2096
  %2098 = vmatprep.mubr.f32.mxu0 0.0
  %v2099 = vand.u32 %v152, 4294901760
  %2100 = vmatmul.mubr.f32.gmra.mrb[0].mxu0 %v2099
  %v2101 = vpop.f32.mrb[0].mxu0
  %v2102 = vadd.f32 %v1811, %v2101
  %v2103 = vpop.f32.mrb[0].mxu0
  %v2104 = vadd.f32 %v1813, %v2103
  %2105 = vmatprep.mubr.f32.mxu0 0.0
  %v2106 = vand.u32 %v155, 4294901760
  %2107 = vmatmul.mubr.f32.gmra.mrb[0].mxu0 %v2106
  %v2108 = vpop.f32.mrb[0].mxu0
  %v2109 = vadd.f32 %v1818, %v2108
  %v2110 = vpop.f32.mrb[0].mxu0
  %v2111 = vadd.f32 %v1820, %v2110
  %2112 = vmatprep.mubr.f32.mxu0 0.0
  %v2113 = vand.u32 %v158, 4294901760
  %2114 = vmatmul.mubr.f32.gmra.mrb[0].mxu0 %v2113
  %v2115 = vpop.f32.mrb[0].mxu0
  %v2116 = vadd.f32 %v1825, %v2115
  %v2117 = vpop.f32.mrb[0].mxu0
  %v2118 = vadd.f32 %v1827, %v2117
  %2119 = vmatprep.mubr.f32.mxu0 0.0
  %v2120 = vand.u32 %v161, 4294901760
  %2121 = vmatmul.mubr.f32.gmra.mrb[0].mxu0 %v2120
  %v2122 = vpop.f32.mrb[0].mxu0
  %v2123 = vadd.f32 %v1832, %v2122
  %v2124 = vpop.f32.mrb[0].mxu0
  %v2125 = vadd.f32 %v1834, %v2124
  %2126 = vmatprep.mubr.f32.mxu0 0.0
  %v2127 = vand.u32 %v164, 4294901760
  %2128 = vmatmul.mubr.f32.gmra.mrb[0].mxu0 %v2127
  %v2129 = vpop.f32.mrb[0].mxu0
  %v2130 = vadd.f32 %v1839, %v2129
  %v2131 = vpop.f32.mrb[0].mxu0
  %v2132 = vadd.f32 %v1841, %v2131
  %2133 = vmatprep.mubr.f32.mxu0 0.0
  %v2134 = vand.u32 %v167, 4294901760
  %2135 = vmatmul.mubr.f32.gmra.mrb[0].mxu0 %v2134
  %v2136 = vpop.f32.mrb[0].mxu0
  %v2137 = vadd.f32 %v1846, %v2136
  %v2138 = vpop.f32.mrb[0].mxu0
  %v2139 = vadd.f32 %v1848, %v2138
  %2140 = vmatprep.mubr.f32.mxu0 0.0
  %v2141 = vand.u32 %v170, 4294901760
  %2142 = vmatmul.mubr.f32.gmra.mrb[0].mxu0 %v2141
  %v2143 = vpop.f32.mrb[0].mxu0
  %v2144 = vadd.f32 %v1853, %v2143
  %v2145 = vpop.f32.mrb[0].mxu0
  %v2146 = vadd.f32 %v1855, %v2145
  %2147 = vmatprep.mubr.f32.mxu0 0.0
  %v2148 = vand.u32 %v173, 4294901760
  %2149 = vmatmul.mubr.f32.gmra.mrb[0].mxu0 %v2148
  %v2150 = vpop.f32.mrb[0].mxu0
  %v2151 = vadd.f32 %v1860, %v2150
  %v2152 = vpop.f32.mrb[0].mxu0
  %v2153 = vadd.f32 %v1862, %v2152
  %2154 = vmatprep.mubr.f32.mxu0 0.0
  %v2155 = vand.u32 %v176, 4294901760
  %2156 = vmatmul.mubr.f32.gmra.mrb[0].mxu0 %v2155
  %v2157 = vpop.f32.mrb[0].mxu0
  %v2158 = vadd.f32 %v1867, %v2157
  %v2159 = vpop.f32.mrb[0].mxu0
  %v2160 = vadd.f32 %v1869, %v2159
  %2161 = vdwg.mxu0
  %v2162 = vmax.f32 %v1941, 0.0
  %v2163 = vmax.f32 %v1943, 0.0
  %v2164 = vmax.f32 %v1948, 0.0
  %v2165 = vmax.f32 %v1950, 0.0
  %v2166 = vmax.f32 %v1955, 0.0
  %v2167 = vmax.f32 %v1957, 0.0
  %v2168 = vmax.f32 %v1962, 0.0
  %v2169 = vmax.f32 %v1964, 0.0
  %v2170 = vmax.f32 %v1969, 0.0
  %v2171 = vmax.f32 %v1971, 0.0
  %v2172 = vmax.f32 %v1976, 0.0
  %v2173 = vmax.f32 %v1978, 0.0
  %v2174 = vmax.f32 %v1983, 0.0
  %v2175 = vmax.f32 %v1985, 0.0
  %v2176 = vmax.f32 %v1990, 0.0
  %v2177 = vmax.f32 %v1992, 0.0
  %v2178 = vmax.f32 %v1997, 0.0
  %v2179 = vmax.f32 %v1999, 0.0
  %v2180 = vmax.f32 %v2004, 0.0
  %v2181 = vmax.f32 %v2006, 0.0
  %v2182 = vmax.f32 %v2011, 0.0
  %v2183 = vmax.f32 %v2013, 0.0
  %v2184 = vmax.f32 %v2018, 0.0
  %v2185 = vmax.f32 %v2020, 0.0
  %v2186 = vmax.f32 %v2025, 0.0
  %v2187 = vmax.f32 %v2027, 0.0
  %v2188 = vmax.f32 %v2032, 0.0
  %v2189 = vmax.f32 %v2034, 0.0
  %v2190 = vmax.f32 %v2039, 0.0
  %v2191 = vmax.f32 %v2041, 0.0
  %v2192 = vmax.f32 %v2046, 0.0
  %v2193 = vmax.f32 %v2048, 0.0
  %v2194 = vmax.f32 %v2053, 0.0
  %v2195 = vmax.f32 %v2055, 0.0
  %v2196 = vmax.f32 %v2060, 0.0
  %v2197 = vmax.f32 %v2062, 0.0
  %v2198 = vmax.f32 %v2067, 0.0
  %v2199 = vmax.f32 %v2069, 0.0
  %v2200 = vmax.f32 %v2074, 0.0
  %v2201 = vmax.f32 %v2076, 0.0
  %v2202 = vmax.f32 %v2081, 0.0
  %v2203 = vmax.f32 %v2083, 0.0
  %v2204 = vmax.f32 %v2088, 0.0
  %v2205 = vmax.f32 %v2090, 0.0
  %v2206 = vmax.f32 %v2095, 0.0
  %v2207 = vmax.f32 %v2097, 0.0
  %v2208 = vmax.f32 %v2102, 0.0
  %v2209 = vmax.f32 %v2104, 0.0
  %v2210 = vmax.f32 %v2109, 0.0
  %v2211 = vmax.f32 %v2111, 0.0
  %v2212 = vmax.f32 %v2116, 0.0
  %v2213 = vmax.f32 %v2118, 0.0
  %v2214 = vmax.f32 %v2123, 0.0
  %v2215 = vmax.f32 %v2125, 0.0
  %v2216 = vmax.f32 %v2130, 0.0
  %v2217 = vmax.f32 %v2132, 0.0
  %v2218 = vmax.f32 %v2137, 0.0
  %v2219 = vmax.f32 %v2139, 0.0
  %v2220 = vmax.f32 %v2144, 0.0
  %v2221 = vmax.f32 %v2146, 0.0
  %v2222 = vmax.f32 %v2151, 0.0
  %v2223 = vmax.f32 %v2153, 0.0
  %v2224 = vmax.f32 %v2158, 0.0
  %v2225 = vmax.f32 %v2160, 0.0
  %s2226 = smul.u32 0, 256
  %v2227 = vlaneseq
  %v2228 = vshrl.u32 %v2227, 7
  %v2229 = vadd.s32 %v2228, 8
  %v2230 = vadd.s32 %v2228, 16
  %v2231 = vadd.s32 %v2228, 24
  %v2232 = vadd.s32 %v2228, 32
  %v2233 = vadd.s32 %v2228, 40
  %v2234 = vadd.s32 %v2228, 48
  %v2235 = vadd.s32 %v2228, 56
  %v2236 = vadd.s32 %v2228, 64
  %v2237 = vadd.s32 %v2228, 72
  %v2238 = vadd.s32 %v2228, 80
  %v2239 = vadd.s32 %v2228, 88
  %v2240 = vadd.s32 %v2228, 96
  %v2241 = vadd.s32 %v2228, 104
  %v2242 = vadd.s32 %v2228, 112
  %v2243 = vadd.s32 %v2228, 120
  %v2244 = vadd.s32 %v2228, 128
  %v2245 = vadd.s32 %v2228, 136
  %v2246 = vadd.s32 %v2228, 144
  %v2247 = vadd.s32 %v2228, 152
  %v2248 = vadd.s32 %v2228, 160
  %v2249 = vadd.s32 %v2228, 168
  %v2250 = vadd.s32 %v2228, 176
  %v2251 = vadd.s32 %v2228, 184
  %v2252 = vadd.s32 %v2228, 192
  %v2253 = vadd.s32 %v2228, 200
  %v2254 = vadd.s32 %v2228, 208
  %v2255 = vadd.s32 %v2228, 216
  %v2256 = vadd.s32 %v2228, 224
  %v2257 = vadd.s32 %v2228, 232
  %v2258 = vadd.s32 %v2228, 240
  %v2259 = vadd.s32 %v2228, 248
  %v2260 = vstv %s2226
  %v2261 = vadd.s32 %v2260, %v2228
  %v2262 = vadd.s32 %v2260, %v2229
  %v2263 = vadd.s32 %v2260, %v2230
  %v2264 = vadd.s32 %v2260, %v2231
  %v2265 = vadd.s32 %v2260, %v2232
  %v2266 = vadd.s32 %v2260, %v2233
  %v2267 = vadd.s32 %v2260, %v2234
  %v2268 = vadd.s32 %v2260, %v2235
  %v2269 = vadd.s32 %v2260, %v2236
  %v2270 = vadd.s32 %v2260, %v2237
  %v2271 = vadd.s32 %v2260, %v2238
  %v2272 = vadd.s32 %v2260, %v2239
  %v2273 = vadd.s32 %v2260, %v2240
  %v2274 = vadd.s32 %v2260, %v2241
  %v2275 = vadd.s32 %v2260, %v2242
  %v2276 = vadd.s32 %v2260, %v2243
  %v2277 = vadd.s32 %v2260, %v2244
  %v2278 = vadd.s32 %v2260, %v2245
  %v2279 = vadd.s32 %v2260, %v2246
  %v2280 = vadd.s32 %v2260, %v2247
  %v2281 = vadd.s32 %v2260, %v2248
  %v2282 = vadd.s32 %v2260, %v2249
  %v2283 = vadd.s32 %v2260, %v2250
  %v2284 = vadd.s32 %v2260, %v2251
  %v2285 = vadd.s32 %v2260, %v2252
  %v2286 = vadd.s32 %v2260, %v2253
  %v2287 = vadd.s32 %v2260, %v2254
  %v2288 = vadd.s32 %v2260, %v2255
  %v2289 = vadd.s32 %v2260, %v2256
  %v2290 = vadd.s32 %v2260, %v2257
  %v2291 = vadd.s32 %v2260, %v2258
  %v2292 = vadd.s32 %v2260, %v2259
  %s2293 = smul.u32 0, 256
  %v2294 = vlaneseq
  %v2295 = vand.u32 %v2294, 127
  %v2296 = vadd.s32 %v2295, 128
  %v2297 = vstv %s2293
  %v2298 = vadd.s32 %v2297, %v2295
  %v2299 = vadd.s32 %v2297, %v2296
  %vm2300 = vcmp.eq.s32.totalorder %v2261, %v2298
  %vm2301 = vcmp.eq.s32.totalorder %v2261, %v2299
  %vm2302 = vcmp.eq.s32.totalorder %v2262, %v2298
  %vm2303 = vcmp.eq.s32.totalorder %v2262, %v2299
  %vm2304 = vcmp.eq.s32.totalorder %v2263, %v2298
  %vm2305 = vcmp.eq.s32.totalorder %v2263, %v2299
  %vm2306 = vcmp.eq.s32.totalorder %v2264, %v2298
  %vm2307 = vcmp.eq.s32.totalorder %v2264, %v2299
  %vm2308 = vcmp.eq.s32.totalorder %v2265, %v2298
  %vm2309 = vcmp.eq.s32.totalorder %v2265, %v2299
  %vm2310 = vcmp.eq.s32.totalorder %v2266, %v2298
  %vm2311 = vcmp.eq.s32.totalorder %v2266, %v2299
  %vm2312 = vcmp.eq.s32.totalorder %v2267, %v2298
  %vm2313 = vcmp.eq.s32.totalorder %v2267, %v2299
  %vm2314 = vcmp.eq.s32.totalorder %v2268, %v2298
  %vm2315 = vcmp.eq.s32.totalorder %v2268, %v2299
  %vm2316 = vcmp.eq.s32.totalorder %v2269, %v2298
  %vm2317 = vcmp.eq.s32.totalorder %v2269, %v2299
  %vm2318 = vcmp.eq.s32.totalorder %v2270, %v2298
  %vm2319 = vcmp.eq.s32.totalorder %v2270, %v2299
  %vm2320 = vcmp.eq.s32.totalorder %v2271, %v2298
  %vm2321 = vcmp.eq.s32.totalorder %v2271, %v2299
  %vm2322 = vcmp.eq.s32.totalorder %v2272, %v2298
  %vm2323 = vcmp.eq.s32.totalorder %v2272, %v2299
  %vm2324 = vcmp.eq.s32.totalorder %v2273, %v2298
  %vm2325 = vcmp.eq.s32.totalorder %v2273, %v2299
  %vm2326 = vcmp.eq.s32.totalorder %v2274, %v2298
  %vm2327 = vcmp.eq.s32.totalorder %v2274, %v2299
  %vm2328 = vcmp.eq.s32.totalorder %v2275, %v2298
  %vm2329 = vcmp.eq.s32.totalorder %v2275, %v2299
  %vm2330 = vcmp.eq.s32.totalorder %v2276, %v2298
  %vm2331 = vcmp.eq.s32.totalorder %v2276, %v2299
  %vm2332 = vcmp.eq.s32.totalorder %v2277, %v2298
  %vm2333 = vcmp.eq.s32.totalorder %v2277, %v2299
  %vm2334 = vcmp.eq.s32.totalorder %v2278, %v2298
  %vm2335 = vcmp.eq.s32.totalorder %v2278, %v2299
  %vm2336 = vcmp.eq.s32.totalorder %v2279, %v2298
  %vm2337 = vcmp.eq.s32.totalorder %v2279, %v2299
  %vm2338 = vcmp.eq.s32.totalorder %v2280, %v2298
  %vm2339 = vcmp.eq.s32.totalorder %v2280, %v2299
  %vm2340 = vcmp.eq.s32.totalorder %v2281, %v2298
  %vm2341 = vcmp.eq.s32.totalorder %v2281, %v2299
  %vm2342 = vcmp.eq.s32.totalorder %v2282, %v2298
  %vm2343 = vcmp.eq.s32.totalorder %v2282, %v2299
  %vm2344 = vcmp.eq.s32.totalorder %v2283, %v2298
  %vm2345 = vcmp.eq.s32.totalorder %v2283, %v2299
  %vm2346 = vcmp.eq.s32.totalorder %v2284, %v2298
  %vm2347 = vcmp.eq.s32.totalorder %v2284, %v2299
  %vm2348 = vcmp.eq.s32.totalorder %v2285, %v2298
  %vm2349 = vcmp.eq.s32.totalorder %v2285, %v2299
  %vm2350 = vcmp.eq.s32.totalorder %v2286, %v2298
  %vm2351 = vcmp.eq.s32.totalorder %v2286, %v2299
  %vm2352 = vcmp.eq.s32.totalorder %v2287, %v2298
  %vm2353 = vcmp.eq.s32.totalorder %v2287, %v2299
  %vm2354 = vcmp.eq.s32.totalorder %v2288, %v2298
  %vm2355 = vcmp.eq.s32.totalorder %v2288, %v2299
  %vm2356 = vcmp.eq.s32.totalorder %v2289, %v2298
  %vm2357 = vcmp.eq.s32.totalorder %v2289, %v2299
  %vm2358 = vcmp.eq.s32.totalorder %v2290, %v2298
  %vm2359 = vcmp.eq.s32.totalorder %v2290, %v2299
  %vm2360 = vcmp.eq.s32.totalorder %v2291, %v2298
  %vm2361 = vcmp.eq.s32.totalorder %v2291, %v2299
  %vm2362 = vcmp.eq.s32.totalorder %v2292, %v2298
  %vm2363 = vcmp.eq.s32.totalorder %v2292, %v2299
  %v2364 = vsel %vm2300, 1e+30, %v2162
  %v2365 = vsel %vm2301, 1e+30, %v2163
  %v2366 = vsel %vm2302, 1e+30, %v2164
  %v2367 = vsel %vm2303, 1e+30, %v2165
  %v2368 = vsel %vm2304, 1e+30, %v2166
  %v2369 = vsel %vm2305, 1e+30, %v2167
  %v2370 = vsel %vm2306, 1e+30, %v2168
  %v2371 = vsel %vm2307, 1e+30, %v2169
  %v2372 = vsel %vm2308, 1e+30, %v2170
  %v2373 = vsel %vm2309, 1e+30, %v2171
  %v2374 = vsel %vm2310, 1e+30, %v2172
  %v2375 = vsel %vm2311, 1e+30, %v2173
  %v2376 = vsel %vm2312, 1e+30, %v2174
  %v2377 = vsel %vm2313, 1e+30, %v2175
  %v2378 = vsel %vm2314, 1e+30, %v2176
  %v2379 = vsel %vm2315, 1e+30, %v2177
  %v2380 = vsel %vm2316, 1e+30, %v2178
  %v2381 = vsel %vm2317, 1e+30, %v2179
  %v2382 = vsel %vm2318, 1e+30, %v2180
  %v2383 = vsel %vm2319, 1e+30, %v2181
  %v2384 = vsel %vm2320, 1e+30, %v2182
  %v2385 = vsel %vm2321, 1e+30, %v2183
  %v2386 = vsel %vm2322, 1e+30, %v2184
  %v2387 = vsel %vm2323, 1e+30, %v2185
  %v2388 = vsel %vm2324, 1e+30, %v2186
  %v2389 = vsel %vm2325, 1e+30, %v2187
  %v2390 = vsel %vm2326, 1e+30, %v2188
  %v2391 = vsel %vm2327, 1e+30, %v2189
  %v2392 = vsel %vm2328, 1e+30, %v2190
  %v2393 = vsel %vm2329, 1e+30, %v2191
  %v2394 = vsel %vm2330, 1e+30, %v2192
  %v2395 = vsel %vm2331, 1e+30, %v2193
  %v2396 = vsel %vm2332, 1e+30, %v2194
  %v2397 = vsel %vm2333, 1e+30, %v2195
  %v2398 = vsel %vm2334, 1e+30, %v2196
  %v2399 = vsel %vm2335, 1e+30, %v2197
  %v2400 = vsel %vm2336, 1e+30, %v2198
  %v2401 = vsel %vm2337, 1e+30, %v2199
  %v2402 = vsel %vm2338, 1e+30, %v2200
  %v2403 = vsel %vm2339, 1e+30, %v2201
  %v2404 = vsel %vm2340, 1e+30, %v2202
  %v2405 = vsel %vm2341, 1e+30, %v2203
  %v2406 = vsel %vm2342, 1e+30, %v2204
  %v2407 = vsel %vm2343, 1e+30, %v2205
  %v2408 = vsel %vm2344, 1e+30, %v2206
  %v2409 = vsel %vm2345, 1e+30, %v2207
  %v2410 = vsel %vm2346, 1e+30, %v2208
  %v2411 = vsel %vm2347, 1e+30, %v2209
  %v2412 = vsel %vm2348, 1e+30, %v2210
  %v2413 = vsel %vm2349, 1e+30, %v2211
  %v2414 = vsel %vm2350, 1e+30, %v2212
  %v2415 = vsel %vm2351, 1e+30, %v2213
  %v2416 = vsel %vm2352, 1e+30, %v2214
  %v2417 = vsel %vm2353, 1e+30, %v2215
  %v2418 = vsel %vm2354, 1e+30, %v2216
  %v2419 = vsel %vm2355, 1e+30, %v2217
  %v2420 = vsel %vm2356, 1e+30, %v2218
  %v2421 = vsel %vm2357, 1e+30, %v2219
  %v2422 = vsel %vm2358, 1e+30, %v2220
  %v2423 = vsel %vm2359, 1e+30, %v2221
  %v2424 = vsel %vm2360, 1e+30, %v2222
  %v2425 = vsel %vm2361, 1e+30, %v2223
  %v2426 = vsel %vm2362, 1e+30, %v2224
  %v2427 = vsel %vm2363, 1e+30, %v2225
  %v2428 = vld [vmem:[#allocation2] sm:$0xff]
  %v2429 = vld [vmem:[#allocation2 + $0x8] sm:$0xff]
  %v2430 = vld [vmem:[#allocation2 + $0x10] sm:$0xff]
  %v2431 = vld [vmem:[#allocation2 + $0x18] sm:$0xff]
  %v2432 = vld [vmem:[#allocation2 + $0x20] sm:$0xff]
  %v2433 = vld [vmem:[#allocation2 + $0x28] sm:$0xff]
  %v2434 = vld [vmem:[#allocation2 + $0x30] sm:$0xff]
  %v2435 = vld [vmem:[#allocation2 + $0x38] sm:$0xff]
  %v2436 = vld [vmem:[#allocation2 + $0x40] sm:$0xff]
  %v2437 = vld [vmem:[#allocation2 + $0x48] sm:$0xff]
  %v2438 = vld [vmem:[#allocation2 + $0x50] sm:$0xff]
  %v2439 = vld [vmem:[#allocation2 + $0x58] sm:$0xff]
  %v2440 = vld [vmem:[#allocation2 + $0x60] sm:$0xff]
  %v2441 = vld [vmem:[#allocation2 + $0x68] sm:$0xff]
  %v2442 = vld [vmem:[#allocation2 + $0x70] sm:$0xff]
  %v2443 = vld [vmem:[#allocation2 + $0x78] sm:$0xff]
  %v2444 = vld [vmem:[#allocation2 + $0x80] sm:$0xff]
  %v2445 = vld [vmem:[#allocation2 + $0x88] sm:$0xff]
  %v2446 = vld [vmem:[#allocation2 + $0x90] sm:$0xff]
  %v2447 = vld [vmem:[#allocation2 + $0x98] sm:$0xff]
  %v2448 = vld [vmem:[#allocation2 + $0xa0] sm:$0xff]
  %v2449 = vld [vmem:[#allocation2 + $0xa8] sm:$0xff]
  %v2450 = vld [vmem:[#allocation2 + $0xb0] sm:$0xff]
  %v2451 = vld [vmem:[#allocation2 + $0xb8] sm:$0xff]
  %v2452 = vld [vmem:[#allocation2 + $0xc0] sm:$0xff]
  %v2453 = vld [vmem:[#allocation2 + $0xc8] sm:$0xff]
  %v2454 = vld [vmem:[#allocation2 + $0xd0] sm:$0xff]
  %v2455 = vld [vmem:[#allocation2 + $0xd8] sm:$0xff]
  %v2456 = vld [vmem:[#allocation2 + $0xe0] sm:$0xff]
  %v2457 = vld [vmem:[#allocation2 + $0xe8] sm:$0xff]
  %v2458 = vld [vmem:[#allocation2 + $0xf0] sm:$0xff]
  %v2459 = vld [vmem:[#allocation2 + $0xf8] sm:$0xff]
  %v2460 = vadd.s32 %v2295, 256
  %v2557 = vand.u32 %v2428, 4294965248
  %v2558 = vand.u32 %v2364, 4294965248
  %v2559 = vand.u32 %v2365, 4294965248
  %v2560 = vand.u32 %v2429, 4294965248
  %v2561 = vand.u32 %v2366, 4294965248
  %v2562 = vand.u32 %v2367, 4294965248
  %v2563 = vand.u32 %v2430, 4294965248
  %v2564 = vand.u32 %v2368, 4294965248
  %v2565 = vand.u32 %v2369, 4294965248
  %v2566 = vand.u32 %v2431, 4294965248
  %v2567 = vand.u32 %v2370, 4294965248
  %v2568 = vand.u32 %v2371, 4294965248
  %v2569 = vand.u32 %v2432, 4294965248
  %v2570 = vand.u32 %v2372, 4294965248
  %v2571 = vand.u32 %v2373, 4294965248
  %v2572 = vand.u32 %v2433, 4294965248
  %v2573 = vand.u32 %v2374, 4294965248
  %v2574 = vand.u32 %v2375, 4294965248
  %v2575 = vand.u32 %v2434, 4294965248
  %v2576 = vand.u32 %v2376, 4294965248
  %v2577 = vand.u32 %v2377, 4294965248
  %v2578 = vand.u32 %v2435, 4294965248
  %v2579 = vand.u32 %v2378, 4294965248
  %v2580 = vand.u32 %v2379, 4294965248
  %v2581 = vand.u32 %v2436, 4294965248
  %v2582 = vand.u32 %v2380, 4294965248
  %v2583 = vand.u32 %v2381, 4294965248
  %v2584 = vand.u32 %v2437, 4294965248
  %v2585 = vand.u32 %v2382, 4294965248
  %v2586 = vand.u32 %v2383, 4294965248
  %v2587 = vand.u32 %v2438, 4294965248
  %v2588 = vand.u32 %v2384, 4294965248
  %v2589 = vand.u32 %v2385, 4294965248
  %v2590 = vand.u32 %v2439, 4294965248
  %v2591 = vand.u32 %v2386, 4294965248
  %v2592 = vand.u32 %v2387, 4294965248
  %v2593 = vand.u32 %v2440, 4294965248
  %v2594 = vand.u32 %v2388, 4294965248
  %v2595 = vand.u32 %v2389, 4294965248
  %v2596 = vand.u32 %v2441, 4294965248
  %v2597 = vand.u32 %v2390, 4294965248
  %v2598 = vand.u32 %v2391, 4294965248
  %v2599 = vand.u32 %v2442, 4294965248
  %v2600 = vand.u32 %v2392, 4294965248
  %v2601 = vand.u32 %v2393, 4294965248
  %v2602 = vand.u32 %v2443, 4294965248
  %v2603 = vand.u32 %v2394, 4294965248
  %v2604 = vand.u32 %v2395, 4294965248
  %v2605 = vand.u32 %v2444, 4294965248
  %v2606 = vand.u32 %v2396, 4294965248
  %v2607 = vand.u32 %v2397, 4294965248
  %v2608 = vand.u32 %v2445, 4294965248
  %v2609 = vand.u32 %v2398, 4294965248
  %v2610 = vand.u32 %v2399, 4294965248
  %v2611 = vand.u32 %v2446, 4294965248
  %v2612 = vand.u32 %v2400, 4294965248
  %v2613 = vand.u32 %v2401, 4294965248
  %v2614 = vand.u32 %v2447, 4294965248
  %v2615 = vand.u32 %v2402, 4294965248
  %v2616 = vand.u32 %v2403, 4294965248
  %v2617 = vand.u32 %v2448, 4294965248
  %v2618 = vand.u32 %v2404, 4294965248
  %v2619 = vand.u32 %v2405, 4294965248
  %v2620 = vand.u32 %v2449, 4294965248
  %v2621 = vand.u32 %v2406, 4294965248
  %v2622 = vand.u32 %v2407, 4294965248
  %v2623 = vand.u32 %v2450, 4294965248
  %v2624 = vand.u32 %v2408, 4294965248
  %v2625 = vand.u32 %v2409, 4294965248
  %v2626 = vand.u32 %v2451, 4294965248
  %v2627 = vand.u32 %v2410, 4294965248
  %v2628 = vand.u32 %v2411, 4294965248
  %v2629 = vand.u32 %v2452, 4294965248
  %v2630 = vand.u32 %v2412, 4294965248
  %v2631 = vand.u32 %v2413, 4294965248
  %v2632 = vand.u32 %v2453, 4294965248
  %v2633 = vand.u32 %v2414, 4294965248
  %v2634 = vand.u32 %v2415, 4294965248
  %v2635 = vand.u32 %v2454, 4294965248
  %v2636 = vand.u32 %v2416, 4294965248
  %v2637 = vand.u32 %v2417, 4294965248
  %v2638 = vand.u32 %v2455, 4294965248
  %v2639 = vand.u32 %v2418, 4294965248
  %v2640 = vand.u32 %v2419, 4294965248
  %v2641 = vand.u32 %v2456, 4294965248
  %v2642 = vand.u32 %v2420, 4294965248
  %v2643 = vand.u32 %v2421, 4294965248
  %v2644 = vand.u32 %v2457, 4294965248
  %v2645 = vand.u32 %v2422, 4294965248
  %v2646 = vand.u32 %v2423, 4294965248
  %v2647 = vand.u32 %v2458, 4294965248
  %v2648 = vand.u32 %v2424, 4294965248
  %v2649 = vand.u32 %v2425, 4294965248
  %v2650 = vand.u32 %v2459, 4294965248
  %v2651 = vand.u32 %v2426, 4294965248
  %v2652 = vand.u32 %v2427, 4294965248
  %v2653 = vor.u32 %v2557, %v2295
  %v2654 = vor.u32 %v2558, %v2296
  %v2655 = vor.u32 %v2559, %v2460
  %v2656 = vor.u32 %v2560, %v2295
  %v2657 = vor.u32 %v2561, %v2296
  %v2658 = vor.u32 %v2562, %v2460
  %v2659 = vor.u32 %v2563, %v2295
  %v2660 = vor.u32 %v2564, %v2296
  %v2661 = vor.u32 %v2565, %v2460
  %v2662 = vor.u32 %v2566, %v2295
  %v2663 = vor.u32 %v2567, %v2296
  %v2664 = vor.u32 %v2568, %v2460
  %v2665 = vor.u32 %v2569, %v2295
  %v2666 = vor.u32 %v2570, %v2296
  %v2667 = vor.u32 %v2571, %v2460
  %v2668 = vor.u32 %v2572, %v2295
  %v2669 = vor.u32 %v2573, %v2296
  %v2670 = vor.u32 %v2574, %v2460
  %v2671 = vor.u32 %v2575, %v2295
  %v2672 = vor.u32 %v2576, %v2296
  %v2673 = vor.u32 %v2577, %v2460
  %v2674 = vor.u32 %v2578, %v2295
  %v2675 = vor.u32 %v2579, %v2296
  %v2676 = vor.u32 %v2580, %v2460
  %v2677 = vor.u32 %v2581, %v2295
  %v2678 = vor.u32 %v2582, %v2296
  %v2679 = vor.u32 %v2583, %v2460
  %v2680 = vor.u32 %v2584, %v2295
  %v2681 = vor.u32 %v2585, %v2296
  %v2682 = vor.u32 %v2586, %v2460
  %v2683 = vor.u32 %v2587, %v2295
  %v2684 = vor.u32 %v2588, %v2296
  %v2685 = vor.u32 %v2589, %v2460
  %v2686 = vor.u32 %v2590, %v2295
  %v2687 = vor.u32 %v2591, %v2296
  %v2688 = vor.u32 %v2592, %v2460
  %v2689 = vor.u32 %v2593, %v2295
  %v2690 = vor.u32 %v2594, %v2296
  %v2691 = vor.u32 %v2595, %v2460
  %v2692 = vor.u32 %v2596, %v2295
  %v2693 = vor.u32 %v2597, %v2296
  %v2694 = vor.u32 %v2598, %v2460
  %v2695 = vor.u32 %v2599, %v2295
  %v2696 = vor.u32 %v2600, %v2296
  %v2697 = vor.u32 %v2601, %v2460
  %v2698 = vor.u32 %v2602, %v2295
  %v2699 = vor.u32 %v2603, %v2296
  %v2700 = vor.u32 %v2604, %v2460
  %v2701 = vor.u32 %v2605, %v2295
  %v2702 = vor.u32 %v2606, %v2296
  %v2703 = vor.u32 %v2607, %v2460
  %v2704 = vor.u32 %v2608, %v2295
  %v2705 = vor.u32 %v2609, %v2296
  %v2706 = vor.u32 %v2610, %v2460
  %v2707 = vor.u32 %v2611, %v2295
  %v2708 = vor.u32 %v2612, %v2296
  %v2709 = vor.u32 %v2613, %v2460
  %v2710 = vor.u32 %v2614, %v2295
  %v2711 = vor.u32 %v2615, %v2296
  %v2712 = vor.u32 %v2616, %v2460
  %v2713 = vor.u32 %v2617, %v2295
  %v2714 = vor.u32 %v2618, %v2296
  %v2715 = vor.u32 %v2619, %v2460
  %v2716 = vor.u32 %v2620, %v2295
  %v2717 = vor.u32 %v2621, %v2296
  %v2718 = vor.u32 %v2622, %v2460
  %v2719 = vor.u32 %v2623, %v2295
  %v2720 = vor.u32 %v2624, %v2296
  %v2721 = vor.u32 %v2625, %v2460
  %v2722 = vor.u32 %v2626, %v2295
  %v2723 = vor.u32 %v2627, %v2296
  %v2724 = vor.u32 %v2628, %v2460
  %v2725 = vor.u32 %v2629, %v2295
  %v2726 = vor.u32 %v2630, %v2296
  %v2727 = vor.u32 %v2631, %v2460
  %v2728 = vor.u32 %v2632, %v2295
  %v2729 = vor.u32 %v2633, %v2296
  %v2730 = vor.u32 %v2634, %v2460
  %v2731 = vor.u32 %v2635, %v2295
  %v2732 = vor.u32 %v2636, %v2296
  %v2733 = vor.u32 %v2637, %v2460
  %v2734 = vor.u32 %v2638, %v2295
  %v2735 = vor.u32 %v2639, %v2296
  %v2736 = vor.u32 %v2640, %v2460
  %v2737 = vor.u32 %v2641, %v2295
  %v2738 = vor.u32 %v2642, %v2296
  %v2739 = vor.u32 %v2643, %v2460
  %v2740 = vor.u32 %v2644, %v2295
  %v2741 = vor.u32 %v2645, %v2296
  %v2742 = vor.u32 %v2646, %v2460
  %v2743 = vor.u32 %v2647, %v2295
  %v2744 = vor.u32 %v2648, %v2296
  %v2745 = vor.u32 %v2649, %v2460
  %v2746 = vor.u32 %v2650, %v2295
  %v2747 = vor.u32 %v2651, %v2296
  %v2748 = vor.u32 %v2652, %v2460
  %vm2749 = vcmp.lt.s32.totalorder %v2653, %v2654
  %v2750 = vsel %vm2749, %v2653, %v2654
  %vm2751 = vcmp.lt.s32.totalorder %v2750, %v2655
  %v2752 = vsel %vm2751, %v2750, %v2655
  %v2753 = vand.u32 %v2752, 65535
  %v2754 = vshra.s32 %v2752, 16
  %v2755 = vcvt.s32.f32 %v2753
  %v2756 = vcvt.s32.f32 %v2754
  %2757 = vmin.xlane.f32.xlu0 %v2756
  %v2758 = vpop.xlane.xlu0 %2757
  %vm2759 = vcmp.eq.f32.partialorder %v2756, %v2758
  %v2760 = vsel %vm2759, %v2755, inf
  %2761 = vmin.xlane.f32.xlu0 %v2760
  %v2762 = vpop.xlane.xlu0 %2761
  %v2763 = vcvt.f32.s32 %v2762
  %v2764 = vcvt.f32.s32 %v2758
  %v2765 = vshll.u32 %v2764, 16
  %v2766 = vadd.s32 %v2765, %v2763
  %vm2767 = vcmp.lt.s32.totalorder %v2656, %v2657
  %v2768 = vsel %vm2767, %v2656, %v2657
  %vm2769 = vcmp.lt.s32.totalorder %v2768, %v2658
  %v2770 = vsel %vm2769, %v2768, %v2658
  %v2771 = vand.u32 %v2770, 65535
  %v2772 = vshra.s32 %v2770, 16
  %v2773 = vcvt.s32.f32 %v2771
  %v2774 = vcvt.s32.f32 %v2772
  %2775 = vmin.xlane.f32.xlu0 %v2774
  %v2776 = vpop.xlane.xlu0 %2775
  %vm2777 = vcmp.eq.f32.partialorder %v2774, %v2776
  %v2778 = vsel %vm2777, %v2773, inf
  %2779 = vmin.xlane.f32.xlu0 %v2778
  %v2780 = vpop.xlane.xlu0 %2779
  %v2781 = vcvt.f32.s32 %v2780
  %v2782 = vcvt.f32.s32 %v2776
  %v2783 = vshll.u32 %v2782, 16
  %v2784 = vadd.s32 %v2783, %v2781
  %vm2785 = vcmp.lt.s32.totalorder %v2659, %v2660
  %v2786 = vsel %vm2785, %v2659, %v2660
  %vm2787 = vcmp.lt.s32.totalorder %v2786, %v2661
  %v2788 = vsel %vm2787, %v2786, %v2661
  %v2789 = vand.u32 %v2788, 65535
  %v2790 = vshra.s32 %v2788, 16
  %v2791 = vcvt.s32.f32 %v2789
  %v2792 = vcvt.s32.f32 %v2790
  %2793 = vmin.xlane.f32.xlu0 %v2792
  %v2794 = vpop.xlane.xlu0 %2793
  %vm2795 = vcmp.eq.f32.partialorder %v2792, %v2794
  %v2796 = vsel %vm2795, %v2791, inf
  %2797 = vmin.xlane.f32.xlu0 %v2796
  %v2798 = vpop.xlane.xlu0 %2797
  %v2799 = vcvt.f32.s32 %v2798
  %v2800 = vcvt.f32.s32 %v2794
  %v2801 = vshll.u32 %v2800, 16
  %v2802 = vadd.s32 %v2801, %v2799
  %vm2803 = vcmp.lt.s32.totalorder %v2662, %v2663
  %v2804 = vsel %vm2803, %v2662, %v2663
  %vm2805 = vcmp.lt.s32.totalorder %v2804, %v2664
  %v2806 = vsel %vm2805, %v2804, %v2664
  %v2807 = vand.u32 %v2806, 65535
  %v2808 = vshra.s32 %v2806, 16
  %v2809 = vcvt.s32.f32 %v2807
  %v2810 = vcvt.s32.f32 %v2808
  %2811 = vmin.xlane.f32.xlu0 %v2810
  %v2812 = vpop.xlane.xlu0 %2811
  %vm2813 = vcmp.eq.f32.partialorder %v2810, %v2812
  %v2814 = vsel %vm2813, %v2809, inf
  %2815 = vmin.xlane.f32.xlu0 %v2814
  %v2816 = vpop.xlane.xlu0 %2815
  %v2817 = vcvt.f32.s32 %v2816
  %v2818 = vcvt.f32.s32 %v2812
  %v2819 = vshll.u32 %v2818, 16
  %v2820 = vadd.s32 %v2819, %v2817
  %vm2821 = vcmp.lt.s32.totalorder %v2665, %v2666
  %v2822 = vsel %vm2821, %v2665, %v2666
  %vm2823 = vcmp.lt.s32.totalorder %v2822, %v2667
  %v2824 = vsel %vm2823, %v2822, %v2667
  %v2825 = vand.u32 %v2824, 65535
  %v2826 = vshra.s32 %v2824, 16
  %v2827 = vcvt.s32.f32 %v2825
  %v2828 = vcvt.s32.f32 %v2826
  %2829 = vmin.xlane.f32.xlu0 %v2828
  %v2830 = vpop.xlane.xlu0 %2829
  %vm2831 = vcmp.eq.f32.partialorder %v2828, %v2830
  %v2832 = vsel %vm2831, %v2827, inf
  %2833 = vmin.xlane.f32.xlu0 %v2832
  %v2834 = vpop.xlane.xlu0 %2833
  %v2835 = vcvt.f32.s32 %v2834
  %v2836 = vcvt.f32.s32 %v2830
  %v2837 = vshll.u32 %v2836, 16
  %v2838 = vadd.s32 %v2837, %v2835
  %vm2839 = vcmp.lt.s32.totalorder %v2668, %v2669
  %v2840 = vsel %vm2839, %v2668, %v2669
  %vm2841 = vcmp.lt.s32.totalorder %v2840, %v2670
  %v2842 = vsel %vm2841, %v2840, %v2670
  %v2843 = vand.u32 %v2842, 65535
  %v2844 = vshra.s32 %v2842, 16
  %v2845 = vcvt.s32.f32 %v2843
  %v2846 = vcvt.s32.f32 %v2844
  %2847 = vmin.xlane.f32.xlu0 %v2846
  %v2848 = vpop.xlane.xlu0 %2847
  %vm2849 = vcmp.eq.f32.partialorder %v2846, %v2848
  %v2850 = vsel %vm2849, %v2845, inf
  %2851 = vmin.xlane.f32.xlu0 %v2850
  %v2852 = vpop.xlane.xlu0 %2851
  %v2853 = vcvt.f32.s32 %v2852
  %v2854 = vcvt.f32.s32 %v2848
  %v2855 = vshll.u32 %v2854, 16
  %v2856 = vadd.s32 %v2855, %v2853
  %vm2857 = vcmp.lt.s32.totalorder %v2671, %v2672
  %v2858 = vsel %vm2857, %v2671, %v2672
  %vm2859 = vcmp.lt.s32.totalorder %v2858, %v2673
  %v2860 = vsel %vm2859, %v2858, %v2673
  %v2861 = vand.u32 %v2860, 65535
  %v2862 = vshra.s32 %v2860, 16
  %v2863 = vcvt.s32.f32 %v2861
  %v2864 = vcvt.s32.f32 %v2862
  %2865 = vmin.xlane.f32.xlu0 %v2864
  %v2866 = vpop.xlane.xlu0 %2865
  %vm2867 = vcmp.eq.f32.partialorder %v2864, %v2866
  %v2868 = vsel %vm2867, %v2863, inf
  %2869 = vmin.xlane.f32.xlu0 %v2868
  %v2870 = vpop.xlane.xlu0 %2869
  %v2871 = vcvt.f32.s32 %v2870
  %v2872 = vcvt.f32.s32 %v2866
  %v2873 = vshll.u32 %v2872, 16
  %v2874 = vadd.s32 %v2873, %v2871
  %vm2875 = vcmp.lt.s32.totalorder %v2674, %v2675
  %v2876 = vsel %vm2875, %v2674, %v2675
  %vm2877 = vcmp.lt.s32.totalorder %v2876, %v2676
  %v2878 = vsel %vm2877, %v2876, %v2676
  %v2879 = vand.u32 %v2878, 65535
  %v2880 = vshra.s32 %v2878, 16
  %v2881 = vcvt.s32.f32 %v2879
  %v2882 = vcvt.s32.f32 %v2880
  %2883 = vmin.xlane.f32.xlu0 %v2882
  %v2884 = vpop.xlane.xlu0 %2883
  %vm2885 = vcmp.eq.f32.partialorder %v2882, %v2884
  %v2886 = vsel %vm2885, %v2881, inf
  %2887 = vmin.xlane.f32.xlu0 %v2886
  %v2888 = vpop.xlane.xlu0 %2887
  %v2889 = vcvt.f32.s32 %v2888
  %v2890 = vcvt.f32.s32 %v2884
  %v2891 = vshll.u32 %v2890, 16
  %v2892 = vadd.s32 %v2891, %v2889
  %vm2893 = vcmp.lt.s32.totalorder %v2677, %v2678
  %v2894 = vsel %vm2893, %v2677, %v2678
  %vm2895 = vcmp.lt.s32.totalorder %v2894, %v2679
  %v2896 = vsel %vm2895, %v2894, %v2679
  %v2897 = vand.u32 %v2896, 65535
  %v2898 = vshra.s32 %v2896, 16
  %v2899 = vcvt.s32.f32 %v2897
  %v2900 = vcvt.s32.f32 %v2898
  %2901 = vmin.xlane.f32.xlu0 %v2900
  %v2902 = vpop.xlane.xlu0 %2901
  %vm2903 = vcmp.eq.f32.partialorder %v2900, %v2902
  %v2904 = vsel %vm2903, %v2899, inf
  %2905 = vmin.xlane.f32.xlu0 %v2904
  %v2906 = vpop.xlane.xlu0 %2905
  %v2907 = vcvt.f32.s32 %v2906
  %v2908 = vcvt.f32.s32 %v2902
  %v2909 = vshll.u32 %v2908, 16
  %v2910 = vadd.s32 %v2909, %v2907
  %vm2911 = vcmp.lt.s32.totalorder %v2680, %v2681
  %v2912 = vsel %vm2911, %v2680, %v2681
  %vm2913 = vcmp.lt.s32.totalorder %v2912, %v2682
  %v2914 = vsel %vm2913, %v2912, %v2682
  %v2915 = vand.u32 %v2914, 65535
  %v2916 = vshra.s32 %v2914, 16
  %v2917 = vcvt.s32.f32 %v2915
  %v2918 = vcvt.s32.f32 %v2916
  %2919 = vmin.xlane.f32.xlu0 %v2918
  %v2920 = vpop.xlane.xlu0 %2919
  %vm2921 = vcmp.eq.f32.partialorder %v2918, %v2920
  %v2922 = vsel %vm2921, %v2917, inf
  %2923 = vmin.xlane.f32.xlu0 %v2922
  %v2924 = vpop.xlane.xlu0 %2923
  %v2925 = vcvt.f32.s32 %v2924
  %v2926 = vcvt.f32.s32 %v2920
  %v2927 = vshll.u32 %v2926, 16
  %v2928 = vadd.s32 %v2927, %v2925
  %vm2929 = vcmp.lt.s32.totalorder %v2683, %v2684
  %v2930 = vsel %vm2929, %v2683, %v2684
  %vm2931 = vcmp.lt.s32.totalorder %v2930, %v2685
  %v2932 = vsel %vm2931, %v2930, %v2685
  %v2933 = vand.u32 %v2932, 65535
  %v2934 = vshra.s32 %v2932, 16
  %v2935 = vcvt.s32.f32 %v2933
  %v2936 = vcvt.s32.f32 %v2934
  %2937 = vmin.xlane.f32.xlu0 %v2936
  %v2938 = vpop.xlane.xlu0 %2937
  %vm2939 = vcmp.eq.f32.partialorder %v2936, %v2938
  %v2940 = vsel %vm2939, %v2935, inf
  %2941 = vmin.xlane.f32.xlu0 %v2940
  %v2942 = vpop.xlane.xlu0 %2941
  %v2943 = vcvt.f32.s32 %v2942
  %v2944 = vcvt.f32.s32 %v2938
  %v2945 = vshll.u32 %v2944, 16
  %v2946 = vadd.s32 %v2945, %v2943
  %vm2947 = vcmp.lt.s32.totalorder %v2686, %v2687
  %v2948 = vsel %vm2947, %v2686, %v2687
  %vm2949 = vcmp.lt.s32.totalorder %v2948, %v2688
  %v2950 = vsel %vm2949, %v2948, %v2688
  %v2951 = vand.u32 %v2950, 65535
  %v2952 = vshra.s32 %v2950, 16
  %v2953 = vcvt.s32.f32 %v2951
  %v2954 = vcvt.s32.f32 %v2952
  %2955 = vmin.xlane.f32.xlu0 %v2954
  %v2956 = vpop.xlane.xlu0 %2955
  %vm2957 = vcmp.eq.f32.partialorder %v2954, %v2956
  %v2958 = vsel %vm2957, %v2953, inf
  %2959 = vmin.xlane.f32.xlu0 %v2958
  %v2960 = vpop.xlane.xlu0 %2959
  %v2961 = vcvt.f32.s32 %v2960
  %v2962 = vcvt.f32.s32 %v2956
  %v2963 = vshll.u32 %v2962, 16
  %v2964 = vadd.s32 %v2963, %v2961
  %vm2965 = vcmp.lt.s32.totalorder %v2689, %v2690
  %v2966 = vsel %vm2965, %v2689, %v2690
  %vm2967 = vcmp.lt.s32.totalorder %v2966, %v2691
  %v2968 = vsel %vm2967, %v2966, %v2691
  %v2969 = vand.u32 %v2968, 65535
  %v2970 = vshra.s32 %v2968, 16
  %v2971 = vcvt.s32.f32 %v2969
  %v2972 = vcvt.s32.f32 %v2970
  %2973 = vmin.xlane.f32.xlu0 %v2972
  %v2974 = vpop.xlane.xlu0 %2973
  %vm2975 = vcmp.eq.f32.partialorder %v2972, %v2974
  %v2976 = vsel %vm2975, %v2971, inf
  %2977 = vmin.xlane.f32.xlu0 %v2976
  %v2978 = vpop.xlane.xlu0 %2977
  %v2979 = vcvt.f32.s32 %v2978
  %v2980 = vcvt.f32.s32 %v2974
  %v2981 = vshll.u32 %v2980, 16
  %v2982 = vadd.s32 %v2981, %v2979
  %vm2983 = vcmp.lt.s32.totalorder %v2692, %v2693
  %v2984 = vsel %vm2983, %v2692, %v2693
  %vm2985 = vcmp.lt.s32.totalorder %v2984, %v2694
  %v2986 = vsel %vm2985, %v2984, %v2694
  %v2987 = vand.u32 %v2986, 65535
  %v2988 = vshra.s32 %v2986, 16
  %v2989 = vcvt.s32.f32 %v2987
  %v2990 = vcvt.s32.f32 %v2988
  %2991 = vmin.xlane.f32.xlu0 %v2990
  %v2992 = vpop.xlane.xlu0 %2991
  %vm2993 = vcmp.eq.f32.partialorder %v2990, %v2992
  %v2994 = vsel %vm2993, %v2989, inf
  %2995 = vmin.xlane.f32.xlu0 %v2994
  %v2996 = vpop.xlane.xlu0 %2995
  %v2997 = vcvt.f32.s32 %v2996
  %v2998 = vcvt.f32.s32 %v2992
  %v2999 = vshll.u32 %v2998, 16
  %v3000 = vadd.s32 %v2999, %v2997
  %vm3001 = vcmp.lt.s32.totalorder %v2695, %v2696
  %v3002 = vsel %vm3001, %v2695, %v2696
  %vm3003 = vcmp.lt.s32.totalorder %v3002, %v2697
  %v3004 = vsel %vm3003, %v3002, %v2697
  %v3005 = vand.u32 %v3004, 65535
  %v3006 = vshra.s32 %v3004, 16
  %v3007 = vcvt.s32.f32 %v3005
  %v3008 = vcvt.s32.f32 %v3006
  %3009 = vmin.xlane.f32.xlu0 %v3008
  %v3010 = vpop.xlane.xlu0 %3009
  %vm3011 = vcmp.eq.f32.partialorder %v3008, %v3010
  %v3012 = vsel %vm3011, %v3007, inf
  %3013 = vmin.xlane.f32.xlu0 %v3012
  %v3014 = vpop.xlane.xlu0 %3013
  %v3015 = vcvt.f32.s32 %v3014
  %v3016 = vcvt.f32.s32 %v3010
  %v3017 = vshll.u32 %v3016, 16
  %v3018 = vadd.s32 %v3017, %v3015
  %vm3019 = vcmp.lt.s32.totalorder %v2698, %v2699
  %v3020 = vsel %vm3019, %v2698, %v2699
  %vm3021 = vcmp.lt.s32.totalorder %v3020, %v2700
  %v3022 = vsel %vm3021, %v3020, %v2700
  %v3023 = vand.u32 %v3022, 65535
  %v3024 = vshra.s32 %v3022, 16
  %v3025 = vcvt.s32.f32 %v3023
  %v3026 = vcvt.s32.f32 %v3024
  %3027 = vmin.xlane.f32.xlu0 %v3026
  %v3028 = vpop.xlane.xlu0 %3027
  %vm3029 = vcmp.eq.f32.partialorder %v3026, %v3028
  %v3030 = vsel %vm3029, %v3025, inf
  %3031 = vmin.xlane.f32.xlu0 %v3030
  %v3032 = vpop.xlane.xlu0 %3031
  %v3033 = vcvt.f32.s32 %v3032
  %v3034 = vcvt.f32.s32 %v3028
  %v3035 = vshll.u32 %v3034, 16
  %v3036 = vadd.s32 %v3035, %v3033
  %vm3037 = vcmp.lt.s32.totalorder %v2701, %v2702
  %v3038 = vsel %vm3037, %v2701, %v2702
  %vm3039 = vcmp.lt.s32.totalorder %v3038, %v2703
  %v3040 = vsel %vm3039, %v3038, %v2703
  %v3041 = vand.u32 %v3040, 65535
  %v3042 = vshra.s32 %v3040, 16
  %v3043 = vcvt.s32.f32 %v3041
  %v3044 = vcvt.s32.f32 %v3042
  %3045 = vmin.xlane.f32.xlu0 %v3044
  %v3046 = vpop.xlane.xlu0 %3045
  %vm3047 = vcmp.eq.f32.partialorder %v3044, %v3046
  %v3048 = vsel %vm3047, %v3043, inf
  %3049 = vmin.xlane.f32.xlu0 %v3048
  %v3050 = vpop.xlane.xlu0 %3049
  %v3051 = vcvt.f32.s32 %v3050
  %v3052 = vcvt.f32.s32 %v3046
  %v3053 = vshll.u32 %v3052, 16
  %v3054 = vadd.s32 %v3053, %v3051
  %vm3055 = vcmp.lt.s32.totalorder %v2704, %v2705
  %v3056 = vsel %vm3055, %v2704, %v2705
  %vm3057 = vcmp.lt.s32.totalorder %v3056, %v2706
  %v3058 = vsel %vm3057, %v3056, %v2706
  %v3059 = vand.u32 %v3058, 65535
  %v3060 = vshra.s32 %v3058, 16
  %v3061 = vcvt.s32.f32 %v3059
  %v3062 = vcvt.s32.f32 %v3060
  %3063 = vmin.xlane.f32.xlu0 %v3062
  %v3064 = vpop.xlane.xlu0 %3063
  %vm3065 = vcmp.eq.f32.partialorder %v3062, %v3064
  %v3066 = vsel %vm3065, %v3061, inf
  %3067 = vmin.xlane.f32.xlu0 %v3066
  %v3068 = vpop.xlane.xlu0 %3067
  %v3069 = vcvt.f32.s32 %v3068
  %v3070 = vcvt.f32.s32 %v3064
  %v3071 = vshll.u32 %v3070, 16
  %v3072 = vadd.s32 %v3071, %v3069
  %vm3073 = vcmp.lt.s32.totalorder %v2707, %v2708
  %v3074 = vsel %vm3073, %v2707, %v2708
  %vm3075 = vcmp.lt.s32.totalorder %v3074, %v2709
  %v3076 = vsel %vm3075, %v3074, %v2709
  %v3077 = vand.u32 %v3076, 65535
  %v3078 = vshra.s32 %v3076, 16
  %v3079 = vcvt.s32.f32 %v3077
  %v3080 = vcvt.s32.f32 %v3078
  %3081 = vmin.xlane.f32.xlu0 %v3080
  %v3082 = vpop.xlane.xlu0 %3081
  %vm3083 = vcmp.eq.f32.partialorder %v3080, %v3082
  %v3084 = vsel %vm3083, %v3079, inf
  %3085 = vmin.xlane.f32.xlu0 %v3084
  %v3086 = vpop.xlane.xlu0 %3085
  %v3087 = vcvt.f32.s32 %v3086
  %v3088 = vcvt.f32.s32 %v3082
  %v3089 = vshll.u32 %v3088, 16
  %v3090 = vadd.s32 %v3089, %v3087
  %vm3091 = vcmp.lt.s32.totalorder %v2710, %v2711
  %v3092 = vsel %vm3091, %v2710, %v2711
  %vm3093 = vcmp.lt.s32.totalorder %v3092, %v2712
  %v3094 = vsel %vm3093, %v3092, %v2712
  %v3095 = vand.u32 %v3094, 65535
  %v3096 = vshra.s32 %v3094, 16
  %v3097 = vcvt.s32.f32 %v3095
  %v3098 = vcvt.s32.f32 %v3096
  %3099 = vmin.xlane.f32.xlu0 %v3098
  %v3100 = vpop.xlane.xlu0 %3099
  %vm3101 = vcmp.eq.f32.partialorder %v3098, %v3100
  %v3102 = vsel %vm3101, %v3097, inf
  %3103 = vmin.xlane.f32.xlu0 %v3102
  %v3104 = vpop.xlane.xlu0 %3103
  %v3105 = vcvt.f32.s32 %v3104
  %v3106 = vcvt.f32.s32 %v3100
  %v3107 = vshll.u32 %v3106, 16
  %v3108 = vadd.s32 %v3107, %v3105
  %vm3109 = vcmp.lt.s32.totalorder %v2713, %v2714
  %v3110 = vsel %vm3109, %v2713, %v2714
  %vm3111 = vcmp.lt.s32.totalorder %v3110, %v2715
  %v3112 = vsel %vm3111, %v3110, %v2715
  %v3113 = vand.u32 %v3112, 65535
  %v3114 = vshra.s32 %v3112, 16
  %v3115 = vcvt.s32.f32 %v3113
  %v3116 = vcvt.s32.f32 %v3114
  %3117 = vmin.xlane.f32.xlu0 %v3116
  %v3118 = vpop.xlane.xlu0 %3117
  %vm3119 = vcmp.eq.f32.partialorder %v3116, %v3118
  %v3120 = vsel %vm3119, %v3115, inf
  %3121 = vmin.xlane.f32.xlu0 %v3120
  %v3122 = vpop.xlane.xlu0 %3121
  %v3123 = vcvt.f32.s32 %v3122
  %v3124 = vcvt.f32.s32 %v3118
  %v3125 = vshll.u32 %v3124, 16
  %v3126 = vadd.s32 %v3125, %v3123
  %vm3127 = vcmp.lt.s32.totalorder %v2716, %v2717
  %v3128 = vsel %vm3127, %v2716, %v2717
  %vm3129 = vcmp.lt.s32.totalorder %v3128, %v2718
  %v3130 = vsel %vm3129, %v3128, %v2718
  %v3131 = vand.u32 %v3130, 65535
  %v3132 = vshra.s32 %v3130, 16
  %v3133 = vcvt.s32.f32 %v3131
  %v3134 = vcvt.s32.f32 %v3132
  %3135 = vmin.xlane.f32.xlu0 %v3134
  %v3136 = vpop.xlane.xlu0 %3135
  %vm3137 = vcmp.eq.f32.partialorder %v3134, %v3136
  %v3138 = vsel %vm3137, %v3133, inf
  %3139 = vmin.xlane.f32.xlu0 %v3138
  %v3140 = vpop.xlane.xlu0 %3139
  %v3141 = vcvt.f32.s32 %v3140
  %v3142 = vcvt.f32.s32 %v3136
  %v3143 = vshll.u32 %v3142, 16
  %v3144 = vadd.s32 %v3143, %v3141
  %vm3145 = vcmp.lt.s32.totalorder %v2719, %v2720
  %v3146 = vsel %vm3145, %v2719, %v2720
  %vm3147 = vcmp.lt.s32.totalorder %v3146, %v2721
  %v3148 = vsel %vm3147, %v3146, %v2721
  %v3149 = vand.u32 %v3148, 65535
  %v3150 = vshra.s32 %v3148, 16
  %v3151 = vcvt.s32.f32 %v3149
  %v3152 = vcvt.s32.f32 %v3150
  %3153 = vmin.xlane.f32.xlu0 %v3152
  %v3154 = vpop.xlane.xlu0 %3153
  %vm3155 = vcmp.eq.f32.partialorder %v3152, %v3154
  %v3156 = vsel %vm3155, %v3151, inf
  %3157 = vmin.xlane.f32.xlu0 %v3156
  %v3158 = vpop.xlane.xlu0 %3157
  %v3159 = vcvt.f32.s32 %v3158
  %v3160 = vcvt.f32.s32 %v3154
  %v3161 = vshll.u32 %v3160, 16
  %v3162 = vadd.s32 %v3161, %v3159
  %vm3163 = vcmp.lt.s32.totalorder %v2722, %v2723
  %v3164 = vsel %vm3163, %v2722, %v2723
  %vm3165 = vcmp.lt.s32.totalorder %v3164, %v2724
  %v3166 = vsel %vm3165, %v3164, %v2724
  %v3167 = vand.u32 %v3166, 65535
  %v3168 = vshra.s32 %v3166, 16
  %v3169 = vcvt.s32.f32 %v3167
  %v3170 = vcvt.s32.f32 %v3168
  %3171 = vmin.xlane.f32.xlu0 %v3170
  %v3172 = vpop.xlane.xlu0 %3171
  %vm3173 = vcmp.eq.f32.partialorder %v3170, %v3172
  %v3174 = vsel %vm3173, %v3169, inf
  %3175 = vmin.xlane.f32.xlu0 %v3174
  %v3176 = vpop.xlane.xlu0 %3175
  %v3177 = vcvt.f32.s32 %v3176
  %v3178 = vcvt.f32.s32 %v3172
  %v3179 = vshll.u32 %v3178, 16
  %v3180 = vadd.s32 %v3179, %v3177
  %vm3181 = vcmp.lt.s32.totalorder %v2725, %v2726
  %v3182 = vsel %vm3181, %v2725, %v2726
  %vm3183 = vcmp.lt.s32.totalorder %v3182, %v2727
  %v3184 = vsel %vm3183, %v3182, %v2727
  %v3185 = vand.u32 %v3184, 65535
  %v3186 = vshra.s32 %v3184, 16
  %v3187 = vcvt.s32.f32 %v3185
  %v3188 = vcvt.s32.f32 %v3186
  %3189 = vmin.xlane.f32.xlu0 %v3188
  %v3190 = vpop.xlane.xlu0 %3189
  %vm3191 = vcmp.eq.f32.partialorder %v3188, %v3190
  %v3192 = vsel %vm3191, %v3187, inf
  %3193 = vmin.xlane.f32.xlu0 %v3192
  %v3194 = vpop.xlane.xlu0 %3193
  %v3195 = vcvt.f32.s32 %v3194
  %v3196 = vcvt.f32.s32 %v3190
  %v3197 = vshll.u32 %v3196, 16
  %v3198 = vadd.s32 %v3197, %v3195
  %vm3199 = vcmp.lt.s32.totalorder %v2728, %v2729
  %v3200 = vsel %vm3199, %v2728, %v2729
  %vm3201 = vcmp.lt.s32.totalorder %v3200, %v2730
  %v3202 = vsel %vm3201, %v3200, %v2730
  %v3203 = vand.u32 %v3202, 65535
  %v3204 = vshra.s32 %v3202, 16
  %v3205 = vcvt.s32.f32 %v3203
  %v3206 = vcvt.s32.f32 %v3204
  %3207 = vmin.xlane.f32.xlu0 %v3206
  %v3208 = vpop.xlane.xlu0 %3207
  %vm3209 = vcmp.eq.f32.partialorder %v3206, %v3208
  %v3210 = vsel %vm3209, %v3205, inf
  %3211 = vmin.xlane.f32.xlu0 %v3210
  %v3212 = vpop.xlane.xlu0 %3211
  %v3213 = vcvt.f32.s32 %v3212
  %v3214 = vcvt.f32.s32 %v3208
  %v3215 = vshll.u32 %v3214, 16
  %v3216 = vadd.s32 %v3215, %v3213
  %vm3217 = vcmp.lt.s32.totalorder %v2731, %v2732
  %v3218 = vsel %vm3217, %v2731, %v2732
  %vm3219 = vcmp.lt.s32.totalorder %v3218, %v2733
  %v3220 = vsel %vm3219, %v3218, %v2733
  %v3221 = vand.u32 %v3220, 65535
  %v3222 = vshra.s32 %v3220, 16
  %v3223 = vcvt.s32.f32 %v3221
  %v3224 = vcvt.s32.f32 %v3222
  %3225 = vmin.xlane.f32.xlu0 %v3224
  %v3226 = vpop.xlane.xlu0 %3225
  %vm3227 = vcmp.eq.f32.partialorder %v3224, %v3226
  %v3228 = vsel %vm3227, %v3223, inf
  %3229 = vmin.xlane.f32.xlu0 %v3228
  %v3230 = vpop.xlane.xlu0 %3229
  %v3231 = vcvt.f32.s32 %v3230
  %v3232 = vcvt.f32.s32 %v3226
  %v3233 = vshll.u32 %v3232, 16
  %v3234 = vadd.s32 %v3233, %v3231
  %vm3235 = vcmp.lt.s32.totalorder %v2734, %v2735
  %v3236 = vsel %vm3235, %v2734, %v2735
  %vm3237 = vcmp.lt.s32.totalorder %v3236, %v2736
  %v3238 = vsel %vm3237, %v3236, %v2736
  %v3239 = vand.u32 %v3238, 65535
  %v3240 = vshra.s32 %v3238, 16
  %v3241 = vcvt.s32.f32 %v3239
  %v3242 = vcvt.s32.f32 %v3240
  %3243 = vmin.xlane.f32.xlu0 %v3242
  %v3244 = vpop.xlane.xlu0 %3243
  %vm3245 = vcmp.eq.f32.partialorder %v3242, %v3244
  %v3246 = vsel %vm3245, %v3241, inf
  %3247 = vmin.xlane.f32.xlu0 %v3246
  %v3248 = vpop.xlane.xlu0 %3247
  %v3249 = vcvt.f32.s32 %v3248
  %v3250 = vcvt.f32.s32 %v3244
  %v3251 = vshll.u32 %v3250, 16
  %v3252 = vadd.s32 %v3251, %v3249
  %vm3253 = vcmp.lt.s32.totalorder %v2737, %v2738
  %v3254 = vsel %vm3253, %v2737, %v2738
  %vm3255 = vcmp.lt.s32.totalorder %v3254, %v2739
  %v3256 = vsel %vm3255, %v3254, %v2739
  %v3257 = vand.u32 %v3256, 65535
  %v3258 = vshra.s32 %v3256, 16
  %v3259 = vcvt.s32.f32 %v3257
  %v3260 = vcvt.s32.f32 %v3258
  %3261 = vmin.xlane.f32.xlu0 %v3260
  %v3262 = vpop.xlane.xlu0 %3261
  %vm3263 = vcmp.eq.f32.partialorder %v3260, %v3262
  %v3264 = vsel %vm3263, %v3259, inf
  %3265 = vmin.xlane.f32.xlu0 %v3264
  %v3266 = vpop.xlane.xlu0 %3265
  %v3267 = vcvt.f32.s32 %v3266
  %v3268 = vcvt.f32.s32 %v3262
  %v3269 = vshll.u32 %v3268, 16
  %v3270 = vadd.s32 %v3269, %v3267
  %vm3271 = vcmp.lt.s32.totalorder %v2740, %v2741
  %v3272 = vsel %vm3271, %v2740, %v2741
  %vm3273 = vcmp.lt.s32.totalorder %v3272, %v2742
  %v3274 = vsel %vm3273, %v3272, %v2742
  %v3275 = vand.u32 %v3274, 65535
  %v3276 = vshra.s32 %v3274, 16
  %v3277 = vcvt.s32.f32 %v3275
  %v3278 = vcvt.s32.f32 %v3276
  %3279 = vmin.xlane.f32.xlu0 %v3278
  %v3280 = vpop.xlane.xlu0 %3279
  %vm3281 = vcmp.eq.f32.partialorder %v3278, %v3280
  %v3282 = vsel %vm3281, %v3277, inf
  %3283 = vmin.xlane.f32.xlu0 %v3282
  %v3284 = vpop.xlane.xlu0 %3283
  %v3285 = vcvt.f32.s32 %v3284
  %v3286 = vcvt.f32.s32 %v3280
  %v3287 = vshll.u32 %v3286, 16
  %v3288 = vadd.s32 %v3287, %v3285
  %vm3289 = vcmp.lt.s32.totalorder %v2743, %v2744
  %v3290 = vsel %vm3289, %v2743, %v2744
  %vm3291 = vcmp.lt.s32.totalorder %v3290, %v2745
  %v3292 = vsel %vm3291, %v3290, %v2745
  %v3293 = vand.u32 %v3292, 65535
  %v3294 = vshra.s32 %v3292, 16
  %v3295 = vcvt.s32.f32 %v3293
  %v3296 = vcvt.s32.f32 %v3294
  %3297 = vmin.xlane.f32.xlu0 %v3296
  %v3298 = vpop.xlane.xlu0 %3297
  %vm3299 = vcmp.eq.f32.partialorder %v3296, %v3298
  %v3300 = vsel %vm3299, %v3295, inf
  %3301 = vmin.xlane.f32.xlu0 %v3300
  %v3302 = vpop.xlane.xlu0 %3301
  %v3303 = vcvt.f32.s32 %v3302
  %v3304 = vcvt.f32.s32 %v3298
  %v3305 = vshll.u32 %v3304, 16
  %v3306 = vadd.s32 %v3305, %v3303
  %vm3307 = vcmp.lt.s32.totalorder %v2746, %v2747
  %v3308 = vsel %vm3307, %v2746, %v2747
  %vm3309 = vcmp.lt.s32.totalorder %v3308, %v2748
  %v3310 = vsel %vm3309, %v3308, %v2748
  %v3311 = vand.u32 %v3310, 65535
  %v3312 = vshra.s32 %v3310, 16
  %v3313 = vcvt.s32.f32 %v3311
  %v3314 = vcvt.s32.f32 %v3312
  %3315 = vmin.xlane.f32.xlu0 %v3314
  %v3316 = vpop.xlane.xlu0 %3315
  %vm3317 = vcmp.eq.f32.partialorder %v3314, %v3316
  %v3318 = vsel %vm3317, %v3313, inf
  %3319 = vmin.xlane.f32.xlu0 %v3318
  %v3320 = vpop.xlane.xlu0 %3319
  %v3321 = vcvt.f32.s32 %v3320
  %v3322 = vcvt.f32.s32 %v3316
  %v3323 = vshll.u32 %v3322, 16
  %v3324 = vadd.s32 %v3323, %v3321
  %v3325 = vand.u32 %v2766, 4294965248
  %v3326 = vand.u32 %v2784, 4294965248
  %v3327 = vand.u32 %v2802, 4294965248
  %v3328 = vand.u32 %v2820, 4294965248
  %v3329 = vand.u32 %v2838, 4294965248
  %v3330 = vand.u32 %v2856, 4294965248
  %v3331 = vand.u32 %v2874, 4294965248
  %v3332 = vand.u32 %v2892, 4294965248
  %v3333 = vand.u32 %v2910, 4294965248
  %v3334 = vand.u32 %v2928, 4294965248
  %v3335 = vand.u32 %v2946, 4294965248
  %v3336 = vand.u32 %v2964, 4294965248
  %v3337 = vand.u32 %v2982, 4294965248
  %v3338 = vand.u32 %v3000, 4294965248
  %v3339 = vand.u32 %v3018, 4294965248
  %v3340 = vand.u32 %v3036, 4294965248
  %v3341 = vand.u32 %v3054, 4294965248
  %v3342 = vand.u32 %v3072, 4294965248
  %v3343 = vand.u32 %v3090, 4294965248
  %v3344 = vand.u32 %v3108, 4294965248
  %v3345 = vand.u32 %v3126, 4294965248
  %v3346 = vand.u32 %v3144, 4294965248
  %v3347 = vand.u32 %v3162, 4294965248
  %v3348 = vand.u32 %v3180, 4294965248
  %v3349 = vand.u32 %v3198, 4294965248
  %v3350 = vand.u32 %v3216, 4294965248
  %v3351 = vand.u32 %v3234, 4294965248
  %v3352 = vand.u32 %v3252, 4294965248
  %v3353 = vand.u32 %v3270, 4294965248
  %v3354 = vand.u32 %v3288, 4294965248
  %v3355 = vand.u32 %v3306, 4294965248
  %v3356 = vand.u32 %v3324, 4294965248
  %vm3389 = vcmp.eq.s32.totalorder %v2295, 0
  %v3390 = vsel %vm3389, %v3325, 1e+30
  %v3391 = vsel %vm3389, %v3326, 1e+30
  %v3392 = vsel %vm3389, %v3327, 1e+30
  %v3393 = vsel %vm3389, %v3328, 1e+30
  %v3394 = vsel %vm3389, %v3329, 1e+30
  %v3395 = vsel %vm3389, %v3330, 1e+30
  %v3396 = vsel %vm3389, %v3331, 1e+30
  %v3397 = vsel %vm3389, %v3332, 1e+30
  %v3398 = vsel %vm3389, %v3333, 1e+30
  %v3399 = vsel %vm3389, %v3334, 1e+30
  %v3400 = vsel %vm3389, %v3335, 1e+30
  %v3401 = vsel %vm3389, %v3336, 1e+30
  %v3402 = vsel %vm3389, %v3337, 1e+30
  %v3403 = vsel %vm3389, %v3338, 1e+30
  %v3404 = vsel %vm3389, %v3339, 1e+30
  %v3405 = vsel %vm3389, %v3340, 1e+30
  %v3406 = vsel %vm3389, %v3341, 1e+30
  %v3407 = vsel %vm3389, %v3342, 1e+30
  %v3408 = vsel %vm3389, %v3343, 1e+30
  %v3409 = vsel %vm3389, %v3344, 1e+30
  %v3410 = vsel %vm3389, %v3345, 1e+30
  %v3411 = vsel %vm3389, %v3346, 1e+30
  %v3412 = vsel %vm3389, %v3347, 1e+30
  %v3413 = vsel %vm3389, %v3348, 1e+30
  %v3414 = vsel %vm3389, %v3349, 1e+30
  %v3415 = vsel %vm3389, %v3350, 1e+30
  %v3416 = vsel %vm3389, %v3351, 1e+30
  %v3417 = vsel %vm3389, %v3352, 1e+30
  %v3418 = vsel %vm3389, %v3353, 1e+30
  %v3419 = vsel %vm3389, %v3354, 1e+30
  %v3420 = vsel %vm3389, %v3355, 1e+30
  %v3421 = vsel %vm3389, %v3356, 1e+30
  %vm3422 = vcmp.eq.s32.totalorder %v2653, %v2766
  %vm3423 = vcmp.eq.s32.totalorder %v2654, %v2766
  %vm3424 = vcmp.eq.s32.totalorder %v2655, %v2766
  %vm3425 = vcmp.eq.s32.totalorder %v2656, %v2784
  %vm3426 = vcmp.eq.s32.totalorder %v2657, %v2784
  %vm3427 = vcmp.eq.s32.totalorder %v2658, %v2784
  %vm3428 = vcmp.eq.s32.totalorder %v2659, %v2802
  %vm3429 = vcmp.eq.s32.totalorder %v2660, %v2802
  %vm3430 = vcmp.eq.s32.totalorder %v2661, %v2802
  %vm3431 = vcmp.eq.s32.totalorder %v2662, %v2820
  %vm3432 = vcmp.eq.s32.totalorder %v2663, %v2820
  %vm3433 = vcmp.eq.s32.totalorder %v2664, %v2820
  %vm3434 = vcmp.eq.s32.totalorder %v2665, %v2838
  %vm3435 = vcmp.eq.s32.totalorder %v2666, %v2838
  %vm3436 = vcmp.eq.s32.totalorder %v2667, %v2838
  %vm3437 = vcmp.eq.s32.totalorder %v2668, %v2856
  %vm3438 = vcmp.eq.s32.totalorder %v2669, %v2856
  %vm3439 = vcmp.eq.s32.totalorder %v2670, %v2856
  %vm3440 = vcmp.eq.s32.totalorder %v2671, %v2874
  %vm3441 = vcmp.eq.s32.totalorder %v2672, %v2874
  %vm3442 = vcmp.eq.s32.totalorder %v2673, %v2874
  %vm3443 = vcmp.eq.s32.totalorder %v2674, %v2892
  %vm3444 = vcmp.eq.s32.totalorder %v2675, %v2892
  %vm3445 = vcmp.eq.s32.totalorder %v2676, %v2892
  %vm3446 = vcmp.eq.s32.totalorder %v2677, %v2910
  %vm3447 = vcmp.eq.s32.totalorder %v2678, %v2910
  %vm3448 = vcmp.eq.s32.totalorder %v2679, %v2910
  %vm3449 = vcmp.eq.s32.totalorder %v2680, %v2928
  %vm3450 = vcmp.eq.s32.totalorder %v2681, %v2928
  %vm3451 = vcmp.eq.s32.totalorder %v2682, %v2928
  %vm3452 = vcmp.eq.s32.totalorder %v2683, %v2946
  %vm3453 = vcmp.eq.s32.totalorder %v2684, %v2946
  %vm3454 = vcmp.eq.s32.totalorder %v2685, %v2946
  %vm3455 = vcmp.eq.s32.totalorder %v2686, %v2964
  %vm3456 = vcmp.eq.s32.totalorder %v2687, %v2964
  %vm3457 = vcmp.eq.s32.totalorder %v2688, %v2964
  %vm3458 = vcmp.eq.s32.totalorder %v2689, %v2982
  %vm3459 = vcmp.eq.s32.totalorder %v2690, %v2982
  %vm3460 = vcmp.eq.s32.totalorder %v2691, %v2982
  %vm3461 = vcmp.eq.s32.totalorder %v2692, %v3000
  %vm3462 = vcmp.eq.s32.totalorder %v2693, %v3000
  %vm3463 = vcmp.eq.s32.totalorder %v2694, %v3000
  %vm3464 = vcmp.eq.s32.totalorder %v2695, %v3018
  %vm3465 = vcmp.eq.s32.totalorder %v2696, %v3018
  %vm3466 = vcmp.eq.s32.totalorder %v2697, %v3018
  %vm3467 = vcmp.eq.s32.totalorder %v2698, %v3036
  %vm3468 = vcmp.eq.s32.totalorder %v2699, %v3036
  %vm3469 = vcmp.eq.s32.totalorder %v2700, %v3036
  %vm3470 = vcmp.eq.s32.totalorder %v2701, %v3054
  %vm3471 = vcmp.eq.s32.totalorder %v2702, %v3054
  %vm3472 = vcmp.eq.s32.totalorder %v2703, %v3054
  %vm3473 = vcmp.eq.s32.totalorder %v2704, %v3072
  %vm3474 = vcmp.eq.s32.totalorder %v2705, %v3072
  %vm3475 = vcmp.eq.s32.totalorder %v2706, %v3072
  %vm3476 = vcmp.eq.s32.totalorder %v2707, %v3090
  %vm3477 = vcmp.eq.s32.totalorder %v2708, %v3090
  %vm3478 = vcmp.eq.s32.totalorder %v2709, %v3090
  %vm3479 = vcmp.eq.s32.totalorder %v2710, %v3108
  %vm3480 = vcmp.eq.s32.totalorder %v2711, %v3108
  %vm3481 = vcmp.eq.s32.totalorder %v2712, %v3108
  %vm3482 = vcmp.eq.s32.totalorder %v2713, %v3126
  %vm3483 = vcmp.eq.s32.totalorder %v2714, %v3126
  %vm3484 = vcmp.eq.s32.totalorder %v2715, %v3126
  %vm3485 = vcmp.eq.s32.totalorder %v2716, %v3144
  %vm3486 = vcmp.eq.s32.totalorder %v2717, %v3144
  %vm3487 = vcmp.eq.s32.totalorder %v2718, %v3144
  %vm3488 = vcmp.eq.s32.totalorder %v2719, %v3162
  %vm3489 = vcmp.eq.s32.totalorder %v2720, %v3162
  %vm3490 = vcmp.eq.s32.totalorder %v2721, %v3162
  %vm3491 = vcmp.eq.s32.totalorder %v2722, %v3180
  %vm3492 = vcmp.eq.s32.totalorder %v2723, %v3180
  %vm3493 = vcmp.eq.s32.totalorder %v2724, %v3180
  %vm3494 = vcmp.eq.s32.totalorder %v2725, %v3198
  %vm3495 = vcmp.eq.s32.totalorder %v2726, %v3198
  %vm3496 = vcmp.eq.s32.totalorder %v2727, %v3198
  %vm3497 = vcmp.eq.s32.totalorder %v2728, %v3216
  %vm3498 = vcmp.eq.s32.totalorder %v2729, %v3216
  %vm3499 = vcmp.eq.s32.totalorder %v2730, %v3216
  %vm3500 = vcmp.eq.s32.totalorder %v2731, %v3234
  %vm3501 = vcmp.eq.s32.totalorder %v2732, %v3234
  %vm3502 = vcmp.eq.s32.totalorder %v2733, %v3234
  %vm3503 = vcmp.eq.s32.totalorder %v2734, %v3252
  %vm3504 = vcmp.eq.s32.totalorder %v2735, %v3252
  %vm3505 = vcmp.eq.s32.totalorder %v2736, %v3252
  %vm3506 = vcmp.eq.s32.totalorder %v2737, %v3270
  %vm3507 = vcmp.eq.s32.totalorder %v2738, %v3270
  %vm3508 = vcmp.eq.s32.totalorder %v2739, %v3270
  %vm3509 = vcmp.eq.s32.totalorder %v2740, %v3288
  %vm3510 = vcmp.eq.s32.totalorder %v2741, %v3288
  %vm3511 = vcmp.eq.s32.totalorder %v2742, %v3288
  %vm3512 = vcmp.eq.s32.totalorder %v2743, %v3306
  %vm3513 = vcmp.eq.s32.totalorder %v2744, %v3306
  %vm3514 = vcmp.eq.s32.totalorder %v2745, %v3306
  %vm3515 = vcmp.eq.s32.totalorder %v2746, %v3324
  %vm3516 = vcmp.eq.s32.totalorder %v2747, %v3324
  %vm3517 = vcmp.eq.s32.totalorder %v2748, %v3324
  %v3518 = vsel %vm3422, 2130706432, %v2653
  %v3519 = vsel %vm3423, 2130706432, %v2654
  %v3520 = vsel %vm3424, 2130706432, %v2655
  %v3521 = vsel %vm3425, 2130706432, %v2656
  %v3522 = vsel %vm3426, 2130706432, %v2657
  %v3523 = vsel %vm3427, 2130706432, %v2658
  %v3524 = vsel %vm3428, 2130706432, %v2659
  %v3525 = vsel %vm3429, 2130706432, %v2660
  %v3526 = vsel %vm3430, 2130706432, %v2661
  %v3527 = vsel %vm3431, 2130706432, %v2662
  %v3528 = vsel %vm3432, 2130706432, %v2663
  %v3529 = vsel %vm3433, 2130706432, %v2664
  %v3530 = vsel %vm3434, 2130706432, %v2665
  %v3531 = vsel %vm3435, 2130706432, %v2666
  %v3532 = vsel %vm3436, 2130706432, %v2667
  %v3533 = vsel %vm3437, 2130706432, %v2668
  %v3534 = vsel %vm3438, 2130706432, %v2669
  %v3535 = vsel %vm3439, 2130706432, %v2670
  %v3536 = vsel %vm3440, 2130706432, %v2671
  %v3537 = vsel %vm3441, 2130706432, %v2672
  %v3538 = vsel %vm3442, 2130706432, %v2673
  %v3539 = vsel %vm3443, 2130706432, %v2674
  %v3540 = vsel %vm3444, 2130706432, %v2675
  %v3541 = vsel %vm3445, 2130706432, %v2676
  %v3542 = vsel %vm3446, 2130706432, %v2677
  %v3543 = vsel %vm3447, 2130706432, %v2678
  %v3544 = vsel %vm3448, 2130706432, %v2679
  %v3545 = vsel %vm3449, 2130706432, %v2680
  %v3546 = vsel %vm3450, 2130706432, %v2681
  %v3547 = vsel %vm3451, 2130706432, %v2682
  %v3548 = vsel %vm3452, 2130706432, %v2683
  %v3549 = vsel %vm3453, 2130706432, %v2684
  %v3550 = vsel %vm3454, 2130706432, %v2685
  %v3551 = vsel %vm3455, 2130706432, %v2686
  %v3552 = vsel %vm3456, 2130706432, %v2687
  %v3553 = vsel %vm3457, 2130706432, %v2688
  %v3554 = vsel %vm3458, 2130706432, %v2689
  %v3555 = vsel %vm3459, 2130706432, %v2690
  %v3556 = vsel %vm3460, 2130706432, %v2691
  %v3557 = vsel %vm3461, 2130706432, %v2692
  %v3558 = vsel %vm3462, 2130706432, %v2693
  %v3559 = vsel %vm3463, 2130706432, %v2694
  %v3560 = vsel %vm3464, 2130706432, %v2695
  %v3561 = vsel %vm3465, 2130706432, %v2696
  %v3562 = vsel %vm3466, 2130706432, %v2697
  %v3563 = vsel %vm3467, 2130706432, %v2698
  %v3564 = vsel %vm3468, 2130706432, %v2699
  %v3565 = vsel %vm3469, 2130706432, %v2700
  %v3566 = vsel %vm3470, 2130706432, %v2701
  %v3567 = vsel %vm3471, 2130706432, %v2702
  %v3568 = vsel %vm3472, 2130706432, %v2703
  %v3569 = vsel %vm3473, 2130706432, %v2704
  %v3570 = vsel %vm3474, 2130706432, %v2705
  %v3571 = vsel %vm3475, 2130706432, %v2706
  %v3572 = vsel %vm3476, 2130706432, %v2707
  %v3573 = vsel %vm3477, 2130706432, %v2708
  %v3574 = vsel %vm3478, 2130706432, %v2709
  %v3575 = vsel %vm3479, 2130706432, %v2710
  %v3576 = vsel %vm3480, 2130706432, %v2711
  %v3577 = vsel %vm3481, 2130706432, %v2712
  %v3578 = vsel %vm3482, 2130706432, %v2713
  %v3579 = vsel %vm3483, 2130706432, %v2714
  %v3580 = vsel %vm3484, 2130706432, %v2715
  %v3581 = vsel %vm3485, 2130706432, %v2716
  %v3582 = vsel %vm3486, 2130706432, %v2717
  %v3583 = vsel %vm3487, 2130706432, %v2718
  %v3584 = vsel %vm3488, 2130706432, %v2719
  %v3585 = vsel %vm3489, 2130706432, %v2720
  %v3586 = vsel %vm3490, 2130706432, %v2721
  %v3587 = vsel %vm3491, 2130706432, %v2722
  %v3588 = vsel %vm3492, 2130706432, %v2723
  %v3589 = vsel %vm3493, 2130706432, %v2724
  %v3590 = vsel %vm3494, 2130706432, %v2725
  %v3591 = vsel %vm3495, 2130706432, %v2726
  %v3592 = vsel %vm3496, 2130706432, %v2727
  %v3593 = vsel %vm3497, 2130706432, %v2728
  %v3594 = vsel %vm3498, 2130706432, %v2729
  %v3595 = vsel %vm3499, 2130706432, %v2730
  %v3596 = vsel %vm3500, 2130706432, %v2731
  %v3597 = vsel %vm3501, 2130706432, %v2732
  %v3598 = vsel %vm3502, 2130706432, %v2733
  %v3599 = vsel %vm3503, 2130706432, %v2734
  %v3600 = vsel %vm3504, 2130706432, %v2735
  %v3601 = vsel %vm3505, 2130706432, %v2736
  %v3602 = vsel %vm3506, 2130706432, %v2737
  %v3603 = vsel %vm3507, 2130706432, %v2738
  %v3604 = vsel %vm3508, 2130706432, %v2739
  %v3605 = vsel %vm3509, 2130706432, %v2740
  %v3606 = vsel %vm3510, 2130706432, %v2741
  %v3607 = vsel %vm3511, 2130706432, %v2742
  %v3608 = vsel %vm3512, 2130706432, %v2743
  %v3609 = vsel %vm3513, 2130706432, %v2744
  %v3610 = vsel %vm3514, 2130706432, %v2745
  %v3611 = vsel %vm3515, 2130706432, %v2746
  %v3612 = vsel %vm3516, 2130706432, %v2747
  %v3613 = vsel %vm3517, 2130706432, %v2748
  %vm3614 = vcmp.lt.s32.totalorder %v3518, %v3519
  %v3615 = vsel %vm3614, %v3518, %v3519
  %vm3616 = vcmp.lt.s32.totalorder %v3615, %v3520
  %v3617 = vsel %vm3616, %v3615, %v3520
  %v3618 = vand.u32 %v3617, 65535
  %v3619 = vshra.s32 %v3617, 16
  %v3620 = vcvt.s32.f32 %v3618
  %v3621 = vcvt.s32.f32 %v3619
  %3622 = vmin.xlane.f32.xlu0 %v3621
  %v3623 = vpop.xlane.xlu0 %3622
  %vm3624 = vcmp.eq.f32.partialorder %v3621, %v3623
  %v3625 = vsel %vm3624, %v3620, inf
  %3626 = vmin.xlane.f32.xlu0 %v3625
  %v3627 = vpop.xlane.xlu0 %3626
  %v3628 = vcvt.f32.s32 %v3627
  %v3629 = vcvt.f32.s32 %v3623
  %v3630 = vshll.u32 %v3629, 16
  %v3631 = vadd.s32 %v3630, %v3628
  %vm3632 = vcmp.lt.s32.totalorder %v3521, %v3522
  %v3633 = vsel %vm3632, %v3521, %v3522
  %vm3634 = vcmp.lt.s32.totalorder %v3633, %v3523
  %v3635 = vsel %vm3634, %v3633, %v3523
  %v3636 = vand.u32 %v3635, 65535
  %v3637 = vshra.s32 %v3635, 16
  %v3638 = vcvt.s32.f32 %v3636
  %v3639 = vcvt.s32.f32 %v3637
  %3640 = vmin.xlane.f32.xlu0 %v3639
  %v3641 = vpop.xlane.xlu0 %3640
  %vm3642 = vcmp.eq.f32.partialorder %v3639, %v3641
  %v3643 = vsel %vm3642, %v3638, inf
  %3644 = vmin.xlane.f32.xlu0 %v3643
  %v3645 = vpop.xlane.xlu0 %3644
  %v3646 = vcvt.f32.s32 %v3645
  %v3647 = vcvt.f32.s32 %v3641
  %v3648 = vshll.u32 %v3647, 16
  %v3649 = vadd.s32 %v3648, %v3646
  %vm3650 = vcmp.lt.s32.totalorder %v3524, %v3525
  %v3651 = vsel %vm3650, %v3524, %v3525
  %vm3652 = vcmp.lt.s32.totalorder %v3651, %v3526
  %v3653 = vsel %vm3652, %v3651, %v3526
  %v3654 = vand.u32 %v3653, 65535
  %v3655 = vshra.s32 %v3653, 16
  %v3656 = vcvt.s32.f32 %v3654
  %v3657 = vcvt.s32.f32 %v3655
  %3658 = vmin.xlane.f32.xlu0 %v3657
  %v3659 = vpop.xlane.xlu0 %3658
  %vm3660 = vcmp.eq.f32.partialorder %v3657, %v3659
  %v3661 = vsel %vm3660, %v3656, inf
  %3662 = vmin.xlane.f32.xlu0 %v3661
  %v3663 = vpop.xlane.xlu0 %3662
  %v3664 = vcvt.f32.s32 %v3663
  %v3665 = vcvt.f32.s32 %v3659
  %v3666 = vshll.u32 %v3665, 16
  %v3667 = vadd.s32 %v3666, %v3664
  %vm3668 = vcmp.lt.s32.totalorder %v3527, %v3528
  %v3669 = vsel %vm3668, %v3527, %v3528
  %vm3670 = vcmp.lt.s32.totalorder %v3669, %v3529
  %v3671 = vsel %vm3670, %v3669, %v3529
  %v3672 = vand.u32 %v3671, 65535
  %v3673 = vshra.s32 %v3671, 16
  %v3674 = vcvt.s32.f32 %v3672
  %v3675 = vcvt.s32.f32 %v3673
  %3676 = vmin.xlane.f32.xlu0 %v3675
  %v3677 = vpop.xlane.xlu0 %3676
  %vm3678 = vcmp.eq.f32.partialorder %v3675, %v3677
  %v3679 = vsel %vm3678, %v3674, inf
  %3680 = vmin.xlane.f32.xlu0 %v3679
  %v3681 = vpop.xlane.xlu0 %3680
  %v3682 = vcvt.f32.s32 %v3681
  %v3683 = vcvt.f32.s32 %v3677
  %v3684 = vshll.u32 %v3683, 16
  %v3685 = vadd.s32 %v3684, %v3682
  %vm3686 = vcmp.lt.s32.totalorder %v3530, %v3531
  %v3687 = vsel %vm3686, %v3530, %v3531
  %vm3688 = vcmp.lt.s32.totalorder %v3687, %v3532
  %v3689 = vsel %vm3688, %v3687, %v3532
  %v3690 = vand.u32 %v3689, 65535
  %v3691 = vshra.s32 %v3689, 16
  %v3692 = vcvt.s32.f32 %v3690
  %v3693 = vcvt.s32.f32 %v3691
  %3694 = vmin.xlane.f32.xlu0 %v3693
  %v3695 = vpop.xlane.xlu0 %3694
  %vm3696 = vcmp.eq.f32.partialorder %v3693, %v3695
  %v3697 = vsel %vm3696, %v3692, inf
  %3698 = vmin.xlane.f32.xlu0 %v3697
  %v3699 = vpop.xlane.xlu0 %3698
  %v3700 = vcvt.f32.s32 %v3699
  %v3701 = vcvt.f32.s32 %v3695
  %v3702 = vshll.u32 %v3701, 16
  %v3703 = vadd.s32 %v3702, %v3700
  %vm3704 = vcmp.lt.s32.totalorder %v3533, %v3534
  %v3705 = vsel %vm3704, %v3533, %v3534
  %vm3706 = vcmp.lt.s32.totalorder %v3705, %v3535
  %v3707 = vsel %vm3706, %v3705, %v3535
  %v3708 = vand.u32 %v3707, 65535
  %v3709 = vshra.s32 %v3707, 16
  %v3710 = vcvt.s32.f32 %v3708
  %v3711 = vcvt.s32.f32 %v3709
  %3712 = vmin.xlane.f32.xlu0 %v3711
  %v3713 = vpop.xlane.xlu0 %3712
  %vm3714 = vcmp.eq.f32.partialorder %v3711, %v3713
  %v3715 = vsel %vm3714, %v3710, inf
  %3716 = vmin.xlane.f32.xlu0 %v3715
  %v3717 = vpop.xlane.xlu0 %3716
  %v3718 = vcvt.f32.s32 %v3717
  %v3719 = vcvt.f32.s32 %v3713
  %v3720 = vshll.u32 %v3719, 16
  %v3721 = vadd.s32 %v3720, %v3718
  %vm3722 = vcmp.lt.s32.totalorder %v3536, %v3537
  %v3723 = vsel %vm3722, %v3536, %v3537
  %vm3724 = vcmp.lt.s32.totalorder %v3723, %v3538
  %v3725 = vsel %vm3724, %v3723, %v3538
  %v3726 = vand.u32 %v3725, 65535
  %v3727 = vshra.s32 %v3725, 16
  %v3728 = vcvt.s32.f32 %v3726
  %v3729 = vcvt.s32.f32 %v3727
  %3730 = vmin.xlane.f32.xlu0 %v3729
  %v3731 = vpop.xlane.xlu0 %3730
  %vm3732 = vcmp.eq.f32.partialorder %v3729, %v3731
  %v3733 = vsel %vm3732, %v3728, inf
  %3734 = vmin.xlane.f32.xlu0 %v3733
  %v3735 = vpop.xlane.xlu0 %3734
  %v3736 = vcvt.f32.s32 %v3735
  %v3737 = vcvt.f32.s32 %v3731
  %v3738 = vshll.u32 %v3737, 16
  %v3739 = vadd.s32 %v3738, %v3736
  %vm3740 = vcmp.lt.s32.totalorder %v3539, %v3540
  %v3741 = vsel %vm3740, %v3539, %v3540
  %vm3742 = vcmp.lt.s32.totalorder %v3741, %v3541
  %v3743 = vsel %vm3742, %v3741, %v3541
  %v3744 = vand.u32 %v3743, 65535
  %v3745 = vshra.s32 %v3743, 16
  %v3746 = vcvt.s32.f32 %v3744
  %v3747 = vcvt.s32.f32 %v3745
  %3748 = vmin.xlane.f32.xlu0 %v3747
  %v3749 = vpop.xlane.xlu0 %3748
  %vm3750 = vcmp.eq.f32.partialorder %v3747, %v3749
  %v3751 = vsel %vm3750, %v3746, inf
  %3752 = vmin.xlane.f32.xlu0 %v3751
  %v3753 = vpop.xlane.xlu0 %3752
  %v3754 = vcvt.f32.s32 %v3753
  %v3755 = vcvt.f32.s32 %v3749
  %v3756 = vshll.u32 %v3755, 16
  %v3757 = vadd.s32 %v3756, %v3754
  %vm3758 = vcmp.lt.s32.totalorder %v3542, %v3543
  %v3759 = vsel %vm3758, %v3542, %v3543
  %vm3760 = vcmp.lt.s32.totalorder %v3759, %v3544
  %v3761 = vsel %vm3760, %v3759, %v3544
  %v3762 = vand.u32 %v3761, 65535
  %v3763 = vshra.s32 %v3761, 16
  %v3764 = vcvt.s32.f32 %v3762
  %v3765 = vcvt.s32.f32 %v3763
  %3766 = vmin.xlane.f32.xlu0 %v3765
  %v3767 = vpop.xlane.xlu0 %3766
  %vm3768 = vcmp.eq.f32.partialorder %v3765, %v3767
  %v3769 = vsel %vm3768, %v3764, inf
  %3770 = vmin.xlane.f32.xlu0 %v3769
  %v3771 = vpop.xlane.xlu0 %3770
  %v3772 = vcvt.f32.s32 %v3771
  %v3773 = vcvt.f32.s32 %v3767
  %v3774 = vshll.u32 %v3773, 16
  %v3775 = vadd.s32 %v3774, %v3772
  %vm3776 = vcmp.lt.s32.totalorder %v3545, %v3546
  %v3777 = vsel %vm3776, %v3545, %v3546
  %vm3778 = vcmp.lt.s32.totalorder %v3777, %v3547
  %v3779 = vsel %vm3778, %v3777, %v3547
  %v3780 = vand.u32 %v3779, 65535
  %v3781 = vshra.s32 %v3779, 16
  %v3782 = vcvt.s32.f32 %v3780
  %v3783 = vcvt.s32.f32 %v3781
  %3784 = vmin.xlane.f32.xlu0 %v3783
  %v3785 = vpop.xlane.xlu0 %3784
  %vm3786 = vcmp.eq.f32.partialorder %v3783, %v3785
  %v3787 = vsel %vm3786, %v3782, inf
  %3788 = vmin.xlane.f32.xlu0 %v3787
  %v3789 = vpop.xlane.xlu0 %3788
  %v3790 = vcvt.f32.s32 %v3789
  %v3791 = vcvt.f32.s32 %v3785
  %v3792 = vshll.u32 %v3791, 16
  %v3793 = vadd.s32 %v3792, %v3790
  %vm3794 = vcmp.lt.s32.totalorder %v3548, %v3549
  %v3795 = vsel %vm3794, %v3548, %v3549
  %vm3796 = vcmp.lt.s32.totalorder %v3795, %v3550
  %v3797 = vsel %vm3796, %v3795, %v3550
  %v3798 = vand.u32 %v3797, 65535
  %v3799 = vshra.s32 %v3797, 16
  %v3800 = vcvt.s32.f32 %v3798
  %v3801 = vcvt.s32.f32 %v3799
  %3802 = vmin.xlane.f32.xlu0 %v3801
  %v3803 = vpop.xlane.xlu0 %3802
  %vm3804 = vcmp.eq.f32.partialorder %v3801, %v3803
  %v3805 = vsel %vm3804, %v3800, inf
  %3806 = vmin.xlane.f32.xlu0 %v3805
  %v3807 = vpop.xlane.xlu0 %3806
  %v3808 = vcvt.f32.s32 %v3807
  %v3809 = vcvt.f32.s32 %v3803
  %v3810 = vshll.u32 %v3809, 16
  %v3811 = vadd.s32 %v3810, %v3808
  %vm3812 = vcmp.lt.s32.totalorder %v3551, %v3552
  %v3813 = vsel %vm3812, %v3551, %v3552
  %vm3814 = vcmp.lt.s32.totalorder %v3813, %v3553
  %v3815 = vsel %vm3814, %v3813, %v3553
  %v3816 = vand.u32 %v3815, 65535
  %v3817 = vshra.s32 %v3815, 16
  %v3818 = vcvt.s32.f32 %v3816
  %v3819 = vcvt.s32.f32 %v3817
  %3820 = vmin.xlane.f32.xlu0 %v3819
  %v3821 = vpop.xlane.xlu0 %3820
  %vm3822 = vcmp.eq.f32.partialorder %v3819, %v3821
  %v3823 = vsel %vm3822, %v3818, inf
  %3824 = vmin.xlane.f32.xlu0 %v3823
  %v3825 = vpop.xlane.xlu0 %3824
  %v3826 = vcvt.f32.s32 %v3825
  %v3827 = vcvt.f32.s32 %v3821
  %v3828 = vshll.u32 %v3827, 16
  %v3829 = vadd.s32 %v3828, %v3826
  %vm3830 = vcmp.lt.s32.totalorder %v3554, %v3555
  %v3831 = vsel %vm3830, %v3554, %v3555
  %vm3832 = vcmp.lt.s32.totalorder %v3831, %v3556
  %v3833 = vsel %vm3832, %v3831, %v3556
  %v3834 = vand.u32 %v3833, 65535
  %v3835 = vshra.s32 %v3833, 16
  %v3836 = vcvt.s32.f32 %v3834
  %v3837 = vcvt.s32.f32 %v3835
  %3838 = vmin.xlane.f32.xlu0 %v3837
  %v3839 = vpop.xlane.xlu0 %3838
  %vm3840 = vcmp.eq.f32.partialorder %v3837, %v3839
  %v3841 = vsel %vm3840, %v3836, inf
  %3842 = vmin.xlane.f32.xlu0 %v3841
  %v3843 = vpop.xlane.xlu0 %3842
  %v3844 = vcvt.f32.s32 %v3843
  %v3845 = vcvt.f32.s32 %v3839
  %v3846 = vshll.u32 %v3845, 16
  %v3847 = vadd.s32 %v3846, %v3844
  %vm3848 = vcmp.lt.s32.totalorder %v3557, %v3558
  %v3849 = vsel %vm3848, %v3557, %v3558
  %vm3850 = vcmp.lt.s32.totalorder %v3849, %v3559
  %v3851 = vsel %vm3850, %v3849, %v3559
  %v3852 = vand.u32 %v3851, 65535
  %v3853 = vshra.s32 %v3851, 16
  %v3854 = vcvt.s32.f32 %v3852
  %v3855 = vcvt.s32.f32 %v3853
  %3856 = vmin.xlane.f32.xlu0 %v3855
  %v3857 = vpop.xlane.xlu0 %3856
  %vm3858 = vcmp.eq.f32.partialorder %v3855, %v3857
  %v3859 = vsel %vm3858, %v3854, inf
  %3860 = vmin.xlane.f32.xlu0 %v3859
  %v3861 = vpop.xlane.xlu0 %3860
  %v3862 = vcvt.f32.s32 %v3861
  %v3863 = vcvt.f32.s32 %v3857
  %v3864 = vshll.u32 %v3863, 16
  %v3865 = vadd.s32 %v3864, %v3862
  %vm3866 = vcmp.lt.s32.totalorder %v3560, %v3561
  %v3867 = vsel %vm3866, %v3560, %v3561
  %vm3868 = vcmp.lt.s32.totalorder %v3867, %v3562
  %v3869 = vsel %vm3868, %v3867, %v3562
  %v3870 = vand.u32 %v3869, 65535
  %v3871 = vshra.s32 %v3869, 16
  %v3872 = vcvt.s32.f32 %v3870
  %v3873 = vcvt.s32.f32 %v3871
  %3874 = vmin.xlane.f32.xlu0 %v3873
  %v3875 = vpop.xlane.xlu0 %3874
  %vm3876 = vcmp.eq.f32.partialorder %v3873, %v3875
  %v3877 = vsel %vm3876, %v3872, inf
  %3878 = vmin.xlane.f32.xlu0 %v3877
  %v3879 = vpop.xlane.xlu0 %3878
  %v3880 = vcvt.f32.s32 %v3879
  %v3881 = vcvt.f32.s32 %v3875
  %v3882 = vshll.u32 %v3881, 16
  %v3883 = vadd.s32 %v3882, %v3880
  %vm3884 = vcmp.lt.s32.totalorder %v3563, %v3564
  %v3885 = vsel %vm3884, %v3563, %v3564
  %vm3886 = vcmp.lt.s32.totalorder %v3885, %v3565
  %v3887 = vsel %vm3886, %v3885, %v3565
  %v3888 = vand.u32 %v3887, 65535
  %v3889 = vshra.s32 %v3887, 16
  %v3890 = vcvt.s32.f32 %v3888
  %v3891 = vcvt.s32.f32 %v3889
  %3892 = vmin.xlane.f32.xlu0 %v3891
  %v3893 = vpop.xlane.xlu0 %3892
  %vm3894 = vcmp.eq.f32.partialorder %v3891, %v3893
  %v3895 = vsel %vm3894, %v3890, inf
  %3896 = vmin.xlane.f32.xlu0 %v3895
  %v3897 = vpop.xlane.xlu0 %3896
  %v3898 = vcvt.f32.s32 %v3897
  %v3899 = vcvt.f32.s32 %v3893
  %v3900 = vshll.u32 %v3899, 16
  %v3901 = vadd.s32 %v3900, %v3898
  %vm3902 = vcmp.lt.s32.totalorder %v3566, %v3567
  %v3903 = vsel %vm3902, %v3566, %v3567
  %vm3904 = vcmp.lt.s32.totalorder %v3903, %v3568
  %v3905 = vsel %vm3904, %v3903, %v3568
  %v3906 = vand.u32 %v3905, 65535
  %v3907 = vshra.s32 %v3905, 16
  %v3908 = vcvt.s32.f32 %v3906
  %v3909 = vcvt.s32.f32 %v3907
  %3910 = vmin.xlane.f32.xlu0 %v3909
  %v3911 = vpop.xlane.xlu0 %3910
  %vm3912 = vcmp.eq.f32.partialorder %v3909, %v3911
  %v3913 = vsel %vm3912, %v3908, inf
  %3914 = vmin.xlane.f32.xlu0 %v3913
  %v3915 = vpop.xlane.xlu0 %3914
  %v3916 = vcvt.f32.s32 %v3915
  %v3917 = vcvt.f32.s32 %v3911
  %v3918 = vshll.u32 %v3917, 16
  %v3919 = vadd.s32 %v3918, %v3916
  %vm3920 = vcmp.lt.s32.totalorder %v3569, %v3570
  %v3921 = vsel %vm3920, %v3569, %v3570
  %vm3922 = vcmp.lt.s32.totalorder %v3921, %v3571
  %v3923 = vsel %vm3922, %v3921, %v3571
  %v3924 = vand.u32 %v3923, 65535
  %v3925 = vshra.s32 %v3923, 16
  %v3926 = vcvt.s32.f32 %v3924
  %v3927 = vcvt.s32.f32 %v3925
  %3928 = vmin.xlane.f32.xlu0 %v3927
  %v3929 = vpop.xlane.xlu0 %3928
  %vm3930 = vcmp.eq.f32.partialorder %v3927, %v3929
  %v3931 = vsel %vm3930, %v3926, inf
  %3932 = vmin.xlane.f32.xlu0 %v3931
  %v3933 = vpop.xlane.xlu0 %3932
  %v3934 = vcvt.f32.s32 %v3933
  %v3935 = vcvt.f32.s32 %v3929
  %v3936 = vshll.u32 %v3935, 16
  %v3937 = vadd.s32 %v3936, %v3934
  %vm3938 = vcmp.lt.s32.totalorder %v3572, %v3573
  %v3939 = vsel %vm3938, %v3572, %v3573
  %vm3940 = vcmp.lt.s32.totalorder %v3939, %v3574
  %v3941 = vsel %vm3940, %v3939, %v3574
  %v3942 = vand.u32 %v3941, 65535
  %v3943 = vshra.s32 %v3941, 16
  %v3944 = vcvt.s32.f32 %v3942
  %v3945 = vcvt.s32.f32 %v3943
  %3946 = vmin.xlane.f32.xlu0 %v3945
  %v3947 = vpop.xlane.xlu0 %3946
  %vm3948 = vcmp.eq.f32.partialorder %v3945, %v3947
  %v3949 = vsel %vm3948, %v3944, inf
  %3950 = vmin.xlane.f32.xlu0 %v3949
  %v3951 = vpop.xlane.xlu0 %3950
  %v3952 = vcvt.f32.s32 %v3951
  %v3953 = vcvt.f32.s32 %v3947
  %v3954 = vshll.u32 %v3953, 16
  %v3955 = vadd.s32 %v3954, %v3952
  %vm3956 = vcmp.lt.s32.totalorder %v3575, %v3576
  %v3957 = vsel %vm3956, %v3575, %v3576
  %vm3958 = vcmp.lt.s32.totalorder %v3957, %v3577
  %v3959 = vsel %vm3958, %v3957, %v3577
  %v3960 = vand.u32 %v3959, 65535
  %v3961 = vshra.s32 %v3959, 16
  %v3962 = vcvt.s32.f32 %v3960
  %v3963 = vcvt.s32.f32 %v3961
  %3964 = vmin.xlane.f32.xlu0 %v3963
  %v3965 = vpop.xlane.xlu0 %3964
  %vm3966 = vcmp.eq.f32.partialorder %v3963, %v3965
  %v3967 = vsel %vm3966, %v3962, inf
  %3968 = vmin.xlane.f32.xlu0 %v3967
  %v3969 = vpop.xlane.xlu0 %3968
  %v3970 = vcvt.f32.s32 %v3969
  %v3971 = vcvt.f32.s32 %v3965
  %v3972 = vshll.u32 %v3971, 16
  %v3973 = vadd.s32 %v3972, %v3970
  %vm3974 = vcmp.lt.s32.totalorder %v3578, %v3579
  %v3975 = vsel %vm3974, %v3578, %v3579
  %vm3976 = vcmp.lt.s32.totalorder %v3975, %v3580
  %v3977 = vsel %vm3976, %v3975, %v3580
  %v3978 = vand.u32 %v3977, 65535
  %v3979 = vshra.s32 %v3977, 16
  %v3980 = vcvt.s32.f32 %v3978
  %v3981 = vcvt.s32.f32 %v3979
  %3982 = vmin.xlane.f32.xlu0 %v3981
  %v3983 = vpop.xlane.xlu0 %3982
  %vm3984 = vcmp.eq.f32.partialorder %v3981, %v3983
  %v3985 = vsel %vm3984, %v3980, inf
  %3986 = vmin.xlane.f32.xlu0 %v3985
  %v3987 = vpop.xlane.xlu0 %3986
  %v3988 = vcvt.f32.s32 %v3987
  %v3989 = vcvt.f32.s32 %v3983
  %v3990 = vshll.u32 %v3989, 16
  %v3991 = vadd.s32 %v3990, %v3988
  %vm3992 = vcmp.lt.s32.totalorder %v3581, %v3582
  %v3993 = vsel %vm3992, %v3581, %v3582
  %vm3994 = vcmp.lt.s32.totalorder %v3993, %v3583
  %v3995 = vsel %vm3994, %v3993, %v3583
  %v3996 = vand.u32 %v3995, 65535
  %v3997 = vshra.s32 %v3995, 16
  %v3998 = vcvt.s32.f32 %v3996
  %v3999 = vcvt.s32.f32 %v3997
  %4000 = vmin.xlane.f32.xlu0 %v3999
  %v4001 = vpop.xlane.xlu0 %4000
  %vm4002 = vcmp.eq.f32.partialorder %v3999, %v4001
  %v4003 = vsel %vm4002, %v3998, inf
  %4004 = vmin.xlane.f32.xlu0 %v4003
  %v4005 = vpop.xlane.xlu0 %4004
  %v4006 = vcvt.f32.s32 %v4005
  %v4007 = vcvt.f32.s32 %v4001
  %v4008 = vshll.u32 %v4007, 16
  %v4009 = vadd.s32 %v4008, %v4006
  %vm4010 = vcmp.lt.s32.totalorder %v3584, %v3585
  %v4011 = vsel %vm4010, %v3584, %v3585
  %vm4012 = vcmp.lt.s32.totalorder %v4011, %v3586
  %v4013 = vsel %vm4012, %v4011, %v3586
  %v4014 = vand.u32 %v4013, 65535
  %v4015 = vshra.s32 %v4013, 16
  %v4016 = vcvt.s32.f32 %v4014
  %v4017 = vcvt.s32.f32 %v4015
  %4018 = vmin.xlane.f32.xlu0 %v4017
  %v4019 = vpop.xlane.xlu0 %4018
  %vm4020 = vcmp.eq.f32.partialorder %v4017, %v4019
  %v4021 = vsel %vm4020, %v4016, inf
  %4022 = vmin.xlane.f32.xlu0 %v4021
  %v4023 = vpop.xlane.xlu0 %4022
  %v4024 = vcvt.f32.s32 %v4023
  %v4025 = vcvt.f32.s32 %v4019
  %v4026 = vshll.u32 %v4025, 16
  %v4027 = vadd.s32 %v4026, %v4024
  %vm4028 = vcmp.lt.s32.totalorder %v3587, %v3588
  %v4029 = vsel %vm4028, %v3587, %v3588
  %vm4030 = vcmp.lt.s32.totalorder %v4029, %v3589
  %v4031 = vsel %vm4030, %v4029, %v3589
  %v4032 = vand.u32 %v4031, 65535
  %v4033 = vshra.s32 %v4031, 16
  %v4034 = vcvt.s32.f32 %v4032
  %v4035 = vcvt.s32.f32 %v4033
  %4036 = vmin.xlane.f32.xlu0 %v4035
  %v4037 = vpop.xlane.xlu0 %4036
  %vm4038 = vcmp.eq.f32.partialorder %v4035, %v4037
  %v4039 = vsel %vm4038, %v4034, inf
  %4040 = vmin.xlane.f32.xlu0 %v4039
  %v4041 = vpop.xlane.xlu0 %4040
  %v4042 = vcvt.f32.s32 %v4041
  %v4043 = vcvt.f32.s32 %v4037
  %v4044 = vshll.u32 %v4043, 16
  %v4045 = vadd.s32 %v4044, %v4042
  %vm4046 = vcmp.lt.s32.totalorder %v3590, %v3591
  %v4047 = vsel %vm4046, %v3590, %v3591
  %vm4048 = vcmp.lt.s32.totalorder %v4047, %v3592
  %v4049 = vsel %vm4048, %v4047, %v3592
  %v4050 = vand.u32 %v4049, 65535
  %v4051 = vshra.s32 %v4049, 16
  %v4052 = vcvt.s32.f32 %v4050
  %v4053 = vcvt.s32.f32 %v4051
  %4054 = vmin.xlane.f32.xlu0 %v4053
  %v4055 = vpop.xlane.xlu0 %4054
  %vm4056 = vcmp.eq.f32.partialorder %v4053, %v4055
  %v4057 = vsel %vm4056, %v4052, inf
  %4058 = vmin.xlane.f32.xlu0 %v4057
  %v4059 = vpop.xlane.xlu0 %4058
  %v4060 = vcvt.f32.s32 %v4059
  %v4061 = vcvt.f32.s32 %v4055
  %v4062 = vshll.u32 %v4061, 16
  %v4063 = vadd.s32 %v4062, %v4060
  %vm4064 = vcmp.lt.s32.totalorder %v3593, %v3594
  %v4065 = vsel %vm4064, %v3593, %v3594
  %vm4066 = vcmp.lt.s32.totalorder %v4065, %v3595
  %v4067 = vsel %vm4066, %v4065, %v3595
  %v4068 = vand.u32 %v4067, 65535
  %v4069 = vshra.s32 %v4067, 16
  %v4070 = vcvt.s32.f32 %v4068
  %v4071 = vcvt.s32.f32 %v4069
  %4072 = vmin.xlane.f32.xlu0 %v4071
  %v4073 = vpop.xlane.xlu0 %4072
  %vm4074 = vcmp.eq.f32.partialorder %v4071, %v4073
  %v4075 = vsel %vm4074, %v4070, inf
  %4076 = vmin.xlane.f32.xlu0 %v4075
  %v4077 = vpop.xlane.xlu0 %4076
  %v4078 = vcvt.f32.s32 %v4077
  %v4079 = vcvt.f32.s32 %v4073
  %v4080 = vshll.u32 %v4079, 16
  %v4081 = vadd.s32 %v4080, %v4078
  %vm4082 = vcmp.lt.s32.totalorder %v3596, %v3597
  %v4083 = vsel %vm4082, %v3596, %v3597
  %vm4084 = vcmp.lt.s32.totalorder %v4083, %v3598
  %v4085 = vsel %vm4084, %v4083, %v3598
  %v4086 = vand.u32 %v4085, 65535
  %v4087 = vshra.s32 %v4085, 16
  %v4088 = vcvt.s32.f32 %v4086
  %v4089 = vcvt.s32.f32 %v4087
  %4090 = vmin.xlane.f32.xlu0 %v4089
  %v4091 = vpop.xlane.xlu0 %4090
  %vm4092 = vcmp.eq.f32.partialorder %v4089, %v4091
  %v4093 = vsel %vm4092, %v4088, inf
  %4094 = vmin.xlane.f32.xlu0 %v4093
  %v4095 = vpop.xlane.xlu0 %4094
  %v4096 = vcvt.f32.s32 %v4095
  %v4097 = vcvt.f32.s32 %v4091
  %v4098 = vshll.u32 %v4097, 16
  %v4099 = vadd.s32 %v4098, %v4096
  %vm4100 = vcmp.lt.s32.totalorder %v3599, %v3600
  %v4101 = vsel %vm4100, %v3599, %v3600
  %vm4102 = vcmp.lt.s32.totalorder %v4101, %v3601
  %v4103 = vsel %vm4102, %v4101, %v3601
  %v4104 = vand.u32 %v4103, 65535
  %v4105 = vshra.s32 %v4103, 16
  %v4106 = vcvt.s32.f32 %v4104
  %v4107 = vcvt.s32.f32 %v4105
  %4108 = vmin.xlane.f32.xlu0 %v4107
  %v4109 = vpop.xlane.xlu0 %4108
  %vm4110 = vcmp.eq.f32.partialorder %v4107, %v4109
  %v4111 = vsel %vm4110, %v4106, inf
  %4112 = vmin.xlane.f32.xlu0 %v4111
  %v4113 = vpop.xlane.xlu0 %4112
  %v4114 = vcvt.f32.s32 %v4113
  %v4115 = vcvt.f32.s32 %v4109
  %v4116 = vshll.u32 %v4115, 16
  %v4117 = vadd.s32 %v4116, %v4114
  %vm4118 = vcmp.lt.s32.totalorder %v3602, %v3603
  %v4119 = vsel %vm4118, %v3602, %v3603
  %vm4120 = vcmp.lt.s32.totalorder %v4119, %v3604
  %v4121 = vsel %vm4120, %v4119, %v3604
  %v4122 = vand.u32 %v4121, 65535
  %v4123 = vshra.s32 %v4121, 16
  %v4124 = vcvt.s32.f32 %v4122
  %v4125 = vcvt.s32.f32 %v4123
  %4126 = vmin.xlane.f32.xlu0 %v4125
  %v4127 = vpop.xlane.xlu0 %4126
  %vm4128 = vcmp.eq.f32.partialorder %v4125, %v4127
  %v4129 = vsel %vm4128, %v4124, inf
  %4130 = vmin.xlane.f32.xlu0 %v4129
  %v4131 = vpop.xlane.xlu0 %4130
  %v4132 = vcvt.f32.s32 %v4131
  %v4133 = vcvt.f32.s32 %v4127
  %v4134 = vshll.u32 %v4133, 16
  %v4135 = vadd.s32 %v4134, %v4132
  %vm4136 = vcmp.lt.s32.totalorder %v3605, %v3606
  %v4137 = vsel %vm4136, %v3605, %v3606
  %vm4138 = vcmp.lt.s32.totalorder %v4137, %v3607
  %v4139 = vsel %vm4138, %v4137, %v3607
  %v4140 = vand.u32 %v4139, 65535
  %v4141 = vshra.s32 %v4139, 16
  %v4142 = vcvt.s32.f32 %v4140
  %v4143 = vcvt.s32.f32 %v4141
  %4144 = vmin.xlane.f32.xlu0 %v4143
  %v4145 = vpop.xlane.xlu0 %4144
  %vm4146 = vcmp.eq.f32.partialorder %v4143, %v4145
  %v4147 = vsel %vm4146, %v4142, inf
  %4148 = vmin.xlane.f32.xlu0 %v4147
  %v4149 = vpop.xlane.xlu0 %4148
  %v4150 = vcvt.f32.s32 %v4149
  %v4151 = vcvt.f32.s32 %v4145
  %v4152 = vshll.u32 %v4151, 16
  %v4153 = vadd.s32 %v4152, %v4150
  %vm4154 = vcmp.lt.s32.totalorder %v3608, %v3609
  %v4155 = vsel %vm4154, %v3608, %v3609
  %vm4156 = vcmp.lt.s32.totalorder %v4155, %v3610
  %v4157 = vsel %vm4156, %v4155, %v3610
  %v4158 = vand.u32 %v4157, 65535
  %v4159 = vshra.s32 %v4157, 16
  %v4160 = vcvt.s32.f32 %v4158
  %v4161 = vcvt.s32.f32 %v4159
  %4162 = vmin.xlane.f32.xlu0 %v4161
  %v4163 = vpop.xlane.xlu0 %4162
  %vm4164 = vcmp.eq.f32.partialorder %v4161, %v4163
  %v4165 = vsel %vm4164, %v4160, inf
  %4166 = vmin.xlane.f32.xlu0 %v4165
  %v4167 = vpop.xlane.xlu0 %4166
  %v4168 = vcvt.f32.s32 %v4167
  %v4169 = vcvt.f32.s32 %v4163
  %v4170 = vshll.u32 %v4169, 16
  %v4171 = vadd.s32 %v4170, %v4168
  %vm4172 = vcmp.lt.s32.totalorder %v3611, %v3612
  %v4173 = vsel %vm4172, %v3611, %v3612
  %vm4174 = vcmp.lt.s32.totalorder %v4173, %v3613
  %v4175 = vsel %vm4174, %v4173, %v3613
  %v4176 = vand.u32 %v4175, 65535
  %v4177 = vshra.s32 %v4175, 16
  %v4178 = vcvt.s32.f32 %v4176
  %v4179 = vcvt.s32.f32 %v4177
  %4180 = vmin.xlane.f32.xlu0 %v4179
  %v4181 = vpop.xlane.xlu0 %4180
  %vm4182 = vcmp.eq.f32.partialorder %v4179, %v4181
  %v4183 = vsel %vm4182, %v4178, inf
  %4184 = vmin.xlane.f32.xlu0 %v4183
  %v4185 = vpop.xlane.xlu0 %4184
  %v4186 = vcvt.f32.s32 %v4185
  %v4187 = vcvt.f32.s32 %v4181
  %v4188 = vshll.u32 %v4187, 16
  %v4189 = vadd.s32 %v4188, %v4186
  %v4190 = vand.u32 %v3631, 4294965248
  %v4191 = vand.u32 %v3649, 4294965248
  %v4192 = vand.u32 %v3667, 4294965248
  %v4193 = vand.u32 %v3685, 4294965248
  %v4194 = vand.u32 %v3703, 4294965248
  %v4195 = vand.u32 %v3721, 4294965248
  %v4196 = vand.u32 %v3739, 4294965248
  %v4197 = vand.u32 %v3757, 4294965248
  %v4198 = vand.u32 %v3775, 4294965248
  %v4199 = vand.u32 %v3793, 4294965248
  %v4200 = vand.u32 %v3811, 4294965248
  %v4201 = vand.u32 %v3829, 4294965248
  %v4202 = vand.u32 %v3847, 4294965248
  %v4203 = vand.u32 %v3865, 4294965248
  %v4204 = vand.u32 %v3883, 4294965248
  %v4205 = vand.u32 %v3901, 4294965248
  %v4206 = vand.u32 %v3919, 4294965248
  %v4207 = vand.u32 %v3937, 4294965248
  %v4208 = vand.u32 %v3955, 4294965248
  %v4209 = vand.u32 %v3973, 4294965248
  %v4210 = vand.u32 %v3991, 4294965248
  %v4211 = vand.u32 %v4009, 4294965248
  %v4212 = vand.u32 %v4027, 4294965248
  %v4213 = vand.u32 %v4045, 4294965248
  %v4214 = vand.u32 %v4063, 4294965248
  %v4215 = vand.u32 %v4081, 4294965248
  %v4216 = vand.u32 %v4099, 4294965248
  %v4217 = vand.u32 %v4117, 4294965248
  %v4218 = vand.u32 %v4135, 4294965248
  %v4219 = vand.u32 %v4153, 4294965248
  %v4220 = vand.u32 %v4171, 4294965248
  %v4221 = vand.u32 %v4189, 4294965248
  %vm4254 = vcmp.eq.s32.totalorder %v2295, 1
  %v4255 = vsel %vm4254, %v4190, %v3390
  %v4256 = vsel %vm4254, %v4191, %v3391
  %v4257 = vsel %vm4254, %v4192, %v3392
  %v4258 = vsel %vm4254, %v4193, %v3393
  %v4259 = vsel %vm4254, %v4194, %v3394
  %v4260 = vsel %vm4254, %v4195, %v3395
  %v4261 = vsel %vm4254, %v4196, %v3396
  %v4262 = vsel %vm4254, %v4197, %v3397
  %v4263 = vsel %vm4254, %v4198, %v3398
  %v4264 = vsel %vm4254, %v4199, %v3399
  %v4265 = vsel %vm4254, %v4200, %v3400
  %v4266 = vsel %vm4254, %v4201, %v3401
  %v4267 = vsel %vm4254, %v4202, %v3402
  %v4268 = vsel %vm4254, %v4203, %v3403
  %v4269 = vsel %vm4254, %v4204, %v3404
  %v4270 = vsel %vm4254, %v4205, %v3405
  %v4271 = vsel %vm4254, %v4206, %v3406
  %v4272 = vsel %vm4254, %v4207, %v3407
  %v4273 = vsel %vm4254, %v4208, %v3408
  %v4274 = vsel %vm4254, %v4209, %v3409
  %v4275 = vsel %vm4254, %v4210, %v3410
  %v4276 = vsel %vm4254, %v4211, %v3411
  %v4277 = vsel %vm4254, %v4212, %v3412
  %v4278 = vsel %vm4254, %v4213, %v3413
  %v4279 = vsel %vm4254, %v4214, %v3414
  %v4280 = vsel %vm4254, %v4215, %v3415
  %v4281 = vsel %vm4254, %v4216, %v3416
  %v4282 = vsel %vm4254, %v4217, %v3417
  %v4283 = vsel %vm4254, %v4218, %v3418
  %v4284 = vsel %vm4254, %v4219, %v3419
  %v4285 = vsel %vm4254, %v4220, %v3420
  %v4286 = vsel %vm4254, %v4221, %v3421
  %vm4287 = vcmp.eq.s32.totalorder %v3518, %v3631
  %vm4288 = vcmp.eq.s32.totalorder %v3519, %v3631
  %vm4289 = vcmp.eq.s32.totalorder %v3520, %v3631
  %vm4290 = vcmp.eq.s32.totalorder %v3521, %v3649
  %vm4291 = vcmp.eq.s32.totalorder %v3522, %v3649
  %vm4292 = vcmp.eq.s32.totalorder %v3523, %v3649
  %vm4293 = vcmp.eq.s32.totalorder %v3524, %v3667
  %vm4294 = vcmp.eq.s32.totalorder %v3525, %v3667
  %vm4295 = vcmp.eq.s32.totalorder %v3526, %v3667
  %vm4296 = vcmp.eq.s32.totalorder %v3527, %v3685
  %vm4297 = vcmp.eq.s32.totalorder %v3528, %v3685
  %vm4298 = vcmp.eq.s32.totalorder %v3529, %v3685
  %vm4299 = vcmp.eq.s32.totalorder %v3530, %v3703
  %vm4300 = vcmp.eq.s32.totalorder %v3531, %v3703
  %vm4301 = vcmp.eq.s32.totalorder %v3532, %v3703
  %vm4302 = vcmp.eq.s32.totalorder %v3533, %v3721
  %vm4303 = vcmp.eq.s32.totalorder %v3534, %v3721
  %vm4304 = vcmp.eq.s32.totalorder %v3535, %v3721
  %vm4305 = vcmp.eq.s32.totalorder %v3536, %v3739
  %vm4306 = vcmp.eq.s32.totalorder %v3537, %v3739
  %vm4307 = vcmp.eq.s32.totalorder %v3538, %v3739
  %vm4308 = vcmp.eq.s32.totalorder %v3539, %v3757
  %vm4309 = vcmp.eq.s32.totalorder %v3540, %v3757
  %vm4310 = vcmp.eq.s32.totalorder %v3541, %v3757
  %vm4311 = vcmp.eq.s32.totalorder %v3542, %v3775
  %vm4312 = vcmp.eq.s32.totalorder %v3543, %v3775
  %vm4313 = vcmp.eq.s32.totalorder %v3544, %v3775
  %vm4314 = vcmp.eq.s32.totalorder %v3545, %v3793
  %vm4315 = vcmp.eq.s32.totalorder %v3546, %v3793
  %vm4316 = vcmp.eq.s32.totalorder %v3547, %v3793
  %vm4317 = vcmp.eq.s32.totalorder %v3548, %v3811
  %vm4318 = vcmp.eq.s32.totalorder %v3549, %v3811
  %vm4319 = vcmp.eq.s32.totalorder %v3550, %v3811
  %vm4320 = vcmp.eq.s32.totalorder %v3551, %v3829
  %vm4321 = vcmp.eq.s32.totalorder %v3552, %v3829
  %vm4322 = vcmp.eq.s32.totalorder %v3553, %v3829
  %vm4323 = vcmp.eq.s32.totalorder %v3554, %v3847
  %vm4324 = vcmp.eq.s32.totalorder %v3555, %v3847
  %vm4325 = vcmp.eq.s32.totalorder %v3556, %v3847
  %vm4326 = vcmp.eq.s32.totalorder %v3557, %v3865
  %vm4327 = vcmp.eq.s32.totalorder %v3558, %v3865
  %vm4328 = vcmp.eq.s32.totalorder %v3559, %v3865
  %vm4329 = vcmp.eq.s32.totalorder %v3560, %v3883
  %vm4330 = vcmp.eq.s32.totalorder %v3561, %v3883
  %vm4331 = vcmp.eq.s32.totalorder %v3562, %v3883
  %vm4332 = vcmp.eq.s32.totalorder %v3563, %v3901
  %vm4333 = vcmp.eq.s32.totalorder %v3564, %v3901
  %vm4334 = vcmp.eq.s32.totalorder %v3565, %v3901
  %vm4335 = vcmp.eq.s32.totalorder %v3566, %v3919
  %vm4336 = vcmp.eq.s32.totalorder %v3567, %v3919
  %vm4337 = vcmp.eq.s32.totalorder %v3568, %v3919
  %vm4338 = vcmp.eq.s32.totalorder %v3569, %v3937
  %vm4339 = vcmp.eq.s32.totalorder %v3570, %v3937
  %vm4340 = vcmp.eq.s32.totalorder %v3571, %v3937
  %vm4341 = vcmp.eq.s32.totalorder %v3572, %v3955
  %vm4342 = vcmp.eq.s32.totalorder %v3573, %v3955
  %vm4343 = vcmp.eq.s32.totalorder %v3574, %v3955
  %vm4344 = vcmp.eq.s32.totalorder %v3575, %v3973
  %vm4345 = vcmp.eq.s32.totalorder %v3576, %v3973
  %vm4346 = vcmp.eq.s32.totalorder %v3577, %v3973
  %vm4347 = vcmp.eq.s32.totalorder %v3578, %v3991
  %vm4348 = vcmp.eq.s32.totalorder %v3579, %v3991
  %vm4349 = vcmp.eq.s32.totalorder %v3580, %v3991
  %vm4350 = vcmp.eq.s32.totalorder %v3581, %v4009
  %vm4351 = vcmp.eq.s32.totalorder %v3582, %v4009
  %vm4352 = vcmp.eq.s32.totalorder %v3583, %v4009
  %vm4353 = vcmp.eq.s32.totalorder %v3584, %v4027
  %vm4354 = vcmp.eq.s32.totalorder %v3585, %v4027
  %vm4355 = vcmp.eq.s32.totalorder %v3586, %v4027
  %vm4356 = vcmp.eq.s32.totalorder %v3587, %v4045
  %vm4357 = vcmp.eq.s32.totalorder %v3588, %v4045
  %vm4358 = vcmp.eq.s32.totalorder %v3589, %v4045
  %vm4359 = vcmp.eq.s32.totalorder %v3590, %v4063
  %vm4360 = vcmp.eq.s32.totalorder %v3591, %v4063
  %vm4361 = vcmp.eq.s32.totalorder %v3592, %v4063
  %vm4362 = vcmp.eq.s32.totalorder %v3593, %v4081
  %vm4363 = vcmp.eq.s32.totalorder %v3594, %v4081
  %vm4364 = vcmp.eq.s32.totalorder %v3595, %v4081
  %vm4365 = vcmp.eq.s32.totalorder %v3596, %v4099
  %vm4366 = vcmp.eq.s32.totalorder %v3597, %v4099
  %vm4367 = vcmp.eq.s32.totalorder %v3598, %v4099
  %vm4368 = vcmp.eq.s32.totalorder %v3599, %v4117
  %vm4369 = vcmp.eq.s32.totalorder %v3600, %v4117
  %vm4370 = vcmp.eq.s32.totalorder %v3601, %v4117
  %vm4371 = vcmp.eq.s32.totalorder %v3602, %v4135
  %vm4372 = vcmp.eq.s32.totalorder %v3603, %v4135
  %vm4373 = vcmp.eq.s32.totalorder %v3604, %v4135
  %vm4374 = vcmp.eq.s32.totalorder %v3605, %v4153
  %vm4375 = vcmp.eq.s32.totalorder %v3606, %v4153
  %vm4376 = vcmp.eq.s32.totalorder %v3607, %v4153
  %vm4377 = vcmp.eq.s32.totalorder %v3608, %v4171
  %vm4378 = vcmp.eq.s32.totalorder %v3609, %v4171
  %vm4379 = vcmp.eq.s32.totalorder %v3610, %v4171
  %vm4380 = vcmp.eq.s32.totalorder %v3611, %v4189
  %vm4381 = vcmp.eq.s32.totalorder %v3612, %v4189
  %vm4382 = vcmp.eq.s32.totalorder %v3613, %v4189
  %v4383 = vsel %vm4287, 2130706432, %v3518
  %v4384 = vsel %vm4288, 2130706432, %v3519
  %v4385 = vsel %vm4289, 2130706432, %v3520
  %v4386 = vsel %vm4290, 2130706432, %v3521
  %v4387 = vsel %vm4291, 2130706432, %v3522
  %v4388 = vsel %vm4292, 2130706432, %v3523
  %v4389 = vsel %vm4293, 2130706432, %v3524
  %v4390 = vsel %vm4294, 2130706432, %v3525
  %v4391 = vsel %vm4295, 2130706432, %v3526
  %v4392 = vsel %vm4296, 2130706432, %v3527
  %v4393 = vsel %vm4297, 2130706432, %v3528
  %v4394 = vsel %vm4298, 2130706432, %v3529
  %v4395 = vsel %vm4299, 2130706432, %v3530
  %v4396 = vsel %vm4300, 2130706432, %v3531
  %v4397 = vsel %vm4301, 2130706432, %v3532
  %v4398 = vsel %vm4302, 2130706432, %v3533
  %v4399 = vsel %vm4303, 2130706432, %v3534
  %v4400 = vsel %vm4304, 2130706432, %v3535
  %v4401 = vsel %vm4305, 2130706432, %v3536
  %v4402 = vsel %vm4306, 2130706432, %v3537
  %v4403 = vsel %vm4307, 2130706432, %v3538
  %v4404 = vsel %vm4308, 2130706432, %v3539
  %v4405 = vsel %vm4309, 2130706432, %v3540
  %v4406 = vsel %vm4310, 2130706432, %v3541
  %v4407 = vsel %vm4311, 2130706432, %v3542
  %v4408 = vsel %vm4312, 2130706432, %v3543
  %v4409 = vsel %vm4313, 2130706432, %v3544
  %v4410 = vsel %vm4314, 2130706432, %v3545
  %v4411 = vsel %vm4315, 2130706432, %v3546
  %v4412 = vsel %vm4316, 2130706432, %v3547
  %v4413 = vsel %vm4317, 2130706432, %v3548
  %v4414 = vsel %vm4318, 2130706432, %v3549
  %v4415 = vsel %vm4319, 2130706432, %v3550
  %v4416 = vsel %vm4320, 2130706432, %v3551
  %v4417 = vsel %vm4321, 2130706432, %v3552
  %v4418 = vsel %vm4322, 2130706432, %v3553
  %v4419 = vsel %vm4323, 2130706432, %v3554
  %v4420 = vsel %vm4324, 2130706432, %v3555
  %v4421 = vsel %vm4325, 2130706432, %v3556
  %v4422 = vsel %vm4326, 2130706432, %v3557
  %v4423 = vsel %vm4327, 2130706432, %v3558
  %v4424 = vsel %vm4328, 2130706432, %v3559
  %v4425 = vsel %vm4329, 2130706432, %v3560
  %v4426 = vsel %vm4330, 2130706432, %v3561
  %v4427 = vsel %vm4331, 2130706432, %v3562
  %v4428 = vsel %vm4332, 2130706432, %v3563
  %v4429 = vsel %vm4333, 2130706432, %v3564
  %v4430 = vsel %vm4334, 2130706432, %v3565
  %v4431 = vsel %vm4335, 2130706432, %v3566
  %v4432 = vsel %vm4336, 2130706432, %v3567
  %v4433 = vsel %vm4337, 2130706432, %v3568
  %v4434 = vsel %vm4338, 2130706432, %v3569
  %v4435 = vsel %vm4339, 2130706432, %v3570
  %v4436 = vsel %vm4340, 2130706432, %v3571
  %v4437 = vsel %vm4341, 2130706432, %v3572
  %v4438 = vsel %vm4342, 2130706432, %v3573
  %v4439 = vsel %vm4343, 2130706432, %v3574
  %v4440 = vsel %vm4344, 2130706432, %v3575
  %v4441 = vsel %vm4345, 2130706432, %v3576
  %v4442 = vsel %vm4346, 2130706432, %v3577
  %v4443 = vsel %vm4347, 2130706432, %v3578
  %v4444 = vsel %vm4348, 2130706432, %v3579
  %v4445 = vsel %vm4349, 2130706432, %v3580
  %v4446 = vsel %vm4350, 2130706432, %v3581
  %v4447 = vsel %vm4351, 2130706432, %v3582
  %v4448 = vsel %vm4352, 2130706432, %v3583
  %v4449 = vsel %vm4353, 2130706432, %v3584
  %v4450 = vsel %vm4354, 2130706432, %v3585
  %v4451 = vsel %vm4355, 2130706432, %v3586
  %v4452 = vsel %vm4356, 2130706432, %v3587
  %v4453 = vsel %vm4357, 2130706432, %v3588
  %v4454 = vsel %vm4358, 2130706432, %v3589
  %v4455 = vsel %vm4359, 2130706432, %v3590
  %v4456 = vsel %vm4360, 2130706432, %v3591
  %v4457 = vsel %vm4361, 2130706432, %v3592
  %v4458 = vsel %vm4362, 2130706432, %v3593
  %v4459 = vsel %vm4363, 2130706432, %v3594
  %v4460 = vsel %vm4364, 2130706432, %v3595
  %v4461 = vsel %vm4365, 2130706432, %v3596
  %v4462 = vsel %vm4366, 2130706432, %v3597
  %v4463 = vsel %vm4367, 2130706432, %v3598
  %v4464 = vsel %vm4368, 2130706432, %v3599
  %v4465 = vsel %vm4369, 2130706432, %v3600
  %v4466 = vsel %vm4370, 2130706432, %v3601
  %v4467 = vsel %vm4371, 2130706432, %v3602
  %v4468 = vsel %vm4372, 2130706432, %v3603
  %v4469 = vsel %vm4373, 2130706432, %v3604
  %v4470 = vsel %vm4374, 2130706432, %v3605
  %v4471 = vsel %vm4375, 2130706432, %v3606
  %v4472 = vsel %vm4376, 2130706432, %v3607
  %v4473 = vsel %vm4377, 2130706432, %v3608
  %v4474 = vsel %vm4378, 2130706432, %v3609
  %v4475 = vsel %vm4379, 2130706432, %v3610
  %v4476 = vsel %vm4380, 2130706432, %v3611
  %v4477 = vsel %vm4381, 2130706432, %v3612
  %v4478 = vsel %vm4382, 2130706432, %v3613
  %vm4479 = vcmp.lt.s32.totalorder %v4383, %v4384
  %v4480 = vsel %vm4479, %v4383, %v4384
  %vm4481 = vcmp.lt.s32.totalorder %v4480, %v4385
  %v4482 = vsel %vm4481, %v4480, %v4385
  %v4483 = vand.u32 %v4482, 65535
  %v4484 = vshra.s32 %v4482, 16
  %v4485 = vcvt.s32.f32 %v4483
  %v4486 = vcvt.s32.f32 %v4484
  %4487 = vmin.xlane.f32.xlu0 %v4486
  %v4488 = vpop.xlane.xlu0 %4487
  %vm4489 = vcmp.eq.f32.partialorder %v4486, %v4488
  %v4490 = vsel %vm4489, %v4485, inf
  %4491 = vmin.xlane.f32.xlu0 %v4490
  %v4492 = vpop.xlane.xlu0 %4491
  %v4493 = vcvt.f32.s32 %v4492
  %v4494 = vcvt.f32.s32 %v4488
  %v4495 = vshll.u32 %v4494, 16
  %v4496 = vadd.s32 %v4495, %v4493
  %vm4497 = vcmp.lt.s32.totalorder %v4386, %v4387
  %v4498 = vsel %vm4497, %v4386, %v4387
  %vm4499 = vcmp.lt.s32.totalorder %v4498, %v4388
  %v4500 = vsel %vm4499, %v4498, %v4388
  %v4501 = vand.u32 %v4500, 65535
  %v4502 = vshra.s32 %v4500, 16
  %v4503 = vcvt.s32.f32 %v4501
  %v4504 = vcvt.s32.f32 %v4502
  %4505 = vmin.xlane.f32.xlu0 %v4504
  %v4506 = vpop.xlane.xlu0 %4505
  %vm4507 = vcmp.eq.f32.partialorder %v4504, %v4506
  %v4508 = vsel %vm4507, %v4503, inf
  %4509 = vmin.xlane.f32.xlu0 %v4508
  %v4510 = vpop.xlane.xlu0 %4509
  %v4511 = vcvt.f32.s32 %v4510
  %v4512 = vcvt.f32.s32 %v4506
  %v4513 = vshll.u32 %v4512, 16
  %v4514 = vadd.s32 %v4513, %v4511
  %vm4515 = vcmp.lt.s32.totalorder %v4389, %v4390
  %v4516 = vsel %vm4515, %v4389, %v4390
  %vm4517 = vcmp.lt.s32.totalorder %v4516, %v4391
  %v4518 = vsel %vm4517, %v4516, %v4391
  %v4519 = vand.u32 %v4518, 65535
  %v4520 = vshra.s32 %v4518, 16
  %v4521 = vcvt.s32.f32 %v4519
  %v4522 = vcvt.s32.f32 %v4520
  %4523 = vmin.xlane.f32.xlu0 %v4522
  %v4524 = vpop.xlane.xlu0 %4523
  %vm4525 = vcmp.eq.f32.partialorder %v4522, %v4524
  %v4526 = vsel %vm4525, %v4521, inf
  %4527 = vmin.xlane.f32.xlu0 %v4526
  %v4528 = vpop.xlane.xlu0 %4527
  %v4529 = vcvt.f32.s32 %v4528
  %v4530 = vcvt.f32.s32 %v4524
  %v4531 = vshll.u32 %v4530, 16
  %v4532 = vadd.s32 %v4531, %v4529
  %vm4533 = vcmp.lt.s32.totalorder %v4392, %v4393
  %v4534 = vsel %vm4533, %v4392, %v4393
  %vm4535 = vcmp.lt.s32.totalorder %v4534, %v4394
  %v4536 = vsel %vm4535, %v4534, %v4394
  %v4537 = vand.u32 %v4536, 65535
  %v4538 = vshra.s32 %v4536, 16
  %v4539 = vcvt.s32.f32 %v4537
  %v4540 = vcvt.s32.f32 %v4538
  %4541 = vmin.xlane.f32.xlu0 %v4540
  %v4542 = vpop.xlane.xlu0 %4541
  %vm4543 = vcmp.eq.f32.partialorder %v4540, %v4542
  %v4544 = vsel %vm4543, %v4539, inf
  %4545 = vmin.xlane.f32.xlu0 %v4544
  %v4546 = vpop.xlane.xlu0 %4545
  %v4547 = vcvt.f32.s32 %v4546
  %v4548 = vcvt.f32.s32 %v4542
  %v4549 = vshll.u32 %v4548, 16
  %v4550 = vadd.s32 %v4549, %v4547
  %vm4551 = vcmp.lt.s32.totalorder %v4395, %v4396
  %v4552 = vsel %vm4551, %v4395, %v4396
  %vm4553 = vcmp.lt.s32.totalorder %v4552, %v4397
  %v4554 = vsel %vm4553, %v4552, %v4397
  %v4555 = vand.u32 %v4554, 65535
  %v4556 = vshra.s32 %v4554, 16
  %v4557 = vcvt.s32.f32 %v4555
  %v4558 = vcvt.s32.f32 %v4556
  %4559 = vmin.xlane.f32.xlu0 %v4558
  %v4560 = vpop.xlane.xlu0 %4559
  %vm4561 = vcmp.eq.f32.partialorder %v4558, %v4560
  %v4562 = vsel %vm4561, %v4557, inf
  %4563 = vmin.xlane.f32.xlu0 %v4562
  %v4564 = vpop.xlane.xlu0 %4563
  %v4565 = vcvt.f32.s32 %v4564
  %v4566 = vcvt.f32.s32 %v4560
  %v4567 = vshll.u32 %v4566, 16
  %v4568 = vadd.s32 %v4567, %v4565
  %vm4569 = vcmp.lt.s32.totalorder %v4398, %v4399
  %v4570 = vsel %vm4569, %v4398, %v4399
  %vm4571 = vcmp.lt.s32.totalorder %v4570, %v4400
  %v4572 = vsel %vm4571, %v4570, %v4400
  %v4573 = vand.u32 %v4572, 65535
  %v4574 = vshra.s32 %v4572, 16
  %v4575 = vcvt.s32.f32 %v4573
  %v4576 = vcvt.s32.f32 %v4574
  %4577 = vmin.xlane.f32.xlu0 %v4576
  %v4578 = vpop.xlane.xlu0 %4577
  %vm4579 = vcmp.eq.f32.partialorder %v4576, %v4578
  %v4580 = vsel %vm4579, %v4575, inf
  %4581 = vmin.xlane.f32.xlu0 %v4580
  %v4582 = vpop.xlane.xlu0 %4581
  %v4583 = vcvt.f32.s32 %v4582
  %v4584 = vcvt.f32.s32 %v4578
  %v4585 = vshll.u32 %v4584, 16
  %v4586 = vadd.s32 %v4585, %v4583
  %vm4587 = vcmp.lt.s32.totalorder %v4401, %v4402
  %v4588 = vsel %vm4587, %v4401, %v4402
  %vm4589 = vcmp.lt.s32.totalorder %v4588, %v4403
  %v4590 = vsel %vm4589, %v4588, %v4403
  %v4591 = vand.u32 %v4590, 65535
  %v4592 = vshra.s32 %v4590, 16
  %v4593 = vcvt.s32.f32 %v4591
  %v4594 = vcvt.s32.f32 %v4592
  %4595 = vmin.xlane.f32.xlu0 %v4594
  %v4596 = vpop.xlane.xlu0 %4595
  %vm4597 = vcmp.eq.f32.partialorder %v4594, %v4596
  %v4598 = vsel %vm4597, %v4593, inf
  %4599 = vmin.xlane.f32.xlu0 %v4598
  %v4600 = vpop.xlane.xlu0 %4599
  %v4601 = vcvt.f32.s32 %v4600
  %v4602 = vcvt.f32.s32 %v4596
  %v4603 = vshll.u32 %v4602, 16
  %v4604 = vadd.s32 %v4603, %v4601
  %vm4605 = vcmp.lt.s32.totalorder %v4404, %v4405
  %v4606 = vsel %vm4605, %v4404, %v4405
  %vm4607 = vcmp.lt.s32.totalorder %v4606, %v4406
  %v4608 = vsel %vm4607, %v4606, %v4406
  %v4609 = vand.u32 %v4608, 65535
  %v4610 = vshra.s32 %v4608, 16
  %v4611 = vcvt.s32.f32 %v4609
  %v4612 = vcvt.s32.f32 %v4610
  %4613 = vmin.xlane.f32.xlu0 %v4612
  %v4614 = vpop.xlane.xlu0 %4613
  %vm4615 = vcmp.eq.f32.partialorder %v4612, %v4614
  %v4616 = vsel %vm4615, %v4611, inf
  %4617 = vmin.xlane.f32.xlu0 %v4616
  %v4618 = vpop.xlane.xlu0 %4617
  %v4619 = vcvt.f32.s32 %v4618
  %v4620 = vcvt.f32.s32 %v4614
  %v4621 = vshll.u32 %v4620, 16
  %v4622 = vadd.s32 %v4621, %v4619
  %vm4623 = vcmp.lt.s32.totalorder %v4407, %v4408
  %v4624 = vsel %vm4623, %v4407, %v4408
  %vm4625 = vcmp.lt.s32.totalorder %v4624, %v4409
  %v4626 = vsel %vm4625, %v4624, %v4409
  %v4627 = vand.u32 %v4626, 65535
  %v4628 = vshra.s32 %v4626, 16
  %v4629 = vcvt.s32.f32 %v4627
  %v4630 = vcvt.s32.f32 %v4628
  %4631 = vmin.xlane.f32.xlu0 %v4630
  %v4632 = vpop.xlane.xlu0 %4631
  %vm4633 = vcmp.eq.f32.partialorder %v4630, %v4632
  %v4634 = vsel %vm4633, %v4629, inf
  %4635 = vmin.xlane.f32.xlu0 %v4634
  %v4636 = vpop.xlane.xlu0 %4635
  %v4637 = vcvt.f32.s32 %v4636
  %v4638 = vcvt.f32.s32 %v4632
  %v4639 = vshll.u32 %v4638, 16
  %v4640 = vadd.s32 %v4639, %v4637
  %vm4641 = vcmp.lt.s32.totalorder %v4410, %v4411
  %v4642 = vsel %vm4641, %v4410, %v4411
  %vm4643 = vcmp.lt.s32.totalorder %v4642, %v4412
  %v4644 = vsel %vm4643, %v4642, %v4412
  %v4645 = vand.u32 %v4644, 65535
  %v4646 = vshra.s32 %v4644, 16
  %v4647 = vcvt.s32.f32 %v4645
  %v4648 = vcvt.s32.f32 %v4646
  %4649 = vmin.xlane.f32.xlu0 %v4648
  %v4650 = vpop.xlane.xlu0 %4649
  %vm4651 = vcmp.eq.f32.partialorder %v4648, %v4650
  %v4652 = vsel %vm4651, %v4647, inf
  %4653 = vmin.xlane.f32.xlu0 %v4652
  %v4654 = vpop.xlane.xlu0 %4653
  %v4655 = vcvt.f32.s32 %v4654
  %v4656 = vcvt.f32.s32 %v4650
  %v4657 = vshll.u32 %v4656, 16
  %v4658 = vadd.s32 %v4657, %v4655
  %vm4659 = vcmp.lt.s32.totalorder %v4413, %v4414
  %v4660 = vsel %vm4659, %v4413, %v4414
  %vm4661 = vcmp.lt.s32.totalorder %v4660, %v4415
  %v4662 = vsel %vm4661, %v4660, %v4415
  %v4663 = vand.u32 %v4662, 65535
  %v4664 = vshra.s32 %v4662, 16
  %v4665 = vcvt.s32.f32 %v4663
  %v4666 = vcvt.s32.f32 %v4664
  %4667 = vmin.xlane.f32.xlu0 %v4666
  %v4668 = vpop.xlane.xlu0 %4667
  %vm4669 = vcmp.eq.f32.partialorder %v4666, %v4668
  %v4670 = vsel %vm4669, %v4665, inf
  %4671 = vmin.xlane.f32.xlu0 %v4670
  %v4672 = vpop.xlane.xlu0 %4671
  %v4673 = vcvt.f32.s32 %v4672
  %v4674 = vcvt.f32.s32 %v4668
  %v4675 = vshll.u32 %v4674, 16
  %v4676 = vadd.s32 %v4675, %v4673
  %vm4677 = vcmp.lt.s32.totalorder %v4416, %v4417
  %v4678 = vsel %vm4677, %v4416, %v4417
  %vm4679 = vcmp.lt.s32.totalorder %v4678, %v4418
  %v4680 = vsel %vm4679, %v4678, %v4418
  %v4681 = vand.u32 %v4680, 65535
  %v4682 = vshra.s32 %v4680, 16
  %v4683 = vcvt.s32.f32 %v4681
  %v4684 = vcvt.s32.f32 %v4682
  %4685 = vmin.xlane.f32.xlu0 %v4684
  %v4686 = vpop.xlane.xlu0 %4685
  %vm4687 = vcmp.eq.f32.partialorder %v4684, %v4686
  %v4688 = vsel %vm4687, %v4683, inf
  %4689 = vmin.xlane.f32.xlu0 %v4688
  %v4690 = vpop.xlane.xlu0 %4689
  %v4691 = vcvt.f32.s32 %v4690
  %v4692 = vcvt.f32.s32 %v4686
  %v4693 = vshll.u32 %v4692, 16
  %v4694 = vadd.s32 %v4693, %v4691
  %vm4695 = vcmp.lt.s32.totalorder %v4419, %v4420
  %v4696 = vsel %vm4695, %v4419, %v4420
  %vm4697 = vcmp.lt.s32.totalorder %v4696, %v4421
  %v4698 = vsel %vm4697, %v4696, %v4421
  %v4699 = vand.u32 %v4698, 65535
  %v4700 = vshra.s32 %v4698, 16
  %v4701 = vcvt.s32.f32 %v4699
  %v4702 = vcvt.s32.f32 %v4700
  %4703 = vmin.xlane.f32.xlu0 %v4702
  %v4704 = vpop.xlane.xlu0 %4703
  %vm4705 = vcmp.eq.f32.partialorder %v4702, %v4704
  %v4706 = vsel %vm4705, %v4701, inf
  %4707 = vmin.xlane.f32.xlu0 %v4706
  %v4708 = vpop.xlane.xlu0 %4707
  %v4709 = vcvt.f32.s32 %v4708
  %v4710 = vcvt.f32.s32 %v4704
  %v4711 = vshll.u32 %v4710, 16
  %v4712 = vadd.s32 %v4711, %v4709
  %vm4713 = vcmp.lt.s32.totalorder %v4422, %v4423
  %v4714 = vsel %vm4713, %v4422, %v4423
  %vm4715 = vcmp.lt.s32.totalorder %v4714, %v4424
  %v4716 = vsel %vm4715, %v4714, %v4424
  %v4717 = vand.u32 %v4716, 65535
  %v4718 = vshra.s32 %v4716, 16
  %v4719 = vcvt.s32.f32 %v4717
  %v4720 = vcvt.s32.f32 %v4718
  %4721 = vmin.xlane.f32.xlu0 %v4720
  %v4722 = vpop.xlane.xlu0 %4721
  %vm4723 = vcmp.eq.f32.partialorder %v4720, %v4722
  %v4724 = vsel %vm4723, %v4719, inf
  %4725 = vmin.xlane.f32.xlu0 %v4724
  %v4726 = vpop.xlane.xlu0 %4725
  %v4727 = vcvt.f32.s32 %v4726
  %v4728 = vcvt.f32.s32 %v4722
  %v4729 = vshll.u32 %v4728, 16
  %v4730 = vadd.s32 %v4729, %v4727
  %vm4731 = vcmp.lt.s32.totalorder %v4425, %v4426
  %v4732 = vsel %vm4731, %v4425, %v4426
  %vm4733 = vcmp.lt.s32.totalorder %v4732, %v4427
  %v4734 = vsel %vm4733, %v4732, %v4427
  %v4735 = vand.u32 %v4734, 65535
  %v4736 = vshra.s32 %v4734, 16
  %v4737 = vcvt.s32.f32 %v4735
  %v4738 = vcvt.s32.f32 %v4736
  %4739 = vmin.xlane.f32.xlu0 %v4738
  %v4740 = vpop.xlane.xlu0 %4739
  %vm4741 = vcmp.eq.f32.partialorder %v4738, %v4740
  %v4742 = vsel %vm4741, %v4737, inf
  %4743 = vmin.xlane.f32.xlu0 %v4742
  %v4744 = vpop.xlane.xlu0 %4743
  %v4745 = vcvt.f32.s32 %v4744
  %v4746 = vcvt.f32.s32 %v4740
  %v4747 = vshll.u32 %v4746, 16
  %v4748 = vadd.s32 %v4747, %v4745
  %vm4749 = vcmp.lt.s32.totalorder %v4428, %v4429
  %v4750 = vsel %vm4749, %v4428, %v4429
  %vm4751 = vcmp.lt.s32.totalorder %v4750, %v4430
  %v4752 = vsel %vm4751, %v4750, %v4430
  %v4753 = vand.u32 %v4752, 65535
  %v4754 = vshra.s32 %v4752, 16
  %v4755 = vcvt.s32.f32 %v4753
  %v4756 = vcvt.s32.f32 %v4754
  %4757 = vmin.xlane.f32.xlu0 %v4756
  %v4758 = vpop.xlane.xlu0 %4757
  %vm4759 = vcmp.eq.f32.partialorder %v4756, %v4758
  %v4760 = vsel %vm4759, %v4755, inf
  %4761 = vmin.xlane.f32.xlu0 %v4760
  %v4762 = vpop.xlane.xlu0 %4761
  %v4763 = vcvt.f32.s32 %v4762
  %v4764 = vcvt.f32.s32 %v4758
  %v4765 = vshll.u32 %v4764, 16
  %v4766 = vadd.s32 %v4765, %v4763
  %vm4767 = vcmp.lt.s32.totalorder %v4431, %v4432
  %v4768 = vsel %vm4767, %v4431, %v4432
  %vm4769 = vcmp.lt.s32.totalorder %v4768, %v4433
  %v4770 = vsel %vm4769, %v4768, %v4433
  %v4771 = vand.u32 %v4770, 65535
  %v4772 = vshra.s32 %v4770, 16
  %v4773 = vcvt.s32.f32 %v4771
  %v4774 = vcvt.s32.f32 %v4772
  %4775 = vmin.xlane.f32.xlu0 %v4774
  %v4776 = vpop.xlane.xlu0 %4775
  %vm4777 = vcmp.eq.f32.partialorder %v4774, %v4776
  %v4778 = vsel %vm4777, %v4773, inf
  %4779 = vmin.xlane.f32.xlu0 %v4778
  %v4780 = vpop.xlane.xlu0 %4779
  %v4781 = vcvt.f32.s32 %v4780
  %v4782 = vcvt.f32.s32 %v4776
  %v4783 = vshll.u32 %v4782, 16
  %v4784 = vadd.s32 %v4783, %v4781
  %vm4785 = vcmp.lt.s32.totalorder %v4434, %v4435
  %v4786 = vsel %vm4785, %v4434, %v4435
  %vm4787 = vcmp.lt.s32.totalorder %v4786, %v4436
  %v4788 = vsel %vm4787, %v4786, %v4436
  %v4789 = vand.u32 %v4788, 65535
  %v4790 = vshra.s32 %v4788, 16
  %v4791 = vcvt.s32.f32 %v4789
  %v4792 = vcvt.s32.f32 %v4790
  %4793 = vmin.xlane.f32.xlu0 %v4792
  %v4794 = vpop.xlane.xlu0 %4793
  %vm4795 = vcmp.eq.f32.partialorder %v4792, %v4794
  %v4796 = vsel %vm4795, %v4791, inf
  %4797 = vmin.xlane.f32.xlu0 %v4796
  %v4798 = vpop.xlane.xlu0 %4797
  %v4799 = vcvt.f32.s32 %v4798
  %v4800 = vcvt.f32.s32 %v4794
  %v4801 = vshll.u32 %v4800, 16
  %v4802 = vadd.s32 %v4801, %v4799
  %vm4803 = vcmp.lt.s32.totalorder %v4437, %v4438
  %v4804 = vsel %vm4803, %v4437, %v4438
  %vm4805 = vcmp.lt.s32.totalorder %v4804, %v4439
  %v4806 = vsel %vm4805, %v4804, %v4439
  %v4807 = vand.u32 %v4806, 65535
  %v4808 = vshra.s32 %v4806, 16
  %v4809 = vcvt.s32.f32 %v4807
  %v4810 = vcvt.s32.f32 %v4808
  %4811 = vmin.xlane.f32.xlu0 %v4810
  %v4812 = vpop.xlane.xlu0 %4811
  %vm4813 = vcmp.eq.f32.partialorder %v4810, %v4812
  %v4814 = vsel %vm4813, %v4809, inf
  %4815 = vmin.xlane.f32.xlu0 %v4814
  %v4816 = vpop.xlane.xlu0 %4815
  %v4817 = vcvt.f32.s32 %v4816
  %v4818 = vcvt.f32.s32 %v4812
  %v4819 = vshll.u32 %v4818, 16
  %v4820 = vadd.s32 %v4819, %v4817
  %vm4821 = vcmp.lt.s32.totalorder %v4440, %v4441
  %v4822 = vsel %vm4821, %v4440, %v4441
  %vm4823 = vcmp.lt.s32.totalorder %v4822, %v4442
  %v4824 = vsel %vm4823, %v4822, %v4442
  %v4825 = vand.u32 %v4824, 65535
  %v4826 = vshra.s32 %v4824, 16
  %v4827 = vcvt.s32.f32 %v4825
  %v4828 = vcvt.s32.f32 %v4826
  %4829 = vmin.xlane.f32.xlu0 %v4828
  %v4830 = vpop.xlane.xlu0 %4829
  %vm4831 = vcmp.eq.f32.partialorder %v4828, %v4830
  %v4832 = vsel %vm4831, %v4827, inf
  %4833 = vmin.xlane.f32.xlu0 %v4832
  %v4834 = vpop.xlane.xlu0 %4833
  %v4835 = vcvt.f32.s32 %v4834
  %v4836 = vcvt.f32.s32 %v4830
  %v4837 = vshll.u32 %v4836, 16
  %v4838 = vadd.s32 %v4837, %v4835
  %vm4839 = vcmp.lt.s32.totalorder %v4443, %v4444
  %v4840 = vsel %vm4839, %v4443, %v4444
  %vm4841 = vcmp.lt.s32.totalorder %v4840, %v4445
  %v4842 = vsel %vm4841, %v4840, %v4445
  %v4843 = vand.u32 %v4842, 65535
  %v4844 = vshra.s32 %v4842, 16
  %v4845 = vcvt.s32.f32 %v4843
  %v4846 = vcvt.s32.f32 %v4844
  %4847 = vmin.xlane.f32.xlu0 %v4846
  %v4848 = vpop.xlane.xlu0 %4847
  %vm4849 = vcmp.eq.f32.partialorder %v4846, %v4848
  %v4850 = vsel %vm4849, %v4845, inf
  %4851 = vmin.xlane.f32.xlu0 %v4850
  %v4852 = vpop.xlane.xlu0 %4851
  %v4853 = vcvt.f32.s32 %v4852
  %v4854 = vcvt.f32.s32 %v4848
  %v4855 = vshll.u32 %v4854, 16
  %v4856 = vadd.s32 %v4855, %v4853
  %vm4857 = vcmp.lt.s32.totalorder %v4446, %v4447
  %v4858 = vsel %vm4857, %v4446, %v4447
  %vm4859 = vcmp.lt.s32.totalorder %v4858, %v4448
  %v4860 = vsel %vm4859, %v4858, %v4448
  %v4861 = vand.u32 %v4860, 65535
  %v4862 = vshra.s32 %v4860, 16
  %v4863 = vcvt.s32.f32 %v4861
  %v4864 = vcvt.s32.f32 %v4862
  %4865 = vmin.xlane.f32.xlu0 %v4864
  %v4866 = vpop.xlane.xlu0 %4865
  %vm4867 = vcmp.eq.f32.partialorder %v4864, %v4866
  %v4868 = vsel %vm4867, %v4863, inf
  %4869 = vmin.xlane.f32.xlu0 %v4868
  %v4870 = vpop.xlane.xlu0 %4869
  %v4871 = vcvt.f32.s32 %v4870
  %v4872 = vcvt.f32.s32 %v4866
  %v4873 = vshll.u32 %v4872, 16
  %v4874 = vadd.s32 %v4873, %v4871
  %vm4875 = vcmp.lt.s32.totalorder %v4449, %v4450
  %v4876 = vsel %vm4875, %v4449, %v4450
  %vm4877 = vcmp.lt.s32.totalorder %v4876, %v4451
  %v4878 = vsel %vm4877, %v4876, %v4451
  %v4879 = vand.u32 %v4878, 65535
  %v4880 = vshra.s32 %v4878, 16
  %v4881 = vcvt.s32.f32 %v4879
  %v4882 = vcvt.s32.f32 %v4880
  %4883 = vmin.xlane.f32.xlu0 %v4882
  %v4884 = vpop.xlane.xlu0 %4883
  %vm4885 = vcmp.eq.f32.partialorder %v4882, %v4884
  %v4886 = vsel %vm4885, %v4881, inf
  %4887 = vmin.xlane.f32.xlu0 %v4886
  %v4888 = vpop.xlane.xlu0 %4887
  %v4889 = vcvt.f32.s32 %v4888
  %v4890 = vcvt.f32.s32 %v4884
  %v4891 = vshll.u32 %v4890, 16
  %v4892 = vadd.s32 %v4891, %v4889
  %vm4893 = vcmp.lt.s32.totalorder %v4452, %v4453
  %v4894 = vsel %vm4893, %v4452, %v4453
  %vm4895 = vcmp.lt.s32.totalorder %v4894, %v4454
  %v4896 = vsel %vm4895, %v4894, %v4454
  %v4897 = vand.u32 %v4896, 65535
  %v4898 = vshra.s32 %v4896, 16
  %v4899 = vcvt.s32.f32 %v4897
  %v4900 = vcvt.s32.f32 %v4898
  %4901 = vmin.xlane.f32.xlu0 %v4900
  %v4902 = vpop.xlane.xlu0 %4901
  %vm4903 = vcmp.eq.f32.partialorder %v4900, %v4902
  %v4904 = vsel %vm4903, %v4899, inf
  %4905 = vmin.xlane.f32.xlu0 %v4904
  %v4906 = vpop.xlane.xlu0 %4905
  %v4907 = vcvt.f32.s32 %v4906
  %v4908 = vcvt.f32.s32 %v4902
  %v4909 = vshll.u32 %v4908, 16
  %v4910 = vadd.s32 %v4909, %v4907
  %vm4911 = vcmp.lt.s32.totalorder %v4455, %v4456
  %v4912 = vsel %vm4911, %v4455, %v4456
  %vm4913 = vcmp.lt.s32.totalorder %v4912, %v4457
  %v4914 = vsel %vm4913, %v4912, %v4457
  %v4915 = vand.u32 %v4914, 65535
  %v4916 = vshra.s32 %v4914, 16
  %v4917 = vcvt.s32.f32 %v4915
  %v4918 = vcvt.s32.f32 %v4916
  %4919 = vmin.xlane.f32.xlu0 %v4918
  %v4920 = vpop.xlane.xlu0 %4919
  %vm4921 = vcmp.eq.f32.partialorder %v4918, %v4920
  %v4922 = vsel %vm4921, %v4917, inf
  %4923 = vmin.xlane.f32.xlu0 %v4922
  %v4924 = vpop.xlane.xlu0 %4923
  %v4925 = vcvt.f32.s32 %v4924
  %v4926 = vcvt.f32.s32 %v4920
  %v4927 = vshll.u32 %v4926, 16
  %v4928 = vadd.s32 %v4927, %v4925
  %vm4929 = vcmp.lt.s32.totalorder %v4458, %v4459
  %v4930 = vsel %vm4929, %v4458, %v4459
  %vm4931 = vcmp.lt.s32.totalorder %v4930, %v4460
  %v4932 = vsel %vm4931, %v4930, %v4460
  %v4933 = vand.u32 %v4932, 65535
  %v4934 = vshra.s32 %v4932, 16
  %v4935 = vcvt.s32.f32 %v4933
  %v4936 = vcvt.s32.f32 %v4934
  %4937 = vmin.xlane.f32.xlu0 %v4936
  %v4938 = vpop.xlane.xlu0 %4937
  %vm4939 = vcmp.eq.f32.partialorder %v4936, %v4938
  %v4940 = vsel %vm4939, %v4935, inf
  %4941 = vmin.xlane.f32.xlu0 %v4940
  %v4942 = vpop.xlane.xlu0 %4941
  %v4943 = vcvt.f32.s32 %v4942
  %v4944 = vcvt.f32.s32 %v4938
  %v4945 = vshll.u32 %v4944, 16
  %v4946 = vadd.s32 %v4945, %v4943
  %vm4947 = vcmp.lt.s32.totalorder %v4461, %v4462
  %v4948 = vsel %vm4947, %v4461, %v4462
  %vm4949 = vcmp.lt.s32.totalorder %v4948, %v4463
  %v4950 = vsel %vm4949, %v4948, %v4463
  %v4951 = vand.u32 %v4950, 65535
  %v4952 = vshra.s32 %v4950, 16
  %v4953 = vcvt.s32.f32 %v4951
  %v4954 = vcvt.s32.f32 %v4952
  %4955 = vmin.xlane.f32.xlu0 %v4954
  %v4956 = vpop.xlane.xlu0 %4955
  %vm4957 = vcmp.eq.f32.partialorder %v4954, %v4956
  %v4958 = vsel %vm4957, %v4953, inf
  %4959 = vmin.xlane.f32.xlu0 %v4958
  %v4960 = vpop.xlane.xlu0 %4959
  %v4961 = vcvt.f32.s32 %v4960
  %v4962 = vcvt.f32.s32 %v4956
  %v4963 = vshll.u32 %v4962, 16
  %v4964 = vadd.s32 %v4963, %v4961
  %vm4965 = vcmp.lt.s32.totalorder %v4464, %v4465
  %v4966 = vsel %vm4965, %v4464, %v4465
  %vm4967 = vcmp.lt.s32.totalorder %v4966, %v4466
  %v4968 = vsel %vm4967, %v4966, %v4466
  %v4969 = vand.u32 %v4968, 65535
  %v4970 = vshra.s32 %v4968, 16
  %v4971 = vcvt.s32.f32 %v4969
  %v4972 = vcvt.s32.f32 %v4970
  %4973 = vmin.xlane.f32.xlu0 %v4972
  %v4974 = vpop.xlane.xlu0 %4973
  %vm4975 = vcmp.eq.f32.partialorder %v4972, %v4974
  %v4976 = vsel %vm4975, %v4971, inf
  %4977 = vmin.xlane.f32.xlu0 %v4976
  %v4978 = vpop.xlane.xlu0 %4977
  %v4979 = vcvt.f32.s32 %v4978
  %v4980 = vcvt.f32.s32 %v4974
  %v4981 = vshll.u32 %v4980, 16
  %v4982 = vadd.s32 %v4981, %v4979
  %vm4983 = vcmp.lt.s32.totalorder %v4467, %v4468
  %v4984 = vsel %vm4983, %v4467, %v4468
  %vm4985 = vcmp.lt.s32.totalorder %v4984, %v4469
  %v4986 = vsel %vm4985, %v4984, %v4469
  %v4987 = vand.u32 %v4986, 65535
  %v4988 = vshra.s32 %v4986, 16
  %v4989 = vcvt.s32.f32 %v4987
  %v4990 = vcvt.s32.f32 %v4988
  %4991 = vmin.xlane.f32.xlu0 %v4990
  %v4992 = vpop.xlane.xlu0 %4991
  %vm4993 = vcmp.eq.f32.partialorder %v4990, %v4992
  %v4994 = vsel %vm4993, %v4989, inf
  %4995 = vmin.xlane.f32.xlu0 %v4994
  %v4996 = vpop.xlane.xlu0 %4995
  %v4997 = vcvt.f32.s32 %v4996
  %v4998 = vcvt.f32.s32 %v4992
  %v4999 = vshll.u32 %v4998, 16
  %v5000 = vadd.s32 %v4999, %v4997
  %vm5001 = vcmp.lt.s32.totalorder %v4470, %v4471
  %v5002 = vsel %vm5001, %v4470, %v4471
  %vm5003 = vcmp.lt.s32.totalorder %v5002, %v4472
  %v5004 = vsel %vm5003, %v5002, %v4472
  %v5005 = vand.u32 %v5004, 65535
  %v5006 = vshra.s32 %v5004, 16
  %v5007 = vcvt.s32.f32 %v5005
  %v5008 = vcvt.s32.f32 %v5006
  %5009 = vmin.xlane.f32.xlu0 %v5008
  %v5010 = vpop.xlane.xlu0 %5009
  %vm5011 = vcmp.eq.f32.partialorder %v5008, %v5010
  %v5012 = vsel %vm5011, %v5007, inf
  %5013 = vmin.xlane.f32.xlu0 %v5012
  %v5014 = vpop.xlane.xlu0 %5013
  %v5015 = vcvt.f32.s32 %v5014
  %v5016 = vcvt.f32.s32 %v5010
  %v5017 = vshll.u32 %v5016, 16
  %v5018 = vadd.s32 %v5017, %v5015
  %vm5019 = vcmp.lt.s32.totalorder %v4473, %v4474
  %v5020 = vsel %vm5019, %v4473, %v4474
  %vm5021 = vcmp.lt.s32.totalorder %v5020, %v4475
  %v5022 = vsel %vm5021, %v5020, %v4475
  %v5023 = vand.u32 %v5022, 65535
  %v5024 = vshra.s32 %v5022, 16
  %v5025 = vcvt.s32.f32 %v5023
  %v5026 = vcvt.s32.f32 %v5024
  %5027 = vmin.xlane.f32.xlu0 %v5026
  %v5028 = vpop.xlane.xlu0 %5027
  %vm5029 = vcmp.eq.f32.partialorder %v5026, %v5028
  %v5030 = vsel %vm5029, %v5025, inf
  %5031 = vmin.xlane.f32.xlu0 %v5030
  %v5032 = vpop.xlane.xlu0 %5031
  %v5033 = vcvt.f32.s32 %v5032
  %v5034 = vcvt.f32.s32 %v5028
  %v5035 = vshll.u32 %v5034, 16
  %v5036 = vadd.s32 %v5035, %v5033
  %vm5037 = vcmp.lt.s32.totalorder %v4476, %v4477
  %v5038 = vsel %vm5037, %v4476, %v4477
  %vm5039 = vcmp.lt.s32.totalorder %v5038, %v4478
  %v5040 = vsel %vm5039, %v5038, %v4478
  %v5041 = vand.u32 %v5040, 65535
  %v5042 = vshra.s32 %v5040, 16
  %v5043 = vcvt.s32.f32 %v5041
  %v5044 = vcvt.s32.f32 %v5042
  %5045 = vmin.xlane.f32.xlu0 %v5044
  %v5046 = vpop.xlane.xlu0 %5045
  %vm5047 = vcmp.eq.f32.partialorder %v5044, %v5046
  %v5048 = vsel %vm5047, %v5043, inf
  %5049 = vmin.xlane.f32.xlu0 %v5048
  %v5050 = vpop.xlane.xlu0 %5049
  %v5051 = vcvt.f32.s32 %v5050
  %v5052 = vcvt.f32.s32 %v5046
  %v5053 = vshll.u32 %v5052, 16
  %v5054 = vadd.s32 %v5053, %v5051
  %v5055 = vand.u32 %v4496, 4294965248
  %v5056 = vand.u32 %v4514, 4294965248
  %v5057 = vand.u32 %v4532, 4294965248
  %v5058 = vand.u32 %v4550, 4294965248
  %v5059 = vand.u32 %v4568, 4294965248
  %v5060 = vand.u32 %v4586, 4294965248
  %v5061 = vand.u32 %v4604, 4294965248
  %v5062 = vand.u32 %v4622, 4294965248
  %v5063 = vand.u32 %v4640, 4294965248
  %v5064 = vand.u32 %v4658, 4294965248
  %v5065 = vand.u32 %v4676, 4294965248
  %v5066 = vand.u32 %v4694, 4294965248
  %v5067 = vand.u32 %v4712, 4294965248
  %v5068 = vand.u32 %v4730, 4294965248
  %v5069 = vand.u32 %v4748, 4294965248
  %v5070 = vand.u32 %v4766, 4294965248
  %v5071 = vand.u32 %v4784, 4294965248
  %v5072 = vand.u32 %v4802, 4294965248
  %v5073 = vand.u32 %v4820, 4294965248
  %v5074 = vand.u32 %v4838, 4294965248
  %v5075 = vand.u32 %v4856, 4294965248
  %v5076 = vand.u32 %v4874, 4294965248
  %v5077 = vand.u32 %v4892, 4294965248
  %v5078 = vand.u32 %v4910, 4294965248
  %v5079 = vand.u32 %v4928, 4294965248
  %v5080 = vand.u32 %v4946, 4294965248
  %v5081 = vand.u32 %v4964, 4294965248
  %v5082 = vand.u32 %v4982, 4294965248
  %v5083 = vand.u32 %v5000, 4294965248
  %v5084 = vand.u32 %v5018, 4294965248
  %v5085 = vand.u32 %v5036, 4294965248
  %v5086 = vand.u32 %v5054, 4294965248
  %vm5119 = vcmp.eq.s32.totalorder %v2295, 2
  %v5120 = vsel %vm5119, %v5055, %v4255
  %v5121 = vsel %vm5119, %v5056, %v4256
  %v5122 = vsel %vm5119, %v5057, %v4257
  %v5123 = vsel %vm5119, %v5058, %v4258
  %v5124 = vsel %vm5119, %v5059, %v4259
  %v5125 = vsel %vm5119, %v5060, %v4260
  %v5126 = vsel %vm5119, %v5061, %v4261
  %v5127 = vsel %vm5119, %v5062, %v4262
  %v5128 = vsel %vm5119, %v5063, %v4263
  %v5129 = vsel %vm5119, %v5064, %v4264
  %v5130 = vsel %vm5119, %v5065, %v4265
  %v5131 = vsel %vm5119, %v5066, %v4266
  %v5132 = vsel %vm5119, %v5067, %v4267
  %v5133 = vsel %vm5119, %v5068, %v4268
  %v5134 = vsel %vm5119, %v5069, %v4269
  %v5135 = vsel %vm5119, %v5070, %v4270
  %v5136 = vsel %vm5119, %v5071, %v4271
  %v5137 = vsel %vm5119, %v5072, %v4272
  %v5138 = vsel %vm5119, %v5073, %v4273
  %v5139 = vsel %vm5119, %v5074, %v4274
  %v5140 = vsel %vm5119, %v5075, %v4275
  %v5141 = vsel %vm5119, %v5076, %v4276
  %v5142 = vsel %vm5119, %v5077, %v4277
  %v5143 = vsel %vm5119, %v5078, %v4278
  %v5144 = vsel %vm5119, %v5079, %v4279
  %v5145 = vsel %vm5119, %v5080, %v4280
  %v5146 = vsel %vm5119, %v5081, %v4281
  %v5147 = vsel %vm5119, %v5082, %v4282
  %v5148 = vsel %vm5119, %v5083, %v4283
  %v5149 = vsel %vm5119, %v5084, %v4284
  %v5150 = vsel %vm5119, %v5085, %v4285
  %v5151 = vsel %vm5119, %v5086, %v4286
  %vm5152 = vcmp.eq.s32.totalorder %v4383, %v4496
  %vm5153 = vcmp.eq.s32.totalorder %v4384, %v4496
  %vm5154 = vcmp.eq.s32.totalorder %v4385, %v4496
  %vm5155 = vcmp.eq.s32.totalorder %v4386, %v4514
  %vm5156 = vcmp.eq.s32.totalorder %v4387, %v4514
  %vm5157 = vcmp.eq.s32.totalorder %v4388, %v4514
  %vm5158 = vcmp.eq.s32.totalorder %v4389, %v4532
  %vm5159 = vcmp.eq.s32.totalorder %v4390, %v4532
  %vm5160 = vcmp.eq.s32.totalorder %v4391, %v4532
  %vm5161 = vcmp.eq.s32.totalorder %v4392, %v4550
  %vm5162 = vcmp.eq.s32.totalorder %v4393, %v4550
  %vm5163 = vcmp.eq.s32.totalorder %v4394, %v4550
  %vm5164 = vcmp.eq.s32.totalorder %v4395, %v4568
  %vm5165 = vcmp.eq.s32.totalorder %v4396, %v4568
  %vm5166 = vcmp.eq.s32.totalorder %v4397, %v4568
  %vm5167 = vcmp.eq.s32.totalorder %v4398, %v4586
  %vm5168 = vcmp.eq.s32.totalorder %v4399, %v4586
  %vm5169 = vcmp.eq.s32.totalorder %v4400, %v4586
  %vm5170 = vcmp.eq.s32.totalorder %v4401, %v4604
  %vm5171 = vcmp.eq.s32.totalorder %v4402, %v4604
  %vm5172 = vcmp.eq.s32.totalorder %v4403, %v4604
  %vm5173 = vcmp.eq.s32.totalorder %v4404, %v4622
  %vm5174 = vcmp.eq.s32.totalorder %v4405, %v4622
  %vm5175 = vcmp.eq.s32.totalorder %v4406, %v4622
  %vm5176 = vcmp.eq.s32.totalorder %v4407, %v4640
  %vm5177 = vcmp.eq.s32.totalorder %v4408, %v4640
  %vm5178 = vcmp.eq.s32.totalorder %v4409, %v4640
  %vm5179 = vcmp.eq.s32.totalorder %v4410, %v4658
  %vm5180 = vcmp.eq.s32.totalorder %v4411, %v4658
  %vm5181 = vcmp.eq.s32.totalorder %v4412, %v4658
  %vm5182 = vcmp.eq.s32.totalorder %v4413, %v4676
  %vm5183 = vcmp.eq.s32.totalorder %v4414, %v4676
  %vm5184 = vcmp.eq.s32.totalorder %v4415, %v4676
  %vm5185 = vcmp.eq.s32.totalorder %v4416, %v4694
  %vm5186 = vcmp.eq.s32.totalorder %v4417, %v4694
  %vm5187 = vcmp.eq.s32.totalorder %v4418, %v4694
  %vm5188 = vcmp.eq.s32.totalorder %v4419, %v4712
  %vm5189 = vcmp.eq.s32.totalorder %v4420, %v4712
  %vm5190 = vcmp.eq.s32.totalorder %v4421, %v4712
  %vm5191 = vcmp.eq.s32.totalorder %v4422, %v4730
  %vm5192 = vcmp.eq.s32.totalorder %v4423, %v4730
  %vm5193 = vcmp.eq.s32.totalorder %v4424, %v4730
  %vm5194 = vcmp.eq.s32.totalorder %v4425, %v4748
  %vm5195 = vcmp.eq.s32.totalorder %v4426, %v4748
  %vm5196 = vcmp.eq.s32.totalorder %v4427, %v4748
  %vm5197 = vcmp.eq.s32.totalorder %v4428, %v4766
  %vm5198 = vcmp.eq.s32.totalorder %v4429, %v4766
  %vm5199 = vcmp.eq.s32.totalorder %v4430, %v4766
  %vm5200 = vcmp.eq.s32.totalorder %v4431, %v4784
  %vm5201 = vcmp.eq.s32.totalorder %v4432, %v4784
  %vm5202 = vcmp.eq.s32.totalorder %v4433, %v4784
  %vm5203 = vcmp.eq.s32.totalorder %v4434, %v4802
  %vm5204 = vcmp.eq.s32.totalorder %v4435, %v4802
  %vm5205 = vcmp.eq.s32.totalorder %v4436, %v4802
  %vm5206 = vcmp.eq.s32.totalorder %v4437, %v4820
  %vm5207 = vcmp.eq.s32.totalorder %v4438, %v4820
  %vm5208 = vcmp.eq.s32.totalorder %v4439, %v4820
  %vm5209 = vcmp.eq.s32.totalorder %v4440, %v4838
  %vm5210 = vcmp.eq.s32.totalorder %v4441, %v4838
  %vm5211 = vcmp.eq.s32.totalorder %v4442, %v4838
  %vm5212 = vcmp.eq.s32.totalorder %v4443, %v4856
  %vm5213 = vcmp.eq.s32.totalorder %v4444, %v4856
  %vm5214 = vcmp.eq.s32.totalorder %v4445, %v4856
  %vm5215 = vcmp.eq.s32.totalorder %v4446, %v4874
  %vm5216 = vcmp.eq.s32.totalorder %v4447, %v4874
  %vm5217 = vcmp.eq.s32.totalorder %v4448, %v4874
  %vm5218 = vcmp.eq.s32.totalorder %v4449, %v4892
  %vm5219 = vcmp.eq.s32.totalorder %v4450, %v4892
  %vm5220 = vcmp.eq.s32.totalorder %v4451, %v4892
  %vm5221 = vcmp.eq.s32.totalorder %v4452, %v4910
  %vm5222 = vcmp.eq.s32.totalorder %v4453, %v4910
  %vm5223 = vcmp.eq.s32.totalorder %v4454, %v4910
  %vm5224 = vcmp.eq.s32.totalorder %v4455, %v4928
  %vm5225 = vcmp.eq.s32.totalorder %v4456, %v4928
  %vm5226 = vcmp.eq.s32.totalorder %v4457, %v4928
  %vm5227 = vcmp.eq.s32.totalorder %v4458, %v4946
  %vm5228 = vcmp.eq.s32.totalorder %v4459, %v4946
  %vm5229 = vcmp.eq.s32.totalorder %v4460, %v4946
  %vm5230 = vcmp.eq.s32.totalorder %v4461, %v4964
  %vm5231 = vcmp.eq.s32.totalorder %v4462, %v4964
  %vm5232 = vcmp.eq.s32.totalorder %v4463, %v4964
  %vm5233 = vcmp.eq.s32.totalorder %v4464, %v4982
  %vm5234 = vcmp.eq.s32.totalorder %v4465, %v4982
  %vm5235 = vcmp.eq.s32.totalorder %v4466, %v4982
  %vm5236 = vcmp.eq.s32.totalorder %v4467, %v5000
  %vm5237 = vcmp.eq.s32.totalorder %v4468, %v5000
  %vm5238 = vcmp.eq.s32.totalorder %v4469, %v5000
  %vm5239 = vcmp.eq.s32.totalorder %v4470, %v5018
  %vm5240 = vcmp.eq.s32.totalorder %v4471, %v5018
  %vm5241 = vcmp.eq.s32.totalorder %v4472, %v5018
  %vm5242 = vcmp.eq.s32.totalorder %v4473, %v5036
  %vm5243 = vcmp.eq.s32.totalorder %v4474, %v5036
  %vm5244 = vcmp.eq.s32.totalorder %v4475, %v5036
  %vm5245 = vcmp.eq.s32.totalorder %v4476, %v5054
  %vm5246 = vcmp.eq.s32.totalorder %v4477, %v5054
  %vm5247 = vcmp.eq.s32.totalorder %v4478, %v5054
  %v5248 = vsel %vm5152, 2130706432, %v4383
  %v5249 = vsel %vm5153, 2130706432, %v4384
  %v5250 = vsel %vm5154, 2130706432, %v4385
  %v5251 = vsel %vm5155, 2130706432, %v4386
  %v5252 = vsel %vm5156, 2130706432, %v4387
  %v5253 = vsel %vm5157, 2130706432, %v4388
  %v5254 = vsel %vm5158, 2130706432, %v4389
  %v5255 = vsel %vm5159, 2130706432, %v4390
  %v5256 = vsel %vm5160, 2130706432, %v4391
  %v5257 = vsel %vm5161, 2130706432, %v4392
  %v5258 = vsel %vm5162, 2130706432, %v4393
  %v5259 = vsel %vm5163, 2130706432, %v4394
  %v5260 = vsel %vm5164, 2130706432, %v4395
  %v5261 = vsel %vm5165, 2130706432, %v4396
  %v5262 = vsel %vm5166, 2130706432, %v4397
  %v5263 = vsel %vm5167, 2130706432, %v4398
  %v5264 = vsel %vm5168, 2130706432, %v4399
  %v5265 = vsel %vm5169, 2130706432, %v4400
  %v5266 = vsel %vm5170, 2130706432, %v4401
  %v5267 = vsel %vm5171, 2130706432, %v4402
  %v5268 = vsel %vm5172, 2130706432, %v4403
  %v5269 = vsel %vm5173, 2130706432, %v4404
  %v5270 = vsel %vm5174, 2130706432, %v4405
  %v5271 = vsel %vm5175, 2130706432, %v4406
  %v5272 = vsel %vm5176, 2130706432, %v4407
  %v5273 = vsel %vm5177, 2130706432, %v4408
  %v5274 = vsel %vm5178, 2130706432, %v4409
  %v5275 = vsel %vm5179, 2130706432, %v4410
  %v5276 = vsel %vm5180, 2130706432, %v4411
  %v5277 = vsel %vm5181, 2130706432, %v4412
  %v5278 = vsel %vm5182, 2130706432, %v4413
  %v5279 = vsel %vm5183, 2130706432, %v4414
  %v5280 = vsel %vm5184, 2130706432, %v4415
  %v5281 = vsel %vm5185, 2130706432, %v4416
  %v5282 = vsel %vm5186, 2130706432, %v4417
  %v5283 = vsel %vm5187, 2130706432, %v4418
  %v5284 = vsel %vm5188, 2130706432, %v4419
  %v5285 = vsel %vm5189, 2130706432, %v4420
  %v5286 = vsel %vm5190, 2130706432, %v4421
  %v5287 = vsel %vm5191, 2130706432, %v4422
  %v5288 = vsel %vm5192, 2130706432, %v4423
  %v5289 = vsel %vm5193, 2130706432, %v4424
  %v5290 = vsel %vm5194, 2130706432, %v4425
  %v5291 = vsel %vm5195, 2130706432, %v4426
  %v5292 = vsel %vm5196, 2130706432, %v4427
  %v5293 = vsel %vm5197, 2130706432, %v4428
  %v5294 = vsel %vm5198, 2130706432, %v4429
  %v5295 = vsel %vm5199, 2130706432, %v4430
  %v5296 = vsel %vm5200, 2130706432, %v4431
  %v5297 = vsel %vm5201, 2130706432, %v4432
  %v5298 = vsel %vm5202, 2130706432, %v4433
  %v5299 = vsel %vm5203, 2130706432, %v4434
  %v5300 = vsel %vm5204, 2130706432, %v4435
  %v5301 = vsel %vm5205, 2130706432, %v4436
  %v5302 = vsel %vm5206, 2130706432, %v4437
  %v5303 = vsel %vm5207, 2130706432, %v4438
  %v5304 = vsel %vm5208, 2130706432, %v4439
  %v5305 = vsel %vm5209, 2130706432, %v4440
  %v5306 = vsel %vm5210, 2130706432, %v4441
  %v5307 = vsel %vm5211, 2130706432, %v4442
  %v5308 = vsel %vm5212, 2130706432, %v4443
  %v5309 = vsel %vm5213, 2130706432, %v4444
  %v5310 = vsel %vm5214, 2130706432, %v4445
  %v5311 = vsel %vm5215, 2130706432, %v4446
  %v5312 = vsel %vm5216, 2130706432, %v4447
  %v5313 = vsel %vm5217, 2130706432, %v4448
  %v5314 = vsel %vm5218, 2130706432, %v4449
  %v5315 = vsel %vm5219, 2130706432, %v4450
  %v5316 = vsel %vm5220, 2130706432, %v4451
  %v5317 = vsel %vm5221, 2130706432, %v4452
  %v5318 = vsel %vm5222, 2130706432, %v4453
  %v5319 = vsel %vm5223, 2130706432, %v4454
  %v5320 = vsel %vm5224, 2130706432, %v4455
  %v5321 = vsel %vm5225, 2130706432, %v4456
  %v5322 = vsel %vm5226, 2130706432, %v4457
  %v5323 = vsel %vm5227, 2130706432, %v4458
  %v5324 = vsel %vm5228, 2130706432, %v4459
  %v5325 = vsel %vm5229, 2130706432, %v4460
  %v5326 = vsel %vm5230, 2130706432, %v4461
  %v5327 = vsel %vm5231, 2130706432, %v4462
  %v5328 = vsel %vm5232, 2130706432, %v4463
  %v5329 = vsel %vm5233, 2130706432, %v4464
  %v5330 = vsel %vm5234, 2130706432, %v4465
  %v5331 = vsel %vm5235, 2130706432, %v4466
  %v5332 = vsel %vm5236, 2130706432, %v4467
  %v5333 = vsel %vm5237, 2130706432, %v4468
  %v5334 = vsel %vm5238, 2130706432, %v4469
  %v5335 = vsel %vm5239, 2130706432, %v4470
  %v5336 = vsel %vm5240, 2130706432, %v4471
  %v5337 = vsel %vm5241, 2130706432, %v4472
  %v5338 = vsel %vm5242, 2130706432, %v4473
  %v5339 = vsel %vm5243, 2130706432, %v4474
  %v5340 = vsel %vm5244, 2130706432, %v4475
  %v5341 = vsel %vm5245, 2130706432, %v4476
  %v5342 = vsel %vm5246, 2130706432, %v4477
  %v5343 = vsel %vm5247, 2130706432, %v4478
  %vm5344 = vcmp.lt.s32.totalorder %v5248, %v5249
  %v5345 = vsel %vm5344, %v5248, %v5249
  %vm5346 = vcmp.lt.s32.totalorder %v5345, %v5250
  %v5347 = vsel %vm5346, %v5345, %v5250
  %v5348 = vand.u32 %v5347, 65535
  %v5349 = vshra.s32 %v5347, 16
  %v5350 = vcvt.s32.f32 %v5348
  %v5351 = vcvt.s32.f32 %v5349
  %5352 = vmin.xlane.f32.xlu0 %v5351
  %v5353 = vpop.xlane.xlu0 %5352
  %vm5354 = vcmp.eq.f32.partialorder %v5351, %v5353
  %v5355 = vsel %vm5354, %v5350, inf
  %5356 = vmin.xlane.f32.xlu0 %v5355
  %v5357 = vpop.xlane.xlu0 %5356
  %v5358 = vcvt.f32.s32 %v5357
  %v5359 = vcvt.f32.s32 %v5353
  %v5360 = vshll.u32 %v5359, 16
  %v5361 = vadd.s32 %v5360, %v5358
  %vm5362 = vcmp.lt.s32.totalorder %v5251, %v5252
  %v5363 = vsel %vm5362, %v5251, %v5252
  %vm5364 = vcmp.lt.s32.totalorder %v5363, %v5253
  %v5365 = vsel %vm5364, %v5363, %v5253
  %v5366 = vand.u32 %v5365, 65535
  %v5367 = vshra.s32 %v5365, 16
  %v5368 = vcvt.s32.f32 %v5366
  %v5369 = vcvt.s32.f32 %v5367
  %5370 = vmin.xlane.f32.xlu0 %v5369
  %v5371 = vpop.xlane.xlu0 %5370
  %vm5372 = vcmp.eq.f32.partialorder %v5369, %v5371
  %v5373 = vsel %vm5372, %v5368, inf
  %5374 = vmin.xlane.f32.xlu0 %v5373
  %v5375 = vpop.xlane.xlu0 %5374
  %v5376 = vcvt.f32.s32 %v5375
  %v5377 = vcvt.f32.s32 %v5371
  %v5378 = vshll.u32 %v5377, 16
  %v5379 = vadd.s32 %v5378, %v5376
  %vm5380 = vcmp.lt.s32.totalorder %v5254, %v5255
  %v5381 = vsel %vm5380, %v5254, %v5255
  %vm5382 = vcmp.lt.s32.totalorder %v5381, %v5256
  %v5383 = vsel %vm5382, %v5381, %v5256
  %v5384 = vand.u32 %v5383, 65535
  %v5385 = vshra.s32 %v5383, 16
  %v5386 = vcvt.s32.f32 %v5384
  %v5387 = vcvt.s32.f32 %v5385
  %5388 = vmin.xlane.f32.xlu0 %v5387
  %v5389 = vpop.xlane.xlu0 %5388
  %vm5390 = vcmp.eq.f32.partialorder %v5387, %v5389
  %v5391 = vsel %vm5390, %v5386, inf
  %5392 = vmin.xlane.f32.xlu0 %v5391
  %v5393 = vpop.xlane.xlu0 %5392
  %v5394 = vcvt.f32.s32 %v5393
  %v5395 = vcvt.f32.s32 %v5389
  %v5396 = vshll.u32 %v5395, 16
  %v5397 = vadd.s32 %v5396, %v5394
  %vm5398 = vcmp.lt.s32.totalorder %v5257, %v5258
  %v5399 = vsel %vm5398, %v5257, %v5258
  %vm5400 = vcmp.lt.s32.totalorder %v5399, %v5259
  %v5401 = vsel %vm5400, %v5399, %v5259
  %v5402 = vand.u32 %v5401, 65535
  %v5403 = vshra.s32 %v5401, 16
  %v5404 = vcvt.s32.f32 %v5402
  %v5405 = vcvt.s32.f32 %v5403
  %5406 = vmin.xlane.f32.xlu0 %v5405
  %v5407 = vpop.xlane.xlu0 %5406
  %vm5408 = vcmp.eq.f32.partialorder %v5405, %v5407
  %v5409 = vsel %vm5408, %v5404, inf
  %5410 = vmin.xlane.f32.xlu0 %v5409
  %v5411 = vpop.xlane.xlu0 %5410
  %v5412 = vcvt.f32.s32 %v5411
  %v5413 = vcvt.f32.s32 %v5407
  %v5414 = vshll.u32 %v5413, 16
  %v5415 = vadd.s32 %v5414, %v5412
  %vm5416 = vcmp.lt.s32.totalorder %v5260, %v5261
  %v5417 = vsel %vm5416, %v5260, %v5261
  %vm5418 = vcmp.lt.s32.totalorder %v5417, %v5262
  %v5419 = vsel %vm5418, %v5417, %v5262
  %v5420 = vand.u32 %v5419, 65535
  %v5421 = vshra.s32 %v5419, 16
  %v5422 = vcvt.s32.f32 %v5420
  %v5423 = vcvt.s32.f32 %v5421
  %5424 = vmin.xlane.f32.xlu0 %v5423
  %v5425 = vpop.xlane.xlu0 %5424
  %vm5426 = vcmp.eq.f32.partialorder %v5423, %v5425
  %v5427 = vsel %vm5426, %v5422, inf
  %5428 = vmin.xlane.f32.xlu0 %v5427
  %v5429 = vpop.xlane.xlu0 %5428
  %v5430 = vcvt.f32.s32 %v5429
  %v5431 = vcvt.f32.s32 %v5425
  %v5432 = vshll.u32 %v5431, 16
  %v5433 = vadd.s32 %v5432, %v5430
  %vm5434 = vcmp.lt.s32.totalorder %v5263, %v5264
  %v5435 = vsel %vm5434, %v5263, %v5264
  %vm5436 = vcmp.lt.s32.totalorder %v5435, %v5265
  %v5437 = vsel %vm5436, %v5435, %v5265
  %v5438 = vand.u32 %v5437, 65535
  %v5439 = vshra.s32 %v5437, 16
  %v5440 = vcvt.s32.f32 %v5438
  %v5441 = vcvt.s32.f32 %v5439
  %5442 = vmin.xlane.f32.xlu0 %v5441
  %v5443 = vpop.xlane.xlu0 %5442
  %vm5444 = vcmp.eq.f32.partialorder %v5441, %v5443
  %v5445 = vsel %vm5444, %v5440, inf
  %5446 = vmin.xlane.f32.xlu0 %v5445
  %v5447 = vpop.xlane.xlu0 %5446
  %v5448 = vcvt.f32.s32 %v5447
  %v5449 = vcvt.f32.s32 %v5443
  %v5450 = vshll.u32 %v5449, 16
  %v5451 = vadd.s32 %v5450, %v5448
  %vm5452 = vcmp.lt.s32.totalorder %v5266, %v5267
  %v5453 = vsel %vm5452, %v5266, %v5267
  %vm5454 = vcmp.lt.s32.totalorder %v5453, %v5268
  %v5455 = vsel %vm5454, %v5453, %v5268
  %v5456 = vand.u32 %v5455, 65535
  %v5457 = vshra.s32 %v5455, 16
  %v5458 = vcvt.s32.f32 %v5456
  %v5459 = vcvt.s32.f32 %v5457
  %5460 = vmin.xlane.f32.xlu0 %v5459
  %v5461 = vpop.xlane.xlu0 %5460
  %vm5462 = vcmp.eq.f32.partialorder %v5459, %v5461
  %v5463 = vsel %vm5462, %v5458, inf
  %5464 = vmin.xlane.f32.xlu0 %v5463
  %v5465 = vpop.xlane.xlu0 %5464
  %v5466 = vcvt.f32.s32 %v5465
  %v5467 = vcvt.f32.s32 %v5461
  %v5468 = vshll.u32 %v5467, 16
  %v5469 = vadd.s32 %v5468, %v5466
  %vm5470 = vcmp.lt.s32.totalorder %v5269, %v5270
  %v5471 = vsel %vm5470, %v5269, %v5270
  %vm5472 = vcmp.lt.s32.totalorder %v5471, %v5271
  %v5473 = vsel %vm5472, %v5471, %v5271
  %v5474 = vand.u32 %v5473, 65535
  %v5475 = vshra.s32 %v5473, 16
  %v5476 = vcvt.s32.f32 %v5474
  %v5477 = vcvt.s32.f32 %v5475
  %5478 = vmin.xlane.f32.xlu0 %v5477
  %v5479 = vpop.xlane.xlu0 %5478
  %vm5480 = vcmp.eq.f32.partialorder %v5477, %v5479
  %v5481 = vsel %vm5480, %v5476, inf
  %5482 = vmin.xlane.f32.xlu0 %v5481
  %v5483 = vpop.xlane.xlu0 %5482
  %v5484 = vcvt.f32.s32 %v5483
  %v5485 = vcvt.f32.s32 %v5479
  %v5486 = vshll.u32 %v5485, 16
  %v5487 = vadd.s32 %v5486, %v5484
  %vm5488 = vcmp.lt.s32.totalorder %v5272, %v5273
  %v5489 = vsel %vm5488, %v5272, %v5273
  %vm5490 = vcmp.lt.s32.totalorder %v5489, %v5274
  %v5491 = vsel %vm5490, %v5489, %v5274
  %v5492 = vand.u32 %v5491, 65535
  %v5493 = vshra.s32 %v5491, 16
  %v5494 = vcvt.s32.f32 %v5492
  %v5495 = vcvt.s32.f32 %v5493
  %5496 = vmin.xlane.f32.xlu0 %v5495
  %v5497 = vpop.xlane.xlu0 %5496
  %vm5498 = vcmp.eq.f32.partialorder %v5495, %v5497
  %v5499 = vsel %vm5498, %v5494, inf
  %5500 = vmin.xlane.f32.xlu0 %v5499
  %v5501 = vpop.xlane.xlu0 %5500
  %v5502 = vcvt.f32.s32 %v5501
  %v5503 = vcvt.f32.s32 %v5497
  %v5504 = vshll.u32 %v5503, 16
  %v5505 = vadd.s32 %v5504, %v5502
  %vm5506 = vcmp.lt.s32.totalorder %v5275, %v5276
  %v5507 = vsel %vm5506, %v5275, %v5276
  %vm5508 = vcmp.lt.s32.totalorder %v5507, %v5277
  %v5509 = vsel %vm5508, %v5507, %v5277
  %v5510 = vand.u32 %v5509, 65535
  %v5511 = vshra.s32 %v5509, 16
  %v5512 = vcvt.s32.f32 %v5510
  %v5513 = vcvt.s32.f32 %v5511
  %5514 = vmin.xlane.f32.xlu0 %v5513
  %v5515 = vpop.xlane.xlu0 %5514
  %vm5516 = vcmp.eq.f32.partialorder %v5513, %v5515
  %v5517 = vsel %vm5516, %v5512, inf
  %5518 = vmin.xlane.f32.xlu0 %v5517
  %v5519 = vpop.xlane.xlu0 %5518
  %v5520 = vcvt.f32.s32 %v5519
  %v5521 = vcvt.f32.s32 %v5515
  %v5522 = vshll.u32 %v5521, 16
  %v5523 = vadd.s32 %v5522, %v5520
  %vm5524 = vcmp.lt.s32.totalorder %v5278, %v5279
  %v5525 = vsel %vm5524, %v5278, %v5279
  %vm5526 = vcmp.lt.s32.totalorder %v5525, %v5280
  %v5527 = vsel %vm5526, %v5525, %v5280
  %v5528 = vand.u32 %v5527, 65535
  %v5529 = vshra.s32 %v5527, 16
  %v5530 = vcvt.s32.f32 %v5528
  %v5531 = vcvt.s32.f32 %v5529
  %5532 = vmin.xlane.f32.xlu0 %v5531
  %v5533 = vpop.xlane.xlu0 %5532
  %vm5534 = vcmp.eq.f32.partialorder %v5531, %v5533
  %v5535 = vsel %vm5534, %v5530, inf
  %5536 = vmin.xlane.f32.xlu0 %v5535
  %v5537 = vpop.xlane.xlu0 %5536
  %v5538 = vcvt.f32.s32 %v5537
  %v5539 = vcvt.f32.s32 %v5533
  %v5540 = vshll.u32 %v5539, 16
  %v5541 = vadd.s32 %v5540, %v5538
  %vm5542 = vcmp.lt.s32.totalorder %v5281, %v5282
  %v5543 = vsel %vm5542, %v5281, %v5282
  %vm5544 = vcmp.lt.s32.totalorder %v5543, %v5283
  %v5545 = vsel %vm5544, %v5543, %v5283
  %v5546 = vand.u32 %v5545, 65535
  %v5547 = vshra.s32 %v5545, 16
  %v5548 = vcvt.s32.f32 %v5546
  %v5549 = vcvt.s32.f32 %v5547
  %5550 = vmin.xlane.f32.xlu0 %v5549
  %v5551 = vpop.xlane.xlu0 %5550
  %vm5552 = vcmp.eq.f32.partialorder %v5549, %v5551
  %v5553 = vsel %vm5552, %v5548, inf
  %5554 = vmin.xlane.f32.xlu0 %v5553
  %v5555 = vpop.xlane.xlu0 %5554
  %v5556 = vcvt.f32.s32 %v5555
  %v5557 = vcvt.f32.s32 %v5551
  %v5558 = vshll.u32 %v5557, 16
  %v5559 = vadd.s32 %v5558, %v5556
  %vm5560 = vcmp.lt.s32.totalorder %v5284, %v5285
  %v5561 = vsel %vm5560, %v5284, %v5285
  %vm5562 = vcmp.lt.s32.totalorder %v5561, %v5286
  %v5563 = vsel %vm5562, %v5561, %v5286
  %v5564 = vand.u32 %v5563, 65535
  %v5565 = vshra.s32 %v5563, 16
  %v5566 = vcvt.s32.f32 %v5564
  %v5567 = vcvt.s32.f32 %v5565
  %5568 = vmin.xlane.f32.xlu0 %v5567
  %v5569 = vpop.xlane.xlu0 %5568
  %vm5570 = vcmp.eq.f32.partialorder %v5567, %v5569
  %v5571 = vsel %vm5570, %v5566, inf
  %5572 = vmin.xlane.f32.xlu0 %v5571
  %v5573 = vpop.xlane.xlu0 %5572
  %v5574 = vcvt.f32.s32 %v5573
  %v5575 = vcvt.f32.s32 %v5569
  %v5576 = vshll.u32 %v5575, 16
  %v5577 = vadd.s32 %v5576, %v5574
  %vm5578 = vcmp.lt.s32.totalorder %v5287, %v5288
  %v5579 = vsel %vm5578, %v5287, %v5288
  %vm5580 = vcmp.lt.s32.totalorder %v5579, %v5289
  %v5581 = vsel %vm5580, %v5579, %v5289
  %v5582 = vand.u32 %v5581, 65535
  %v5583 = vshra.s32 %v5581, 16
  %v5584 = vcvt.s32.f32 %v5582
  %v5585 = vcvt.s32.f32 %v5583
  %5586 = vmin.xlane.f32.xlu0 %v5585
  %v5587 = vpop.xlane.xlu0 %5586
  %vm5588 = vcmp.eq.f32.partialorder %v5585, %v5587
  %v5589 = vsel %vm5588, %v5584, inf
  %5590 = vmin.xlane.f32.xlu0 %v5589
  %v5591 = vpop.xlane.xlu0 %5590
  %v5592 = vcvt.f32.s32 %v5591
  %v5593 = vcvt.f32.s32 %v5587
  %v5594 = vshll.u32 %v5593, 16
  %v5595 = vadd.s32 %v5594, %v5592
  %vm5596 = vcmp.lt.s32.totalorder %v5290, %v5291
  %v5597 = vsel %vm5596, %v5290, %v5291
  %vm5598 = vcmp.lt.s32.totalorder %v5597, %v5292
  %v5599 = vsel %vm5598, %v5597, %v5292
  %v5600 = vand.u32 %v5599, 65535
  %v5601 = vshra.s32 %v5599, 16
  %v5602 = vcvt.s32.f32 %v5600
  %v5603 = vcvt.s32.f32 %v5601
  %5604 = vmin.xlane.f32.xlu0 %v5603
  %v5605 = vpop.xlane.xlu0 %5604
  %vm5606 = vcmp.eq.f32.partialorder %v5603, %v5605
  %v5607 = vsel %vm5606, %v5602, inf
  %5608 = vmin.xlane.f32.xlu0 %v5607
  %v5609 = vpop.xlane.xlu0 %5608
  %v5610 = vcvt.f32.s32 %v5609
  %v5611 = vcvt.f32.s32 %v5605
  %v5612 = vshll.u32 %v5611, 16
  %v5613 = vadd.s32 %v5612, %v5610
  %vm5614 = vcmp.lt.s32.totalorder %v5293, %v5294
  %v5615 = vsel %vm5614, %v5293, %v5294
  %vm5616 = vcmp.lt.s32.totalorder %v5615, %v5295
  %v5617 = vsel %vm5616, %v5615, %v5295
  %v5618 = vand.u32 %v5617, 65535
  %v5619 = vshra.s32 %v5617, 16
  %v5620 = vcvt.s32.f32 %v5618
  %v5621 = vcvt.s32.f32 %v5619
  %5622 = vmin.xlane.f32.xlu0 %v5621
  %v5623 = vpop.xlane.xlu0 %5622
  %vm5624 = vcmp.eq.f32.partialorder %v5621, %v5623
  %v5625 = vsel %vm5624, %v5620, inf
  %5626 = vmin.xlane.f32.xlu0 %v5625
  %v5627 = vpop.xlane.xlu0 %5626
  %v5628 = vcvt.f32.s32 %v5627
  %v5629 = vcvt.f32.s32 %v5623
  %v5630 = vshll.u32 %v5629, 16
  %v5631 = vadd.s32 %v5630, %v5628
  %vm5632 = vcmp.lt.s32.totalorder %v5296, %v5297
  %v5633 = vsel %vm5632, %v5296, %v5297
  %vm5634 = vcmp.lt.s32.totalorder %v5633, %v5298
  %v5635 = vsel %vm5634, %v5633, %v5298
  %v5636 = vand.u32 %v5635, 65535
  %v5637 = vshra.s32 %v5635, 16
  %v5638 = vcvt.s32.f32 %v5636
  %v5639 = vcvt.s32.f32 %v5637
  %5640 = vmin.xlane.f32.xlu0 %v5639
  %v5641 = vpop.xlane.xlu0 %5640
  %vm5642 = vcmp.eq.f32.partialorder %v5639, %v5641
  %v5643 = vsel %vm5642, %v5638, inf
  %5644 = vmin.xlane.f32.xlu0 %v5643
  %v5645 = vpop.xlane.xlu0 %5644
  %v5646 = vcvt.f32.s32 %v5645
  %v5647 = vcvt.f32.s32 %v5641
  %v5648 = vshll.u32 %v5647, 16
  %v5649 = vadd.s32 %v5648, %v5646
  %vm5650 = vcmp.lt.s32.totalorder %v5299, %v5300
  %v5651 = vsel %vm5650, %v5299, %v5300
  %vm5652 = vcmp.lt.s32.totalorder %v5651, %v5301
  %v5653 = vsel %vm5652, %v5651, %v5301
  %v5654 = vand.u32 %v5653, 65535
  %v5655 = vshra.s32 %v5653, 16
  %v5656 = vcvt.s32.f32 %v5654
  %v5657 = vcvt.s32.f32 %v5655
  %5658 = vmin.xlane.f32.xlu0 %v5657
  %v5659 = vpop.xlane.xlu0 %5658
  %vm5660 = vcmp.eq.f32.partialorder %v5657, %v5659
  %v5661 = vsel %vm5660, %v5656, inf
  %5662 = vmin.xlane.f32.xlu0 %v5661
  %v5663 = vpop.xlane.xlu0 %5662
  %v5664 = vcvt.f32.s32 %v5663
  %v5665 = vcvt.f32.s32 %v5659
  %v5666 = vshll.u32 %v5665, 16
  %v5667 = vadd.s32 %v5666, %v5664
  %vm5668 = vcmp.lt.s32.totalorder %v5302, %v5303
  %v5669 = vsel %vm5668, %v5302, %v5303
  %vm5670 = vcmp.lt.s32.totalorder %v5669, %v5304
  %v5671 = vsel %vm5670, %v5669, %v5304
  %v5672 = vand.u32 %v5671, 65535
  %v5673 = vshra.s32 %v5671, 16
  %v5674 = vcvt.s32.f32 %v5672
  %v5675 = vcvt.s32.f32 %v5673
  %5676 = vmin.xlane.f32.xlu0 %v5675
  %v5677 = vpop.xlane.xlu0 %5676
  %vm5678 = vcmp.eq.f32.partialorder %v5675, %v5677
  %v5679 = vsel %vm5678, %v5674, inf
  %5680 = vmin.xlane.f32.xlu0 %v5679
  %v5681 = vpop.xlane.xlu0 %5680
  %v5682 = vcvt.f32.s32 %v5681
  %v5683 = vcvt.f32.s32 %v5677
  %v5684 = vshll.u32 %v5683, 16
  %v5685 = vadd.s32 %v5684, %v5682
  %vm5686 = vcmp.lt.s32.totalorder %v5305, %v5306
  %v5687 = vsel %vm5686, %v5305, %v5306
  %vm5688 = vcmp.lt.s32.totalorder %v5687, %v5307
  %v5689 = vsel %vm5688, %v5687, %v5307
  %v5690 = vand.u32 %v5689, 65535
  %v5691 = vshra.s32 %v5689, 16
  %v5692 = vcvt.s32.f32 %v5690
  %v5693 = vcvt.s32.f32 %v5691
  %5694 = vmin.xlane.f32.xlu0 %v5693
  %v5695 = vpop.xlane.xlu0 %5694
  %vm5696 = vcmp.eq.f32.partialorder %v5693, %v5695
  %v5697 = vsel %vm5696, %v5692, inf
  %5698 = vmin.xlane.f32.xlu0 %v5697
  %v5699 = vpop.xlane.xlu0 %5698
  %v5700 = vcvt.f32.s32 %v5699
  %v5701 = vcvt.f32.s32 %v5695
  %v5702 = vshll.u32 %v5701, 16
  %v5703 = vadd.s32 %v5702, %v5700
  %vm5704 = vcmp.lt.s32.totalorder %v5308, %v5309
  %v5705 = vsel %vm5704, %v5308, %v5309
  %vm5706 = vcmp.lt.s32.totalorder %v5705, %v5310
  %v5707 = vsel %vm5706, %v5705, %v5310
  %v5708 = vand.u32 %v5707, 65535
  %v5709 = vshra.s32 %v5707, 16
  %v5710 = vcvt.s32.f32 %v5708
  %v5711 = vcvt.s32.f32 %v5709
  %5712 = vmin.xlane.f32.xlu0 %v5711
  %v5713 = vpop.xlane.xlu0 %5712
  %vm5714 = vcmp.eq.f32.partialorder %v5711, %v5713
  %v5715 = vsel %vm5714, %v5710, inf
  %5716 = vmin.xlane.f32.xlu0 %v5715
  %v5717 = vpop.xlane.xlu0 %5716
  %v5718 = vcvt.f32.s32 %v5717
  %v5719 = vcvt.f32.s32 %v5713
  %v5720 = vshll.u32 %v5719, 16
  %v5721 = vadd.s32 %v5720, %v5718
  %vm5722 = vcmp.lt.s32.totalorder %v5311, %v5312
  %v5723 = vsel %vm5722, %v5311, %v5312
  %vm5724 = vcmp.lt.s32.totalorder %v5723, %v5313
  %v5725 = vsel %vm5724, %v5723, %v5313
  %v5726 = vand.u32 %v5725, 65535
  %v5727 = vshra.s32 %v5725, 16
  %v5728 = vcvt.s32.f32 %v5726
  %v5729 = vcvt.s32.f32 %v5727
  %5730 = vmin.xlane.f32.xlu0 %v5729
  %v5731 = vpop.xlane.xlu0 %5730
  %vm5732 = vcmp.eq.f32.partialorder %v5729, %v5731
  %v5733 = vsel %vm5732, %v5728, inf
  %5734 = vmin.xlane.f32.xlu0 %v5733
  %v5735 = vpop.xlane.xlu0 %5734
  %v5736 = vcvt.f32.s32 %v5735
  %v5737 = vcvt.f32.s32 %v5731
  %v5738 = vshll.u32 %v5737, 16
  %v5739 = vadd.s32 %v5738, %v5736
  %vm5740 = vcmp.lt.s32.totalorder %v5314, %v5315
  %v5741 = vsel %vm5740, %v5314, %v5315
  %vm5742 = vcmp.lt.s32.totalorder %v5741, %v5316
  %v5743 = vsel %vm5742, %v5741, %v5316
  %v5744 = vand.u32 %v5743, 65535
  %v5745 = vshra.s32 %v5743, 16
  %v5746 = vcvt.s32.f32 %v5744
  %v5747 = vcvt.s32.f32 %v5745
  %5748 = vmin.xlane.f32.xlu0 %v5747
  %v5749 = vpop.xlane.xlu0 %5748
  %vm5750 = vcmp.eq.f32.partialorder %v5747, %v5749
  %v5751 = vsel %vm5750, %v5746, inf
  %5752 = vmin.xlane.f32.xlu0 %v5751
  %v5753 = vpop.xlane.xlu0 %5752
  %v5754 = vcvt.f32.s32 %v5753
  %v5755 = vcvt.f32.s32 %v5749
  %v5756 = vshll.u32 %v5755, 16
  %v5757 = vadd.s32 %v5756, %v5754
  %vm5758 = vcmp.lt.s32.totalorder %v5317, %v5318
  %v5759 = vsel %vm5758, %v5317, %v5318
  %vm5760 = vcmp.lt.s32.totalorder %v5759, %v5319
  %v5761 = vsel %vm5760, %v5759, %v5319
  %v5762 = vand.u32 %v5761, 65535
  %v5763 = vshra.s32 %v5761, 16
  %v5764 = vcvt.s32.f32 %v5762
  %v5765 = vcvt.s32.f32 %v5763
  %5766 = vmin.xlane.f32.xlu0 %v5765
  %v5767 = vpop.xlane.xlu0 %5766
  %vm5768 = vcmp.eq.f32.partialorder %v5765, %v5767
  %v5769 = vsel %vm5768, %v5764, inf
  %5770 = vmin.xlane.f32.xlu0 %v5769
  %v5771 = vpop.xlane.xlu0 %5770
  %v5772 = vcvt.f32.s32 %v5771
  %v5773 = vcvt.f32.s32 %v5767
  %v5774 = vshll.u32 %v5773, 16
  %v5775 = vadd.s32 %v5774, %v5772
  %vm5776 = vcmp.lt.s32.totalorder %v5320, %v5321
  %v5777 = vsel %vm5776, %v5320, %v5321
  %vm5778 = vcmp.lt.s32.totalorder %v5777, %v5322
  %v5779 = vsel %vm5778, %v5777, %v5322
  %v5780 = vand.u32 %v5779, 65535
  %v5781 = vshra.s32 %v5779, 16
  %v5782 = vcvt.s32.f32 %v5780
  %v5783 = vcvt.s32.f32 %v5781
  %5784 = vmin.xlane.f32.xlu0 %v5783
  %v5785 = vpop.xlane.xlu0 %5784
  %vm5786 = vcmp.eq.f32.partialorder %v5783, %v5785
  %v5787 = vsel %vm5786, %v5782, inf
  %5788 = vmin.xlane.f32.xlu0 %v5787
  %v5789 = vpop.xlane.xlu0 %5788
  %v5790 = vcvt.f32.s32 %v5789
  %v5791 = vcvt.f32.s32 %v5785
  %v5792 = vshll.u32 %v5791, 16
  %v5793 = vadd.s32 %v5792, %v5790
  %vm5794 = vcmp.lt.s32.totalorder %v5323, %v5324
  %v5795 = vsel %vm5794, %v5323, %v5324
  %vm5796 = vcmp.lt.s32.totalorder %v5795, %v5325
  %v5797 = vsel %vm5796, %v5795, %v5325
  %v5798 = vand.u32 %v5797, 65535
  %v5799 = vshra.s32 %v5797, 16
  %v5800 = vcvt.s32.f32 %v5798
  %v5801 = vcvt.s32.f32 %v5799
  %5802 = vmin.xlane.f32.xlu0 %v5801
  %v5803 = vpop.xlane.xlu0 %5802
  %vm5804 = vcmp.eq.f32.partialorder %v5801, %v5803
  %v5805 = vsel %vm5804, %v5800, inf
  %5806 = vmin.xlane.f32.xlu0 %v5805
  %v5807 = vpop.xlane.xlu0 %5806
  %v5808 = vcvt.f32.s32 %v5807
  %v5809 = vcvt.f32.s32 %v5803
  %v5810 = vshll.u32 %v5809, 16
  %v5811 = vadd.s32 %v5810, %v5808
  %vm5812 = vcmp.lt.s32.totalorder %v5326, %v5327
  %v5813 = vsel %vm5812, %v5326, %v5327
  %vm5814 = vcmp.lt.s32.totalorder %v5813, %v5328
  %v5815 = vsel %vm5814, %v5813, %v5328
  %v5816 = vand.u32 %v5815, 65535
  %v5817 = vshra.s32 %v5815, 16
  %v5818 = vcvt.s32.f32 %v5816
  %v5819 = vcvt.s32.f32 %v5817
  %5820 = vmin.xlane.f32.xlu0 %v5819
  %v5821 = vpop.xlane.xlu0 %5820
  %vm5822 = vcmp.eq.f32.partialorder %v5819, %v5821
  %v5823 = vsel %vm5822, %v5818, inf
  %5824 = vmin.xlane.f32.xlu0 %v5823
  %v5825 = vpop.xlane.xlu0 %5824
  %v5826 = vcvt.f32.s32 %v5825
  %v5827 = vcvt.f32.s32 %v5821
  %v5828 = vshll.u32 %v5827, 16
  %v5829 = vadd.s32 %v5828, %v5826
  %vm5830 = vcmp.lt.s32.totalorder %v5329, %v5330
  %v5831 = vsel %vm5830, %v5329, %v5330
  %vm5832 = vcmp.lt.s32.totalorder %v5831, %v5331
  %v5833 = vsel %vm5832, %v5831, %v5331
  %v5834 = vand.u32 %v5833, 65535
  %v5835 = vshra.s32 %v5833, 16
  %v5836 = vcvt.s32.f32 %v5834
  %v5837 = vcvt.s32.f32 %v5835
  %5838 = vmin.xlane.f32.xlu0 %v5837
  %v5839 = vpop.xlane.xlu0 %5838
  %vm5840 = vcmp.eq.f32.partialorder %v5837, %v5839
  %v5841 = vsel %vm5840, %v5836, inf
  %5842 = vmin.xlane.f32.xlu0 %v5841
  %v5843 = vpop.xlane.xlu0 %5842
  %v5844 = vcvt.f32.s32 %v5843
  %v5845 = vcvt.f32.s32 %v5839
  %v5846 = vshll.u32 %v5845, 16
  %v5847 = vadd.s32 %v5846, %v5844
  %vm5848 = vcmp.lt.s32.totalorder %v5332, %v5333
  %v5849 = vsel %vm5848, %v5332, %v5333
  %vm5850 = vcmp.lt.s32.totalorder %v5849, %v5334
  %v5851 = vsel %vm5850, %v5849, %v5334
  %v5852 = vand.u32 %v5851, 65535
  %v5853 = vshra.s32 %v5851, 16
  %v5854 = vcvt.s32.f32 %v5852
  %v5855 = vcvt.s32.f32 %v5853
  %5856 = vmin.xlane.f32.xlu0 %v5855
  %v5857 = vpop.xlane.xlu0 %5856
  %vm5858 = vcmp.eq.f32.partialorder %v5855, %v5857
  %v5859 = vsel %vm5858, %v5854, inf
  %5860 = vmin.xlane.f32.xlu0 %v5859
  %v5861 = vpop.xlane.xlu0 %5860
  %v5862 = vcvt.f32.s32 %v5861
  %v5863 = vcvt.f32.s32 %v5857
  %v5864 = vshll.u32 %v5863, 16
  %v5865 = vadd.s32 %v5864, %v5862
  %vm5866 = vcmp.lt.s32.totalorder %v5335, %v5336
  %v5867 = vsel %vm5866, %v5335, %v5336
  %vm5868 = vcmp.lt.s32.totalorder %v5867, %v5337
  %v5869 = vsel %vm5868, %v5867, %v5337
  %v5870 = vand.u32 %v5869, 65535
  %v5871 = vshra.s32 %v5869, 16
  %v5872 = vcvt.s32.f32 %v5870
  %v5873 = vcvt.s32.f32 %v5871
  %5874 = vmin.xlane.f32.xlu0 %v5873
  %v5875 = vpop.xlane.xlu0 %5874
  %vm5876 = vcmp.eq.f32.partialorder %v5873, %v5875
  %v5877 = vsel %vm5876, %v5872, inf
  %5878 = vmin.xlane.f32.xlu0 %v5877
  %v5879 = vpop.xlane.xlu0 %5878
  %v5880 = vcvt.f32.s32 %v5879
  %v5881 = vcvt.f32.s32 %v5875
  %v5882 = vshll.u32 %v5881, 16
  %v5883 = vadd.s32 %v5882, %v5880
  %vm5884 = vcmp.lt.s32.totalorder %v5338, %v5339
  %v5885 = vsel %vm5884, %v5338, %v5339
  %vm5886 = vcmp.lt.s32.totalorder %v5885, %v5340
  %v5887 = vsel %vm5886, %v5885, %v5340
  %v5888 = vand.u32 %v5887, 65535
  %v5889 = vshra.s32 %v5887, 16
  %v5890 = vcvt.s32.f32 %v5888
  %v5891 = vcvt.s32.f32 %v5889
  %5892 = vmin.xlane.f32.xlu0 %v5891
  %v5893 = vpop.xlane.xlu0 %5892
  %vm5894 = vcmp.eq.f32.partialorder %v5891, %v5893
  %v5895 = vsel %vm5894, %v5890, inf
  %5896 = vmin.xlane.f32.xlu0 %v5895
  %v5897 = vpop.xlane.xlu0 %5896
  %v5898 = vcvt.f32.s32 %v5897
  %v5899 = vcvt.f32.s32 %v5893
  %v5900 = vshll.u32 %v5899, 16
  %v5901 = vadd.s32 %v5900, %v5898
  %vm5902 = vcmp.lt.s32.totalorder %v5341, %v5342
  %v5903 = vsel %vm5902, %v5341, %v5342
  %vm5904 = vcmp.lt.s32.totalorder %v5903, %v5343
  %v5905 = vsel %vm5904, %v5903, %v5343
  %v5906 = vand.u32 %v5905, 65535
  %v5907 = vshra.s32 %v5905, 16
  %v5908 = vcvt.s32.f32 %v5906
  %v5909 = vcvt.s32.f32 %v5907
  %5910 = vmin.xlane.f32.xlu0 %v5909
  %v5911 = vpop.xlane.xlu0 %5910
  %vm5912 = vcmp.eq.f32.partialorder %v5909, %v5911
  %v5913 = vsel %vm5912, %v5908, inf
  %5914 = vmin.xlane.f32.xlu0 %v5913
  %v5915 = vpop.xlane.xlu0 %5914
  %v5916 = vcvt.f32.s32 %v5915
  %v5917 = vcvt.f32.s32 %v5911
  %v5918 = vshll.u32 %v5917, 16
  %v5919 = vadd.s32 %v5918, %v5916
  %v5920 = vand.u32 %v5361, 4294965248
  %v5921 = vand.u32 %v5379, 4294965248
  %v5922 = vand.u32 %v5397, 4294965248
  %v5923 = vand.u32 %v5415, 4294965248
  %v5924 = vand.u32 %v5433, 4294965248
  %v5925 = vand.u32 %v5451, 4294965248
  %v5926 = vand.u32 %v5469, 4294965248
  %v5927 = vand.u32 %v5487, 4294965248
  %v5928 = vand.u32 %v5505, 4294965248
  %v5929 = vand.u32 %v5523, 4294965248
  %v5930 = vand.u32 %v5541, 4294965248
  %v5931 = vand.u32 %v5559, 4294965248
  %v5932 = vand.u32 %v5577, 4294965248
  %v5933 = vand.u32 %v5595, 4294965248
  %v5934 = vand.u32 %v5613, 4294965248
  %v5935 = vand.u32 %v5631, 4294965248
  %v5936 = vand.u32 %v5649, 4294965248
  %v5937 = vand.u32 %v5667, 4294965248
  %v5938 = vand.u32 %v5685, 4294965248
  %v5939 = vand.u32 %v5703, 4294965248
  %v5940 = vand.u32 %v5721, 4294965248
  %v5941 = vand.u32 %v5739, 4294965248
  %v5942 = vand.u32 %v5757, 4294965248
  %v5943 = vand.u32 %v5775, 4294965248
  %v5944 = vand.u32 %v5793, 4294965248
  %v5945 = vand.u32 %v5811, 4294965248
  %v5946 = vand.u32 %v5829, 4294965248
  %v5947 = vand.u32 %v5847, 4294965248
  %v5948 = vand.u32 %v5865, 4294965248
  %v5949 = vand.u32 %v5883, 4294965248
  %v5950 = vand.u32 %v5901, 4294965248
  %v5951 = vand.u32 %v5919, 4294965248
  %vm5984 = vcmp.eq.s32.totalorder %v2295, 3
  %v5985 = vsel %vm5984, %v5920, %v5120
  %v5986 = vsel %vm5984, %v5921, %v5121
  %v5987 = vsel %vm5984, %v5922, %v5122
  %v5988 = vsel %vm5984, %v5923, %v5123
  %v5989 = vsel %vm5984, %v5924, %v5124
  %v5990 = vsel %vm5984, %v5925, %v5125
  %v5991 = vsel %vm5984, %v5926, %v5126
  %v5992 = vsel %vm5984, %v5927, %v5127
  %v5993 = vsel %vm5984, %v5928, %v5128
  %v5994 = vsel %vm5984, %v5929, %v5129
  %v5995 = vsel %vm5984, %v5930, %v5130
  %v5996 = vsel %vm5984, %v5931, %v5131
  %v5997 = vsel %vm5984, %v5932, %v5132
  %v5998 = vsel %vm5984, %v5933, %v5133
  %v5999 = vsel %vm5984, %v5934, %v5134
  %v6000 = vsel %vm5984, %v5935, %v5135
  %v6001 = vsel %vm5984, %v5936, %v5136
  %v6002 = vsel %vm5984, %v5937, %v5137
  %v6003 = vsel %vm5984, %v5938, %v5138
  %v6004 = vsel %vm5984, %v5939, %v5139
  %v6005 = vsel %vm5984, %v5940, %v5140
  %v6006 = vsel %vm5984, %v5941, %v5141
  %v6007 = vsel %vm5984, %v5942, %v5142
  %v6008 = vsel %vm5984, %v5943, %v5143
  %v6009 = vsel %vm5984, %v5944, %v5144
  %v6010 = vsel %vm5984, %v5945, %v5145
  %v6011 = vsel %vm5984, %v5946, %v5146
  %v6012 = vsel %vm5984, %v5947, %v5147
  %v6013 = vsel %vm5984, %v5948, %v5148
  %v6014 = vsel %vm5984, %v5949, %v5149
  %v6015 = vsel %vm5984, %v5950, %v5150
  %v6016 = vsel %vm5984, %v5951, %v5151
  %6017 = vst [vmem:[#allocation2] sm:$0xff] %v5985
  %6018 = vst [vmem:[#allocation2 + $0x8] sm:$0xff] %v5986
  %6019 = vst [vmem:[#allocation2 + $0x10] sm:$0xff] %v5987
  %6020 = vst [vmem:[#allocation2 + $0x18] sm:$0xff] %v5988
  %6021 = vst [vmem:[#allocation2 + $0x20] sm:$0xff] %v5989
  %6022 = vst [vmem:[#allocation2 + $0x28] sm:$0xff] %v5990
  %6023 = vst [vmem:[#allocation2 + $0x30] sm:$0xff] %v5991
  %6024 = vst [vmem:[#allocation2 + $0x38] sm:$0xff] %v5992
  %6025 = vst [vmem:[#allocation2 + $0x40] sm:$0xff] %v5993
  %6026 = vst [vmem:[#allocation2 + $0x48] sm:$0xff] %v5994
  %6027 = vst [vmem:[#allocation2 + $0x50] sm:$0xff] %v5995
  %6028 = vst [vmem:[#allocation2 + $0x58] sm:$0xff] %v5996
  %6029 = vst [vmem:[#allocation2 + $0x60] sm:$0xff] %v5997
  %6030 = vst [vmem:[#allocation2 + $0x68] sm:$0xff] %v5998
  %6031 = vst [vmem:[#allocation2 + $0x70] sm:$0xff] %v5999
  %6032 = vst [vmem:[#allocation2 + $0x78] sm:$0xff] %v6000
  %6033 = vst [vmem:[#allocation2 + $0x80] sm:$0xff] %v6001
  %6034 = vst [vmem:[#allocation2 + $0x88] sm:$0xff] %v6002
  %6035 = vst [vmem:[#allocation2 + $0x90] sm:$0xff] %v6003
  %6036 = vst [vmem:[#allocation2 + $0x98] sm:$0xff] %v6004
  %6037 = vst [vmem:[#allocation2 + $0xa0] sm:$0xff] %v6005
  %6038 = vst [vmem:[#allocation2 + $0xa8] sm:$0xff] %v6006
  %6039 = vst [vmem:[#allocation2 + $0xb0] sm:$0xff] %v6007
  %6040 = vst [vmem:[#allocation2 + $0xb8] sm:$0xff] %v6008
  %6041 = vst [vmem:[#allocation2 + $0xc0] sm:$0xff] %v6009
  %6042 = vst [vmem:[#allocation2 + $0xc8] sm:$0xff] %v6010
  %6043 = vst [vmem:[#allocation2 + $0xd0] sm:$0xff] %v6011
  %6044 = vst [vmem:[#allocation2 + $0xd8] sm:$0xff] %v6012
  %6045 = vst [vmem:[#allocation2 + $0xe0] sm:$0xff] %v6013
  %6046 = vst [vmem:[#allocation2 + $0xe8] sm:$0xff] %v6014
  %6047 = vst [vmem:[#allocation2 + $0xf0] sm:$0xff] %v6015
  %6048 = vst [vmem:[#allocation2 + $0xf8] sm:$0xff] %v6016
  // Predicated region
  $region14: #{tpu_custom_call.1} parent=0 // pred_check
    %p6049 = pneg %p11
  $region15: #{tpu_custom_call.1} parent=0 // pred_check_branch
    %6051 = sbr.rel (%p6049) target = $region17
  $region16: #{tpu_custom_call.1} parent=0 // pred_region
    %vm6052 = vcmp.lt.f32.partialorder %v5985, 5e+29
    %vm6053 = vcmp.lt.f32.partialorder %v5986, 5e+29
    %vm6054 = vcmp.lt.f32.partialorder %v5987, 5e+29
    %vm6055 = vcmp.lt.f32.partialorder %v5988, 5e+29
    %vm6056 = vcmp.lt.f32.partialorder %v5989, 5e+29
    %vm6057 = vcmp.lt.f32.partialorder %v5990, 5e+29
    %vm6058 = vcmp.lt.f32.partialorder %v5991, 5e+29
    %vm6059 = vcmp.lt.f32.partialorder %v5992, 5e+29
    %vm6060 = vcmp.lt.f32.partialorder %v5993, 5e+29
    %vm6061 = vcmp.lt.f32.partialorder %v5994, 5e+29
    %vm6062 = vcmp.lt.f32.partialorder %v5995, 5e+29
    %vm6063 = vcmp.lt.f32.partialorder %v5996, 5e+29
    %vm6064 = vcmp.lt.f32.partialorder %v5997, 5e+29
    %vm6065 = vcmp.lt.f32.partialorder %v5998, 5e+29
    %vm6066 = vcmp.lt.f32.partialorder %v5999, 5e+29
    %vm6067 = vcmp.lt.f32.partialorder %v6000, 5e+29
    %vm6068 = vcmp.lt.f32.partialorder %v6001, 5e+29
    %vm6069 = vcmp.lt.f32.partialorder %v6002, 5e+29
    %vm6070 = vcmp.lt.f32.partialorder %v6003, 5e+29
    %vm6071 = vcmp.lt.f32.partialorder %v6004, 5e+29
    %vm6072 = vcmp.lt.f32.partialorder %v6005, 5e+29
    %vm6073 = vcmp.lt.f32.partialorder %v6006, 5e+29
    %vm6074 = vcmp.lt.f32.partialorder %v6007, 5e+29
    %vm6075 = vcmp.lt.f32.partialorder %v6008, 5e+29
    %vm6076 = vcmp.lt.f32.partialorder %v6009, 5e+29
    %vm6077 = vcmp.lt.f32.partialorder %v6010, 5e+29
    %vm6078 = vcmp.lt.f32.partialorder %v6011, 5e+29
    %vm6079 = vcmp.lt.f32.partialorder %v6012, 5e+29
    %vm6080 = vcmp.lt.f32.partialorder %v6013, 5e+29
    %vm6081 = vcmp.lt.f32.partialorder %v6014, 5e+29
    %vm6082 = vcmp.lt.f32.partialorder %v6015, 5e+29
    %vm6083 = vcmp.lt.f32.partialorder %v6016, 5e+29
    %v6084 = vsel %vm6052, %v5985, 0.0
    %v6085 = vsel %vm6053, %v5986, 0.0
    %v6086 = vsel %vm6054, %v5987, 0.0
    %v6087 = vsel %vm6055, %v5988, 0.0
    %v6088 = vsel %vm6056, %v5989, 0.0
    %v6089 = vsel %vm6057, %v5990, 0.0
    %v6090 = vsel %vm6058, %v5991, 0.0
    %v6091 = vsel %vm6059, %v5992, 0.0
    %v6092 = vsel %vm6060, %v5993, 0.0
    %v6093 = vsel %vm6061, %v5994, 0.0
    %v6094 = vsel %vm6062, %v5995, 0.0
    %v6095 = vsel %vm6063, %v5996, 0.0
    %v6096 = vsel %vm6064, %v5997, 0.0
    %v6097 = vsel %vm6065, %v5998, 0.0
    %v6098 = vsel %vm6066, %v5999, 0.0
    %v6099 = vsel %vm6067, %v6000, 0.0
    %v6100 = vsel %vm6068, %v6001, 0.0
    %v6101 = vsel %vm6069, %v6002, 0.0
    %v6102 = vsel %vm6070, %v6003, 0.0
    %v6103 = vsel %vm6071, %v6004, 0.0
    %v6104 = vsel %vm6072, %v6005, 0.0
    %v6105 = vsel %vm6073, %v6006, 0.0
    %v6106 = vsel %vm6074, %v6007, 0.0
    %v6107 = vsel %vm6075, %v6008, 0.0
    %v6108 = vsel %vm6076, %v6009, 0.0
    %v6109 = vsel %vm6077, %v6010, 0.0
    %v6110 = vsel %vm6078, %v6011, 0.0
    %v6111 = vsel %vm6079, %v6012, 0.0
    %v6112 = vsel %vm6080, %v6013, 0.0
    %v6113 = vsel %vm6081, %v6014, 0.0
    %v6114 = vsel %vm6082, %v6015, 0.0
    %v6115 = vsel %vm6083, %v6016, 0.0
    %6116 = vadd.xlane.f32.xlu0 %v6084
    %v6117 = vpop.xlane.xlu0 %6116
    %6118 = vadd.xlane.f32.xlu0 %v6085
    %v6119 = vpop.xlane.xlu0 %6118
    %6120 = vadd.xlane.f32.xlu0 %v6086
    %v6121 = vpop.xlane.xlu0 %6120
    %6122 = vadd.xlane.f32.xlu0 %v6087
    %v6123 = vpop.xlane.xlu0 %6122
    %6124 = vadd.xlane.f32.xlu0 %v6088
    %v6125 = vpop.xlane.xlu0 %6124
    %6126 = vadd.xlane.f32.xlu0 %v6089
    %v6127 = vpop.xlane.xlu0 %6126
    %6128 = vadd.xlane.f32.xlu0 %v6090
    %v6129 = vpop.xlane.xlu0 %6128
    %6130 = vadd.xlane.f32.xlu0 %v6091
    %v6131 = vpop.xlane.xlu0 %6130
    %6132 = vadd.xlane.f32.xlu0 %v6092
    %v6133 = vpop.xlane.xlu0 %6132
    %6134 = vadd.xlane.f32.xlu0 %v6093
    %v6135 = vpop.xlane.xlu0 %6134
    %6136 = vadd.xlane.f32.xlu0 %v6094
    %v6137 = vpop.xlane.xlu0 %6136
    %6138 = vadd.xlane.f32.xlu0 %v6095
    %v6139 = vpop.xlane.xlu0 %6138
    %6140 = vadd.xlane.f32.xlu0 %v6096
    %v6141 = vpop.xlane.xlu0 %6140
    %6142 = vadd.xlane.f32.xlu0 %v6097
    %v6143 = vpop.xlane.xlu0 %6142
    %6144 = vadd.xlane.f32.xlu0 %v6098
    %v6145 = vpop.xlane.xlu0 %6144
    %6146 = vadd.xlane.f32.xlu0 %v6099
    %v6147 = vpop.xlane.xlu0 %6146
    %6148 = vadd.xlane.f32.xlu0 %v6100
    %v6149 = vpop.xlane.xlu0 %6148
    %6150 = vadd.xlane.f32.xlu0 %v6101
    %v6151 = vpop.xlane.xlu0 %6150
    %6152 = vadd.xlane.f32.xlu0 %v6102
    %v6153 = vpop.xlane.xlu0 %6152
    %6154 = vadd.xlane.f32.xlu0 %v6103
    %v6155 = vpop.xlane.xlu0 %6154
    %6156 = vadd.xlane.f32.xlu0 %v6104
    %v6157 = vpop.xlane.xlu0 %6156
    %6158 = vadd.xlane.f32.xlu0 %v6105
    %v6159 = vpop.xlane.xlu0 %6158
    %6160 = vadd.xlane.f32.xlu0 %v6106
    %v6161 = vpop.xlane.xlu0 %6160
    %6162 = vadd.xlane.f32.xlu0 %v6107
    %v6163 = vpop.xlane.xlu0 %6162
    %6164 = vadd.xlane.f32.xlu0 %v6108
    %v6165 = vpop.xlane.xlu0 %6164
    %6166 = vadd.xlane.f32.xlu0 %v6109
    %v6167 = vpop.xlane.xlu0 %6166
    %6168 = vadd.xlane.f32.xlu0 %v6110
    %v6169 = vpop.xlane.xlu0 %6168
    %6170 = vadd.xlane.f32.xlu0 %v6111
    %v6171 = vpop.xlane.xlu0 %6170
    %6172 = vadd.xlane.f32.xlu0 %v6112
    %v6173 = vpop.xlane.xlu0 %6172
    %6174 = vadd.xlane.f32.xlu0 %v6113
    %v6175 = vpop.xlane.xlu0 %6174
    %6176 = vadd.xlane.f32.xlu0 %v6114
    %v6177 = vpop.xlane.xlu0 %6176
    %6178 = vadd.xlane.f32.xlu0 %v6115
    %v6179 = vpop.xlane.xlu0 %6178
    %v6180 = vmul.f32 %v6117, 0.25
    %v6181 = vmul.f32 %v6119, 0.25
    %v6182 = vmul.f32 %v6121, 0.25
    %v6183 = vmul.f32 %v6123, 0.25
    %v6184 = vmul.f32 %v6125, 0.25
    %v6185 = vmul.f32 %v6127, 0.25
    %v6186 = vmul.f32 %v6129, 0.25
    %v6187 = vmul.f32 %v6131, 0.25
    %v6188 = vmul.f32 %v6133, 0.25
    %v6189 = vmul.f32 %v6135, 0.25
    %v6190 = vmul.f32 %v6137, 0.25
    %v6191 = vmul.f32 %v6139, 0.25
    %v6192 = vmul.f32 %v6141, 0.25
    %v6193 = vmul.f32 %v6143, 0.25
    %v6194 = vmul.f32 %v6145, 0.25
    %v6195 = vmul.f32 %v6147, 0.25
    %v6196 = vmul.f32 %v6149, 0.25
    %v6197 = vmul.f32 %v6151, 0.25
    %v6198 = vmul.f32 %v6153, 0.25
    %v6199 = vmul.f32 %v6155, 0.25
    %v6200 = vmul.f32 %v6157, 0.25
    %v6201 = vmul.f32 %v6159, 0.25
    %v6202 = vmul.f32 %v6161, 0.25
    %v6203 = vmul.f32 %v6163, 0.25
    %v6204 = vmul.f32 %v6165, 0.25
    %v6205 = vmul.f32 %v6167, 0.25
    %v6206 = vmul.f32 %v6169, 0.25
    %v6207 = vmul.f32 %v6171, 0.25
    %v6208 = vmul.f32 %v6173, 0.25
    %v6209 = vmul.f32 %v6175, 0.25
    %v6210 = vmul.f32 %v6177, 0.25
    %v6211 = vmul.f32 %v6179, 0.25
    %vm6212 = vcmask 7168
    %6213 = vst.msk [vmem:[%s2] sm:$0xff] %vm6212, %v6180
    %6214 = vst.msk [vmem:[%s2 + $0x8] sm:$0xff] %vm6212, %v6181
    %6215 = vst.msk [vmem:[%s2 + $0x10] sm:$0xff] %vm6212, %v6182
    %6216 = vst.msk [vmem:[%s2 + $0x18] sm:$0xff] %vm6212, %v6183
    %6217 = vst.msk [vmem:[%s2 + $0x20] sm:$0xff] %vm6212, %v6184
    %6218 = vst.msk [vmem:[%s2 + $0x28] sm:$0xff] %vm6212, %v6185
    %6219 = vst.msk [vmem:[%s2 + $0x30] sm:$0xff] %vm6212, %v6186
    %6220 = vst.msk [vmem:[%s2 + $0x38] sm:$0xff] %vm6212, %v6187
    %6221 = vst.msk [vmem:[%s2 + $0x40] sm:$0xff] %vm6212, %v6188
    %6222 = vst.msk [vmem:[%s2 + $0x48] sm:$0xff] %vm6212, %v6189
    %6223 = vst.msk [vmem:[%s2 + $0x50] sm:$0xff] %vm6212, %v6190
    %6224 = vst.msk [vmem:[%s2 + $0x58] sm:$0xff] %vm6212, %v6191
    %6225 = vst.msk [vmem:[%s2 + $0x60] sm:$0xff] %vm6212, %v6192
    %6226 = vst.msk [vmem:[%s2 + $0x68] sm:$0xff] %vm6212, %v6193
    %6227 = vst.msk [vmem:[%s2 + $0x70] sm:$0xff] %vm6212, %v6194
    %6228 = vst.msk [vmem:[%s2 + $0x78] sm:$0xff] %vm6212, %v6195
    %6229 = vst.msk [vmem:[%s2 + $0x80] sm:$0xff] %vm6212, %v6196
    %6230 = vst.msk [vmem:[%s2 + $0x88] sm:$0xff] %vm6212, %v6197
    %6231 = vst.msk [vmem:[%s2 + $0x90] sm:$0xff] %vm6212, %v6198
    %6232 = vst.msk [vmem:[%s2 + $0x98] sm:$0xff] %vm6212, %v6199
    %6233 = vst.msk [vmem:[%s2 + $0xa0] sm:$0xff] %vm6212, %v6200
    %6234 = vst.msk [vmem:[%s2 + $0xa8] sm:$0xff] %vm6212, %v6201
    %6235 = vst.msk [vmem:[%s2 + $0xb0] sm:$0xff] %vm6212, %v6202
    %6236 = vst.msk [vmem:[%s2 + $0xb8] sm:$0xff] %vm6212, %v6203
    %6237 = vst.msk [vmem:[%s2 + $0xc0] sm:$0xff] %vm6212, %v6204
    %6238 = vst.msk [vmem:[%s2 + $0xc8] sm:$0xff] %vm6212, %v6205
    %6239 = vst.msk [vmem:[%s2 + $0xd0] sm:$0xff] %vm6212, %v6206
    %6240 = vst.msk [vmem:[%s2 + $0xd8] sm:$0xff] %vm6212, %v6207
    %6241 = vst.msk [vmem:[%s2 + $0xe0] sm:$0xff] %vm6212, %v6208
    %6242 = vst.msk [vmem:[%s2 + $0xe8] sm:$0xff] %vm6212, %v6209
    %6243 = vst.msk [vmem:[%s2 + $0xf0] sm:$0xff] %vm6212, %v6210
    %6244 = vst.msk [vmem:[%s2 + $0xf8] sm:$0xff] %vm6212, %v6211
  $region17: #{tpu_custom_call.1} parent=0 // pred_fallthru
    _
  // Predicated region
  $region18: #{tpu_custom_call.1} parent=0 // pred_check
    _
  $region19: #{tpu_custom_call.1} parent=0 // pred_check_branch
    %6246 = sbr.rel (0) target = $region21
  $region20: #{tpu_custom_call.1} parent=0 // pred_region
    _
  $region21: #{tpu_custom_call.1} parent=0 // pred_fallthru
    _
  // Predicated region
  $region22: #{tpu_custom_call.1} parent=0 // pred_check
    _
  $region23: #{tpu_custom_call.1} parent=0 // pred_check_branch
    %6248 = sbr.rel (0) target = $region25
  $region24: #{tpu_custom_call.1} parent=0 // pred_region
    _
  $region25: #{tpu_custom_call.1} parent=0 // pred_fallthru
    _

</llo_original>
